<compile_context>
chip_gen: v7x
topology: tpu7x:2x2x1
jax: 0.10.0
libtpu: 0.0.40
codegen_flags: <defaults>
</compile_context>

<pallas_src>
import numpy as np
import jax
import jax.numpy as jnp
from jax.experimental import pallas as pl
from jax.experimental.pallas import tpu as pltpu

_INV_SQRT2 = 0.7071067811865476


# --------------------------------------------------------------------------
# small in-kernel helpers (everything operates on (H, W) channel planes)
# --------------------------------------------------------------------------

def _erf(x):
    # Abramowitz & Stegun 7.1.26 rational approximation (|err| < 1.5e-7).
    # The divide is routed through the EUP via pl.reciprocal(approx=True).
    p = jnp.float32(0.3275911)
    a1 = jnp.float32(0.254829592)
    a2 = jnp.float32(-0.284496736)
    a3 = jnp.float32(1.421413741)
    a4 = jnp.float32(-1.453152027)
    a5 = jnp.float32(1.061405429)
    s = jnp.sign(x)
    ax = jnp.abs(x)
    t = pl.reciprocal(1.0 + p * ax, approx=True)
    poly = ((((a5 * t + a4) * t + a3) * t + a2) * t + a1) * t
    return s * (1.0 - poly * jnp.exp(-ax * ax))


def _gelu(x):
    # PyTorch F.gelu default ("none") = exact erf-based GELU.
    return 0.5 * x * (1.0 + _erf(x * jnp.float32(_INV_SQRT2)))


def _shift_rows(p, s):
    """out[h, w] = p[h - s, w], zero padded (|s| <= 1)."""
    if s == 0:
        return p
    h, w = p.shape
    zrow = jnp.zeros((1, w), p.dtype)
    if s > 0:
        return jnp.concatenate([zrow, p[:h - 1, :]], axis=0)
    return jnp.concatenate([p[1:, :], zrow], axis=0)


def _shift_cols(p, s):
    """out[h, w] = p[h, w - s], zero padded (|s| <= 1)."""
    if s == 0:
        return p
    h, w = p.shape
    zcol = jnp.zeros((h, 1), p.dtype)
    if s > 0:
        return jnp.concatenate([zcol, p[:, :w - 1]], axis=1)
    return jnp.concatenate([p[:, 1:], zcol], axis=1)


def _tap_planes(p):
    """taps[ty*3+tx][h, w] = p[h+ty-1, w+tx-1] with zero padding (3x3 window)."""
    taps = []
    for ty in range(3):
        pr = _shift_rows(p, 1 - ty)
        for tx in range(3):
            taps.append(_shift_cols(pr, 1 - tx))
    return taps


def _dwconv3x3(p, w_ref, row):
    """3x3 depthwise conv of one plane; w_ref is SMEM (C, 9), row = channel."""
    taps = _tap_planes(p)
    acc = w_ref[row, 0] * taps[0]
    for k in range(1, 9):
        acc = acc + w_ref[row, k] * taps[k]
    return acc


def _conv1x1_planes(planes, w_ref, b_ref=None):
    """1x1 conv as VPU broadcast-FMAs; w_ref is SMEM (out_ch, in_ch)."""
    out_ch, in_ch = w_ref.shape
    outs = []
    for o in range(out_ch):
        acc = w_ref[o, 0] * planes[0]
        for i in range(1, in_ch):
            acc = acc + w_ref[o, i] * planes[i]
        if b_ref is not None:
            acc = acc + b_ref[0, o]
        outs.append(acc)
    return outs


def _layernorm_planes(planes, w_ref, b_ref):
    """WithBias LayerNorm over the channel dim (per pixel), eps = 1e-5."""
    c = len(planes)
    mu = planes[0]
    for p in planes[1:]:
        mu = mu + p
    mu = mu * (1.0 / c)
    var = (planes[0] - mu) ** 2
    for p in planes[1:]:
        var = var + (p - mu) ** 2
    var = var * (1.0 / c)
    rstd = jax.lax.rsqrt(var + 1e-5)
    return [(planes[i] - mu) * rstd * w_ref[0, i] + b_ref[0, i] for i in range(c)]


def _plane_sum(p):
    """Sum of a (H, W) plane as a (1, 1) array (lane reduce then sublane)."""
    return jnp.sum(jnp.sum(p, axis=1, keepdims=True), axis=0, keepdims=True)


def _l2norm_plane(p):
    """F.normalize over the whole plane: p / max(||p||_2, 1e-12)."""
    ss = _plane_sum(p * p)
    nrm = jnp.maximum(jnp.sqrt(ss), 1e-12)
    return p * (1.0 / nrm)


# --------------------------------------------------------------------------
# fused kernel 1: conv1 + norm1 + channel attention + residual
# --------------------------------------------------------------------------

def _attn_block_kernel(r_ref, s_ref, c1_w, c1_b, ln1_w, ln1_b,
                       kv_w, kv_dw, q_w, q_dw, temp, po_w, o_ref):
    dim = r_ref.shape[1]
    dim2 = s_ref.shape[1]
    heads = temp.shape[1]
    c_head = dim // heads
    f32 = jnp.float32

    r_planes = [r_ref[0, c].astype(f32) for c in range(dim)]
    s_planes = [s_ref[0, c].astype(f32) for c in range(dim2)]

    # conv1 (1x1 with bias) on S, then the shared norm1 on both streams.
    s_proj = _conv1x1_planes(s_planes, c1_w, c1_b)
    s_n = _layernorm_planes(s_proj, ln1_w, ln1_b)
    r_n = _layernorm_planes(r_planes, ln1_w, ln1_b)

    # kv = dwconv3x3(kv_1x1(r_n)); chunk into k, v (bias=False).
    kv_pre = _conv1x1_planes(r_n, kv_w)                         # 2*dim planes
    kv_planes = [_dwconv3x3(kv_pre[c], kv_dw, c) for c in range(2 * dim)]
    k_planes = kv_planes[:dim]
    v_planes = kv_planes[dim:]

    # q = dense 3x3 conv(q_1x1(s_n)) (groups=1, bias=False).
    q_pre = _conv1x1_planes(s_n, q_w)                           # dim planes
    q_taps = [_tap_planes(p) for p in q_pre]
    q_planes = []
    for o in range(dim):
        acc = None
        for i in range(dim):
            for k in range(9):
                term = q_dw[o, i * 9 + k] * q_taps[i][k]
                acc = term if acc is None else acc + term
        q_planes.append(acc)

    # transposed (channel) attention per head.
    out_planes = [None] * dim
    for h in range(heads):
        base = h * c_head
        qn = [_l2norm_plane(q_planes[base + j]) for j in range(c_head)]
        kn = [_l2norm_plane(k_planes[base + j]) for j in range(c_head)]
        t_h = temp[0, h]
        for i in range(c_head):
            logits = [t_h * _plane_sum(qn[i] * kn[j]) for j in range(c_head)]
            m = logits[0]
            for lg in logits[1:]:
                m = jnp.maximum(m, lg)
            exps = [jnp.exp(lg - m) for lg in logits]
            den = exps[0]
            for e in exps[1:]:
                den = den + e
            inv = 1.0 / den
            acc = (exps[0] * inv) * v_planes[base + 0]
            for j in range(1, c_head):
                acc = acc + (exps[j] * inv) * v_planes[base + j]
            out_planes[base + i] = acc

    # project_out (1x1, bias=False) + residual with the *normed* R
    # (matches IFA.forward, where input_R is reassigned to norm1(input_R)).
    proj = _conv1x1_planes(out_planes, po_w)
    for o in range(dim):
        o_ref[0, o] = (r_n[o] + proj[o]).astype(o_ref.dtype)


def _attention_block(r, s, params):
    B, dim, H, W = r.shape
    dim2 = s.shape[1]
    heads = params['temperature'].shape[0]
    args = (
        r, s,
        params['conv1_w'],                               # (dim, dim2)
        params['conv1_b'].reshape(1, dim),
        params['ln1_w'].reshape(1, dim),
        params['ln1_b'].reshape(1, dim),
        params['kv_w'],                                  # (2*dim, dim)
        params['kv_dw_w'].reshape(2 * dim, 9),
        params['q_w'],                                   # (dim, dim)
        params['q_dw_w'].reshape(dim, dim * 9),
        params['temperature'].reshape(1, heads),
        params['po_w'],                                  # (dim, dim)
    )
    smem = pl.BlockSpec(memory_space=pltpu.MemorySpace.SMEM)
    in_specs = [
        pl.BlockSpec((1, dim, H, W), lambda b: (b, 0, 0, 0)),
        pl.BlockSpec((1, dim2, H, W), lambda b: (b, 0, 0, 0)),
    ] + [smem] * 10
    return pl.pallas_call(
        _attn_block_kernel,
        out_shape=jax.ShapeDtypeStruct((B, dim, H, W), r.dtype),
        grid=(B,),
        in_specs=in_specs,
        out_specs=pl.BlockSpec((1, dim, H, W), lambda b: (b, 0, 0, 0)),
        compiler_params=pltpu.CompilerParams(dimension_semantics=("parallel",)),
    )(*args)


# --------------------------------------------------------------------------
# fused kernel 2: norm2 + FeedForward (project_in -> dwconv+GELU gate ->
#                 project_out) + residual
# --------------------------------------------------------------------------

def _ffn_block_kernel(x_ref, ln2_w, ln2_b, w_in, w_dw, w_out, o_ref):
    dim = x_ref.shape[1]
    c2 = w_in.shape[0]
    hidden = c2 // 2
    f32 = jnp.float32

    x_planes = [x_ref[0, c].astype(f32) for c in range(dim)]
    n = _layernorm_planes(x_planes, ln2_w, ln2_b)               # norm2
    y = _conv1x1_planes(n, w_in)                                # project_in
    d = [_dwconv3x3(y[c], w_dw, c) for c in range(c2)]          # depthwise 3x3
    z = [_gelu(d[j]) * d[j + hidden] for j in range(hidden)]    # chunk + gate
    proj = _conv1x1_planes(z, w_out)                            # project_out
    for o in range(dim):
        o_ref[0, o] = (x_planes[o] + proj[o]).astype(o_ref.dtype)


def _ffn_block(x, params):
    B, dim, H, W = x.shape
    c2 = params['w_in'].shape[0]
    args = (
        x,
        params['ln2_w'].reshape(1, dim),
        params['ln2_b'].reshape(1, dim),
        params['w_in'],                                  # (c2, dim)
        params['w_dw'].reshape(c2, 9),
        params['w_out'],                                 # (dim, hidden)
    )
    smem = pl.BlockSpec(memory_space=pltpu.MemorySpace.SMEM)
    in_specs = [pl.BlockSpec((1, dim, H, W), lambda b: (b, 0, 0, 0))] + [smem] * 5
    return pl.pallas_call(
        _ffn_block_kernel,
        out_shape=jax.ShapeDtypeStruct((B, dim, H, W), x.dtype),
        grid=(B,),
        in_specs=in_specs,
        out_specs=pl.BlockSpec((1, dim, H, W), lambda b: (b, 0, 0, 0)),
        compiler_params=pltpu.CompilerParams(dimension_semantics=("parallel",)),
    )(*args)


# --------------------------------------------------------------------------
# IFA forward (wrapper = glue only; inputs stay NCHW, no transposes)
# --------------------------------------------------------------------------

def ifa_pallas(input_R, input_S, params):
    B, dim, H, W = input_R.shape
    Hs, Ws = input_S.shape[2], input_S.shape[3]
    # F.interpolate(mode='nearest'): src = floor(dst * in/out). Static gather
    # done as wrapper indexing glue (pure data movement, no compute).
    idx_h = np.arange(H) * Hs // H
    idx_w = np.arange(W) * Ws // W
    s_up = input_S[:, :, idx_h, :][:, :, :, idx_w]
    r2 = _attention_block(input_R, s_up, params)   # conv1+norm1+attn+residual
    return _ffn_block(r2, params)                  # norm2+ffn+residual


# --------------------------------------------------------------------------
# pure-JAX reference of the full IFA forward (numerical sanity check only)
# --------------------------------------------------------------------------

def _layernorm_ref(x, w, b):
    mu = jnp.mean(x, axis=1, keepdims=True)
    var = jnp.mean((x - mu) ** 2, axis=1, keepdims=True)
    return (x - mu) / jnp.sqrt(var + 1e-5) * w[None, :, None, None] \
        + b[None, :, None, None]


def _conv1x1_ref(x, w, b=None):
    y = jnp.einsum('bihw,oi->bohw', x, w)
    if b is not None:
        y = y + b[None, :, None, None]
    return y


def _dwconv3x3_ref(x, w):
    c = x.shape[1]
    return jax.lax.conv_general_dilated(
        x, w[:, None, :, :], window_strides=(1, 1), padding=((1, 1), (1, 1)),
        dimension_numbers=('NCHW', 'OIHW', 'NCHW'), feature_group_count=c)


def _conv3x3_ref(x, w):
    return jax.lax.conv_general_dilated(
        x, w, window_strides=(1, 1), padding=((1, 1), (1, 1)),
        dimension_numbers=('NCHW', 'OIHW', 'NCHW'))


def _attention_ref(x, y, p):
    b, c, h, w = x.shape
    heads = p['temperature'].shape[0]
    kv = _dwconv3x3_ref(_conv1x1_ref(x, p['kv_w']), p['kv_dw_w'])
    k, v = kv[:, :c], kv[:, c:]
    q = _conv3x3_ref(_conv1x1_ref(y, p['q_w']), p['q_dw_w'])

    def heads_view(t):
        return t.reshape(b, heads, c // heads, h * w)

    q, k, v = heads_view(q), heads_view(k), heads_view(v)
    q = q / jnp.maximum(jnp.linalg.norm(q, axis=-1, keepdims=True), 1e-12)
    k = k / jnp.maximum(jnp.linalg.norm(k, axis=-1, keepdims=True), 1e-12)
    attn = jnp.einsum('bhcn,bhdn->bhcd', q, k) \
        * p['temperature'][None, :, None, None]
    attn = jax.nn.softmax(attn, axis=-1)
    out = jnp.einsum('bhcd,bhdn->bhcn', attn, v).reshape(b, c, h, w)
    return _conv1x1_ref(out, p['po_w'])


def _ffn_ref(x, p):
    y = _dwconv3x3_ref(_conv1x1_ref(x, p['w_in']), p['w_dw'])
    hidden = y.shape[1] // 2
    z = jax.nn.gelu(y[:, :hidden], approximate=False) * y[:, hidden:]
    return _conv1x1_ref(z, p['w_out'])


def ifa_reference(input_R, input_S, p):
    H, W = input_R.shape[2], input_R.shape[3]
    Hs, Ws = input_S.shape[2], input_S.shape[3]
    idx_h = np.arange(H) * Hs // H
    idx_w = np.arange(W) * Ws // W
    s = input_S[:, :, idx_h, :][:, :, :, idx_w]
    s = _conv1x1_ref(s, p['conv1_w'], p['conv1_b'])
    r = _layernorm_ref(input_R, p['ln1_w'], p['ln1_b'])
    s = _layernorm_ref(s, p['ln1_w'], p['ln1_b'])
    r = r + _attention_ref(r, s, p)
    r = r + _ffn_ref(_layernorm_ref(r, p['ln2_w'], p['ln2_b']), p)
    return r


# --------------------------------------------------------------------------

if __name__ == "__main__":
    # IFA(dim_2=3, dim=4, num_heads=2, ffn_expansion_factor=2.66, bias=False,
    #     LayerNorm_type='WithBias')
    B, dim_2, dim = 2, 3, 4
    num_heads = 2
    ffn_expansion_factor = 2.66
    hidden = int(dim * ffn_expansion_factor)    # 10
    c2 = 2 * hidden                             # 20
    H, W = 16, 128                              # W=128 keeps stores lane-dense
    Hs, Ws = 8, 64                              # low-res input_S (interpolated up)

    key = jax.random.PRNGKey(0)
    ks = jax.random.split(key, 17)

    def rnd(k, shape, scale=0.2):
        return scale * jax.random.normal(k, shape, jnp.float32)

    # Parameter layouts relative to PyTorch:
    #   every 1x1 conv weight (O, I, 1, 1) is stored as (O, I)
    #   kv_dwconv.weight (2d, 1, 3, 3)  -> kv_dw_w (2d, 3, 3)
    #   q_dwconv.weight  (d, d, 3, 3)   -> q_dw_w  (d, d, 3, 3)   (dense conv)
    #   ffn.dwconv.weight(c2, 1, 3, 3)  -> w_dw    (c2, 3, 3)
    params = {
        'conv1_w': rnd(ks[0], (dim, dim_2)),
        'conv1_b': rnd(ks[1], (dim,), 0.1),
        'ln1_w': 1.0 + rnd(ks[2], (dim,), 0.1),
        'ln1_b': rnd(ks[3], (dim,), 0.1),
        'kv_w': rnd(ks[4], (2 * dim, dim)),
        'kv_dw_w': rnd(ks[5], (2 * dim, 3, 3)),
        'q_w': rnd(ks[6], (dim, dim)),
        'q_dw_w': rnd(ks[7], (dim, dim, 3, 3)),
        'temperature': 1.0 + rnd(ks[8], (num_heads,), 0.1),
        'po_w': rnd(ks[9], (dim, dim)),
        'ln2_w': 1.0 + rnd(ks[10], (dim,), 0.1),
        'ln2_b': rnd(ks[11], (dim,), 0.1),
        'w_in': rnd(ks[12], (c2, dim)),
        'w_dw': rnd(ks[13], (c2, 3, 3)),
        'w_out': rnd(ks[14], (dim, hidden)),
    }

    input_R = jax.random.normal(ks[15], (B, dim, H, W), jnp.float32)   # NCHW
    input_S = jax.random.normal(ks[16], (B, dim_2, Hs, Ws), jnp.float32)

    out = jax.block_until_ready(ifa_pallas(input_R, input_S, params))
    ref = jax.block_until_ready(ifa_reference(input_R, input_S, params))

    assert out.shape == (B, dim, H, W)
    np.testing.assert_allclose(np.asarray(out), np.asarray(ref),
                               rtol=2e-2, atol=5e-3)
    print("KERNEL_OK")
</pallas_src>

<mosaic_0001>
module attributes {stable_mosaic.version = 11 : i64} {
  func.func @_attn_block_kernel(%arg0: i32, %arg1: memref<1x4x16x128xf32, #tpu.memory_space<vmem>>, %arg2: memref<1x3x16x128xf32, #tpu.memory_space<vmem>>, %arg3: memref<4x3xf32, #tpu.memory_space<smem>>, %arg4: memref<1x4xf32, #tpu.memory_space<smem>>, %arg5: memref<1x4xf32, #tpu.memory_space<smem>>, %arg6: memref<1x4xf32, #tpu.memory_space<smem>>, %arg7: memref<8x4xf32, #tpu.memory_space<smem>>, %arg8: memref<8x9xf32, #tpu.memory_space<smem>>, %arg9: memref<4x4xf32, #tpu.memory_space<smem>>, %arg10: memref<4x36xf32, #tpu.memory_space<smem>>, %arg11: memref<1x2xf32, #tpu.memory_space<smem>>, %arg12: memref<4x4xf32, #tpu.memory_space<smem>>, %arg13: memref<1x4x16x128xf32, #tpu.memory_space<vmem>>) attributes {dimension_semantics = [#tpu.dimension_semantics<parallel>], iteration_bounds = array<i64: 2>, scalar_prefetch = 0 : i64, scratch_operands = 0 : i64, tpu.core_type = #tpu.core_type<tc>, window_params = [{transform_indices = @transform_0, window_bounds = array<i64: 1, 4, 16, 128>}, {transform_indices = @transform_1, window_bounds = array<i64: 1, 3, 16, 128>}, {transform_indices = @transform_2, window_bounds = array<i64: 4, 3>}, {transform_indices = @transform_3, window_bounds = array<i64: 1, 4>}, {transform_indices = @transform_4, window_bounds = array<i64: 1, 4>}, {transform_indices = @transform_5, window_bounds = array<i64: 1, 4>}, {transform_indices = @transform_6, window_bounds = array<i64: 8, 4>}, {transform_indices = @transform_7, window_bounds = array<i64: 8, 9>}, {transform_indices = @transform_8, window_bounds = array<i64: 4, 4>}, {transform_indices = @transform_9, window_bounds = array<i64: 4, 36>}, {transform_indices = @transform_10, window_bounds = array<i64: 1, 2>}, {transform_indices = @transform_11, window_bounds = array<i64: 4, 4>}, {transform_indices = @transform_12, window_bounds = array<i64: 1, 4, 16, 128>}]} {
    %c0 = arith.constant 0 : index
    %c0_0 = arith.constant 0 : index
    %c0_1 = arith.constant 0 : index
    %c0_2 = arith.constant 0 : index
    %0 = vector.load %arg1[%c0, %c0_0, %c0_1, %c0_2] : memref<1x4x16x128xf32, #tpu.memory_space<vmem>>, vector<1x1x16x128xf32>
    %1 = vector.shape_cast %0 : vector<1x1x16x128xf32> to vector<16x128xf32>
    %c0_3 = arith.constant 0 : index
    %c1 = arith.constant 1 : index
    %c0_4 = arith.constant 0 : index
    %c0_5 = arith.constant 0 : index
    %2 = vector.load %arg1[%c0_3, %c1, %c0_4, %c0_5] : memref<1x4x16x128xf32, #tpu.memory_space<vmem>>, vector<1x1x16x128xf32>
    %3 = vector.shape_cast %2 : vector<1x1x16x128xf32> to vector<16x128xf32>
    %c0_6 = arith.constant 0 : index
    %c2 = arith.constant 2 : index
    %c0_7 = arith.constant 0 : index
    %c0_8 = arith.constant 0 : index
    %4 = vector.load %arg1[%c0_6, %c2, %c0_7, %c0_8] : memref<1x4x16x128xf32, #tpu.memory_space<vmem>>, vector<1x1x16x128xf32>
    %5 = vector.shape_cast %4 : vector<1x1x16x128xf32> to vector<16x128xf32>
    %c0_9 = arith.constant 0 : index
    %c3 = arith.constant 3 : index
    %c0_10 = arith.constant 0 : index
    %c0_11 = arith.constant 0 : index
    %6 = vector.load %arg1[%c0_9, %c3, %c0_10, %c0_11] : memref<1x4x16x128xf32, #tpu.memory_space<vmem>>, vector<1x1x16x128xf32>
    %7 = vector.shape_cast %6 : vector<1x1x16x128xf32> to vector<16x128xf32>
    %c0_12 = arith.constant 0 : index
    %c0_13 = arith.constant 0 : index
    %c0_14 = arith.constant 0 : index
    %c0_15 = arith.constant 0 : index
    %8 = vector.load %arg2[%c0_12, %c0_13, %c0_14, %c0_15] : memref<1x3x16x128xf32, #tpu.memory_space<vmem>>, vector<1x1x16x128xf32>
    %9 = vector.shape_cast %8 : vector<1x1x16x128xf32> to vector<16x128xf32>
    %c0_16 = arith.constant 0 : index
    %c1_17 = arith.constant 1 : index
    %c0_18 = arith.constant 0 : index
    %c0_19 = arith.constant 0 : index
    %10 = vector.load %arg2[%c0_16, %c1_17, %c0_18, %c0_19] : memref<1x3x16x128xf32, #tpu.memory_space<vmem>>, vector<1x1x16x128xf32>
    %11 = vector.shape_cast %10 : vector<1x1x16x128xf32> to vector<16x128xf32>
    %c0_20 = arith.constant 0 : index
    %c2_21 = arith.constant 2 : index
    %c0_22 = arith.constant 0 : index
    %c0_23 = arith.constant 0 : index
    %12 = vector.load %arg2[%c0_20, %c2_21, %c0_22, %c0_23] : memref<1x3x16x128xf32, #tpu.memory_space<vmem>>, vector<1x1x16x128xf32>
    %13 = vector.shape_cast %12 : vector<1x1x16x128xf32> to vector<16x128xf32>
    %c0_24 = arith.constant 0 : index
    %c0_25 = arith.constant 0 : index
    %14 = memref.load %arg3[%c0_24, %c0_25] : memref<4x3xf32, #tpu.memory_space<smem>>
    %15 = vector.broadcast %14 : f32 to vector<16x128xf32>
    %16 = arith.mulf %15, %9 : vector<16x128xf32>
    %c0_26 = arith.constant 0 : index
    %c1_27 = arith.constant 1 : index
    %17 = memref.load %arg3[%c0_26, %c1_27] : memref<4x3xf32, #tpu.memory_space<smem>>
    %18 = vector.broadcast %17 : f32 to vector<16x128xf32>
    %19 = arith.mulf %18, %11 : vector<16x128xf32>
    %20 = arith.addf %16, %19 : vector<16x128xf32>
    %c0_28 = arith.constant 0 : index
    %c2_29 = arith.constant 2 : index
    %21 = memref.load %arg3[%c0_28, %c2_29] : memref<4x3xf32, #tpu.memory_space<smem>>
    %22 = vector.broadcast %21 : f32 to vector<16x128xf32>
    %23 = arith.mulf %22, %13 : vector<16x128xf32>
    %24 = arith.addf %20, %23 : vector<16x128xf32>
    %c0_30 = arith.constant 0 : index
    %c0_31 = arith.constant 0 : index
    %25 = memref.load %arg4[%c0_30, %c0_31] : memref<1x4xf32, #tpu.memory_space<smem>>
    %26 = vector.broadcast %25 : f32 to vector<16x128xf32>
    %27 = arith.addf %24, %26 : vector<16x128xf32>
    %c1_32 = arith.constant 1 : index
    %c0_33 = arith.constant 0 : index
    %28 = memref.load %arg3[%c1_32, %c0_33] : memref<4x3xf32, #tpu.memory_space<smem>>
    %29 = vector.broadcast %28 : f32 to vector<16x128xf32>
    %30 = arith.mulf %29, %9 : vector<16x128xf32>
    %c1_34 = arith.constant 1 : index
    %c1_35 = arith.constant 1 : index
    %31 = memref.load %arg3[%c1_34, %c1_35] : memref<4x3xf32, #tpu.memory_space<smem>>
    %32 = vector.broadcast %31 : f32 to vector<16x128xf32>
    %33 = arith.mulf %32, %11 : vector<16x128xf32>
    %34 = arith.addf %30, %33 : vector<16x128xf32>
    %c1_36 = arith.constant 1 : index
    %c2_37 = arith.constant 2 : index
    %35 = memref.load %arg3[%c1_36, %c2_37] : memref<4x3xf32, #tpu.memory_space<smem>>
    %36 = vector.broadcast %35 : f32 to vector<16x128xf32>
    %37 = arith.mulf %36, %13 : vector<16x128xf32>
    %38 = arith.addf %34, %37 : vector<16x128xf32>
    %c0_38 = arith.constant 0 : index
    %c1_39 = arith.constant 1 : index
    %39 = memref.load %arg4[%c0_38, %c1_39] : memref<1x4xf32, #tpu.memory_space<smem>>
    %40 = vector.broadcast %39 : f32 to vector<16x128xf32>
    %41 = arith.addf %38, %40 : vector<16x128xf32>
    %c2_40 = arith.constant 2 : index
    %c0_41 = arith.constant 0 : index
    %42 = memref.load %arg3[%c2_40, %c0_41] : memref<4x3xf32, #tpu.memory_space<smem>>
    %43 = vector.broadcast %42 : f32 to vector<16x128xf32>
    %44 = arith.mulf %43, %9 : vector<16x128xf32>
    %c2_42 = arith.constant 2 : index
    %c1_43 = arith.constant 1 : index
    %45 = memref.load %arg3[%c2_42, %c1_43] : memref<4x3xf32, #tpu.memory_space<smem>>
    %46 = vector.broadcast %45 : f32 to vector<16x128xf32>
    %47 = arith.mulf %46, %11 : vector<16x128xf32>
    %48 = arith.addf %44, %47 : vector<16x128xf32>
    %c2_44 = arith.constant 2 : index
    %c2_45 = arith.constant 2 : index
    %49 = memref.load %arg3[%c2_44, %c2_45] : memref<4x3xf32, #tpu.memory_space<smem>>
    %50 = vector.broadcast %49 : f32 to vector<16x128xf32>
    %51 = arith.mulf %50, %13 : vector<16x128xf32>
    %52 = arith.addf %48, %51 : vector<16x128xf32>
    %c0_46 = arith.constant 0 : index
    %c2_47 = arith.constant 2 : index
    %53 = memref.load %arg4[%c0_46, %c2_47] : memref<1x4xf32, #tpu.memory_space<smem>>
    %54 = vector.broadcast %53 : f32 to vector<16x128xf32>
    %55 = arith.addf %52, %54 : vector<16x128xf32>
    %c3_48 = arith.constant 3 : index
    %c0_49 = arith.constant 0 : index
    %56 = memref.load %arg3[%c3_48, %c0_49] : memref<4x3xf32, #tpu.memory_space<smem>>
    %57 = vector.broadcast %56 : f32 to vector<16x128xf32>
    %58 = arith.mulf %57, %9 : vector<16x128xf32>
    %c3_50 = arith.constant 3 : index
    %c1_51 = arith.constant 1 : index
    %59 = memref.load %arg3[%c3_50, %c1_51] : memref<4x3xf32, #tpu.memory_space<smem>>
    %60 = vector.broadcast %59 : f32 to vector<16x128xf32>
    %61 = arith.mulf %60, %11 : vector<16x128xf32>
    %62 = arith.addf %58, %61 : vector<16x128xf32>
    %c3_52 = arith.constant 3 : index
    %c2_53 = arith.constant 2 : index
    %63 = memref.load %arg3[%c3_52, %c2_53] : memref<4x3xf32, #tpu.memory_space<smem>>
    %64 = vector.broadcast %63 : f32 to vector<16x128xf32>
    %65 = arith.mulf %64, %13 : vector<16x128xf32>
    %66 = arith.addf %62, %65 : vector<16x128xf32>
    %c0_54 = arith.constant 0 : index
    %c3_55 = arith.constant 3 : index
    %67 = memref.load %arg4[%c0_54, %c3_55] : memref<1x4xf32, #tpu.memory_space<smem>>
    %68 = vector.broadcast %67 : f32 to vector<16x128xf32>
    %69 = arith.addf %66, %68 : vector<16x128xf32>
    %70 = arith.addf %27, %41 : vector<16x128xf32>
    %71 = arith.addf %70, %55 : vector<16x128xf32>
    %72 = arith.addf %71, %69 : vector<16x128xf32>
    %cst = arith.constant 2.500000e-01 : f32
    %73 = vector.broadcast %cst : f32 to vector<16x128xf32>
    %74 = arith.mulf %72, %73 : vector<16x128xf32>
    %75 = arith.subf %27, %74 : vector<16x128xf32>
    %76 = arith.mulf %75, %75 : vector<16x128xf32>
    %77 = arith.subf %41, %74 : vector<16x128xf32>
    %78 = arith.mulf %77, %77 : vector<16x128xf32>
    %79 = arith.addf %76, %78 : vector<16x128xf32>
    %80 = arith.subf %55, %74 : vector<16x128xf32>
    %81 = arith.mulf %80, %80 : vector<16x128xf32>
    %82 = arith.addf %79, %81 : vector<16x128xf32>
    %83 = arith.subf %69, %74 : vector<16x128xf32>
    %84 = arith.mulf %83, %83 : vector<16x128xf32>
    %85 = arith.addf %82, %84 : vector<16x128xf32>
    %cst_56 = arith.constant 2.500000e-01 : f32
    %86 = vector.broadcast %cst_56 : f32 to vector<16x128xf32>
    %87 = arith.mulf %85, %86 : vector<16x128xf32>
    %cst_57 = arith.constant 9.99999974E-6 : f32
    %88 = vector.broadcast %cst_57 : f32 to vector<16x128xf32>
    %89 = arith.addf %87, %88 : vector<16x128xf32>
    %90 = math.rsqrt %89 : vector<16x128xf32>
    %91 = arith.subf %27, %74 : vector<16x128xf32>
    %92 = arith.mulf %91, %90 : vector<16x128xf32>
    %c0_58 = arith.constant 0 : index
    %c0_59 = arith.constant 0 : index
    %93 = memref.load %arg5[%c0_58, %c0_59] : memref<1x4xf32, #tpu.memory_space<smem>>
    %94 = vector.broadcast %93 : f32 to vector<16x128xf32>
    %95 = arith.mulf %92, %94 : vector<16x128xf32>
    %c0_60 = arith.constant 0 : index
    %c0_61 = arith.constant 0 : index
    %96 = memref.load %arg6[%c0_60, %c0_61] : memref<1x4xf32, #tpu.memory_space<smem>>
    %97 = vector.broadcast %96 : f32 to vector<16x128xf32>
    %98 = arith.addf %95, %97 : vector<16x128xf32>
    %99 = arith.subf %41, %74 : vector<16x128xf32>
    %100 = arith.mulf %99, %90 : vector<16x128xf32>
    %c0_62 = arith.constant 0 : index
    %c1_63 = arith.constant 1 : index
    %101 = memref.load %arg5[%c0_62, %c1_63] : memref<1x4xf32, #tpu.memory_space<smem>>
    %102 = vector.broadcast %101 : f32 to vector<16x128xf32>
    %103 = arith.mulf %100, %102 : vector<16x128xf32>
    %c0_64 = arith.constant 0 : index
    %c1_65 = arith.constant 1 : index
    %104 = memref.load %arg6[%c0_64, %c1_65] : memref<1x4xf32, #tpu.memory_space<smem>>
    %105 = vector.broadcast %104 : f32 to vector<16x128xf32>
    %106 = arith.addf %103, %105 : vector<16x128xf32>
    %107 = arith.subf %55, %74 : vector<16x128xf32>
    %108 = arith.mulf %107, %90 : vector<16x128xf32>
    %c0_66 = arith.constant 0 : index
    %c2_67 = arith.constant 2 : index
    %109 = memref.load %arg5[%c0_66, %c2_67] : memref<1x4xf32, #tpu.memory_space<smem>>
    %110 = vector.broadcast %109 : f32 to vector<16x128xf32>
    %111 = arith.mulf %108, %110 : vector<16x128xf32>
    %c0_68 = arith.constant 0 : index
    %c2_69 = arith.constant 2 : index
    %112 = memref.load %arg6[%c0_68, %c2_69] : memref<1x4xf32, #tpu.memory_space<smem>>
    %113 = vector.broadcast %112 : f32 to vector<16x128xf32>
    %114 = arith.addf %111, %113 : vector<16x128xf32>
    %115 = arith.subf %69, %74 : vector<16x128xf32>
    %116 = arith.mulf %115, %90 : vector<16x128xf32>
    %c0_70 = arith.constant 0 : index
    %c3_71 = arith.constant 3 : index
    %117 = memref.load %arg5[%c0_70, %c3_71] : memref<1x4xf32, #tpu.memory_space<smem>>
    %118 = vector.broadcast %117 : f32 to vector<16x128xf32>
    %119 = arith.mulf %116, %118 : vector<16x128xf32>
    %c0_72 = arith.constant 0 : index
    %c3_73 = arith.constant 3 : index
    %120 = memref.load %arg6[%c0_72, %c3_73] : memref<1x4xf32, #tpu.memory_space<smem>>
    %121 = vector.broadcast %120 : f32 to vector<16x128xf32>
    %122 = arith.addf %119, %121 : vector<16x128xf32>
    %123 = arith.addf %1, %3 : vector<16x128xf32>
    %124 = arith.addf %123, %5 : vector<16x128xf32>
    %125 = arith.addf %124, %7 : vector<16x128xf32>
    %cst_74 = arith.constant 2.500000e-01 : f32
    %126 = vector.broadcast %cst_74 : f32 to vector<16x128xf32>
    %127 = arith.mulf %125, %126 : vector<16x128xf32>
    %128 = arith.subf %1, %127 : vector<16x128xf32>
    %129 = arith.mulf %128, %128 : vector<16x128xf32>
    %130 = arith.subf %3, %127 : vector<16x128xf32>
    %131 = arith.mulf %130, %130 : vector<16x128xf32>
    %132 = arith.addf %129, %131 : vector<16x128xf32>
    %133 = arith.subf %5, %127 : vector<16x128xf32>
    %134 = arith.mulf %133, %133 : vector<16x128xf32>
    %135 = arith.addf %132, %134 : vector<16x128xf32>
    %136 = arith.subf %7, %127 : vector<16x128xf32>
    %137 = arith.mulf %136, %136 : vector<16x128xf32>
    %138 = arith.addf %135, %137 : vector<16x128xf32>
    %cst_75 = arith.constant 2.500000e-01 : f32
    %139 = vector.broadcast %cst_75 : f32 to vector<16x128xf32>
    %140 = arith.mulf %138, %139 : vector<16x128xf32>
    %cst_76 = arith.constant 9.99999974E-6 : f32
    %141 = vector.broadcast %cst_76 : f32 to vector<16x128xf32>
    %142 = arith.addf %140, %141 : vector<16x128xf32>
    %143 = math.rsqrt %142 : vector<16x128xf32>
    %144 = arith.subf %1, %127 : vector<16x128xf32>
    %145 = arith.mulf %144, %143 : vector<16x128xf32>
    %c0_77 = arith.constant 0 : index
    %c0_78 = arith.constant 0 : index
    %146 = memref.load %arg5[%c0_77, %c0_78] : memref<1x4xf32, #tpu.memory_space<smem>>
    %147 = vector.broadcast %146 : f32 to vector<16x128xf32>
    %148 = arith.mulf %145, %147 : vector<16x128xf32>
    %c0_79 = arith.constant 0 : index
    %c0_80 = arith.constant 0 : index
    %149 = memref.load %arg6[%c0_79, %c0_80] : memref<1x4xf32, #tpu.memory_space<smem>>
    %150 = vector.broadcast %149 : f32 to vector<16x128xf32>
    %151 = arith.addf %148, %150 : vector<16x128xf32>
    %152 = arith.subf %3, %127 : vector<16x128xf32>
    %153 = arith.mulf %152, %143 : vector<16x128xf32>
    %c0_81 = arith.constant 0 : index
    %c1_82 = arith.constant 1 : index
    %154 = memref.load %arg5[%c0_81, %c1_82] : memref<1x4xf32, #tpu.memory_space<smem>>
    %155 = vector.broadcast %154 : f32 to vector<16x128xf32>
    %156 = arith.mulf %153, %155 : vector<16x128xf32>
    %c0_83 = arith.constant 0 : index
    %c1_84 = arith.constant 1 : index
    %157 = memref.load %arg6[%c0_83, %c1_84] : memref<1x4xf32, #tpu.memory_space<smem>>
    %158 = vector.broadcast %157 : f32 to vector<16x128xf32>
    %159 = arith.addf %156, %158 : vector<16x128xf32>
    %160 = arith.subf %5, %127 : vector<16x128xf32>
    %161 = arith.mulf %160, %143 : vector<16x128xf32>
    %c0_85 = arith.constant 0 : index
    %c2_86 = arith.constant 2 : index
    %162 = memref.load %arg5[%c0_85, %c2_86] : memref<1x4xf32, #tpu.memory_space<smem>>
    %163 = vector.broadcast %162 : f32 to vector<16x128xf32>
    %164 = arith.mulf %161, %163 : vector<16x128xf32>
    %c0_87 = arith.constant 0 : index
    %c2_88 = arith.constant 2 : index
    %165 = memref.load %arg6[%c0_87, %c2_88] : memref<1x4xf32, #tpu.memory_space<smem>>
    %166 = vector.broadcast %165 : f32 to vector<16x128xf32>
    %167 = arith.addf %164, %166 : vector<16x128xf32>
    %168 = arith.subf %7, %127 : vector<16x128xf32>
    %169 = arith.mulf %168, %143 : vector<16x128xf32>
    %c0_89 = arith.constant 0 : index
    %c3_90 = arith.constant 3 : index
    %170 = memref.load %arg5[%c0_89, %c3_90] : memref<1x4xf32, #tpu.memory_space<smem>>
    %171 = vector.broadcast %170 : f32 to vector<16x128xf32>
    %172 = arith.mulf %169, %171 : vector<16x128xf32>
    %c0_91 = arith.constant 0 : index
    %c3_92 = arith.constant 3 : index
    %173 = memref.load %arg6[%c0_91, %c3_92] : memref<1x4xf32, #tpu.memory_space<smem>>
    %174 = vector.broadcast %173 : f32 to vector<16x128xf32>
    %175 = arith.addf %172, %174 : vector<16x128xf32>
    %c0_93 = arith.constant 0 : index
    %c0_94 = arith.constant 0 : index
    %176 = memref.load %arg7[%c0_93, %c0_94] : memref<8x4xf32, #tpu.memory_space<smem>>
    %177 = vector.broadcast %176 : f32 to vector<16x128xf32>
    %178 = arith.mulf %177, %151 : vector<16x128xf32>
    %c0_95 = arith.constant 0 : index
    %c1_96 = arith.constant 1 : index
    %179 = memref.load %arg7[%c0_95, %c1_96] : memref<8x4xf32, #tpu.memory_space<smem>>
    %180 = vector.broadcast %179 : f32 to vector<16x128xf32>
    %181 = arith.mulf %180, %159 : vector<16x128xf32>
    %182 = arith.addf %178, %181 : vector<16x128xf32>
    %c0_97 = arith.constant 0 : index
    %c2_98 = arith.constant 2 : index
    %183 = memref.load %arg7[%c0_97, %c2_98] : memref<8x4xf32, #tpu.memory_space<smem>>
    %184 = vector.broadcast %183 : f32 to vector<16x128xf32>
    %185 = arith.mulf %184, %167 : vector<16x128xf32>
    %186 = arith.addf %182, %185 : vector<16x128xf32>
    %c0_99 = arith.constant 0 : index
    %c3_100 = arith.constant 3 : index
    %187 = memref.load %arg7[%c0_99, %c3_100] : memref<8x4xf32, #tpu.memory_space<smem>>
    %188 = vector.broadcast %187 : f32 to vector<16x128xf32>
    %189 = arith.mulf %188, %175 : vector<16x128xf32>
    %190 = arith.addf %186, %189 : vector<16x128xf32>
    %c1_101 = arith.constant 1 : index
    %c0_102 = arith.constant 0 : index
    %191 = memref.load %arg7[%c1_101, %c0_102] : memref<8x4xf32, #tpu.memory_space<smem>>
    %192 = vector.broadcast %191 : f32 to vector<16x128xf32>
    %193 = arith.mulf %192, %151 : vector<16x128xf32>
    %c1_103 = arith.constant 1 : index
    %c1_104 = arith.constant 1 : index
    %194 = memref.load %arg7[%c1_103, %c1_104] : memref<8x4xf32, #tpu.memory_space<smem>>
    %195 = vector.broadcast %194 : f32 to vector<16x128xf32>
    %196 = arith.mulf %195, %159 : vector<16x128xf32>
    %197 = arith.addf %193, %196 : vector<16x128xf32>
    %c1_105 = arith.constant 1 : index
    %c2_106 = arith.constant 2 : index
    %198 = memref.load %arg7[%c1_105, %c2_106] : memref<8x4xf32, #tpu.memory_space<smem>>
    %199 = vector.broadcast %198 : f32 to vector<16x128xf32>
    %200 = arith.mulf %199, %167 : vector<16x128xf32>
    %201 = arith.addf %197, %200 : vector<16x128xf32>
    %c1_107 = arith.constant 1 : index
    %c3_108 = arith.constant 3 : index
    %202 = memref.load %arg7[%c1_107, %c3_108] : memref<8x4xf32, #tpu.memory_space<smem>>
    %203 = vector.broadcast %202 : f32 to vector<16x128xf32>
    %204 = arith.mulf %203, %175 : vector<16x128xf32>
    %205 = arith.addf %201, %204 : vector<16x128xf32>
    %c2_109 = arith.constant 2 : index
    %c0_110 = arith.constant 0 : index
    %206 = memref.load %arg7[%c2_109, %c0_110] : memref<8x4xf32, #tpu.memory_space<smem>>
    %207 = vector.broadcast %206 : f32 to vector<16x128xf32>
    %208 = arith.mulf %207, %151 : vector<16x128xf32>
    %c2_111 = arith.constant 2 : index
    %c1_112 = arith.constant 1 : index
    %209 = memref.load %arg7[%c2_111, %c1_112] : memref<8x4xf32, #tpu.memory_space<smem>>
    %210 = vector.broadcast %209 : f32 to vector<16x128xf32>
    %211 = arith.mulf %210, %159 : vector<16x128xf32>
    %212 = arith.addf %208, %211 : vector<16x128xf32>
    %c2_113 = arith.constant 2 : index
    %c2_114 = arith.constant 2 : index
    %213 = memref.load %arg7[%c2_113, %c2_114] : memref<8x4xf32, #tpu.memory_space<smem>>
    %214 = vector.broadcast %213 : f32 to vector<16x128xf32>
    %215 = arith.mulf %214, %167 : vector<16x128xf32>
    %216 = arith.addf %212, %215 : vector<16x128xf32>
    %c2_115 = arith.constant 2 : index
    %c3_116 = arith.constant 3 : index
    %217 = memref.load %arg7[%c2_115, %c3_116] : memref<8x4xf32, #tpu.memory_space<smem>>
    %218 = vector.broadcast %217 : f32 to vector<16x128xf32>
    %219 = arith.mulf %218, %175 : vector<16x128xf32>
    %220 = arith.addf %216, %219 : vector<16x128xf32>
    %c3_117 = arith.constant 3 : index
    %c0_118 = arith.constant 0 : index
    %221 = memref.load %arg7[%c3_117, %c0_118] : memref<8x4xf32, #tpu.memory_space<smem>>
    %222 = vector.broadcast %221 : f32 to vector<16x128xf32>
    %223 = arith.mulf %222, %151 : vector<16x128xf32>
    %c3_119 = arith.constant 3 : index
    %c1_120 = arith.constant 1 : index
    %224 = memref.load %arg7[%c3_119, %c1_120] : memref<8x4xf32, #tpu.memory_space<smem>>
    %225 = vector.broadcast %224 : f32 to vector<16x128xf32>
    %226 = arith.mulf %225, %159 : vector<16x128xf32>
    %227 = arith.addf %223, %226 : vector<16x128xf32>
    %c3_121 = arith.constant 3 : index
    %c2_122 = arith.constant 2 : index
    %228 = memref.load %arg7[%c3_121, %c2_122] : memref<8x4xf32, #tpu.memory_space<smem>>
    %229 = vector.broadcast %228 : f32 to vector<16x128xf32>
    %230 = arith.mulf %229, %167 : vector<16x128xf32>
    %231 = arith.addf %227, %230 : vector<16x128xf32>
    %c3_123 = arith.constant 3 : index
    %c3_124 = arith.constant 3 : index
    %232 = memref.load %arg7[%c3_123, %c3_124] : memref<8x4xf32, #tpu.memory_space<smem>>
    %233 = vector.broadcast %232 : f32 to vector<16x128xf32>
    %234 = arith.mulf %233, %175 : vector<16x128xf32>
    %235 = arith.addf %231, %234 : vector<16x128xf32>
    %c4 = arith.constant 4 : index
    %c0_125 = arith.constant 0 : index
    %236 = memref.load %arg7[%c4, %c0_125] : memref<8x4xf32, #tpu.memory_space<smem>>
    %237 = vector.broadcast %236 : f32 to vector<16x128xf32>
    %238 = arith.mulf %237, %151 : vector<16x128xf32>
    %c4_126 = arith.constant 4 : index
    %c1_127 = arith.constant 1 : index
    %239 = memref.load %arg7[%c4_126, %c1_127] : memref<8x4xf32, #tpu.memory_space<smem>>
    %240 = vector.broadcast %239 : f32 to vector<16x128xf32>
    %241 = arith.mulf %240, %159 : vector<16x128xf32>
    %242 = arith.addf %238, %241 : vector<16x128xf32>
    %c4_128 = arith.constant 4 : index
    %c2_129 = arith.constant 2 : index
    %243 = memref.load %arg7[%c4_128, %c2_129] : memref<8x4xf32, #tpu.memory_space<smem>>
    %244 = vector.broadcast %243 : f32 to vector<16x128xf32>
    %245 = arith.mulf %244, %167 : vector<16x128xf32>
    %246 = arith.addf %242, %245 : vector<16x128xf32>
    %c4_130 = arith.constant 4 : index
    %c3_131 = arith.constant 3 : index
    %247 = memref.load %arg7[%c4_130, %c3_131] : memref<8x4xf32, #tpu.memory_space<smem>>
    %248 = vector.broadcast %247 : f32 to vector<16x128xf32>
    %249 = arith.mulf %248, %175 : vector<16x128xf32>
    %250 = arith.addf %246, %249 : vector<16x128xf32>
    %c5 = arith.constant 5 : index
    %c0_132 = arith.constant 0 : index
    %251 = memref.load %arg7[%c5, %c0_132] : memref<8x4xf32, #tpu.memory_space<smem>>
    %252 = vector.broadcast %251 : f32 to vector<16x128xf32>
    %253 = arith.mulf %252, %151 : vector<16x128xf32>
    %c5_133 = arith.constant 5 : index
    %c1_134 = arith.constant 1 : index
    %254 = memref.load %arg7[%c5_133, %c1_134] : memref<8x4xf32, #tpu.memory_space<smem>>
    %255 = vector.broadcast %254 : f32 to vector<16x128xf32>
    %256 = arith.mulf %255, %159 : vector<16x128xf32>
    %257 = arith.addf %253, %256 : vector<16x128xf32>
    %c5_135 = arith.constant 5 : index
    %c2_136 = arith.constant 2 : index
    %258 = memref.load %arg7[%c5_135, %c2_136] : memref<8x4xf32, #tpu.memory_space<smem>>
    %259 = vector.broadcast %258 : f32 to vector<16x128xf32>
    %260 = arith.mulf %259, %167 : vector<16x128xf32>
    %261 = arith.addf %257, %260 : vector<16x128xf32>
    %c5_137 = arith.constant 5 : index
    %c3_138 = arith.constant 3 : index
    %262 = memref.load %arg7[%c5_137, %c3_138] : memref<8x4xf32, #tpu.memory_space<smem>>
    %263 = vector.broadcast %262 : f32 to vector<16x128xf32>
    %264 = arith.mulf %263, %175 : vector<16x128xf32>
    %265 = arith.addf %261, %264 : vector<16x128xf32>
    %c6 = arith.constant 6 : index
    %c0_139 = arith.constant 0 : index
    %266 = memref.load %arg7[%c6, %c0_139] : memref<8x4xf32, #tpu.memory_space<smem>>
    %267 = vector.broadcast %266 : f32 to vector<16x128xf32>
    %268 = arith.mulf %267, %151 : vector<16x128xf32>
    %c6_140 = arith.constant 6 : index
    %c1_141 = arith.constant 1 : index
    %269 = memref.load %arg7[%c6_140, %c1_141] : memref<8x4xf32, #tpu.memory_space<smem>>
    %270 = vector.broadcast %269 : f32 to vector<16x128xf32>
    %271 = arith.mulf %270, %159 : vector<16x128xf32>
    %272 = arith.addf %268, %271 : vector<16x128xf32>
    %c6_142 = arith.constant 6 : index
    %c2_143 = arith.constant 2 : index
    %273 = memref.load %arg7[%c6_142, %c2_143] : memref<8x4xf32, #tpu.memory_space<smem>>
    %274 = vector.broadcast %273 : f32 to vector<16x128xf32>
    %275 = arith.mulf %274, %167 : vector<16x128xf32>
    %276 = arith.addf %272, %275 : vector<16x128xf32>
    %c6_144 = arith.constant 6 : index
    %c3_145 = arith.constant 3 : index
    %277 = memref.load %arg7[%c6_144, %c3_145] : memref<8x4xf32, #tpu.memory_space<smem>>
    %278 = vector.broadcast %277 : f32 to vector<16x128xf32>
    %279 = arith.mulf %278, %175 : vector<16x128xf32>
    %280 = arith.addf %276, %279 : vector<16x128xf32>
    %c7 = arith.constant 7 : index
    %c0_146 = arith.constant 0 : index
    %281 = memref.load %arg7[%c7, %c0_146] : memref<8x4xf32, #tpu.memory_space<smem>>
    %282 = vector.broadcast %281 : f32 to vector<16x128xf32>
    %283 = arith.mulf %282, %151 : vector<16x128xf32>
    %c7_147 = arith.constant 7 : index
    %c1_148 = arith.constant 1 : index
    %284 = memref.load %arg7[%c7_147, %c1_148] : memref<8x4xf32, #tpu.memory_space<smem>>
    %285 = vector.broadcast %284 : f32 to vector<16x128xf32>
    %286 = arith.mulf %285, %159 : vector<16x128xf32>
    %287 = arith.addf %283, %286 : vector<16x128xf32>
    %c7_149 = arith.constant 7 : index
    %c2_150 = arith.constant 2 : index
    %288 = memref.load %arg7[%c7_149, %c2_150] : memref<8x4xf32, #tpu.memory_space<smem>>
    %289 = vector.broadcast %288 : f32 to vector<16x128xf32>
    %290 = arith.mulf %289, %167 : vector<16x128xf32>
    %291 = arith.addf %287, %290 : vector<16x128xf32>
    %c7_151 = arith.constant 7 : index
    %c3_152 = arith.constant 3 : index
    %292 = memref.load %arg7[%c7_151, %c3_152] : memref<8x4xf32, #tpu.memory_space<smem>>
    %293 = vector.broadcast %292 : f32 to vector<16x128xf32>
    %294 = arith.mulf %293, %175 : vector<16x128xf32>
    %295 = arith.addf %291, %294 : vector<16x128xf32>
    %cst_153 = arith.constant 0.000000e+00 : f32
    %296 = vector.broadcast %cst_153 : f32 to vector<1x128xf32>
    %297 = vector.extract_strided_slice %190 {offsets = [0, 0], sizes = [15, 128], strides = [1, 1]} : vector<16x128xf32> to vector<15x128xf32>
    %298 = tpu.concatenate %296, %297 in 0 : vector<1x128xf32>, vector<15x128xf32> -> vector<16x128xf32>
    %cst_154 = arith.constant 0.000000e+00 : f32
    %299 = vector.broadcast %cst_154 : f32 to vector<16x1xf32>
    %300 = vector.extract_strided_slice %298 {offsets = [0, 0], sizes = [16, 127], strides = [1, 1]} : vector<16x128xf32> to vector<16x127xf32>
    %301 = tpu.concatenate %299, %300 in 1 : vector<16x1xf32>, vector<16x127xf32> -> vector<16x128xf32>
    %cst_155 = arith.constant 0.000000e+00 : f32
    %302 = vector.broadcast %cst_155 : f32 to vector<16x1xf32>
    %303 = vector.extract_strided_slice %298 {offsets = [0, 1], sizes = [16, 127], strides = [1, 1]} : vector<16x128xf32> to vector<16x127xf32>
    %304 = tpu.concatenate %303, %302 in 1 : vector<16x127xf32>, vector<16x1xf32> -> vector<16x128xf32>
    %cst_156 = arith.constant 0.000000e+00 : f32
    %305 = vector.broadcast %cst_156 : f32 to vector<16x1xf32>
    %306 = vector.extract_strided_slice %190 {offsets = [0, 0], sizes = [16, 127], strides = [1, 1]} : vector<16x128xf32> to vector<16x127xf32>
    %307 = tpu.concatenate %305, %306 in 1 : vector<16x1xf32>, vector<16x127xf32> -> vector<16x128xf32>
    %cst_157 = arith.constant 0.000000e+00 : f32
    %308 = vector.broadcast %cst_157 : f32 to vector<16x1xf32>
    %309 = vector.extract_strided_slice %190 {offsets = [0, 1], sizes = [16, 127], strides = [1, 1]} : vector<16x128xf32> to vector<16x127xf32>
    %310 = tpu.concatenate %309, %308 in 1 : vector<16x127xf32>, vector<16x1xf32> -> vector<16x128xf32>
    %cst_158 = arith.constant 0.000000e+00 : f32
    %311 = vector.broadcast %cst_158 : f32 to vector<1x128xf32>
    %312 = vector.extract_strided_slice %190 {offsets = [1, 0], sizes = [15, 128], strides = [1, 1]} : vector<16x128xf32> to vector<15x128xf32>
    %313 = tpu.concatenate %312, %311 in 0 : vector<15x128xf32>, vector<1x128xf32> -> vector<16x128xf32>
    %cst_159 = arith.constant 0.000000e+00 : f32
    %314 = vector.broadcast %cst_159 : f32 to vector<16x1xf32>
    %315 = vector.extract_strided_slice %313 {offsets = [0, 0], sizes = [16, 127], strides = [1, 1]} : vector<16x128xf32> to vector<16x127xf32>
    %316 = tpu.concatenate %314, %315 in 1 : vector<16x1xf32>, vector<16x127xf32> -> vector<16x128xf32>
    %cst_160 = arith.constant 0.000000e+00 : f32
    %317 = vector.broadcast %cst_160 : f32 to vector<16x1xf32>
    %318 = vector.extract_strided_slice %313 {offsets = [0, 1], sizes = [16, 127], strides = [1, 1]} : vector<16x128xf32> to vector<16x127xf32>
    %319 = tpu.concatenate %318, %317 in 1 : vector<16x127xf32>, vector<16x1xf32> -> vector<16x128xf32>
    %c0_161 = arith.constant 0 : index
    %c0_162 = arith.constant 0 : index
    %320 = memref.load %arg8[%c0_161, %c0_162] : memref<8x9xf32, #tpu.memory_space<smem>>
    %321 = vector.broadcast %320 : f32 to vector<16x128xf32>
    %322 = arith.mulf %321, %301 : vector<16x128xf32>
    %c0_163 = arith.constant 0 : index
    %c1_164 = arith.constant 1 : index
    %323 = memref.load %arg8[%c0_163, %c1_164] : memref<8x9xf32, #tpu.memory_space<smem>>
    %324 = vector.broadcast %323 : f32 to vector<16x128xf32>
    %325 = arith.mulf %324, %298 : vector<16x128xf32>
    %326 = arith.addf %322, %325 : vector<16x128xf32>
    %c0_165 = arith.constant 0 : index
    %c2_166 = arith.constant 2 : index
    %327 = memref.load %arg8[%c0_165, %c2_166] : memref<8x9xf32, #tpu.memory_space<smem>>
    %328 = vector.broadcast %327 : f32 to vector<16x128xf32>
    %329 = arith.mulf %328, %304 : vector<16x128xf32>
    %330 = arith.addf %326, %329 : vector<16x128xf32>
    %c0_167 = arith.constant 0 : index
    %c3_168 = arith.constant 3 : index
    %331 = memref.load %arg8[%c0_167, %c3_168] : memref<8x9xf32, #tpu.memory_space<smem>>
    %332 = vector.broadcast %331 : f32 to vector<16x128xf32>
    %333 = arith.mulf %332, %307 : vector<16x128xf32>
    %334 = arith.addf %330, %333 : vector<16x128xf32>
    %c0_169 = arith.constant 0 : index
    %c4_170 = arith.constant 4 : index
    %335 = memref.load %arg8[%c0_169, %c4_170] : memref<8x9xf32, #tpu.memory_space<smem>>
    %336 = vector.broadcast %335 : f32 to vector<16x128xf32>
    %337 = arith.mulf %336, %190 : vector<16x128xf32>
    %338 = arith.addf %334, %337 : vector<16x128xf32>
    %c0_171 = arith.constant 0 : index
    %c5_172 = arith.constant 5 : index
    %339 = memref.load %arg8[%c0_171, %c5_172] : memref<8x9xf32, #tpu.memory_space<smem>>
    %340 = vector.broadcast %339 : f32 to vector<16x128xf32>
    %341 = arith.mulf %340, %310 : vector<16x128xf32>
    %342 = arith.addf %338, %341 : vector<16x128xf32>
    %c0_173 = arith.constant 0 : index
    %c6_174 = arith.constant 6 : index
    %343 = memref.load %arg8[%c0_173, %c6_174] : memref<8x9xf32, #tpu.memory_space<smem>>
    %344 = vector.broadcast %343 : f32 to vector<16x128xf32>
    %345 = arith.mulf %344, %316 : vector<16x128xf32>
    %346 = arith.addf %342, %345 : vector<16x128xf32>
    %c0_175 = arith.constant 0 : index
    %c7_176 = arith.constant 7 : index
    %347 = memref.load %arg8[%c0_175, %c7_176] : memref<8x9xf32, #tpu.memory_space<smem>>
    %348 = vector.broadcast %347 : f32 to vector<16x128xf32>
    %349 = arith.mulf %348, %313 : vector<16x128xf32>
    %350 = arith.addf %346, %349 : vector<16x128xf32>
    %c0_177 = arith.constant 0 : index
    %c8 = arith.constant 8 : index
    %351 = memref.load %arg8[%c0_177, %c8] : memref<8x9xf32, #tpu.memory_space<smem>>
    %352 = vector.broadcast %351 : f32 to vector<16x128xf32>
    %353 = arith.mulf %352, %319 : vector<16x128xf32>
    %354 = arith.addf %350, %353 : vector<16x128xf32>
    %cst_178 = arith.constant 0.000000e+00 : f32
    %355 = vector.broadcast %cst_178 : f32 to vector<1x128xf32>
    %356 = vector.extract_strided_slice %205 {offsets = [0, 0], sizes = [15, 128], strides = [1, 1]} : vector<16x128xf32> to vector<15x128xf32>
    %357 = tpu.concatenate %355, %356 in 0 : vector<1x128xf32>, vector<15x128xf32> -> vector<16x128xf32>
    %cst_179 = arith.constant 0.000000e+00 : f32
    %358 = vector.broadcast %cst_179 : f32 to vector<16x1xf32>
    %359 = vector.extract_strided_slice %357 {offsets = [0, 0], sizes = [16, 127], strides = [1, 1]} : vector<16x128xf32> to vector<16x127xf32>
    %360 = tpu.concatenate %358, %359 in 1 : vector<16x1xf32>, vector<16x127xf32> -> vector<16x128xf32>
    %cst_180 = arith.constant 0.000000e+00 : f32
    %361 = vector.broadcast %cst_180 : f32 to vector<16x1xf32>
    %362 = vector.extract_strided_slice %357 {offsets = [0, 1], sizes = [16, 127], strides = [1, 1]} : vector<16x128xf32> to vector<16x127xf32>
    %363 = tpu.concatenate %362, %361 in 1 : vector<16x127xf32>, vector<16x1xf32> -> vector<16x128xf32>
    %cst_181 = arith.constant 0.000000e+00 : f32
    %364 = vector.broadcast %cst_181 : f32 to vector<16x1xf32>
    %365 = vector.extract_strided_slice %205 {offsets = [0, 0], sizes = [16, 127], strides = [1, 1]} : vector<16x128xf32> to vector<16x127xf32>
    %366 = tpu.concatenate %364, %365 in 1 : vector<16x1xf32>, vector<16x127xf32> -> vector<16x128xf32>
    %cst_182 = arith.constant 0.000000e+00 : f32
    %367 = vector.broadcast %cst_182 : f32 to vector<16x1xf32>
    %368 = vector.extract_strided_slice %205 {offsets = [0, 1], sizes = [16, 127], strides = [1, 1]} : vector<16x128xf32> to vector<16x127xf32>
    %369 = tpu.concatenate %368, %367 in 1 : vector<16x127xf32>, vector<16x1xf32> -> vector<16x128xf32>
    %cst_183 = arith.constant 0.000000e+00 : f32
    %370 = vector.broadcast %cst_183 : f32 to vector<1x128xf32>
    %371 = vector.extract_strided_slice %205 {offsets = [1, 0], sizes = [15, 128], strides = [1, 1]} : vector<16x128xf32> to vector<15x128xf32>
    %372 = tpu.concatenate %371, %370 in 0 : vector<15x128xf32>, vector<1x128xf32> -> vector<16x128xf32>
    %cst_184 = arith.constant 0.000000e+00 : f32
    %373 = vector.broadcast %cst_184 : f32 to vector<16x1xf32>
    %374 = vector.extract_strided_slice %372 {offsets = [0, 0], sizes = [16, 127], strides = [1, 1]} : vector<16x128xf32> to vector<16x127xf32>
    %375 = tpu.concatenate %373, %374 in 1 : vector<16x1xf32>, vector<16x127xf32> -> vector<16x128xf32>
    %cst_185 = arith.constant 0.000000e+00 : f32
    %376 = vector.broadcast %cst_185 : f32 to vector<16x1xf32>
    %377 = vector.extract_strided_slice %372 {offsets = [0, 1], sizes = [16, 127], strides = [1, 1]} : vector<16x128xf32> to vector<16x127xf32>
    %378 = tpu.concatenate %377, %376 in 1 : vector<16x127xf32>, vector<16x1xf32> -> vector<16x128xf32>
    %c1_186 = arith.constant 1 : index
    %c0_187 = arith.constant 0 : index
    %379 = memref.load %arg8[%c1_186, %c0_187] : memref<8x9xf32, #tpu.memory_space<smem>>
    %380 = vector.broadcast %379 : f32 to vector<16x128xf32>
    %381 = arith.mulf %380, %360 : vector<16x128xf32>
    %c1_188 = arith.constant 1 : index
    %c1_189 = arith.constant 1 : index
    %382 = memref.load %arg8[%c1_188, %c1_189] : memref<8x9xf32, #tpu.memory_space<smem>>
    %383 = vector.broadcast %382 : f32 to vector<16x128xf32>
    %384 = arith.mulf %383, %357 : vector<16x128xf32>
    %385 = arith.addf %381, %384 : vector<16x128xf32>
    %c1_190 = arith.constant 1 : index
    %c2_191 = arith.constant 2 : index
    %386 = memref.load %arg8[%c1_190, %c2_191] : memref<8x9xf32, #tpu.memory_space<smem>>
    %387 = vector.broadcast %386 : f32 to vector<16x128xf32>
    %388 = arith.mulf %387, %363 : vector<16x128xf32>
    %389 = arith.addf %385, %388 : vector<16x128xf32>
    %c1_192 = arith.constant 1 : index
    %c3_193 = arith.constant 3 : index
    %390 = memref.load %arg8[%c1_192, %c3_193] : memref<8x9xf32, #tpu.memory_space<smem>>
    %391 = vector.broadcast %390 : f32 to vector<16x128xf32>
    %392 = arith.mulf %391, %366 : vector<16x128xf32>
    %393 = arith.addf %389, %392 : vector<16x128xf32>
    %c1_194 = arith.constant 1 : index
    %c4_195 = arith.constant 4 : index
    %394 = memref.load %arg8[%c1_194, %c4_195] : memref<8x9xf32, #tpu.memory_space<smem>>
    %395 = vector.broadcast %394 : f32 to vector<16x128xf32>
    %396 = arith.mulf %395, %205 : vector<16x128xf32>
    %397 = arith.addf %393, %396 : vector<16x128xf32>
    %c1_196 = arith.constant 1 : index
    %c5_197 = arith.constant 5 : index
    %398 = memref.load %arg8[%c1_196, %c5_197] : memref<8x9xf32, #tpu.memory_space<smem>>
    %399 = vector.broadcast %398 : f32 to vector<16x128xf32>
    %400 = arith.mulf %399, %369 : vector<16x128xf32>
    %401 = arith.addf %397, %400 : vector<16x128xf32>
    %c1_198 = arith.constant 1 : index
    %c6_199 = arith.constant 6 : index
    %402 = memref.load %arg8[%c1_198, %c6_199] : memref<8x9xf32, #tpu.memory_space<smem>>
    %403 = vector.broadcast %402 : f32 to vector<16x128xf32>
    %404 = arith.mulf %403, %375 : vector<16x128xf32>
    %405 = arith.addf %401, %404 : vector<16x128xf32>
    %c1_200 = arith.constant 1 : index
    %c7_201 = arith.constant 7 : index
    %406 = memref.load %arg8[%c1_200, %c7_201] : memref<8x9xf32, #tpu.memory_space<smem>>
    %407 = vector.broadcast %406 : f32 to vector<16x128xf32>
    %408 = arith.mulf %407, %372 : vector<16x128xf32>
    %409 = arith.addf %405, %408 : vector<16x128xf32>
    %c1_202 = arith.constant 1 : index
    %c8_203 = arith.constant 8 : index
    %410 = memref.load %arg8[%c1_202, %c8_203] : memref<8x9xf32, #tpu.memory_space<smem>>
    %411 = vector.broadcast %410 : f32 to vector<16x128xf32>
    %412 = arith.mulf %411, %378 : vector<16x128xf32>
    %413 = arith.addf %409, %412 : vector<16x128xf32>
    %cst_204 = arith.constant 0.000000e+00 : f32
    %414 = vector.broadcast %cst_204 : f32 to vector<1x128xf32>
    %415 = vector.extract_strided_slice %220 {offsets = [0, 0], sizes = [15, 128], strides = [1, 1]} : vector<16x128xf32> to vector<15x128xf32>
    %416 = tpu.concatenate %414, %415 in 0 : vector<1x128xf32>, vector<15x128xf32> -> vector<16x128xf32>
    %cst_205 = arith.constant 0.000000e+00 : f32
    %417 = vector.broadcast %cst_205 : f32 to vector<16x1xf32>
    %418 = vector.extract_strided_slice %416 {offsets = [0, 0], sizes = [16, 127], strides = [1, 1]} : vector<16x128xf32> to vector<16x127xf32>
    %419 = tpu.concatenate %417, %418 in 1 : vector<16x1xf32>, vector<16x127xf32> -> vector<16x128xf32>
    %cst_206 = arith.constant 0.000000e+00 : f32
    %420 = vector.broadcast %cst_206 : f32 to vector<16x1xf32>
    %421 = vector.extract_strided_slice %416 {offsets = [0, 1], sizes = [16, 127], strides = [1, 1]} : vector<16x128xf32> to vector<16x127xf32>
    %422 = tpu.concatenate %421, %420 in 1 : vector<16x127xf32>, vector<16x1xf32> -> vector<16x128xf32>
    %cst_207 = arith.constant 0.000000e+00 : f32
    %423 = vector.broadcast %cst_207 : f32 to vector<16x1xf32>
    %424 = vector.extract_strided_slice %220 {offsets = [0, 0], sizes = [16, 127], strides = [1, 1]} : vector<16x128xf32> to vector<16x127xf32>
    %425 = tpu.concatenate %423, %424 in 1 : vector<16x1xf32>, vector<16x127xf32> -> vector<16x128xf32>
    %cst_208 = arith.constant 0.000000e+00 : f32
    %426 = vector.broadcast %cst_208 : f32 to vector<16x1xf32>
    %427 = vector.extract_strided_slice %220 {offsets = [0, 1], sizes = [16, 127], strides = [1, 1]} : vector<16x128xf32> to vector<16x127xf32>
    %428 = tpu.concatenate %427, %426 in 1 : vector<16x127xf32>, vector<16x1xf32> -> vector<16x128xf32>
    %cst_209 = arith.constant 0.000000e+00 : f32
    %429 = vector.broadcast %cst_209 : f32 to vector<1x128xf32>
    %430 = vector.extract_strided_slice %220 {offsets = [1, 0], sizes = [15, 128], strides = [1, 1]} : vector<16x128xf32> to vector<15x128xf32>
    %431 = tpu.concatenate %430, %429 in 0 : vector<15x128xf32>, vector<1x128xf32> -> vector<16x128xf32>
    %cst_210 = arith.constant 0.000000e+00 : f32
    %432 = vector.broadcast %cst_210 : f32 to vector<16x1xf32>
    %433 = vector.extract_strided_slice %431 {offsets = [0, 0], sizes = [16, 127], strides = [1, 1]} : vector<16x128xf32> to vector<16x127xf32>
    %434 = tpu.concatenate %432, %433 in 1 : vector<16x1xf32>, vector<16x127xf32> -> vector<16x128xf32>
    %cst_211 = arith.constant 0.000000e+00 : f32
    %435 = vector.broadcast %cst_211 : f32 to vector<16x1xf32>
    %436 = vector.extract_strided_slice %431 {offsets = [0, 1], sizes = [16, 127], strides = [1, 1]} : vector<16x128xf32> to vector<16x127xf32>
    %437 = tpu.concatenate %436, %435 in 1 : vector<16x127xf32>, vector<16x1xf32> -> vector<16x128xf32>
    %c2_212 = arith.constant 2 : index
    %c0_213 = arith.constant 0 : index
    %438 = memref.load %arg8[%c2_212, %c0_213] : memref<8x9xf32, #tpu.memory_space<smem>>
    %439 = vector.broadcast %438 : f32 to vector<16x128xf32>
    %440 = arith.mulf %439, %419 : vector<16x128xf32>
    %c2_214 = arith.constant 2 : index
    %c1_215 = arith.constant 1 : index
    %441 = memref.load %arg8[%c2_214, %c1_215] : memref<8x9xf32, #tpu.memory_space<smem>>
    %442 = vector.broadcast %441 : f32 to vector<16x128xf32>
    %443 = arith.mulf %442, %416 : vector<16x128xf32>
    %444 = arith.addf %440, %443 : vector<16x128xf32>
    %c2_216 = arith.constant 2 : index
    %c2_217 = arith.constant 2 : index
    %445 = memref.load %arg8[%c2_216, %c2_217] : memref<8x9xf32, #tpu.memory_space<smem>>
    %446 = vector.broadcast %445 : f32 to vector<16x128xf32>
    %447 = arith.mulf %446, %422 : vector<16x128xf32>
    %448 = arith.addf %444, %447 : vector<16x128xf32>
    %c2_218 = arith.constant 2 : index
    %c3_219 = arith.constant 3 : index
    %449 = memref.load %arg8[%c2_218, %c3_219] : memref<8x9xf32, #tpu.memory_space<smem>>
    %450 = vector.broadcast %449 : f32 to vector<16x128xf32>
    %451 = arith.mulf %450, %425 : vector<16x128xf32>
    %452 = arith.addf %448, %451 : vector<16x128xf32>
    %c2_220 = arith.constant 2 : index
    %c4_221 = arith.constant 4 : index
    %453 = memref.load %arg8[%c2_220, %c4_221] : memref<8x9xf32, #tpu.memory_space<smem>>
    %454 = vector.broadcast %453 : f32 to vector<16x128xf32>
    %455 = arith.mulf %454, %220 : vector<16x128xf32>
    %456 = arith.addf %452, %455 : vector<16x128xf32>
    %c2_222 = arith.constant 2 : index
    %c5_223 = arith.constant 5 : index
    %457 = memref.load %arg8[%c2_222, %c5_223] : memref<8x9xf32, #tpu.memory_space<smem>>
    %458 = vector.broadcast %457 : f32 to vector<16x128xf32>
    %459 = arith.mulf %458, %428 : vector<16x128xf32>
    %460 = arith.addf %456, %459 : vector<16x128xf32>
    %c2_224 = arith.constant 2 : index
    %c6_225 = arith.constant 6 : index
    %461 = memref.load %arg8[%c2_224, %c6_225] : memref<8x9xf32, #tpu.memory_space<smem>>
    %462 = vector.broadcast %461 : f32 to vector<16x128xf32>
    %463 = arith.mulf %462, %434 : vector<16x128xf32>
    %464 = arith.addf %460, %463 : vector<16x128xf32>
    %c2_226 = arith.constant 2 : index
    %c7_227 = arith.constant 7 : index
    %465 = memref.load %arg8[%c2_226, %c7_227] : memref<8x9xf32, #tpu.memory_space<smem>>
    %466 = vector.broadcast %465 : f32 to vector<16x128xf32>
    %467 = arith.mulf %466, %431 : vector<16x128xf32>
    %468 = arith.addf %464, %467 : vector<16x128xf32>
    %c2_228 = arith.constant 2 : index
    %c8_229 = arith.constant 8 : index
    %469 = memref.load %arg8[%c2_228, %c8_229] : memref<8x9xf32, #tpu.memory_space<smem>>
    %470 = vector.broadcast %469 : f32 to vector<16x128xf32>
    %471 = arith.mulf %470, %437 : vector<16x128xf32>
    %472 = arith.addf %468, %471 : vector<16x128xf32>
    %cst_230 = arith.constant 0.000000e+00 : f32
    %473 = vector.broadcast %cst_230 : f32 to vector<1x128xf32>
    %474 = vector.extract_strided_slice %235 {offsets = [0, 0], sizes = [15, 128], strides = [1, 1]} : vector<16x128xf32> to vector<15x128xf32>
    %475 = tpu.concatenate %473, %474 in 0 : vector<1x128xf32>, vector<15x128xf32> -> vector<16x128xf32>
    %cst_231 = arith.constant 0.000000e+00 : f32
    %476 = vector.broadcast %cst_231 : f32 to vector<16x1xf32>
    %477 = vector.extract_strided_slice %475 {offsets = [0, 0], sizes = [16, 127], strides = [1, 1]} : vector<16x128xf32> to vector<16x127xf32>
    %478 = tpu.concatenate %476, %477 in 1 : vector<16x1xf32>, vector<16x127xf32> -> vector<16x128xf32>
    %cst_232 = arith.constant 0.000000e+00 : f32
    %479 = vector.broadcast %cst_232 : f32 to vector<16x1xf32>
    %480 = vector.extract_strided_slice %475 {offsets = [0, 1], sizes = [16, 127], strides = [1, 1]} : vector<16x128xf32> to vector<16x127xf32>
    %481 = tpu.concatenate %480, %479 in 1 : vector<16x127xf32>, vector<16x1xf32> -> vector<16x128xf32>
    %cst_233 = arith.constant 0.000000e+00 : f32
    %482 = vector.broadcast %cst_233 : f32 to vector<16x1xf32>
    %483 = vector.extract_strided_slice %235 {offsets = [0, 0], sizes = [16, 127], strides = [1, 1]} : vector<16x128xf32> to vector<16x127xf32>
    %484 = tpu.concatenate %482, %483 in 1 : vector<16x1xf32>, vector<16x127xf32> -> vector<16x128xf32>
    %cst_234 = arith.constant 0.000000e+00 : f32
    %485 = vector.broadcast %cst_234 : f32 to vector<16x1xf32>
    %486 = vector.extract_strided_slice %235 {offsets = [0, 1], sizes = [16, 127], strides = [1, 1]} : vector<16x128xf32> to vector<16x127xf32>
    %487 = tpu.concatenate %486, %485 in 1 : vector<16x127xf32>, vector<16x1xf32> -> vector<16x128xf32>
    %cst_235 = arith.constant 0.000000e+00 : f32
    %488 = vector.broadcast %cst_235 : f32 to vector<1x128xf32>
    %489 = vector.extract_strided_slice %235 {offsets = [1, 0], sizes = [15, 128], strides = [1, 1]} : vector<16x128xf32> to vector<15x128xf32>
    %490 = tpu.concatenate %489, %488 in 0 : vector<15x128xf32>, vector<1x128xf32> -> vector<16x128xf32>
    %cst_236 = arith.constant 0.000000e+00 : f32
    %491 = vector.broadcast %cst_236 : f32 to vector<16x1xf32>
    %492 = vector.extract_strided_slice %490 {offsets = [0, 0], sizes = [16, 127], strides = [1, 1]} : vector<16x128xf32> to vector<16x127xf32>
    %493 = tpu.concatenate %491, %492 in 1 : vector<16x1xf32>, vector<16x127xf32> -> vector<16x128xf32>
    %cst_237 = arith.constant 0.000000e+00 : f32
    %494 = vector.broadcast %cst_237 : f32 to vector<16x1xf32>
    %495 = vector.extract_strided_slice %490 {offsets = [0, 1], sizes = [16, 127], strides = [1, 1]} : vector<16x128xf32> to vector<16x127xf32>
    %496 = tpu.concatenate %495, %494 in 1 : vector<16x127xf32>, vector<16x1xf32> -> vector<16x128xf32>
    %c3_238 = arith.constant 3 : index
    %c0_239 = arith.constant 0 : index
    %497 = memref.load %arg8[%c3_238, %c0_239] : memref<8x9xf32, #tpu.memory_space<smem>>
    %498 = vector.broadcast %497 : f32 to vector<16x128xf32>
    %499 = arith.mulf %498, %478 : vector<16x128xf32>
    %c3_240 = arith.constant 3 : index
    %c1_241 = arith.constant 1 : index
    %500 = memref.load %arg8[%c3_240, %c1_241] : memref<8x9xf32, #tpu.memory_space<smem>>
    %501 = vector.broadcast %500 : f32 to vector<16x128xf32>
    %502 = arith.mulf %501, %475 : vector<16x128xf32>
    %503 = arith.addf %499, %502 : vector<16x128xf32>
    %c3_242 = arith.constant 3 : index
    %c2_243 = arith.constant 2 : index
    %504 = memref.load %arg8[%c3_242, %c2_243] : memref<8x9xf32, #tpu.memory_space<smem>>
    %505 = vector.broadcast %504 : f32 to vector<16x128xf32>
    %506 = arith.mulf %505, %481 : vector<16x128xf32>
    %507 = arith.addf %503, %506 : vector<16x128xf32>
    %c3_244 = arith.constant 3 : index
    %c3_245 = arith.constant 3 : index
    %508 = memref.load %arg8[%c3_244, %c3_245] : memref<8x9xf32, #tpu.memory_space<smem>>
    %509 = vector.broadcast %508 : f32 to vector<16x128xf32>
    %510 = arith.mulf %509, %484 : vector<16x128xf32>
    %511 = arith.addf %507, %510 : vector<16x128xf32>
    %c3_246 = arith.constant 3 : index
    %c4_247 = arith.constant 4 : index
    %512 = memref.load %arg8[%c3_246, %c4_247] : memref<8x9xf32, #tpu.memory_space<smem>>
    %513 = vector.broadcast %512 : f32 to vector<16x128xf32>
    %514 = arith.mulf %513, %235 : vector<16x128xf32>
    %515 = arith.addf %511, %514 : vector<16x128xf32>
    %c3_248 = arith.constant 3 : index
    %c5_249 = arith.constant 5 : index
    %516 = memref.load %arg8[%c3_248, %c5_249] : memref<8x9xf32, #tpu.memory_space<smem>>
    %517 = vector.broadcast %516 : f32 to vector<16x128xf32>
    %518 = arith.mulf %517, %487 : vector<16x128xf32>
    %519 = arith.addf %515, %518 : vector<16x128xf32>
    %c3_250 = arith.constant 3 : index
    %c6_251 = arith.constant 6 : index
    %520 = memref.load %arg8[%c3_250, %c6_251] : memref<8x9xf32, #tpu.memory_space<smem>>
    %521 = vector.broadcast %520 : f32 to vector<16x128xf32>
    %522 = arith.mulf %521, %493 : vector<16x128xf32>
    %523 = arith.addf %519, %522 : vector<16x128xf32>
    %c3_252 = arith.constant 3 : index
    %c7_253 = arith.constant 7 : index
    %524 = memref.load %arg8[%c3_252, %c7_253] : memref<8x9xf32, #tpu.memory_space<smem>>
    %525 = vector.broadcast %524 : f32 to vector<16x128xf32>
    %526 = arith.mulf %525, %490 : vector<16x128xf32>
    %527 = arith.addf %523, %526 : vector<16x128xf32>
    %c3_254 = arith.constant 3 : index
    %c8_255 = arith.constant 8 : index
    %528 = memref.load %arg8[%c3_254, %c8_255] : memref<8x9xf32, #tpu.memory_space<smem>>
    %529 = vector.broadcast %528 : f32 to vector<16x128xf32>
    %530 = arith.mulf %529, %496 : vector<16x128xf32>
    %531 = arith.addf %527, %530 : vector<16x128xf32>
    %cst_256 = arith.constant 0.000000e+00 : f32
    %532 = vector.broadcast %cst_256 : f32 to vector<1x128xf32>
    %533 = vector.extract_strided_slice %250 {offsets = [0, 0], sizes = [15, 128], strides = [1, 1]} : vector<16x128xf32> to vector<15x128xf32>
    %534 = tpu.concatenate %532, %533 in 0 : vector<1x128xf32>, vector<15x128xf32> -> vector<16x128xf32>
    %cst_257 = arith.constant 0.000000e+00 : f32
    %535 = vector.broadcast %cst_257 : f32 to vector<16x1xf32>
    %536 = vector.extract_strided_slice %534 {offsets = [0, 0], sizes = [16, 127], strides = [1, 1]} : vector<16x128xf32> to vector<16x127xf32>
    %537 = tpu.concatenate %535, %536 in 1 : vector<16x1xf32>, vector<16x127xf32> -> vector<16x128xf32>
    %cst_258 = arith.constant 0.000000e+00 : f32
    %538 = vector.broadcast %cst_258 : f32 to vector<16x1xf32>
    %539 = vector.extract_strided_slice %534 {offsets = [0, 1], sizes = [16, 127], strides = [1, 1]} : vector<16x128xf32> to vector<16x127xf32>
    %540 = tpu.concatenate %539, %538 in 1 : vector<16x127xf32>, vector<16x1xf32> -> vector<16x128xf32>
    %cst_259 = arith.constant 0.000000e+00 : f32
    %541 = vector.broadcast %cst_259 : f32 to vector<16x1xf32>
    %542 = vector.extract_strided_slice %250 {offsets = [0, 0], sizes = [16, 127], strides = [1, 1]} : vector<16x128xf32> to vector<16x127xf32>
    %543 = tpu.concatenate %541, %542 in 1 : vector<16x1xf32>, vector<16x127xf32> -> vector<16x128xf32>
    %cst_260 = arith.constant 0.000000e+00 : f32
    %544 = vector.broadcast %cst_260 : f32 to vector<16x1xf32>
    %545 = vector.extract_strided_slice %250 {offsets = [0, 1], sizes = [16, 127], strides = [1, 1]} : vector<16x128xf32> to vector<16x127xf32>
    %546 = tpu.concatenate %545, %544 in 1 : vector<16x127xf32>, vector<16x1xf32> -> vector<16x128xf32>
    %cst_261 = arith.constant 0.000000e+00 : f32
    %547 = vector.broadcast %cst_261 : f32 to vector<1x128xf32>
    %548 = vector.extract_strided_slice %250 {offsets = [1, 0], sizes = [15, 128], strides = [1, 1]} : vector<16x128xf32> to vector<15x128xf32>
    %549 = tpu.concatenate %548, %547 in 0 : vector<15x128xf32>, vector<1x128xf32> -> vector<16x128xf32>
    %cst_262 = arith.constant 0.000000e+00 : f32
    %550 = vector.broadcast %cst_262 : f32 to vector<16x1xf32>
    %551 = vector.extract_strided_slice %549 {offsets = [0, 0], sizes = [16, 127], strides = [1, 1]} : vector<16x128xf32> to vector<16x127xf32>
    %552 = tpu.concatenate %550, %551 in 1 : vector<16x1xf32>, vector<16x127xf32> -> vector<16x128xf32>
    %cst_263 = arith.constant 0.000000e+00 : f32
    %553 = vector.broadcast %cst_263 : f32 to vector<16x1xf32>
    %554 = vector.extract_strided_slice %549 {offsets = [0, 1], sizes = [16, 127], strides = [1, 1]} : vector<16x128xf32> to vector<16x127xf32>
    %555 = tpu.concatenate %554, %553 in 1 : vector<16x127xf32>, vector<16x1xf32> -> vector<16x128xf32>
    %c4_264 = arith.constant 4 : index
    %c0_265 = arith.constant 0 : index
    %556 = memref.load %arg8[%c4_264, %c0_265] : memref<8x9xf32, #tpu.memory_space<smem>>
    %557 = vector.broadcast %556 : f32 to vector<16x128xf32>
    %558 = arith.mulf %557, %537 : vector<16x128xf32>
    %c4_266 = arith.constant 4 : index
    %c1_267 = arith.constant 1 : index
    %559 = memref.load %arg8[%c4_266, %c1_267] : memref<8x9xf32, #tpu.memory_space<smem>>
    %560 = vector.broadcast %559 : f32 to vector<16x128xf32>
    %561 = arith.mulf %560, %534 : vector<16x128xf32>
    %562 = arith.addf %558, %561 : vector<16x128xf32>
    %c4_268 = arith.constant 4 : index
    %c2_269 = arith.constant 2 : index
    %563 = memref.load %arg8[%c4_268, %c2_269] : memref<8x9xf32, #tpu.memory_space<smem>>
    %564 = vector.broadcast %563 : f32 to vector<16x128xf32>
    %565 = arith.mulf %564, %540 : vector<16x128xf32>
    %566 = arith.addf %562, %565 : vector<16x128xf32>
    %c4_270 = arith.constant 4 : index
    %c3_271 = arith.constant 3 : index
    %567 = memref.load %arg8[%c4_270, %c3_271] : memref<8x9xf32, #tpu.memory_space<smem>>
    %568 = vector.broadcast %567 : f32 to vector<16x128xf32>
    %569 = arith.mulf %568, %543 : vector<16x128xf32>
    %570 = arith.addf %566, %569 : vector<16x128xf32>
    %c4_272 = arith.constant 4 : index
    %c4_273 = arith.constant 4 : index
    %571 = memref.load %arg8[%c4_272, %c4_273] : memref<8x9xf32, #tpu.memory_space<smem>>
    %572 = vector.broadcast %571 : f32 to vector<16x128xf32>
    %573 = arith.mulf %572, %250 : vector<16x128xf32>
    %574 = arith.addf %570, %573 : vector<16x128xf32>
    %c4_274 = arith.constant 4 : index
    %c5_275 = arith.constant 5 : index
    %575 = memref.load %arg8[%c4_274, %c5_275] : memref<8x9xf32, #tpu.memory_space<smem>>
    %576 = vector.broadcast %575 : f32 to vector<16x128xf32>
    %577 = arith.mulf %576, %546 : vector<16x128xf32>
    %578 = arith.addf %574, %577 : vector<16x128xf32>
    %c4_276 = arith.constant 4 : index
    %c6_277 = arith.constant 6 : index
    %579 = memref.load %arg8[%c4_276, %c6_277] : memref<8x9xf32, #tpu.memory_space<smem>>
    %580 = vector.broadcast %579 : f32 to vector<16x128xf32>
    %581 = arith.mulf %580, %552 : vector<16x128xf32>
    %582 = arith.addf %578, %581 : vector<16x128xf32>
    %c4_278 = arith.constant 4 : index
    %c7_279 = arith.constant 7 : index
    %583 = memref.load %arg8[%c4_278, %c7_279] : memref<8x9xf32, #tpu.memory_space<smem>>
    %584 = vector.broadcast %583 : f32 to vector<16x128xf32>
    %585 = arith.mulf %584, %549 : vector<16x128xf32>
    %586 = arith.addf %582, %585 : vector<16x128xf32>
    %c4_280 = arith.constant 4 : index
    %c8_281 = arith.constant 8 : index
    %587 = memref.load %arg8[%c4_280, %c8_281] : memref<8x9xf32, #tpu.memory_space<smem>>
    %588 = vector.broadcast %587 : f32 to vector<16x128xf32>
    %589 = arith.mulf %588, %555 : vector<16x128xf32>
    %590 = arith.addf %586, %589 : vector<16x128xf32>
    %cst_282 = arith.constant 0.000000e+00 : f32
    %591 = vector.broadcast %cst_282 : f32 to vector<1x128xf32>
    %592 = vector.extract_strided_slice %265 {offsets = [0, 0], sizes = [15, 128], strides = [1, 1]} : vector<16x128xf32> to vector<15x128xf32>
    %593 = tpu.concatenate %591, %592 in 0 : vector<1x128xf32>, vector<15x128xf32> -> vector<16x128xf32>
    %cst_283 = arith.constant 0.000000e+00 : f32
    %594 = vector.broadcast %cst_283 : f32 to vector<16x1xf32>
    %595 = vector.extract_strided_slice %593 {offsets = [0, 0], sizes = [16, 127], strides = [1, 1]} : vector<16x128xf32> to vector<16x127xf32>
    %596 = tpu.concatenate %594, %595 in 1 : vector<16x1xf32>, vector<16x127xf32> -> vector<16x128xf32>
    %cst_284 = arith.constant 0.000000e+00 : f32
    %597 = vector.broadcast %cst_284 : f32 to vector<16x1xf32>
    %598 = vector.extract_strided_slice %593 {offsets = [0, 1], sizes = [16, 127], strides = [1, 1]} : vector<16x128xf32> to vector<16x127xf32>
    %599 = tpu.concatenate %598, %597 in 1 : vector<16x127xf32>, vector<16x1xf32> -> vector<16x128xf32>
    %cst_285 = arith.constant 0.000000e+00 : f32
    %600 = vector.broadcast %cst_285 : f32 to vector<16x1xf32>
    %601 = vector.extract_strided_slice %265 {offsets = [0, 0], sizes = [16, 127], strides = [1, 1]} : vector<16x128xf32> to vector<16x127xf32>
    %602 = tpu.concatenate %600, %601 in 1 : vector<16x1xf32>, vector<16x127xf32> -> vector<16x128xf32>
    %cst_286 = arith.constant 0.000000e+00 : f32
    %603 = vector.broadcast %cst_286 : f32 to vector<16x1xf32>
    %604 = vector.extract_strided_slice %265 {offsets = [0, 1], sizes = [16, 127], strides = [1, 1]} : vector<16x128xf32> to vector<16x127xf32>
    %605 = tpu.concatenate %604, %603 in 1 : vector<16x127xf32>, vector<16x1xf32> -> vector<16x128xf32>
    %cst_287 = arith.constant 0.000000e+00 : f32
    %606 = vector.broadcast %cst_287 : f32 to vector<1x128xf32>
    %607 = vector.extract_strided_slice %265 {offsets = [1, 0], sizes = [15, 128], strides = [1, 1]} : vector<16x128xf32> to vector<15x128xf32>
    %608 = tpu.concatenate %607, %606 in 0 : vector<15x128xf32>, vector<1x128xf32> -> vector<16x128xf32>
    %cst_288 = arith.constant 0.000000e+00 : f32
    %609 = vector.broadcast %cst_288 : f32 to vector<16x1xf32>
    %610 = vector.extract_strided_slice %608 {offsets = [0, 0], sizes = [16, 127], strides = [1, 1]} : vector<16x128xf32> to vector<16x127xf32>
    %611 = tpu.concatenate %609, %610 in 1 : vector<16x1xf32>, vector<16x127xf32> -> vector<16x128xf32>
    %cst_289 = arith.constant 0.000000e+00 : f32
    %612 = vector.broadcast %cst_289 : f32 to vector<16x1xf32>
    %613 = vector.extract_strided_slice %608 {offsets = [0, 1], sizes = [16, 127], strides = [1, 1]} : vector<16x128xf32> to vector<16x127xf32>
    %614 = tpu.concatenate %613, %612 in 1 : vector<16x127xf32>, vector<16x1xf32> -> vector<16x128xf32>
    %c5_290 = arith.constant 5 : index
    %c0_291 = arith.constant 0 : index
    %615 = memref.load %arg8[%c5_290, %c0_291] : memref<8x9xf32, #tpu.memory_space<smem>>
    %616 = vector.broadcast %615 : f32 to vector<16x128xf32>
    %617 = arith.mulf %616, %596 : vector<16x128xf32>
    %c5_292 = arith.constant 5 : index
    %c1_293 = arith.constant 1 : index
    %618 = memref.load %arg8[%c5_292, %c1_293] : memref<8x9xf32, #tpu.memory_space<smem>>
    %619 = vector.broadcast %618 : f32 to vector<16x128xf32>
    %620 = arith.mulf %619, %593 : vector<16x128xf32>
    %621 = arith.addf %617, %620 : vector<16x128xf32>
    %c5_294 = arith.constant 5 : index
    %c2_295 = arith.constant 2 : index
    %622 = memref.load %arg8[%c5_294, %c2_295] : memref<8x9xf32, #tpu.memory_space<smem>>
    %623 = vector.broadcast %622 : f32 to vector<16x128xf32>
    %624 = arith.mulf %623, %599 : vector<16x128xf32>
    %625 = arith.addf %621, %624 : vector<16x128xf32>
    %c5_296 = arith.constant 5 : index
    %c3_297 = arith.constant 3 : index
    %626 = memref.load %arg8[%c5_296, %c3_297] : memref<8x9xf32, #tpu.memory_space<smem>>
    %627 = vector.broadcast %626 : f32 to vector<16x128xf32>
    %628 = arith.mulf %627, %602 : vector<16x128xf32>
    %629 = arith.addf %625, %628 : vector<16x128xf32>
    %c5_298 = arith.constant 5 : index
    %c4_299 = arith.constant 4 : index
    %630 = memref.load %arg8[%c5_298, %c4_299] : memref<8x9xf32, #tpu.memory_space<smem>>
    %631 = vector.broadcast %630 : f32 to vector<16x128xf32>
    %632 = arith.mulf %631, %265 : vector<16x128xf32>
    %633 = arith.addf %629, %632 : vector<16x128xf32>
    %c5_300 = arith.constant 5 : index
    %c5_301 = arith.constant 5 : index
    %634 = memref.load %arg8[%c5_300, %c5_301] : memref<8x9xf32, #tpu.memory_space<smem>>
    %635 = vector.broadcast %634 : f32 to vector<16x128xf32>
    %636 = arith.mulf %635, %605 : vector<16x128xf32>
    %637 = arith.addf %633, %636 : vector<16x128xf32>
    %c5_302 = arith.constant 5 : index
    %c6_303 = arith.constant 6 : index
    %638 = memref.load %arg8[%c5_302, %c6_303] : memref<8x9xf32, #tpu.memory_space<smem>>
    %639 = vector.broadcast %638 : f32 to vector<16x128xf32>
    %640 = arith.mulf %639, %611 : vector<16x128xf32>
    %641 = arith.addf %637, %640 : vector<16x128xf32>
    %c5_304 = arith.constant 5 : index
    %c7_305 = arith.constant 7 : index
    %642 = memref.load %arg8[%c5_304, %c7_305] : memref<8x9xf32, #tpu.memory_space<smem>>
    %643 = vector.broadcast %642 : f32 to vector<16x128xf32>
    %644 = arith.mulf %643, %608 : vector<16x128xf32>
    %645 = arith.addf %641, %644 : vector<16x128xf32>
    %c5_306 = arith.constant 5 : index
    %c8_307 = arith.constant 8 : index
    %646 = memref.load %arg8[%c5_306, %c8_307] : memref<8x9xf32, #tpu.memory_space<smem>>
    %647 = vector.broadcast %646 : f32 to vector<16x128xf32>
    %648 = arith.mulf %647, %614 : vector<16x128xf32>
    %649 = arith.addf %645, %648 : vector<16x128xf32>
    %cst_308 = arith.constant 0.000000e+00 : f32
    %650 = vector.broadcast %cst_308 : f32 to vector<1x128xf32>
    %651 = vector.extract_strided_slice %280 {offsets = [0, 0], sizes = [15, 128], strides = [1, 1]} : vector<16x128xf32> to vector<15x128xf32>
    %652 = tpu.concatenate %650, %651 in 0 : vector<1x128xf32>, vector<15x128xf32> -> vector<16x128xf32>
    %cst_309 = arith.constant 0.000000e+00 : f32
    %653 = vector.broadcast %cst_309 : f32 to vector<16x1xf32>
    %654 = vector.extract_strided_slice %652 {offsets = [0, 0], sizes = [16, 127], strides = [1, 1]} : vector<16x128xf32> to vector<16x127xf32>
    %655 = tpu.concatenate %653, %654 in 1 : vector<16x1xf32>, vector<16x127xf32> -> vector<16x128xf32>
    %cst_310 = arith.constant 0.000000e+00 : f32
    %656 = vector.broadcast %cst_310 : f32 to vector<16x1xf32>
    %657 = vector.extract_strided_slice %652 {offsets = [0, 1], sizes = [16, 127], strides = [1, 1]} : vector<16x128xf32> to vector<16x127xf32>
    %658 = tpu.concatenate %657, %656 in 1 : vector<16x127xf32>, vector<16x1xf32> -> vector<16x128xf32>
    %cst_311 = arith.constant 0.000000e+00 : f32
    %659 = vector.broadcast %cst_311 : f32 to vector<16x1xf32>
    %660 = vector.extract_strided_slice %280 {offsets = [0, 0], sizes = [16, 127], strides = [1, 1]} : vector<16x128xf32> to vector<16x127xf32>
    %661 = tpu.concatenate %659, %660 in 1 : vector<16x1xf32>, vector<16x127xf32> -> vector<16x128xf32>
    %cst_312 = arith.constant 0.000000e+00 : f32
    %662 = vector.broadcast %cst_312 : f32 to vector<16x1xf32>
    %663 = vector.extract_strided_slice %280 {offsets = [0, 1], sizes = [16, 127], strides = [1, 1]} : vector<16x128xf32> to vector<16x127xf32>
    %664 = tpu.concatenate %663, %662 in 1 : vector<16x127xf32>, vector<16x1xf32> -> vector<16x128xf32>
    %cst_313 = arith.constant 0.000000e+00 : f32
    %665 = vector.broadcast %cst_313 : f32 to vector<1x128xf32>
    %666 = vector.extract_strided_slice %280 {offsets = [1, 0], sizes = [15, 128], strides = [1, 1]} : vector<16x128xf32> to vector<15x128xf32>
    %667 = tpu.concatenate %666, %665 in 0 : vector<15x128xf32>, vector<1x128xf32> -> vector<16x128xf32>
    %cst_314 = arith.constant 0.000000e+00 : f32
    %668 = vector.broadcast %cst_314 : f32 to vector<16x1xf32>
    %669 = vector.extract_strided_slice %667 {offsets = [0, 0], sizes = [16, 127], strides = [1, 1]} : vector<16x128xf32> to vector<16x127xf32>
    %670 = tpu.concatenate %668, %669 in 1 : vector<16x1xf32>, vector<16x127xf32> -> vector<16x128xf32>
    %cst_315 = arith.constant 0.000000e+00 : f32
    %671 = vector.broadcast %cst_315 : f32 to vector<16x1xf32>
    %672 = vector.extract_strided_slice %667 {offsets = [0, 1], sizes = [16, 127], strides = [1, 1]} : vector<16x128xf32> to vector<16x127xf32>
    %673 = tpu.concatenate %672, %671 in 1 : vector<16x127xf32>, vector<16x1xf32> -> vector<16x128xf32>
    %c6_316 = arith.constant 6 : index
    %c0_317 = arith.constant 0 : index
    %674 = memref.load %arg8[%c6_316, %c0_317] : memref<8x9xf32, #tpu.memory_space<smem>>
    %675 = vector.broadcast %674 : f32 to vector<16x128xf32>
    %676 = arith.mulf %675, %655 : vector<16x128xf32>
    %c6_318 = arith.constant 6 : index
    %c1_319 = arith.constant 1 : index
    %677 = memref.load %arg8[%c6_318, %c1_319] : memref<8x9xf32, #tpu.memory_space<smem>>
    %678 = vector.broadcast %677 : f32 to vector<16x128xf32>
    %679 = arith.mulf %678, %652 : vector<16x128xf32>
    %680 = arith.addf %676, %679 : vector<16x128xf32>
    %c6_320 = arith.constant 6 : index
    %c2_321 = arith.constant 2 : index
    %681 = memref.load %arg8[%c6_320, %c2_321] : memref<8x9xf32, #tpu.memory_space<smem>>
    %682 = vector.broadcast %681 : f32 to vector<16x128xf32>
    %683 = arith.mulf %682, %658 : vector<16x128xf32>
    %684 = arith.addf %680, %683 : vector<16x128xf32>
    %c6_322 = arith.constant 6 : index
    %c3_323 = arith.constant 3 : index
    %685 = memref.load %arg8[%c6_322, %c3_323] : memref<8x9xf32, #tpu.memory_space<smem>>
    %686 = vector.broadcast %685 : f32 to vector<16x128xf32>
    %687 = arith.mulf %686, %661 : vector<16x128xf32>
    %688 = arith.addf %684, %687 : vector<16x128xf32>
    %c6_324 = arith.constant 6 : index
    %c4_325 = arith.constant 4 : index
    %689 = memref.load %arg8[%c6_324, %c4_325] : memref<8x9xf32, #tpu.memory_space<smem>>
    %690 = vector.broadcast %689 : f32 to vector<16x128xf32>
    %691 = arith.mulf %690, %280 : vector<16x128xf32>
    %692 = arith.addf %688, %691 : vector<16x128xf32>
    %c6_326 = arith.constant 6 : index
    %c5_327 = arith.constant 5 : index
    %693 = memref.load %arg8[%c6_326, %c5_327] : memref<8x9xf32, #tpu.memory_space<smem>>
    %694 = vector.broadcast %693 : f32 to vector<16x128xf32>
    %695 = arith.mulf %694, %664 : vector<16x128xf32>
    %696 = arith.addf %692, %695 : vector<16x128xf32>
    %c6_328 = arith.constant 6 : index
    %c6_329 = arith.constant 6 : index
    %697 = memref.load %arg8[%c6_328, %c6_329] : memref<8x9xf32, #tpu.memory_space<smem>>
    %698 = vector.broadcast %697 : f32 to vector<16x128xf32>
    %699 = arith.mulf %698, %670 : vector<16x128xf32>
    %700 = arith.addf %696, %699 : vector<16x128xf32>
    %c6_330 = arith.constant 6 : index
    %c7_331 = arith.constant 7 : index
    %701 = memref.load %arg8[%c6_330, %c7_331] : memref<8x9xf32, #tpu.memory_space<smem>>
    %702 = vector.broadcast %701 : f32 to vector<16x128xf32>
    %703 = arith.mulf %702, %667 : vector<16x128xf32>
    %704 = arith.addf %700, %703 : vector<16x128xf32>
    %c6_332 = arith.constant 6 : index
    %c8_333 = arith.constant 8 : index
    %705 = memref.load %arg8[%c6_332, %c8_333] : memref<8x9xf32, #tpu.memory_space<smem>>
    %706 = vector.broadcast %705 : f32 to vector<16x128xf32>
    %707 = arith.mulf %706, %673 : vector<16x128xf32>
    %708 = arith.addf %704, %707 : vector<16x128xf32>
    %cst_334 = arith.constant 0.000000e+00 : f32
    %709 = vector.broadcast %cst_334 : f32 to vector<1x128xf32>
    %710 = vector.extract_strided_slice %295 {offsets = [0, 0], sizes = [15, 128], strides = [1, 1]} : vector<16x128xf32> to vector<15x128xf32>
    %711 = tpu.concatenate %709, %710 in 0 : vector<1x128xf32>, vector<15x128xf32> -> vector<16x128xf32>
    %cst_335 = arith.constant 0.000000e+00 : f32
    %712 = vector.broadcast %cst_335 : f32 to vector<16x1xf32>
    %713 = vector.extract_strided_slice %711 {offsets = [0, 0], sizes = [16, 127], strides = [1, 1]} : vector<16x128xf32> to vector<16x127xf32>
    %714 = tpu.concatenate %712, %713 in 1 : vector<16x1xf32>, vector<16x127xf32> -> vector<16x128xf32>
    %cst_336 = arith.constant 0.000000e+00 : f32
    %715 = vector.broadcast %cst_336 : f32 to vector<16x1xf32>
    %716 = vector.extract_strided_slice %711 {offsets = [0, 1], sizes = [16, 127], strides = [1, 1]} : vector<16x128xf32> to vector<16x127xf32>
    %717 = tpu.concatenate %716, %715 in 1 : vector<16x127xf32>, vector<16x1xf32> -> vector<16x128xf32>
    %cst_337 = arith.constant 0.000000e+00 : f32
    %718 = vector.broadcast %cst_337 : f32 to vector<16x1xf32>
    %719 = vector.extract_strided_slice %295 {offsets = [0, 0], sizes = [16, 127], strides = [1, 1]} : vector<16x128xf32> to vector<16x127xf32>
    %720 = tpu.concatenate %718, %719 in 1 : vector<16x1xf32>, vector<16x127xf32> -> vector<16x128xf32>
    %cst_338 = arith.constant 0.000000e+00 : f32
    %721 = vector.broadcast %cst_338 : f32 to vector<16x1xf32>
    %722 = vector.extract_strided_slice %295 {offsets = [0, 1], sizes = [16, 127], strides = [1, 1]} : vector<16x128xf32> to vector<16x127xf32>
    %723 = tpu.concatenate %722, %721 in 1 : vector<16x127xf32>, vector<16x1xf32> -> vector<16x128xf32>
    %cst_339 = arith.constant 0.000000e+00 : f32
    %724 = vector.broadcast %cst_339 : f32 to vector<1x128xf32>
    %725 = vector.extract_strided_slice %295 {offsets = [1, 0], sizes = [15, 128], strides = [1, 1]} : vector<16x128xf32> to vector<15x128xf32>
    %726 = tpu.concatenate %725, %724 in 0 : vector<15x128xf32>, vector<1x128xf32> -> vector<16x128xf32>
    %cst_340 = arith.constant 0.000000e+00 : f32
    %727 = vector.broadcast %cst_340 : f32 to vector<16x1xf32>
    %728 = vector.extract_strided_slice %726 {offsets = [0, 0], sizes = [16, 127], strides = [1, 1]} : vector<16x128xf32> to vector<16x127xf32>
    %729 = tpu.concatenate %727, %728 in 1 : vector<16x1xf32>, vector<16x127xf32> -> vector<16x128xf32>
    %cst_341 = arith.constant 0.000000e+00 : f32
    %730 = vector.broadcast %cst_341 : f32 to vector<16x1xf32>
    %731 = vector.extract_strided_slice %726 {offsets = [0, 1], sizes = [16, 127], strides = [1, 1]} : vector<16x128xf32> to vector<16x127xf32>
    %732 = tpu.concatenate %731, %730 in 1 : vector<16x127xf32>, vector<16x1xf32> -> vector<16x128xf32>
    %c7_342 = arith.constant 7 : index
    %c0_343 = arith.constant 0 : index
    %733 = memref.load %arg8[%c7_342, %c0_343] : memref<8x9xf32, #tpu.memory_space<smem>>
    %734 = vector.broadcast %733 : f32 to vector<16x128xf32>
    %735 = arith.mulf %734, %714 : vector<16x128xf32>
    %c7_344 = arith.constant 7 : index
    %c1_345 = arith.constant 1 : index
    %736 = memref.load %arg8[%c7_344, %c1_345] : memref<8x9xf32, #tpu.memory_space<smem>>
    %737 = vector.broadcast %736 : f32 to vector<16x128xf32>
    %738 = arith.mulf %737, %711 : vector<16x128xf32>
    %739 = arith.addf %735, %738 : vector<16x128xf32>
    %c7_346 = arith.constant 7 : index
    %c2_347 = arith.constant 2 : index
    %740 = memref.load %arg8[%c7_346, %c2_347] : memref<8x9xf32, #tpu.memory_space<smem>>
    %741 = vector.broadcast %740 : f32 to vector<16x128xf32>
    %742 = arith.mulf %741, %717 : vector<16x128xf32>
    %743 = arith.addf %739, %742 : vector<16x128xf32>
    %c7_348 = arith.constant 7 : index
    %c3_349 = arith.constant 3 : index
    %744 = memref.load %arg8[%c7_348, %c3_349] : memref<8x9xf32, #tpu.memory_space<smem>>
    %745 = vector.broadcast %744 : f32 to vector<16x128xf32>
    %746 = arith.mulf %745, %720 : vector<16x128xf32>
    %747 = arith.addf %743, %746 : vector<16x128xf32>
    %c7_350 = arith.constant 7 : index
    %c4_351 = arith.constant 4 : index
    %748 = memref.load %arg8[%c7_350, %c4_351] : memref<8x9xf32, #tpu.memory_space<smem>>
    %749 = vector.broadcast %748 : f32 to vector<16x128xf32>
    %750 = arith.mulf %749, %295 : vector<16x128xf32>
    %751 = arith.addf %747, %750 : vector<16x128xf32>
    %c7_352 = arith.constant 7 : index
    %c5_353 = arith.constant 5 : index
    %752 = memref.load %arg8[%c7_352, %c5_353] : memref<8x9xf32, #tpu.memory_space<smem>>
    %753 = vector.broadcast %752 : f32 to vector<16x128xf32>
    %754 = arith.mulf %753, %723 : vector<16x128xf32>
    %755 = arith.addf %751, %754 : vector<16x128xf32>
    %c7_354 = arith.constant 7 : index
    %c6_355 = arith.constant 6 : index
    %756 = memref.load %arg8[%c7_354, %c6_355] : memref<8x9xf32, #tpu.memory_space<smem>>
    %757 = vector.broadcast %756 : f32 to vector<16x128xf32>
    %758 = arith.mulf %757, %729 : vector<16x128xf32>
    %759 = arith.addf %755, %758 : vector<16x128xf32>
    %c7_356 = arith.constant 7 : index
    %c7_357 = arith.constant 7 : index
    %760 = memref.load %arg8[%c7_356, %c7_357] : memref<8x9xf32, #tpu.memory_space<smem>>
    %761 = vector.broadcast %760 : f32 to vector<16x128xf32>
    %762 = arith.mulf %761, %726 : vector<16x128xf32>
    %763 = arith.addf %759, %762 : vector<16x128xf32>
    %c7_358 = arith.constant 7 : index
    %c8_359 = arith.constant 8 : index
    %764 = memref.load %arg8[%c7_358, %c8_359] : memref<8x9xf32, #tpu.memory_space<smem>>
    %765 = vector.broadcast %764 : f32 to vector<16x128xf32>
    %766 = arith.mulf %765, %732 : vector<16x128xf32>
    %767 = arith.addf %763, %766 : vector<16x128xf32>
    %c0_360 = arith.constant 0 : index
    %c0_361 = arith.constant 0 : index
    %768 = memref.load %arg9[%c0_360, %c0_361] : memref<4x4xf32, #tpu.memory_space<smem>>
    %769 = vector.broadcast %768 : f32 to vector<16x128xf32>
    %770 = arith.mulf %769, %98 : vector<16x128xf32>
    %c0_362 = arith.constant 0 : index
    %c1_363 = arith.constant 1 : index
    %771 = memref.load %arg9[%c0_362, %c1_363] : memref<4x4xf32, #tpu.memory_space<smem>>
    %772 = vector.broadcast %771 : f32 to vector<16x128xf32>
    %773 = arith.mulf %772, %106 : vector<16x128xf32>
    %774 = arith.addf %770, %773 : vector<16x128xf32>
    %c0_364 = arith.constant 0 : index
    %c2_365 = arith.constant 2 : index
    %775 = memref.load %arg9[%c0_364, %c2_365] : memref<4x4xf32, #tpu.memory_space<smem>>
    %776 = vector.broadcast %775 : f32 to vector<16x128xf32>
    %777 = arith.mulf %776, %114 : vector<16x128xf32>
    %778 = arith.addf %774, %777 : vector<16x128xf32>
    %c0_366 = arith.constant 0 : index
    %c3_367 = arith.constant 3 : index
    %779 = memref.load %arg9[%c0_366, %c3_367] : memref<4x4xf32, #tpu.memory_space<smem>>
    %780 = vector.broadcast %779 : f32 to vector<16x128xf32>
    %781 = arith.mulf %780, %122 : vector<16x128xf32>
    %782 = arith.addf %778, %781 : vector<16x128xf32>
    %c1_368 = arith.constant 1 : index
    %c0_369 = arith.constant 0 : index
    %783 = memref.load %arg9[%c1_368, %c0_369] : memref<4x4xf32, #tpu.memory_space<smem>>
    %784 = vector.broadcast %783 : f32 to vector<16x128xf32>
    %785 = arith.mulf %784, %98 : vector<16x128xf32>
    %c1_370 = arith.constant 1 : index
    %c1_371 = arith.constant 1 : index
    %786 = memref.load %arg9[%c1_370, %c1_371] : memref<4x4xf32, #tpu.memory_space<smem>>
    %787 = vector.broadcast %786 : f32 to vector<16x128xf32>
    %788 = arith.mulf %787, %106 : vector<16x128xf32>
    %789 = arith.addf %785, %788 : vector<16x128xf32>
    %c1_372 = arith.constant 1 : index
    %c2_373 = arith.constant 2 : index
    %790 = memref.load %arg9[%c1_372, %c2_373] : memref<4x4xf32, #tpu.memory_space<smem>>
    %791 = vector.broadcast %790 : f32 to vector<16x128xf32>
    %792 = arith.mulf %791, %114 : vector<16x128xf32>
    %793 = arith.addf %789, %792 : vector<16x128xf32>
    %c1_374 = arith.constant 1 : index
    %c3_375 = arith.constant 3 : index
    %794 = memref.load %arg9[%c1_374, %c3_375] : memref<4x4xf32, #tpu.memory_space<smem>>
    %795 = vector.broadcast %794 : f32 to vector<16x128xf32>
    %796 = arith.mulf %795, %122 : vector<16x128xf32>
    %797 = arith.addf %793, %796 : vector<16x128xf32>
    %c2_376 = arith.constant 2 : index
    %c0_377 = arith.constant 0 : index
    %798 = memref.load %arg9[%c2_376, %c0_377] : memref<4x4xf32, #tpu.memory_space<smem>>
    %799 = vector.broadcast %798 : f32 to vector<16x128xf32>
    %800 = arith.mulf %799, %98 : vector<16x128xf32>
    %c2_378 = arith.constant 2 : index
    %c1_379 = arith.constant 1 : index
    %801 = memref.load %arg9[%c2_378, %c1_379] : memref<4x4xf32, #tpu.memory_space<smem>>
    %802 = vector.broadcast %801 : f32 to vector<16x128xf32>
    %803 = arith.mulf %802, %106 : vector<16x128xf32>
    %804 = arith.addf %800, %803 : vector<16x128xf32>
    %c2_380 = arith.constant 2 : index
    %c2_381 = arith.constant 2 : index
    %805 = memref.load %arg9[%c2_380, %c2_381] : memref<4x4xf32, #tpu.memory_space<smem>>
    %806 = vector.broadcast %805 : f32 to vector<16x128xf32>
    %807 = arith.mulf %806, %114 : vector<16x128xf32>
    %808 = arith.addf %804, %807 : vector<16x128xf32>
    %c2_382 = arith.constant 2 : index
    %c3_383 = arith.constant 3 : index
    %809 = memref.load %arg9[%c2_382, %c3_383] : memref<4x4xf32, #tpu.memory_space<smem>>
    %810 = vector.broadcast %809 : f32 to vector<16x128xf32>
    %811 = arith.mulf %810, %122 : vector<16x128xf32>
    %812 = arith.addf %808, %811 : vector<16x128xf32>
    %c3_384 = arith.constant 3 : index
    %c0_385 = arith.constant 0 : index
    %813 = memref.load %arg9[%c3_384, %c0_385] : memref<4x4xf32, #tpu.memory_space<smem>>
    %814 = vector.broadcast %813 : f32 to vector<16x128xf32>
    %815 = arith.mulf %814, %98 : vector<16x128xf32>
    %c3_386 = arith.constant 3 : index
    %c1_387 = arith.constant 1 : index
    %816 = memref.load %arg9[%c3_386, %c1_387] : memref<4x4xf32, #tpu.memory_space<smem>>
    %817 = vector.broadcast %816 : f32 to vector<16x128xf32>
    %818 = arith.mulf %817, %106 : vector<16x128xf32>
    %819 = arith.addf %815, %818 : vector<16x128xf32>
    %c3_388 = arith.constant 3 : index
    %c2_389 = arith.constant 2 : index
    %820 = memref.load %arg9[%c3_388, %c2_389] : memref<4x4xf32, #tpu.memory_space<smem>>
    %821 = vector.broadcast %820 : f32 to vector<16x128xf32>
    %822 = arith.mulf %821, %114 : vector<16x128xf32>
    %823 = arith.addf %819, %822 : vector<16x128xf32>
    %c3_390 = arith.constant 3 : index
    %c3_391 = arith.constant 3 : index
    %824 = memref.load %arg9[%c3_390, %c3_391] : memref<4x4xf32, #tpu.memory_space<smem>>
    %825 = vector.broadcast %824 : f32 to vector<16x128xf32>
    %826 = arith.mulf %825, %122 : vector<16x128xf32>
    %827 = arith.addf %823, %826 : vector<16x128xf32>
    %cst_392 = arith.constant 0.000000e+00 : f32
    %828 = vector.broadcast %cst_392 : f32 to vector<1x128xf32>
    %829 = vector.extract_strided_slice %782 {offsets = [0, 0], sizes = [15, 128], strides = [1, 1]} : vector<16x128xf32> to vector<15x128xf32>
    %830 = tpu.concatenate %828, %829 in 0 : vector<1x128xf32>, vector<15x128xf32> -> vector<16x128xf32>
    %cst_393 = arith.constant 0.000000e+00 : f32
    %831 = vector.broadcast %cst_393 : f32 to vector<16x1xf32>
    %832 = vector.extract_strided_slice %830 {offsets = [0, 0], sizes = [16, 127], strides = [1, 1]} : vector<16x128xf32> to vector<16x127xf32>
    %833 = tpu.concatenate %831, %832 in 1 : vector<16x1xf32>, vector<16x127xf32> -> vector<16x128xf32>
    %cst_394 = arith.constant 0.000000e+00 : f32
    %834 = vector.broadcast %cst_394 : f32 to vector<16x1xf32>
    %835 = vector.extract_strided_slice %830 {offsets = [0, 1], sizes = [16, 127], strides = [1, 1]} : vector<16x128xf32> to vector<16x127xf32>
    %836 = tpu.concatenate %835, %834 in 1 : vector<16x127xf32>, vector<16x1xf32> -> vector<16x128xf32>
    %cst_395 = arith.constant 0.000000e+00 : f32
    %837 = vector.broadcast %cst_395 : f32 to vector<16x1xf32>
    %838 = vector.extract_strided_slice %782 {offsets = [0, 0], sizes = [16, 127], strides = [1, 1]} : vector<16x128xf32> to vector<16x127xf32>
    %839 = tpu.concatenate %837, %838 in 1 : vector<16x1xf32>, vector<16x127xf32> -> vector<16x128xf32>
    %cst_396 = arith.constant 0.000000e+00 : f32
    %840 = vector.broadcast %cst_396 : f32 to vector<16x1xf32>
    %841 = vector.extract_strided_slice %782 {offsets = [0, 1], sizes = [16, 127], strides = [1, 1]} : vector<16x128xf32> to vector<16x127xf32>
    %842 = tpu.concatenate %841, %840 in 1 : vector<16x127xf32>, vector<16x1xf32> -> vector<16x128xf32>
    %cst_397 = arith.constant 0.000000e+00 : f32
    %843 = vector.broadcast %cst_397 : f32 to vector<1x128xf32>
    %844 = vector.extract_strided_slice %782 {offsets = [1, 0], sizes = [15, 128], strides = [1, 1]} : vector<16x128xf32> to vector<15x128xf32>
    %845 = tpu.concatenate %844, %843 in 0 : vector<15x128xf32>, vector<1x128xf32> -> vector<16x128xf32>
    %cst_398 = arith.constant 0.000000e+00 : f32
    %846 = vector.broadcast %cst_398 : f32 to vector<16x1xf32>
    %847 = vector.extract_strided_slice %845 {offsets = [0, 0], sizes = [16, 127], strides = [1, 1]} : vector<16x128xf32> to vector<16x127xf32>
    %848 = tpu.concatenate %846, %847 in 1 : vector<16x1xf32>, vector<16x127xf32> -> vector<16x128xf32>
    %cst_399 = arith.constant 0.000000e+00 : f32
    %849 = vector.broadcast %cst_399 : f32 to vector<16x1xf32>
    %850 = vector.extract_strided_slice %845 {offsets = [0, 1], sizes = [16, 127], strides = [1, 1]} : vector<16x128xf32> to vector<16x127xf32>
    %851 = tpu.concatenate %850, %849 in 1 : vector<16x127xf32>, vector<16x1xf32> -> vector<16x128xf32>
    %cst_400 = arith.constant 0.000000e+00 : f32
    %852 = vector.broadcast %cst_400 : f32 to vector<1x128xf32>
    %853 = vector.extract_strided_slice %797 {offsets = [0, 0], sizes = [15, 128], strides = [1, 1]} : vector<16x128xf32> to vector<15x128xf32>
    %854 = tpu.concatenate %852, %853 in 0 : vector<1x128xf32>, vector<15x128xf32> -> vector<16x128xf32>
    %cst_401 = arith.constant 0.000000e+00 : f32
    %855 = vector.broadcast %cst_401 : f32 to vector<16x1xf32>
    %856 = vector.extract_strided_slice %854 {offsets = [0, 0], sizes = [16, 127], strides = [1, 1]} : vector<16x128xf32> to vector<16x127xf32>
    %857 = tpu.concatenate %855, %856 in 1 : vector<16x1xf32>, vector<16x127xf32> -> vector<16x128xf32>
    %cst_402 = arith.constant 0.000000e+00 : f32
    %858 = vector.broadcast %cst_402 : f32 to vector<16x1xf32>
    %859 = vector.extract_strided_slice %854 {offsets = [0, 1], sizes = [16, 127], strides = [1, 1]} : vector<16x128xf32> to vector<16x127xf32>
    %860 = tpu.concatenate %859, %858 in 1 : vector<16x127xf32>, vector<16x1xf32> -> vector<16x128xf32>
    %cst_403 = arith.constant 0.000000e+00 : f32
    %861 = vector.broadcast %cst_403 : f32 to vector<16x1xf32>
    %862 = vector.extract_strided_slice %797 {offsets = [0, 0], sizes = [16, 127], strides = [1, 1]} : vector<16x128xf32> to vector<16x127xf32>
    %863 = tpu.concatenate %861, %862 in 1 : vector<16x1xf32>, vector<16x127xf32> -> vector<16x128xf32>
    %cst_404 = arith.constant 0.000000e+00 : f32
    %864 = vector.broadcast %cst_404 : f32 to vector<16x1xf32>
    %865 = vector.extract_strided_slice %797 {offsets = [0, 1], sizes = [16, 127], strides = [1, 1]} : vector<16x128xf32> to vector<16x127xf32>
    %866 = tpu.concatenate %865, %864 in 1 : vector<16x127xf32>, vector<16x1xf32> -> vector<16x128xf32>
    %cst_405 = arith.constant 0.000000e+00 : f32
    %867 = vector.broadcast %cst_405 : f32 to vector<1x128xf32>
    %868 = vector.extract_strided_slice %797 {offsets = [1, 0], sizes = [15, 128], strides = [1, 1]} : vector<16x128xf32> to vector<15x128xf32>
    %869 = tpu.concatenate %868, %867 in 0 : vector<15x128xf32>, vector<1x128xf32> -> vector<16x128xf32>
    %cst_406 = arith.constant 0.000000e+00 : f32
    %870 = vector.broadcast %cst_406 : f32 to vector<16x1xf32>
    %871 = vector.extract_strided_slice %869 {offsets = [0, 0], sizes = [16, 127], strides = [1, 1]} : vector<16x128xf32> to vector<16x127xf32>
    %872 = tpu.concatenate %870, %871 in 1 : vector<16x1xf32>, vector<16x127xf32> -> vector<16x128xf32>
    %cst_407 = arith.constant 0.000000e+00 : f32
    %873 = vector.broadcast %cst_407 : f32 to vector<16x1xf32>
    %874 = vector.extract_strided_slice %869 {offsets = [0, 1], sizes = [16, 127], strides = [1, 1]} : vector<16x128xf32> to vector<16x127xf32>
    %875 = tpu.concatenate %874, %873 in 1 : vector<16x127xf32>, vector<16x1xf32> -> vector<16x128xf32>
    %cst_408 = arith.constant 0.000000e+00 : f32
    %876 = vector.broadcast %cst_408 : f32 to vector<1x128xf32>
    %877 = vector.extract_strided_slice %812 {offsets = [0, 0], sizes = [15, 128], strides = [1, 1]} : vector<16x128xf32> to vector<15x128xf32>
    %878 = tpu.concatenate %876, %877 in 0 : vector<1x128xf32>, vector<15x128xf32> -> vector<16x128xf32>
    %cst_409 = arith.constant 0.000000e+00 : f32
    %879 = vector.broadcast %cst_409 : f32 to vector<16x1xf32>
    %880 = vector.extract_strided_slice %878 {offsets = [0, 0], sizes = [16, 127], strides = [1, 1]} : vector<16x128xf32> to vector<16x127xf32>
    %881 = tpu.concatenate %879, %880 in 1 : vector<16x1xf32>, vector<16x127xf32> -> vector<16x128xf32>
    %cst_410 = arith.constant 0.000000e+00 : f32
    %882 = vector.broadcast %cst_410 : f32 to vector<16x1xf32>
    %883 = vector.extract_strided_slice %878 {offsets = [0, 1], sizes = [16, 127], strides = [1, 1]} : vector<16x128xf32> to vector<16x127xf32>
    %884 = tpu.concatenate %883, %882 in 1 : vector<16x127xf32>, vector<16x1xf32> -> vector<16x128xf32>
    %cst_411 = arith.constant 0.000000e+00 : f32
    %885 = vector.broadcast %cst_411 : f32 to vector<16x1xf32>
    %886 = vector.extract_strided_slice %812 {offsets = [0, 0], sizes = [16, 127], strides = [1, 1]} : vector<16x128xf32> to vector<16x127xf32>
    %887 = tpu.concatenate %885, %886 in 1 : vector<16x1xf32>, vector<16x127xf32> -> vector<16x128xf32>
    %cst_412 = arith.constant 0.000000e+00 : f32
    %888 = vector.broadcast %cst_412 : f32 to vector<16x1xf32>
    %889 = vector.extract_strided_slice %812 {offsets = [0, 1], sizes = [16, 127], strides = [1, 1]} : vector<16x128xf32> to vector<16x127xf32>
    %890 = tpu.concatenate %889, %888 in 1 : vector<16x127xf32>, vector<16x1xf32> -> vector<16x128xf32>
    %cst_413 = arith.constant 0.000000e+00 : f32
    %891 = vector.broadcast %cst_413 : f32 to vector<1x128xf32>
    %892 = vector.extract_strided_slice %812 {offsets = [1, 0], sizes = [15, 128], strides = [1, 1]} : vector<16x128xf32> to vector<15x128xf32>
    %893 = tpu.concatenate %892, %891 in 0 : vector<15x128xf32>, vector<1x128xf32> -> vector<16x128xf32>
    %cst_414 = arith.constant 0.000000e+00 : f32
    %894 = vector.broadcast %cst_414 : f32 to vector<16x1xf32>
    %895 = vector.extract_strided_slice %893 {offsets = [0, 0], sizes = [16, 127], strides = [1, 1]} : vector<16x128xf32> to vector<16x127xf32>
    %896 = tpu.concatenate %894, %895 in 1 : vector<16x1xf32>, vector<16x127xf32> -> vector<16x128xf32>
    %cst_415 = arith.constant 0.000000e+00 : f32
    %897 = vector.broadcast %cst_415 : f32 to vector<16x1xf32>
    %898 = vector.extract_strided_slice %893 {offsets = [0, 1], sizes = [16, 127], strides = [1, 1]} : vector<16x128xf32> to vector<16x127xf32>
    %899 = tpu.concatenate %898, %897 in 1 : vector<16x127xf32>, vector<16x1xf32> -> vector<16x128xf32>
    %cst_416 = arith.constant 0.000000e+00 : f32
    %900 = vector.broadcast %cst_416 : f32 to vector<1x128xf32>
    %901 = vector.extract_strided_slice %827 {offsets = [0, 0], sizes = [15, 128], strides = [1, 1]} : vector<16x128xf32> to vector<15x128xf32>
    %902 = tpu.concatenate %900, %901 in 0 : vector<1x128xf32>, vector<15x128xf32> -> vector<16x128xf32>
    %cst_417 = arith.constant 0.000000e+00 : f32
    %903 = vector.broadcast %cst_417 : f32 to vector<16x1xf32>
    %904 = vector.extract_strided_slice %902 {offsets = [0, 0], sizes = [16, 127], strides = [1, 1]} : vector<16x128xf32> to vector<16x127xf32>
    %905 = tpu.concatenate %903, %904 in 1 : vector<16x1xf32>, vector<16x127xf32> -> vector<16x128xf32>
    %cst_418 = arith.constant 0.000000e+00 : f32
    %906 = vector.broadcast %cst_418 : f32 to vector<16x1xf32>
    %907 = vector.extract_strided_slice %902 {offsets = [0, 1], sizes = [16, 127], strides = [1, 1]} : vector<16x128xf32> to vector<16x127xf32>
    %908 = tpu.concatenate %907, %906 in 1 : vector<16x127xf32>, vector<16x1xf32> -> vector<16x128xf32>
    %cst_419 = arith.constant 0.000000e+00 : f32
    %909 = vector.broadcast %cst_419 : f32 to vector<16x1xf32>
    %910 = vector.extract_strided_slice %827 {offsets = [0, 0], sizes = [16, 127], strides = [1, 1]} : vector<16x128xf32> to vector<16x127xf32>
    %911 = tpu.concatenate %909, %910 in 1 : vector<16x1xf32>, vector<16x127xf32> -> vector<16x128xf32>
    %cst_420 = arith.constant 0.000000e+00 : f32
    %912 = vector.broadcast %cst_420 : f32 to vector<16x1xf32>
    %913 = vector.extract_strided_slice %827 {offsets = [0, 1], sizes = [16, 127], strides = [1, 1]} : vector<16x128xf32> to vector<16x127xf32>
    %914 = tpu.concatenate %913, %912 in 1 : vector<16x127xf32>, vector<16x1xf32> -> vector<16x128xf32>
    %cst_421 = arith.constant 0.000000e+00 : f32
    %915 = vector.broadcast %cst_421 : f32 to vector<1x128xf32>
    %916 = vector.extract_strided_slice %827 {offsets = [1, 0], sizes = [15, 128], strides = [1, 1]} : vector<16x128xf32> to vector<15x128xf32>
    %917 = tpu.concatenate %916, %915 in 0 : vector<15x128xf32>, vector<1x128xf32> -> vector<16x128xf32>
    %cst_422 = arith.constant 0.000000e+00 : f32
    %918 = vector.broadcast %cst_422 : f32 to vector<16x1xf32>
    %919 = vector.extract_strided_slice %917 {offsets = [0, 0], sizes = [16, 127], strides = [1, 1]} : vector<16x128xf32> to vector<16x127xf32>
    %920 = tpu.concatenate %918, %919 in 1 : vector<16x1xf32>, vector<16x127xf32> -> vector<16x128xf32>
    %cst_423 = arith.constant 0.000000e+00 : f32
    %921 = vector.broadcast %cst_423 : f32 to vector<16x1xf32>
    %922 = vector.extract_strided_slice %917 {offsets = [0, 1], sizes = [16, 127], strides = [1, 1]} : vector<16x128xf32> to vector<16x127xf32>
    %923 = tpu.concatenate %922, %921 in 1 : vector<16x127xf32>, vector<16x1xf32> -> vector<16x128xf32>
    %c0_424 = arith.constant 0 : index
    %c0_425 = arith.constant 0 : index
    %924 = memref.load %arg10[%c0_424, %c0_425] : memref<4x36xf32, #tpu.memory_space<smem>>
    %925 = vector.broadcast %924 : f32 to vector<16x128xf32>
    %926 = arith.mulf %925, %833 : vector<16x128xf32>
    %c0_426 = arith.constant 0 : index
    %c1_427 = arith.constant 1 : index
    %927 = memref.load %arg10[%c0_426, %c1_427] : memref<4x36xf32, #tpu.memory_space<smem>>
    %928 = vector.broadcast %927 : f32 to vector<16x128xf32>
    %929 = arith.mulf %928, %830 : vector<16x128xf32>
    %930 = arith.addf %926, %929 : vector<16x128xf32>
    %c0_428 = arith.constant 0 : index
    %c2_429 = arith.constant 2 : index
    %931 = memref.load %arg10[%c0_428, %c2_429] : memref<4x36xf32, #tpu.memory_space<smem>>
    %932 = vector.broadcast %931 : f32 to vector<16x128xf32>
    %933 = arith.mulf %932, %836 : vector<16x128xf32>
    %934 = arith.addf %930, %933 : vector<16x128xf32>
    %c0_430 = arith.constant 0 : index
    %c3_431 = arith.constant 3 : index
    %935 = memref.load %arg10[%c0_430, %c3_431] : memref<4x36xf32, #tpu.memory_space<smem>>
    %936 = vector.broadcast %935 : f32 to vector<16x128xf32>
    %937 = arith.mulf %936, %839 : vector<16x128xf32>
    %938 = arith.addf %934, %937 : vector<16x128xf32>
    %c0_432 = arith.constant 0 : index
    %c4_433 = arith.constant 4 : index
    %939 = memref.load %arg10[%c0_432, %c4_433] : memref<4x36xf32, #tpu.memory_space<smem>>
    %940 = vector.broadcast %939 : f32 to vector<16x128xf32>
    %941 = arith.mulf %940, %782 : vector<16x128xf32>
    %942 = arith.addf %938, %941 : vector<16x128xf32>
    %c0_434 = arith.constant 0 : index
    %c5_435 = arith.constant 5 : index
    %943 = memref.load %arg10[%c0_434, %c5_435] : memref<4x36xf32, #tpu.memory_space<smem>>
    %944 = vector.broadcast %943 : f32 to vector<16x128xf32>
    %945 = arith.mulf %944, %842 : vector<16x128xf32>
    %946 = arith.addf %942, %945 : vector<16x128xf32>
    %c0_436 = arith.constant 0 : index
    %c6_437 = arith.constant 6 : index
    %947 = memref.load %arg10[%c0_436, %c6_437] : memref<4x36xf32, #tpu.memory_space<smem>>
    %948 = vector.broadcast %947 : f32 to vector<16x128xf32>
    %949 = arith.mulf %948, %848 : vector<16x128xf32>
    %950 = arith.addf %946, %949 : vector<16x128xf32>
    %c0_438 = arith.constant 0 : index
    %c7_439 = arith.constant 7 : index
    %951 = memref.load %arg10[%c0_438, %c7_439] : memref<4x36xf32, #tpu.memory_space<smem>>
    %952 = vector.broadcast %951 : f32 to vector<16x128xf32>
    %953 = arith.mulf %952, %845 : vector<16x128xf32>
    %954 = arith.addf %950, %953 : vector<16x128xf32>
    %c0_440 = arith.constant 0 : index
    %c8_441 = arith.constant 8 : index
    %955 = memref.load %arg10[%c0_440, %c8_441] : memref<4x36xf32, #tpu.memory_space<smem>>
    %956 = vector.broadcast %955 : f32 to vector<16x128xf32>
    %957 = arith.mulf %956, %851 : vector<16x128xf32>
    %958 = arith.addf %954, %957 : vector<16x128xf32>
    %c0_442 = arith.constant 0 : index
    %c9 = arith.constant 9 : index
    %959 = memref.load %arg10[%c0_442, %c9] : memref<4x36xf32, #tpu.memory_space<smem>>
    %960 = vector.broadcast %959 : f32 to vector<16x128xf32>
    %961 = arith.mulf %960, %857 : vector<16x128xf32>
    %962 = arith.addf %958, %961 : vector<16x128xf32>
    %c0_443 = arith.constant 0 : index
    %c10 = arith.constant 10 : index
    %963 = memref.load %arg10[%c0_443, %c10] : memref<4x36xf32, #tpu.memory_space<smem>>
    %964 = vector.broadcast %963 : f32 to vector<16x128xf32>
    %965 = arith.mulf %964, %854 : vector<16x128xf32>
    %966 = arith.addf %962, %965 : vector<16x128xf32>
    %c0_444 = arith.constant 0 : index
    %c11 = arith.constant 11 : index
    %967 = memref.load %arg10[%c0_444, %c11] : memref<4x36xf32, #tpu.memory_space<smem>>
    %968 = vector.broadcast %967 : f32 to vector<16x128xf32>
    %969 = arith.mulf %968, %860 : vector<16x128xf32>
    %970 = arith.addf %966, %969 : vector<16x128xf32>
    %c0_445 = arith.constant 0 : index
    %c12 = arith.constant 12 : index
    %971 = memref.load %arg10[%c0_445, %c12] : memref<4x36xf32, #tpu.memory_space<smem>>
    %972 = vector.broadcast %971 : f32 to vector<16x128xf32>
    %973 = arith.mulf %972, %863 : vector<16x128xf32>
    %974 = arith.addf %970, %973 : vector<16x128xf32>
    %c0_446 = arith.constant 0 : index
    %c13 = arith.constant 13 : index
    %975 = memref.load %arg10[%c0_446, %c13] : memref<4x36xf32, #tpu.memory_space<smem>>
    %976 = vector.broadcast %975 : f32 to vector<16x128xf32>
    %977 = arith.mulf %976, %797 : vector<16x128xf32>
    %978 = arith.addf %974, %977 : vector<16x128xf32>
    %c0_447 = arith.constant 0 : index
    %c14 = arith.constant 14 : index
    %979 = memref.load %arg10[%c0_447, %c14] : memref<4x36xf32, #tpu.memory_space<smem>>
    %980 = vector.broadcast %979 : f32 to vector<16x128xf32>
    %981 = arith.mulf %980, %866 : vector<16x128xf32>
    %982 = arith.addf %978, %981 : vector<16x128xf32>
    %c0_448 = arith.constant 0 : index
    %c15 = arith.constant 15 : index
    %983 = memref.load %arg10[%c0_448, %c15] : memref<4x36xf32, #tpu.memory_space<smem>>
    %984 = vector.broadcast %983 : f32 to vector<16x128xf32>
    %985 = arith.mulf %984, %872 : vector<16x128xf32>
    %986 = arith.addf %982, %985 : vector<16x128xf32>
    %c0_449 = arith.constant 0 : index
    %c16 = arith.constant 16 : index
    %987 = memref.load %arg10[%c0_449, %c16] : memref<4x36xf32, #tpu.memory_space<smem>>
    %988 = vector.broadcast %987 : f32 to vector<16x128xf32>
    %989 = arith.mulf %988, %869 : vector<16x128xf32>
    %990 = arith.addf %986, %989 : vector<16x128xf32>
    %c0_450 = arith.constant 0 : index
    %c17 = arith.constant 17 : index
    %991 = memref.load %arg10[%c0_450, %c17] : memref<4x36xf32, #tpu.memory_space<smem>>
    %992 = vector.broadcast %991 : f32 to vector<16x128xf32>
    %993 = arith.mulf %992, %875 : vector<16x128xf32>
    %994 = arith.addf %990, %993 : vector<16x128xf32>
    %c0_451 = arith.constant 0 : index
    %c18 = arith.constant 18 : index
    %995 = memref.load %arg10[%c0_451, %c18] : memref<4x36xf32, #tpu.memory_space<smem>>
    %996 = vector.broadcast %995 : f32 to vector<16x128xf32>
    %997 = arith.mulf %996, %881 : vector<16x128xf32>
    %998 = arith.addf %994, %997 : vector<16x128xf32>
    %c0_452 = arith.constant 0 : index
    %c19 = arith.constant 19 : index
    %999 = memref.load %arg10[%c0_452, %c19] : memref<4x36xf32, #tpu.memory_space<smem>>
    %1000 = vector.broadcast %999 : f32 to vector<16x128xf32>
    %1001 = arith.mulf %1000, %878 : vector<16x128xf32>
    %1002 = arith.addf %998, %1001 : vector<16x128xf32>
    %c0_453 = arith.constant 0 : index
    %c20 = arith.constant 20 : index
    %1003 = memref.load %arg10[%c0_453, %c20] : memref<4x36xf32, #tpu.memory_space<smem>>
    %1004 = vector.broadcast %1003 : f32 to vector<16x128xf32>
    %1005 = arith.mulf %1004, %884 : vector<16x128xf32>
    %1006 = arith.addf %1002, %1005 : vector<16x128xf32>
    %c0_454 = arith.constant 0 : index
    %c21 = arith.constant 21 : index
    %1007 = memref.load %arg10[%c0_454, %c21] : memref<4x36xf32, #tpu.memory_space<smem>>
    %1008 = vector.broadcast %1007 : f32 to vector<16x128xf32>
    %1009 = arith.mulf %1008, %887 : vector<16x128xf32>
    %1010 = arith.addf %1006, %1009 : vector<16x128xf32>
    %c0_455 = arith.constant 0 : index
    %c22 = arith.constant 22 : index
    %1011 = memref.load %arg10[%c0_455, %c22] : memref<4x36xf32, #tpu.memory_space<smem>>
    %1012 = vector.broadcast %1011 : f32 to vector<16x128xf32>
    %1013 = arith.mulf %1012, %812 : vector<16x128xf32>
    %1014 = arith.addf %1010, %1013 : vector<16x128xf32>
    %c0_456 = arith.constant 0 : index
    %c23 = arith.constant 23 : index
    %1015 = memref.load %arg10[%c0_456, %c23] : memref<4x36xf32, #tpu.memory_space<smem>>
    %1016 = vector.broadcast %1015 : f32 to vector<16x128xf32>
    %1017 = arith.mulf %1016, %890 : vector<16x128xf32>
    %1018 = arith.addf %1014, %1017 : vector<16x128xf32>
    %c0_457 = arith.constant 0 : index
    %c24 = arith.constant 24 : index
    %1019 = memref.load %arg10[%c0_457, %c24] : memref<4x36xf32, #tpu.memory_space<smem>>
    %1020 = vector.broadcast %1019 : f32 to vector<16x128xf32>
    %1021 = arith.mulf %1020, %896 : vector<16x128xf32>
    %1022 = arith.addf %1018, %1021 : vector<16x128xf32>
    %c0_458 = arith.constant 0 : index
    %c25 = arith.constant 25 : index
    %1023 = memref.load %arg10[%c0_458, %c25] : memref<4x36xf32, #tpu.memory_space<smem>>
    %1024 = vector.broadcast %1023 : f32 to vector<16x128xf32>
    %1025 = arith.mulf %1024, %893 : vector<16x128xf32>
    %1026 = arith.addf %1022, %1025 : vector<16x128xf32>
    %c0_459 = arith.constant 0 : index
    %c26 = arith.constant 26 : index
    %1027 = memref.load %arg10[%c0_459, %c26] : memref<4x36xf32, #tpu.memory_space<smem>>
    %1028 = vector.broadcast %1027 : f32 to vector<16x128xf32>
    %1029 = arith.mulf %1028, %899 : vector<16x128xf32>
    %1030 = arith.addf %1026, %1029 : vector<16x128xf32>
    %c0_460 = arith.constant 0 : index
    %c27 = arith.constant 27 : index
    %1031 = memref.load %arg10[%c0_460, %c27] : memref<4x36xf32, #tpu.memory_space<smem>>
    %1032 = vector.broadcast %1031 : f32 to vector<16x128xf32>
    %1033 = arith.mulf %1032, %905 : vector<16x128xf32>
    %1034 = arith.addf %1030, %1033 : vector<16x128xf32>
    %c0_461 = arith.constant 0 : index
    %c28 = arith.constant 28 : index
    %1035 = memref.load %arg10[%c0_461, %c28] : memref<4x36xf32, #tpu.memory_space<smem>>
    %1036 = vector.broadcast %1035 : f32 to vector<16x128xf32>
    %1037 = arith.mulf %1036, %902 : vector<16x128xf32>
    %1038 = arith.addf %1034, %1037 : vector<16x128xf32>
    %c0_462 = arith.constant 0 : index
    %c29 = arith.constant 29 : index
    %1039 = memref.load %arg10[%c0_462, %c29] : memref<4x36xf32, #tpu.memory_space<smem>>
    %1040 = vector.broadcast %1039 : f32 to vector<16x128xf32>
    %1041 = arith.mulf %1040, %908 : vector<16x128xf32>
    %1042 = arith.addf %1038, %1041 : vector<16x128xf32>
    %c0_463 = arith.constant 0 : index
    %c30 = arith.constant 30 : index
    %1043 = memref.load %arg10[%c0_463, %c30] : memref<4x36xf32, #tpu.memory_space<smem>>
    %1044 = vector.broadcast %1043 : f32 to vector<16x128xf32>
    %1045 = arith.mulf %1044, %911 : vector<16x128xf32>
    %1046 = arith.addf %1042, %1045 : vector<16x128xf32>
    %c0_464 = arith.constant 0 : index
    %c31 = arith.constant 31 : index
    %1047 = memref.load %arg10[%c0_464, %c31] : memref<4x36xf32, #tpu.memory_space<smem>>
    %1048 = vector.broadcast %1047 : f32 to vector<16x128xf32>
    %1049 = arith.mulf %1048, %827 : vector<16x128xf32>
    %1050 = arith.addf %1046, %1049 : vector<16x128xf32>
    %c0_465 = arith.constant 0 : index
    %c32 = arith.constant 32 : index
    %1051 = memref.load %arg10[%c0_465, %c32] : memref<4x36xf32, #tpu.memory_space<smem>>
    %1052 = vector.broadcast %1051 : f32 to vector<16x128xf32>
    %1053 = arith.mulf %1052, %914 : vector<16x128xf32>
    %1054 = arith.addf %1050, %1053 : vector<16x128xf32>
    %c0_466 = arith.constant 0 : index
    %c33 = arith.constant 33 : index
    %1055 = memref.load %arg10[%c0_466, %c33] : memref<4x36xf32, #tpu.memory_space<smem>>
    %1056 = vector.broadcast %1055 : f32 to vector<16x128xf32>
    %1057 = arith.mulf %1056, %920 : vector<16x128xf32>
    %1058 = arith.addf %1054, %1057 : vector<16x128xf32>
    %c0_467 = arith.constant 0 : index
    %c34 = arith.constant 34 : index
    %1059 = memref.load %arg10[%c0_467, %c34] : memref<4x36xf32, #tpu.memory_space<smem>>
    %1060 = vector.broadcast %1059 : f32 to vector<16x128xf32>
    %1061 = arith.mulf %1060, %917 : vector<16x128xf32>
    %1062 = arith.addf %1058, %1061 : vector<16x128xf32>
    %c0_468 = arith.constant 0 : index
    %c35 = arith.constant 35 : index
    %1063 = memref.load %arg10[%c0_468, %c35] : memref<4x36xf32, #tpu.memory_space<smem>>
    %1064 = vector.broadcast %1063 : f32 to vector<16x128xf32>
    %1065 = arith.mulf %1064, %923 : vector<16x128xf32>
    %1066 = arith.addf %1062, %1065 : vector<16x128xf32>
    %c1_469 = arith.constant 1 : index
    %c0_470 = arith.constant 0 : index
    %1067 = memref.load %arg10[%c1_469, %c0_470] : memref<4x36xf32, #tpu.memory_space<smem>>
    %1068 = vector.broadcast %1067 : f32 to vector<16x128xf32>
    %1069 = arith.mulf %1068, %833 : vector<16x128xf32>
    %c1_471 = arith.constant 1 : index
    %c1_472 = arith.constant 1 : index
    %1070 = memref.load %arg10[%c1_471, %c1_472] : memref<4x36xf32, #tpu.memory_space<smem>>
    %1071 = vector.broadcast %1070 : f32 to vector<16x128xf32>
    %1072 = arith.mulf %1071, %830 : vector<16x128xf32>
    %1073 = arith.addf %1069, %1072 : vector<16x128xf32>
    %c1_473 = arith.constant 1 : index
    %c2_474 = arith.constant 2 : index
    %1074 = memref.load %arg10[%c1_473, %c2_474] : memref<4x36xf32, #tpu.memory_space<smem>>
    %1075 = vector.broadcast %1074 : f32 to vector<16x128xf32>
    %1076 = arith.mulf %1075, %836 : vector<16x128xf32>
    %1077 = arith.addf %1073, %1076 : vector<16x128xf32>
    %c1_475 = arith.constant 1 : index
    %c3_476 = arith.constant 3 : index
    %1078 = memref.load %arg10[%c1_475, %c3_476] : memref<4x36xf32, #tpu.memory_space<smem>>
    %1079 = vector.broadcast %1078 : f32 to vector<16x128xf32>
    %1080 = arith.mulf %1079, %839 : vector<16x128xf32>
    %1081 = arith.addf %1077, %1080 : vector<16x128xf32>
    %c1_477 = arith.constant 1 : index
    %c4_478 = arith.constant 4 : index
    %1082 = memref.load %arg10[%c1_477, %c4_478] : memref<4x36xf32, #tpu.memory_space<smem>>
    %1083 = vector.broadcast %1082 : f32 to vector<16x128xf32>
    %1084 = arith.mulf %1083, %782 : vector<16x128xf32>
    %1085 = arith.addf %1081, %1084 : vector<16x128xf32>
    %c1_479 = arith.constant 1 : index
    %c5_480 = arith.constant 5 : index
    %1086 = memref.load %arg10[%c1_479, %c5_480] : memref<4x36xf32, #tpu.memory_space<smem>>
    %1087 = vector.broadcast %1086 : f32 to vector<16x128xf32>
    %1088 = arith.mulf %1087, %842 : vector<16x128xf32>
    %1089 = arith.addf %1085, %1088 : vector<16x128xf32>
    %c1_481 = arith.constant 1 : index
    %c6_482 = arith.constant 6 : index
    %1090 = memref.load %arg10[%c1_481, %c6_482] : memref<4x36xf32, #tpu.memory_space<smem>>
    %1091 = vector.broadcast %1090 : f32 to vector<16x128xf32>
    %1092 = arith.mulf %1091, %848 : vector<16x128xf32>
    %1093 = arith.addf %1089, %1092 : vector<16x128xf32>
    %c1_483 = arith.constant 1 : index
    %c7_484 = arith.constant 7 : index
    %1094 = memref.load %arg10[%c1_483, %c7_484] : memref<4x36xf32, #tpu.memory_space<smem>>
    %1095 = vector.broadcast %1094 : f32 to vector<16x128xf32>
    %1096 = arith.mulf %1095, %845 : vector<16x128xf32>
    %1097 = arith.addf %1093, %1096 : vector<16x128xf32>
    %c1_485 = arith.constant 1 : index
    %c8_486 = arith.constant 8 : index
    %1098 = memref.load %arg10[%c1_485, %c8_486] : memref<4x36xf32, #tpu.memory_space<smem>>
    %1099 = vector.broadcast %1098 : f32 to vector<16x128xf32>
    %1100 = arith.mulf %1099, %851 : vector<16x128xf32>
    %1101 = arith.addf %1097, %1100 : vector<16x128xf32>
    %c1_487 = arith.constant 1 : index
    %c9_488 = arith.constant 9 : index
    %1102 = memref.load %arg10[%c1_487, %c9_488] : memref<4x36xf32, #tpu.memory_space<smem>>
    %1103 = vector.broadcast %1102 : f32 to vector<16x128xf32>
    %1104 = arith.mulf %1103, %857 : vector<16x128xf32>
    %1105 = arith.addf %1101, %1104 : vector<16x128xf32>
    %c1_489 = arith.constant 1 : index
    %c10_490 = arith.constant 10 : index
    %1106 = memref.load %arg10[%c1_489, %c10_490] : memref<4x36xf32, #tpu.memory_space<smem>>
    %1107 = vector.broadcast %1106 : f32 to vector<16x128xf32>
    %1108 = arith.mulf %1107, %854 : vector<16x128xf32>
    %1109 = arith.addf %1105, %1108 : vector<16x128xf32>
    %c1_491 = arith.constant 1 : index
    %c11_492 = arith.constant 11 : index
    %1110 = memref.load %arg10[%c1_491, %c11_492] : memref<4x36xf32, #tpu.memory_space<smem>>
    %1111 = vector.broadcast %1110 : f32 to vector<16x128xf32>
    %1112 = arith.mulf %1111, %860 : vector<16x128xf32>
    %1113 = arith.addf %1109, %1112 : vector<16x128xf32>
    %c1_493 = arith.constant 1 : index
    %c12_494 = arith.constant 12 : index
    %1114 = memref.load %arg10[%c1_493, %c12_494] : memref<4x36xf32, #tpu.memory_space<smem>>
    %1115 = vector.broadcast %1114 : f32 to vector<16x128xf32>
    %1116 = arith.mulf %1115, %863 : vector<16x128xf32>
    %1117 = arith.addf %1113, %1116 : vector<16x128xf32>
    %c1_495 = arith.constant 1 : index
    %c13_496 = arith.constant 13 : index
    %1118 = memref.load %arg10[%c1_495, %c13_496] : memref<4x36xf32, #tpu.memory_space<smem>>
    %1119 = vector.broadcast %1118 : f32 to vector<16x128xf32>
    %1120 = arith.mulf %1119, %797 : vector<16x128xf32>
    %1121 = arith.addf %1117, %1120 : vector<16x128xf32>
    %c1_497 = arith.constant 1 : index
    %c14_498 = arith.constant 14 : index
    %1122 = memref.load %arg10[%c1_497, %c14_498] : memref<4x36xf32, #tpu.memory_space<smem>>
    %1123 = vector.broadcast %1122 : f32 to vector<16x128xf32>
    %1124 = arith.mulf %1123, %866 : vector<16x128xf32>
    %1125 = arith.addf %1121, %1124 : vector<16x128xf32>
    %c1_499 = arith.constant 1 : index
    %c15_500 = arith.constant 15 : index
    %1126 = memref.load %arg10[%c1_499, %c15_500] : memref<4x36xf32, #tpu.memory_space<smem>>
    %1127 = vector.broadcast %1126 : f32 to vector<16x128xf32>
    %1128 = arith.mulf %1127, %872 : vector<16x128xf32>
    %1129 = arith.addf %1125, %1128 : vector<16x128xf32>
    %c1_501 = arith.constant 1 : index
    %c16_502 = arith.constant 16 : index
    %1130 = memref.load %arg10[%c1_501, %c16_502] : memref<4x36xf32, #tpu.memory_space<smem>>
    %1131 = vector.broadcast %1130 : f32 to vector<16x128xf32>
    %1132 = arith.mulf %1131, %869 : vector<16x128xf32>
    %1133 = arith.addf %1129, %1132 : vector<16x128xf32>
    %c1_503 = arith.constant 1 : index
    %c17_504 = arith.constant 17 : index
    %1134 = memref.load %arg10[%c1_503, %c17_504] : memref<4x36xf32, #tpu.memory_space<smem>>
    %1135 = vector.broadcast %1134 : f32 to vector<16x128xf32>
    %1136 = arith.mulf %1135, %875 : vector<16x128xf32>
    %1137 = arith.addf %1133, %1136 : vector<16x128xf32>
    %c1_505 = arith.constant 1 : index
    %c18_506 = arith.constant 18 : index
    %1138 = memref.load %arg10[%c1_505, %c18_506] : memref<4x36xf32, #tpu.memory_space<smem>>
    %1139 = vector.broadcast %1138 : f32 to vector<16x128xf32>
    %1140 = arith.mulf %1139, %881 : vector<16x128xf32>
    %1141 = arith.addf %1137, %1140 : vector<16x128xf32>
    %c1_507 = arith.constant 1 : index
    %c19_508 = arith.constant 19 : index
    %1142 = memref.load %arg10[%c1_507, %c19_508] : memref<4x36xf32, #tpu.memory_space<smem>>
    %1143 = vector.broadcast %1142 : f32 to vector<16x128xf32>
    %1144 = arith.mulf %1143, %878 : vector<16x128xf32>
    %1145 = arith.addf %1141, %1144 : vector<16x128xf32>
    %c1_509 = arith.constant 1 : index
    %c20_510 = arith.constant 20 : index
    %1146 = memref.load %arg10[%c1_509, %c20_510] : memref<4x36xf32, #tpu.memory_space<smem>>
    %1147 = vector.broadcast %1146 : f32 to vector<16x128xf32>
    %1148 = arith.mulf %1147, %884 : vector<16x128xf32>
    %1149 = arith.addf %1145, %1148 : vector<16x128xf32>
    %c1_511 = arith.constant 1 : index
    %c21_512 = arith.constant 21 : index
    %1150 = memref.load %arg10[%c1_511, %c21_512] : memref<4x36xf32, #tpu.memory_space<smem>>
    %1151 = vector.broadcast %1150 : f32 to vector<16x128xf32>
    %1152 = arith.mulf %1151, %887 : vector<16x128xf32>
    %1153 = arith.addf %1149, %1152 : vector<16x128xf32>
    %c1_513 = arith.constant 1 : index
    %c22_514 = arith.constant 22 : index
    %1154 = memref.load %arg10[%c1_513, %c22_514] : memref<4x36xf32, #tpu.memory_space<smem>>
    %1155 = vector.broadcast %1154 : f32 to vector<16x128xf32>
    %1156 = arith.mulf %1155, %812 : vector<16x128xf32>
    %1157 = arith.addf %1153, %1156 : vector<16x128xf32>
    %c1_515 = arith.constant 1 : index
    %c23_516 = arith.constant 23 : index
    %1158 = memref.load %arg10[%c1_515, %c23_516] : memref<4x36xf32, #tpu.memory_space<smem>>
    %1159 = vector.broadcast %1158 : f32 to vector<16x128xf32>
    %1160 = arith.mulf %1159, %890 : vector<16x128xf32>
    %1161 = arith.addf %1157, %1160 : vector<16x128xf32>
    %c1_517 = arith.constant 1 : index
    %c24_518 = arith.constant 24 : index
    %1162 = memref.load %arg10[%c1_517, %c24_518] : memref<4x36xf32, #tpu.memory_space<smem>>
    %1163 = vector.broadcast %1162 : f32 to vector<16x128xf32>
    %1164 = arith.mulf %1163, %896 : vector<16x128xf32>
    %1165 = arith.addf %1161, %1164 : vector<16x128xf32>
    %c1_519 = arith.constant 1 : index
    %c25_520 = arith.constant 25 : index
    %1166 = memref.load %arg10[%c1_519, %c25_520] : memref<4x36xf32, #tpu.memory_space<smem>>
    %1167 = vector.broadcast %1166 : f32 to vector<16x128xf32>
    %1168 = arith.mulf %1167, %893 : vector<16x128xf32>
    %1169 = arith.addf %1165, %1168 : vector<16x128xf32>
    %c1_521 = arith.constant 1 : index
    %c26_522 = arith.constant 26 : index
    %1170 = memref.load %arg10[%c1_521, %c26_522] : memref<4x36xf32, #tpu.memory_space<smem>>
    %1171 = vector.broadcast %1170 : f32 to vector<16x128xf32>
    %1172 = arith.mulf %1171, %899 : vector<16x128xf32>
    %1173 = arith.addf %1169, %1172 : vector<16x128xf32>
    %c1_523 = arith.constant 1 : index
    %c27_524 = arith.constant 27 : index
    %1174 = memref.load %arg10[%c1_523, %c27_524] : memref<4x36xf32, #tpu.memory_space<smem>>
    %1175 = vector.broadcast %1174 : f32 to vector<16x128xf32>
    %1176 = arith.mulf %1175, %905 : vector<16x128xf32>
    %1177 = arith.addf %1173, %1176 : vector<16x128xf32>
    %c1_525 = arith.constant 1 : index
    %c28_526 = arith.constant 28 : index
    %1178 = memref.load %arg10[%c1_525, %c28_526] : memref<4x36xf32, #tpu.memory_space<smem>>
    %1179 = vector.broadcast %1178 : f32 to vector<16x128xf32>
    %1180 = arith.mulf %1179, %902 : vector<16x128xf32>
    %1181 = arith.addf %1177, %1180 : vector<16x128xf32>
    %c1_527 = arith.constant 1 : index
    %c29_528 = arith.constant 29 : index
    %1182 = memref.load %arg10[%c1_527, %c29_528] : memref<4x36xf32, #tpu.memory_space<smem>>
    %1183 = vector.broadcast %1182 : f32 to vector<16x128xf32>
    %1184 = arith.mulf %1183, %908 : vector<16x128xf32>
    %1185 = arith.addf %1181, %1184 : vector<16x128xf32>
    %c1_529 = arith.constant 1 : index
    %c30_530 = arith.constant 30 : index
    %1186 = memref.load %arg10[%c1_529, %c30_530] : memref<4x36xf32, #tpu.memory_space<smem>>
    %1187 = vector.broadcast %1186 : f32 to vector<16x128xf32>
    %1188 = arith.mulf %1187, %911 : vector<16x128xf32>
    %1189 = arith.addf %1185, %1188 : vector<16x128xf32>
    %c1_531 = arith.constant 1 : index
    %c31_532 = arith.constant 31 : index
    %1190 = memref.load %arg10[%c1_531, %c31_532] : memref<4x36xf32, #tpu.memory_space<smem>>
    %1191 = vector.broadcast %1190 : f32 to vector<16x128xf32>
    %1192 = arith.mulf %1191, %827 : vector<16x128xf32>
    %1193 = arith.addf %1189, %1192 : vector<16x128xf32>
    %c1_533 = arith.constant 1 : index
    %c32_534 = arith.constant 32 : index
    %1194 = memref.load %arg10[%c1_533, %c32_534] : memref<4x36xf32, #tpu.memory_space<smem>>
    %1195 = vector.broadcast %1194 : f32 to vector<16x128xf32>
    %1196 = arith.mulf %1195, %914 : vector<16x128xf32>
    %1197 = arith.addf %1193, %1196 : vector<16x128xf32>
    %c1_535 = arith.constant 1 : index
    %c33_536 = arith.constant 33 : index
    %1198 = memref.load %arg10[%c1_535, %c33_536] : memref<4x36xf32, #tpu.memory_space<smem>>
    %1199 = vector.broadcast %1198 : f32 to vector<16x128xf32>
    %1200 = arith.mulf %1199, %920 : vector<16x128xf32>
    %1201 = arith.addf %1197, %1200 : vector<16x128xf32>
    %c1_537 = arith.constant 1 : index
    %c34_538 = arith.constant 34 : index
    %1202 = memref.load %arg10[%c1_537, %c34_538] : memref<4x36xf32, #tpu.memory_space<smem>>
    %1203 = vector.broadcast %1202 : f32 to vector<16x128xf32>
    %1204 = arith.mulf %1203, %917 : vector<16x128xf32>
    %1205 = arith.addf %1201, %1204 : vector<16x128xf32>
    %c1_539 = arith.constant 1 : index
    %c35_540 = arith.constant 35 : index
    %1206 = memref.load %arg10[%c1_539, %c35_540] : memref<4x36xf32, #tpu.memory_space<smem>>
    %1207 = vector.broadcast %1206 : f32 to vector<16x128xf32>
    %1208 = arith.mulf %1207, %923 : vector<16x128xf32>
    %1209 = arith.addf %1205, %1208 : vector<16x128xf32>
    %c2_541 = arith.constant 2 : index
    %c0_542 = arith.constant 0 : index
    %1210 = memref.load %arg10[%c2_541, %c0_542] : memref<4x36xf32, #tpu.memory_space<smem>>
    %1211 = vector.broadcast %1210 : f32 to vector<16x128xf32>
    %1212 = arith.mulf %1211, %833 : vector<16x128xf32>
    %c2_543 = arith.constant 2 : index
    %c1_544 = arith.constant 1 : index
    %1213 = memref.load %arg10[%c2_543, %c1_544] : memref<4x36xf32, #tpu.memory_space<smem>>
    %1214 = vector.broadcast %1213 : f32 to vector<16x128xf32>
    %1215 = arith.mulf %1214, %830 : vector<16x128xf32>
    %1216 = arith.addf %1212, %1215 : vector<16x128xf32>
    %c2_545 = arith.constant 2 : index
    %c2_546 = arith.constant 2 : index
    %1217 = memref.load %arg10[%c2_545, %c2_546] : memref<4x36xf32, #tpu.memory_space<smem>>
    %1218 = vector.broadcast %1217 : f32 to vector<16x128xf32>
    %1219 = arith.mulf %1218, %836 : vector<16x128xf32>
    %1220 = arith.addf %1216, %1219 : vector<16x128xf32>
    %c2_547 = arith.constant 2 : index
    %c3_548 = arith.constant 3 : index
    %1221 = memref.load %arg10[%c2_547, %c3_548] : memref<4x36xf32, #tpu.memory_space<smem>>
    %1222 = vector.broadcast %1221 : f32 to vector<16x128xf32>
    %1223 = arith.mulf %1222, %839 : vector<16x128xf32>
    %1224 = arith.addf %1220, %1223 : vector<16x128xf32>
    %c2_549 = arith.constant 2 : index
    %c4_550 = arith.constant 4 : index
    %1225 = memref.load %arg10[%c2_549, %c4_550] : memref<4x36xf32, #tpu.memory_space<smem>>
    %1226 = vector.broadcast %1225 : f32 to vector<16x128xf32>
    %1227 = arith.mulf %1226, %782 : vector<16x128xf32>
    %1228 = arith.addf %1224, %1227 : vector<16x128xf32>
    %c2_551 = arith.constant 2 : index
    %c5_552 = arith.constant 5 : index
    %1229 = memref.load %arg10[%c2_551, %c5_552] : memref<4x36xf32, #tpu.memory_space<smem>>
    %1230 = vector.broadcast %1229 : f32 to vector<16x128xf32>
    %1231 = arith.mulf %1230, %842 : vector<16x128xf32>
    %1232 = arith.addf %1228, %1231 : vector<16x128xf32>
    %c2_553 = arith.constant 2 : index
    %c6_554 = arith.constant 6 : index
    %1233 = memref.load %arg10[%c2_553, %c6_554] : memref<4x36xf32, #tpu.memory_space<smem>>
    %1234 = vector.broadcast %1233 : f32 to vector<16x128xf32>
    %1235 = arith.mulf %1234, %848 : vector<16x128xf32>
    %1236 = arith.addf %1232, %1235 : vector<16x128xf32>
    %c2_555 = arith.constant 2 : index
    %c7_556 = arith.constant 7 : index
    %1237 = memref.load %arg10[%c2_555, %c7_556] : memref<4x36xf32, #tpu.memory_space<smem>>
    %1238 = vector.broadcast %1237 : f32 to vector<16x128xf32>
    %1239 = arith.mulf %1238, %845 : vector<16x128xf32>
    %1240 = arith.addf %1236, %1239 : vector<16x128xf32>
    %c2_557 = arith.constant 2 : index
    %c8_558 = arith.constant 8 : index
    %1241 = memref.load %arg10[%c2_557, %c8_558] : memref<4x36xf32, #tpu.memory_space<smem>>
    %1242 = vector.broadcast %1241 : f32 to vector<16x128xf32>
    %1243 = arith.mulf %1242, %851 : vector<16x128xf32>
    %1244 = arith.addf %1240, %1243 : vector<16x128xf32>
    %c2_559 = arith.constant 2 : index
    %c9_560 = arith.constant 9 : index
    %1245 = memref.load %arg10[%c2_559, %c9_560] : memref<4x36xf32, #tpu.memory_space<smem>>
    %1246 = vector.broadcast %1245 : f32 to vector<16x128xf32>
    %1247 = arith.mulf %1246, %857 : vector<16x128xf32>
    %1248 = arith.addf %1244, %1247 : vector<16x128xf32>
    %c2_561 = arith.constant 2 : index
    %c10_562 = arith.constant 10 : index
    %1249 = memref.load %arg10[%c2_561, %c10_562] : memref<4x36xf32, #tpu.memory_space<smem>>
    %1250 = vector.broadcast %1249 : f32 to vector<16x128xf32>
    %1251 = arith.mulf %1250, %854 : vector<16x128xf32>
    %1252 = arith.addf %1248, %1251 : vector<16x128xf32>
    %c2_563 = arith.constant 2 : index
    %c11_564 = arith.constant 11 : index
    %1253 = memref.load %arg10[%c2_563, %c11_564] : memref<4x36xf32, #tpu.memory_space<smem>>
    %1254 = vector.broadcast %1253 : f32 to vector<16x128xf32>
    %1255 = arith.mulf %1254, %860 : vector<16x128xf32>
    %1256 = arith.addf %1252, %1255 : vector<16x128xf32>
    %c2_565 = arith.constant 2 : index
    %c12_566 = arith.constant 12 : index
    %1257 = memref.load %arg10[%c2_565, %c12_566] : memref<4x36xf32, #tpu.memory_space<smem>>
    %1258 = vector.broadcast %1257 : f32 to vector<16x128xf32>
    %1259 = arith.mulf %1258, %863 : vector<16x128xf32>
    %1260 = arith.addf %1256, %1259 : vector<16x128xf32>
    %c2_567 = arith.constant 2 : index
    %c13_568 = arith.constant 13 : index
    %1261 = memref.load %arg10[%c2_567, %c13_568] : memref<4x36xf32, #tpu.memory_space<smem>>
    %1262 = vector.broadcast %1261 : f32 to vector<16x128xf32>
    %1263 = arith.mulf %1262, %797 : vector<16x128xf32>
    %1264 = arith.addf %1260, %1263 : vector<16x128xf32>
    %c2_569 = arith.constant 2 : index
    %c14_570 = arith.constant 14 : index
    %1265 = memref.load %arg10[%c2_569, %c14_570] : memref<4x36xf32, #tpu.memory_space<smem>>
    %1266 = vector.broadcast %1265 : f32 to vector<16x128xf32>
    %1267 = arith.mulf %1266, %866 : vector<16x128xf32>
    %1268 = arith.addf %1264, %1267 : vector<16x128xf32>
    %c2_571 = arith.constant 2 : index
    %c15_572 = arith.constant 15 : index
    %1269 = memref.load %arg10[%c2_571, %c15_572] : memref<4x36xf32, #tpu.memory_space<smem>>
    %1270 = vector.broadcast %1269 : f32 to vector<16x128xf32>
    %1271 = arith.mulf %1270, %872 : vector<16x128xf32>
    %1272 = arith.addf %1268, %1271 : vector<16x128xf32>
    %c2_573 = arith.constant 2 : index
    %c16_574 = arith.constant 16 : index
    %1273 = memref.load %arg10[%c2_573, %c16_574] : memref<4x36xf32, #tpu.memory_space<smem>>
    %1274 = vector.broadcast %1273 : f32 to vector<16x128xf32>
    %1275 = arith.mulf %1274, %869 : vector<16x128xf32>
    %1276 = arith.addf %1272, %1275 : vector<16x128xf32>
    %c2_575 = arith.constant 2 : index
    %c17_576 = arith.constant 17 : index
    %1277 = memref.load %arg10[%c2_575, %c17_576] : memref<4x36xf32, #tpu.memory_space<smem>>
    %1278 = vector.broadcast %1277 : f32 to vector<16x128xf32>
    %1279 = arith.mulf %1278, %875 : vector<16x128xf32>
    %1280 = arith.addf %1276, %1279 : vector<16x128xf32>
    %c2_577 = arith.constant 2 : index
    %c18_578 = arith.constant 18 : index
    %1281 = memref.load %arg10[%c2_577, %c18_578] : memref<4x36xf32, #tpu.memory_space<smem>>
    %1282 = vector.broadcast %1281 : f32 to vector<16x128xf32>
    %1283 = arith.mulf %1282, %881 : vector<16x128xf32>
    %1284 = arith.addf %1280, %1283 : vector<16x128xf32>
    %c2_579 = arith.constant 2 : index
    %c19_580 = arith.constant 19 : index
    %1285 = memref.load %arg10[%c2_579, %c19_580] : memref<4x36xf32, #tpu.memory_space<smem>>
    %1286 = vector.broadcast %1285 : f32 to vector<16x128xf32>
    %1287 = arith.mulf %1286, %878 : vector<16x128xf32>
    %1288 = arith.addf %1284, %1287 : vector<16x128xf32>
    %c2_581 = arith.constant 2 : index
    %c20_582 = arith.constant 20 : index
    %1289 = memref.load %arg10[%c2_581, %c20_582] : memref<4x36xf32, #tpu.memory_space<smem>>
    %1290 = vector.broadcast %1289 : f32 to vector<16x128xf32>
    %1291 = arith.mulf %1290, %884 : vector<16x128xf32>
    %1292 = arith.addf %1288, %1291 : vector<16x128xf32>
    %c2_583 = arith.constant 2 : index
    %c21_584 = arith.constant 21 : index
    %1293 = memref.load %arg10[%c2_583, %c21_584] : memref<4x36xf32, #tpu.memory_space<smem>>
    %1294 = vector.broadcast %1293 : f32 to vector<16x128xf32>
    %1295 = arith.mulf %1294, %887 : vector<16x128xf32>
    %1296 = arith.addf %1292, %1295 : vector<16x128xf32>
    %c2_585 = arith.constant 2 : index
    %c22_586 = arith.constant 22 : index
    %1297 = memref.load %arg10[%c2_585, %c22_586] : memref<4x36xf32, #tpu.memory_space<smem>>
    %1298 = vector.broadcast %1297 : f32 to vector<16x128xf32>
    %1299 = arith.mulf %1298, %812 : vector<16x128xf32>
    %1300 = arith.addf %1296, %1299 : vector<16x128xf32>
    %c2_587 = arith.constant 2 : index
    %c23_588 = arith.constant 23 : index
    %1301 = memref.load %arg10[%c2_587, %c23_588] : memref<4x36xf32, #tpu.memory_space<smem>>
    %1302 = vector.broadcast %1301 : f32 to vector<16x128xf32>
    %1303 = arith.mulf %1302, %890 : vector<16x128xf32>
    %1304 = arith.addf %1300, %1303 : vector<16x128xf32>
    %c2_589 = arith.constant 2 : index
    %c24_590 = arith.constant 24 : index
    %1305 = memref.load %arg10[%c2_589, %c24_590] : memref<4x36xf32, #tpu.memory_space<smem>>
    %1306 = vector.broadcast %1305 : f32 to vector<16x128xf32>
    %1307 = arith.mulf %1306, %896 : vector<16x128xf32>
    %1308 = arith.addf %1304, %1307 : vector<16x128xf32>
    %c2_591 = arith.constant 2 : index
    %c25_592 = arith.constant 25 : index
    %1309 = memref.load %arg10[%c2_591, %c25_592] : memref<4x36xf32, #tpu.memory_space<smem>>
    %1310 = vector.broadcast %1309 : f32 to vector<16x128xf32>
    %1311 = arith.mulf %1310, %893 : vector<16x128xf32>
    %1312 = arith.addf %1308, %1311 : vector<16x128xf32>
    %c2_593 = arith.constant 2 : index
    %c26_594 = arith.constant 26 : index
    %1313 = memref.load %arg10[%c2_593, %c26_594] : memref<4x36xf32, #tpu.memory_space<smem>>
    %1314 = vector.broadcast %1313 : f32 to vector<16x128xf32>
    %1315 = arith.mulf %1314, %899 : vector<16x128xf32>
    %1316 = arith.addf %1312, %1315 : vector<16x128xf32>
    %c2_595 = arith.constant 2 : index
    %c27_596 = arith.constant 27 : index
    %1317 = memref.load %arg10[%c2_595, %c27_596] : memref<4x36xf32, #tpu.memory_space<smem>>
    %1318 = vector.broadcast %1317 : f32 to vector<16x128xf32>
    %1319 = arith.mulf %1318, %905 : vector<16x128xf32>
    %1320 = arith.addf %1316, %1319 : vector<16x128xf32>
    %c2_597 = arith.constant 2 : index
    %c28_598 = arith.constant 28 : index
    %1321 = memref.load %arg10[%c2_597, %c28_598] : memref<4x36xf32, #tpu.memory_space<smem>>
    %1322 = vector.broadcast %1321 : f32 to vector<16x128xf32>
    %1323 = arith.mulf %1322, %902 : vector<16x128xf32>
    %1324 = arith.addf %1320, %1323 : vector<16x128xf32>
    %c2_599 = arith.constant 2 : index
    %c29_600 = arith.constant 29 : index
    %1325 = memref.load %arg10[%c2_599, %c29_600] : memref<4x36xf32, #tpu.memory_space<smem>>
    %1326 = vector.broadcast %1325 : f32 to vector<16x128xf32>
    %1327 = arith.mulf %1326, %908 : vector<16x128xf32>
    %1328 = arith.addf %1324, %1327 : vector<16x128xf32>
    %c2_601 = arith.constant 2 : index
    %c30_602 = arith.constant 30 : index
    %1329 = memref.load %arg10[%c2_601, %c30_602] : memref<4x36xf32, #tpu.memory_space<smem>>
    %1330 = vector.broadcast %1329 : f32 to vector<16x128xf32>
    %1331 = arith.mulf %1330, %911 : vector<16x128xf32>
    %1332 = arith.addf %1328, %1331 : vector<16x128xf32>
    %c2_603 = arith.constant 2 : index
    %c31_604 = arith.constant 31 : index
    %1333 = memref.load %arg10[%c2_603, %c31_604] : memref<4x36xf32, #tpu.memory_space<smem>>
    %1334 = vector.broadcast %1333 : f32 to vector<16x128xf32>
    %1335 = arith.mulf %1334, %827 : vector<16x128xf32>
    %1336 = arith.addf %1332, %1335 : vector<16x128xf32>
    %c2_605 = arith.constant 2 : index
    %c32_606 = arith.constant 32 : index
    %1337 = memref.load %arg10[%c2_605, %c32_606] : memref<4x36xf32, #tpu.memory_space<smem>>
    %1338 = vector.broadcast %1337 : f32 to vector<16x128xf32>
    %1339 = arith.mulf %1338, %914 : vector<16x128xf32>
    %1340 = arith.addf %1336, %1339 : vector<16x128xf32>
    %c2_607 = arith.constant 2 : index
    %c33_608 = arith.constant 33 : index
    %1341 = memref.load %arg10[%c2_607, %c33_608] : memref<4x36xf32, #tpu.memory_space<smem>>
    %1342 = vector.broadcast %1341 : f32 to vector<16x128xf32>
    %1343 = arith.mulf %1342, %920 : vector<16x128xf32>
    %1344 = arith.addf %1340, %1343 : vector<16x128xf32>
    %c2_609 = arith.constant 2 : index
    %c34_610 = arith.constant 34 : index
    %1345 = memref.load %arg10[%c2_609, %c34_610] : memref<4x36xf32, #tpu.memory_space<smem>>
    %1346 = vector.broadcast %1345 : f32 to vector<16x128xf32>
    %1347 = arith.mulf %1346, %917 : vector<16x128xf32>
    %1348 = arith.addf %1344, %1347 : vector<16x128xf32>
    %c2_611 = arith.constant 2 : index
    %c35_612 = arith.constant 35 : index
    %1349 = memref.load %arg10[%c2_611, %c35_612] : memref<4x36xf32, #tpu.memory_space<smem>>
    %1350 = vector.broadcast %1349 : f32 to vector<16x128xf32>
    %1351 = arith.mulf %1350, %923 : vector<16x128xf32>
    %1352 = arith.addf %1348, %1351 : vector<16x128xf32>
    %c3_613 = arith.constant 3 : index
    %c0_614 = arith.constant 0 : index
    %1353 = memref.load %arg10[%c3_613, %c0_614] : memref<4x36xf32, #tpu.memory_space<smem>>
    %1354 = vector.broadcast %1353 : f32 to vector<16x128xf32>
    %1355 = arith.mulf %1354, %833 : vector<16x128xf32>
    %c3_615 = arith.constant 3 : index
    %c1_616 = arith.constant 1 : index
    %1356 = memref.load %arg10[%c3_615, %c1_616] : memref<4x36xf32, #tpu.memory_space<smem>>
    %1357 = vector.broadcast %1356 : f32 to vector<16x128xf32>
    %1358 = arith.mulf %1357, %830 : vector<16x128xf32>
    %1359 = arith.addf %1355, %1358 : vector<16x128xf32>
    %c3_617 = arith.constant 3 : index
    %c2_618 = arith.constant 2 : index
    %1360 = memref.load %arg10[%c3_617, %c2_618] : memref<4x36xf32, #tpu.memory_space<smem>>
    %1361 = vector.broadcast %1360 : f32 to vector<16x128xf32>
    %1362 = arith.mulf %1361, %836 : vector<16x128xf32>
    %1363 = arith.addf %1359, %1362 : vector<16x128xf32>
    %c3_619 = arith.constant 3 : index
    %c3_620 = arith.constant 3 : index
    %1364 = memref.load %arg10[%c3_619, %c3_620] : memref<4x36xf32, #tpu.memory_space<smem>>
    %1365 = vector.broadcast %1364 : f32 to vector<16x128xf32>
    %1366 = arith.mulf %1365, %839 : vector<16x128xf32>
    %1367 = arith.addf %1363, %1366 : vector<16x128xf32>
    %c3_621 = arith.constant 3 : index
    %c4_622 = arith.constant 4 : index
    %1368 = memref.load %arg10[%c3_621, %c4_622] : memref<4x36xf32, #tpu.memory_space<smem>>
    %1369 = vector.broadcast %1368 : f32 to vector<16x128xf32>
    %1370 = arith.mulf %1369, %782 : vector<16x128xf32>
    %1371 = arith.addf %1367, %1370 : vector<16x128xf32>
    %c3_623 = arith.constant 3 : index
    %c5_624 = arith.constant 5 : index
    %1372 = memref.load %arg10[%c3_623, %c5_624] : memref<4x36xf32, #tpu.memory_space<smem>>
    %1373 = vector.broadcast %1372 : f32 to vector<16x128xf32>
    %1374 = arith.mulf %1373, %842 : vector<16x128xf32>
    %1375 = arith.addf %1371, %1374 : vector<16x128xf32>
    %c3_625 = arith.constant 3 : index
    %c6_626 = arith.constant 6 : index
    %1376 = memref.load %arg10[%c3_625, %c6_626] : memref<4x36xf32, #tpu.memory_space<smem>>
    %1377 = vector.broadcast %1376 : f32 to vector<16x128xf32>
    %1378 = arith.mulf %1377, %848 : vector<16x128xf32>
    %1379 = arith.addf %1375, %1378 : vector<16x128xf32>
    %c3_627 = arith.constant 3 : index
    %c7_628 = arith.constant 7 : index
    %1380 = memref.load %arg10[%c3_627, %c7_628] : memref<4x36xf32, #tpu.memory_space<smem>>
    %1381 = vector.broadcast %1380 : f32 to vector<16x128xf32>
    %1382 = arith.mulf %1381, %845 : vector<16x128xf32>
    %1383 = arith.addf %1379, %1382 : vector<16x128xf32>
    %c3_629 = arith.constant 3 : index
    %c8_630 = arith.constant 8 : index
    %1384 = memref.load %arg10[%c3_629, %c8_630] : memref<4x36xf32, #tpu.memory_space<smem>>
    %1385 = vector.broadcast %1384 : f32 to vector<16x128xf32>
    %1386 = arith.mulf %1385, %851 : vector<16x128xf32>
    %1387 = arith.addf %1383, %1386 : vector<16x128xf32>
    %c3_631 = arith.constant 3 : index
    %c9_632 = arith.constant 9 : index
    %1388 = memref.load %arg10[%c3_631, %c9_632] : memref<4x36xf32, #tpu.memory_space<smem>>
    %1389 = vector.broadcast %1388 : f32 to vector<16x128xf32>
    %1390 = arith.mulf %1389, %857 : vector<16x128xf32>
    %1391 = arith.addf %1387, %1390 : vector<16x128xf32>
    %c3_633 = arith.constant 3 : index
    %c10_634 = arith.constant 10 : index
    %1392 = memref.load %arg10[%c3_633, %c10_634] : memref<4x36xf32, #tpu.memory_space<smem>>
    %1393 = vector.broadcast %1392 : f32 to vector<16x128xf32>
    %1394 = arith.mulf %1393, %854 : vector<16x128xf32>
    %1395 = arith.addf %1391, %1394 : vector<16x128xf32>
    %c3_635 = arith.constant 3 : index
    %c11_636 = arith.constant 11 : index
    %1396 = memref.load %arg10[%c3_635, %c11_636] : memref<4x36xf32, #tpu.memory_space<smem>>
    %1397 = vector.broadcast %1396 : f32 to vector<16x128xf32>
    %1398 = arith.mulf %1397, %860 : vector<16x128xf32>
    %1399 = arith.addf %1395, %1398 : vector<16x128xf32>
    %c3_637 = arith.constant 3 : index
    %c12_638 = arith.constant 12 : index
    %1400 = memref.load %arg10[%c3_637, %c12_638] : memref<4x36xf32, #tpu.memory_space<smem>>
    %1401 = vector.broadcast %1400 : f32 to vector<16x128xf32>
    %1402 = arith.mulf %1401, %863 : vector<16x128xf32>
    %1403 = arith.addf %1399, %1402 : vector<16x128xf32>
    %c3_639 = arith.constant 3 : index
    %c13_640 = arith.constant 13 : index
    %1404 = memref.load %arg10[%c3_639, %c13_640] : memref<4x36xf32, #tpu.memory_space<smem>>
    %1405 = vector.broadcast %1404 : f32 to vector<16x128xf32>
    %1406 = arith.mulf %1405, %797 : vector<16x128xf32>
    %1407 = arith.addf %1403, %1406 : vector<16x128xf32>
    %c3_641 = arith.constant 3 : index
    %c14_642 = arith.constant 14 : index
    %1408 = memref.load %arg10[%c3_641, %c14_642] : memref<4x36xf32, #tpu.memory_space<smem>>
    %1409 = vector.broadcast %1408 : f32 to vector<16x128xf32>
    %1410 = arith.mulf %1409, %866 : vector<16x128xf32>
    %1411 = arith.addf %1407, %1410 : vector<16x128xf32>
    %c3_643 = arith.constant 3 : index
    %c15_644 = arith.constant 15 : index
    %1412 = memref.load %arg10[%c3_643, %c15_644] : memref<4x36xf32, #tpu.memory_space<smem>>
    %1413 = vector.broadcast %1412 : f32 to vector<16x128xf32>
    %1414 = arith.mulf %1413, %872 : vector<16x128xf32>
    %1415 = arith.addf %1411, %1414 : vector<16x128xf32>
    %c3_645 = arith.constant 3 : index
    %c16_646 = arith.constant 16 : index
    %1416 = memref.load %arg10[%c3_645, %c16_646] : memref<4x36xf32, #tpu.memory_space<smem>>
    %1417 = vector.broadcast %1416 : f32 to vector<16x128xf32>
    %1418 = arith.mulf %1417, %869 : vector<16x128xf32>
    %1419 = arith.addf %1415, %1418 : vector<16x128xf32>
    %c3_647 = arith.constant 3 : index
    %c17_648 = arith.constant 17 : index
    %1420 = memref.load %arg10[%c3_647, %c17_648] : memref<4x36xf32, #tpu.memory_space<smem>>
    %1421 = vector.broadcast %1420 : f32 to vector<16x128xf32>
    %1422 = arith.mulf %1421, %875 : vector<16x128xf32>
    %1423 = arith.addf %1419, %1422 : vector<16x128xf32>
    %c3_649 = arith.constant 3 : index
    %c18_650 = arith.constant 18 : index
    %1424 = memref.load %arg10[%c3_649, %c18_650] : memref<4x36xf32, #tpu.memory_space<smem>>
    %1425 = vector.broadcast %1424 : f32 to vector<16x128xf32>
    %1426 = arith.mulf %1425, %881 : vector<16x128xf32>
    %1427 = arith.addf %1423, %1426 : vector<16x128xf32>
    %c3_651 = arith.constant 3 : index
    %c19_652 = arith.constant 19 : index
    %1428 = memref.load %arg10[%c3_651, %c19_652] : memref<4x36xf32, #tpu.memory_space<smem>>
    %1429 = vector.broadcast %1428 : f32 to vector<16x128xf32>
    %1430 = arith.mulf %1429, %878 : vector<16x128xf32>
    %1431 = arith.addf %1427, %1430 : vector<16x128xf32>
    %c3_653 = arith.constant 3 : index
    %c20_654 = arith.constant 20 : index
    %1432 = memref.load %arg10[%c3_653, %c20_654] : memref<4x36xf32, #tpu.memory_space<smem>>
    %1433 = vector.broadcast %1432 : f32 to vector<16x128xf32>
    %1434 = arith.mulf %1433, %884 : vector<16x128xf32>
    %1435 = arith.addf %1431, %1434 : vector<16x128xf32>
    %c3_655 = arith.constant 3 : index
    %c21_656 = arith.constant 21 : index
    %1436 = memref.load %arg10[%c3_655, %c21_656] : memref<4x36xf32, #tpu.memory_space<smem>>
    %1437 = vector.broadcast %1436 : f32 to vector<16x128xf32>
    %1438 = arith.mulf %1437, %887 : vector<16x128xf32>
    %1439 = arith.addf %1435, %1438 : vector<16x128xf32>
    %c3_657 = arith.constant 3 : index
    %c22_658 = arith.constant 22 : index
    %1440 = memref.load %arg10[%c3_657, %c22_658] : memref<4x36xf32, #tpu.memory_space<smem>>
    %1441 = vector.broadcast %1440 : f32 to vector<16x128xf32>
    %1442 = arith.mulf %1441, %812 : vector<16x128xf32>
    %1443 = arith.addf %1439, %1442 : vector<16x128xf32>
    %c3_659 = arith.constant 3 : index
    %c23_660 = arith.constant 23 : index
    %1444 = memref.load %arg10[%c3_659, %c23_660] : memref<4x36xf32, #tpu.memory_space<smem>>
    %1445 = vector.broadcast %1444 : f32 to vector<16x128xf32>
    %1446 = arith.mulf %1445, %890 : vector<16x128xf32>
    %1447 = arith.addf %1443, %1446 : vector<16x128xf32>
    %c3_661 = arith.constant 3 : index
    %c24_662 = arith.constant 24 : index
    %1448 = memref.load %arg10[%c3_661, %c24_662] : memref<4x36xf32, #tpu.memory_space<smem>>
    %1449 = vector.broadcast %1448 : f32 to vector<16x128xf32>
    %1450 = arith.mulf %1449, %896 : vector<16x128xf32>
    %1451 = arith.addf %1447, %1450 : vector<16x128xf32>
    %c3_663 = arith.constant 3 : index
    %c25_664 = arith.constant 25 : index
    %1452 = memref.load %arg10[%c3_663, %c25_664] : memref<4x36xf32, #tpu.memory_space<smem>>
    %1453 = vector.broadcast %1452 : f32 to vector<16x128xf32>
    %1454 = arith.mulf %1453, %893 : vector<16x128xf32>
    %1455 = arith.addf %1451, %1454 : vector<16x128xf32>
    %c3_665 = arith.constant 3 : index
    %c26_666 = arith.constant 26 : index
    %1456 = memref.load %arg10[%c3_665, %c26_666] : memref<4x36xf32, #tpu.memory_space<smem>>
    %1457 = vector.broadcast %1456 : f32 to vector<16x128xf32>
    %1458 = arith.mulf %1457, %899 : vector<16x128xf32>
    %1459 = arith.addf %1455, %1458 : vector<16x128xf32>
    %c3_667 = arith.constant 3 : index
    %c27_668 = arith.constant 27 : index
    %1460 = memref.load %arg10[%c3_667, %c27_668] : memref<4x36xf32, #tpu.memory_space<smem>>
    %1461 = vector.broadcast %1460 : f32 to vector<16x128xf32>
    %1462 = arith.mulf %1461, %905 : vector<16x128xf32>
    %1463 = arith.addf %1459, %1462 : vector<16x128xf32>
    %c3_669 = arith.constant 3 : index
    %c28_670 = arith.constant 28 : index
    %1464 = memref.load %arg10[%c3_669, %c28_670] : memref<4x36xf32, #tpu.memory_space<smem>>
    %1465 = vector.broadcast %1464 : f32 to vector<16x128xf32>
    %1466 = arith.mulf %1465, %902 : vector<16x128xf32>
    %1467 = arith.addf %1463, %1466 : vector<16x128xf32>
    %c3_671 = arith.constant 3 : index
    %c29_672 = arith.constant 29 : index
    %1468 = memref.load %arg10[%c3_671, %c29_672] : memref<4x36xf32, #tpu.memory_space<smem>>
    %1469 = vector.broadcast %1468 : f32 to vector<16x128xf32>
    %1470 = arith.mulf %1469, %908 : vector<16x128xf32>
    %1471 = arith.addf %1467, %1470 : vector<16x128xf32>
    %c3_673 = arith.constant 3 : index
    %c30_674 = arith.constant 30 : index
    %1472 = memref.load %arg10[%c3_673, %c30_674] : memref<4x36xf32, #tpu.memory_space<smem>>
    %1473 = vector.broadcast %1472 : f32 to vector<16x128xf32>
    %1474 = arith.mulf %1473, %911 : vector<16x128xf32>
    %1475 = arith.addf %1471, %1474 : vector<16x128xf32>
    %c3_675 = arith.constant 3 : index
    %c31_676 = arith.constant 31 : index
    %1476 = memref.load %arg10[%c3_675, %c31_676] : memref<4x36xf32, #tpu.memory_space<smem>>
    %1477 = vector.broadcast %1476 : f32 to vector<16x128xf32>
    %1478 = arith.mulf %1477, %827 : vector<16x128xf32>
    %1479 = arith.addf %1475, %1478 : vector<16x128xf32>
    %c3_677 = arith.constant 3 : index
    %c32_678 = arith.constant 32 : index
    %1480 = memref.load %arg10[%c3_677, %c32_678] : memref<4x36xf32, #tpu.memory_space<smem>>
    %1481 = vector.broadcast %1480 : f32 to vector<16x128xf32>
    %1482 = arith.mulf %1481, %914 : vector<16x128xf32>
    %1483 = arith.addf %1479, %1482 : vector<16x128xf32>
    %c3_679 = arith.constant 3 : index
    %c33_680 = arith.constant 33 : index
    %1484 = memref.load %arg10[%c3_679, %c33_680] : memref<4x36xf32, #tpu.memory_space<smem>>
    %1485 = vector.broadcast %1484 : f32 to vector<16x128xf32>
    %1486 = arith.mulf %1485, %920 : vector<16x128xf32>
    %1487 = arith.addf %1483, %1486 : vector<16x128xf32>
    %c3_681 = arith.constant 3 : index
    %c34_682 = arith.constant 34 : index
    %1488 = memref.load %arg10[%c3_681, %c34_682] : memref<4x36xf32, #tpu.memory_space<smem>>
    %1489 = vector.broadcast %1488 : f32 to vector<16x128xf32>
    %1490 = arith.mulf %1489, %917 : vector<16x128xf32>
    %1491 = arith.addf %1487, %1490 : vector<16x128xf32>
    %c3_683 = arith.constant 3 : index
    %c35_684 = arith.constant 35 : index
    %1492 = memref.load %arg10[%c3_683, %c35_684] : memref<4x36xf32, #tpu.memory_space<smem>>
    %1493 = vector.broadcast %1492 : f32 to vector<16x128xf32>
    %1494 = arith.mulf %1493, %923 : vector<16x128xf32>
    %1495 = arith.addf %1491, %1494 : vector<16x128xf32>
    %1496 = arith.mulf %1066, %1066 : vector<16x128xf32>
    %cst_685 = arith.constant dense<0.000000e+00> : vector<16xf32>
    %1497 = vector.multi_reduction <add>, %1496, %cst_685 [1] : vector<16x128xf32> to vector<16xf32>
    %1498 = vector.shape_cast %1497 : vector<16xf32> to vector<16x1xf32>
    %cst_686 = arith.constant dense<0.000000e+00> : vector<1xf32>
    %1499 = vector.multi_reduction <add>, %1498, %cst_686 [0] : vector<16x1xf32> to vector<1xf32>
    %1500 = vector.shape_cast %1499 : vector<1xf32> to vector<1x1xf32>
    %1501 = math.sqrt %1500 : vector<1x1xf32>
    %cst_687 = arith.constant 9.99999996E-13 : f32
    %1502 = vector.broadcast %cst_687 : f32 to vector<1x1xf32>
    %1503 = arith.maximumf %1501, %1502 : vector<1x1xf32>
    %cst_688 = arith.constant 1.000000e+00 : f32
    %1504 = vector.broadcast %cst_688 : f32 to vector<1x1xf32>
    %1505 = arith.divf %1504, %1503 : vector<1x1xf32>
    %1506 = vector.broadcast %1505 : vector<1x1xf32> to vector<16x128xf32>
    %1507 = arith.mulf %1066, %1506 : vector<16x128xf32>
    %1508 = arith.mulf %1209, %1209 : vector<16x128xf32>
    %cst_689 = arith.constant dense<0.000000e+00> : vector<16xf32>
    %1509 = vector.multi_reduction <add>, %1508, %cst_689 [1] : vector<16x128xf32> to vector<16xf32>
    %1510 = vector.shape_cast %1509 : vector<16xf32> to vector<16x1xf32>
    %cst_690 = arith.constant dense<0.000000e+00> : vector<1xf32>
    %1511 = vector.multi_reduction <add>, %1510, %cst_690 [0] : vector<16x1xf32> to vector<1xf32>
    %1512 = vector.shape_cast %1511 : vector<1xf32> to vector<1x1xf32>
    %1513 = math.sqrt %1512 : vector<1x1xf32>
    %cst_691 = arith.constant 9.99999996E-13 : f32
    %1514 = vector.broadcast %cst_691 : f32 to vector<1x1xf32>
    %1515 = arith.maximumf %1513, %1514 : vector<1x1xf32>
    %cst_692 = arith.constant 1.000000e+00 : f32
    %1516 = vector.broadcast %cst_692 : f32 to vector<1x1xf32>
    %1517 = arith.divf %1516, %1515 : vector<1x1xf32>
    %1518 = vector.broadcast %1517 : vector<1x1xf32> to vector<16x128xf32>
    %1519 = arith.mulf %1209, %1518 : vector<16x128xf32>
    %1520 = arith.mulf %354, %354 : vector<16x128xf32>
    %cst_693 = arith.constant dense<0.000000e+00> : vector<16xf32>
    %1521 = vector.multi_reduction <add>, %1520, %cst_693 [1] : vector<16x128xf32> to vector<16xf32>
    %1522 = vector.shape_cast %1521 : vector<16xf32> to vector<16x1xf32>
    %cst_694 = arith.constant dense<0.000000e+00> : vector<1xf32>
    %1523 = vector.multi_reduction <add>, %1522, %cst_694 [0] : vector<16x1xf32> to vector<1xf32>
    %1524 = vector.shape_cast %1523 : vector<1xf32> to vector<1x1xf32>
    %1525 = math.sqrt %1524 : vector<1x1xf32>
    %cst_695 = arith.constant 9.99999996E-13 : f32
    %1526 = vector.broadcast %cst_695 : f32 to vector<1x1xf32>
    %1527 = arith.maximumf %1525, %1526 : vector<1x1xf32>
    %cst_696 = arith.constant 1.000000e+00 : f32
    %1528 = vector.broadcast %cst_696 : f32 to vector<1x1xf32>
    %1529 = arith.divf %1528, %1527 : vector<1x1xf32>
    %1530 = vector.broadcast %1529 : vector<1x1xf32> to vector<16x128xf32>
    %1531 = arith.mulf %354, %1530 : vector<16x128xf32>
    %1532 = arith.mulf %413, %413 : vector<16x128xf32>
    %cst_697 = arith.constant dense<0.000000e+00> : vector<16xf32>
    %1533 = vector.multi_reduction <add>, %1532, %cst_697 [1] : vector<16x128xf32> to vector<16xf32>
    %1534 = vector.shape_cast %1533 : vector<16xf32> to vector<16x1xf32>
    %cst_698 = arith.constant dense<0.000000e+00> : vector<1xf32>
    %1535 = vector.multi_reduction <add>, %1534, %cst_698 [0] : vector<16x1xf32> to vector<1xf32>
    %1536 = vector.shape_cast %1535 : vector<1xf32> to vector<1x1xf32>
    %1537 = math.sqrt %1536 : vector<1x1xf32>
    %cst_699 = arith.constant 9.99999996E-13 : f32
    %1538 = vector.broadcast %cst_699 : f32 to vector<1x1xf32>
    %1539 = arith.maximumf %1537, %1538 : vector<1x1xf32>
    %cst_700 = arith.constant 1.000000e+00 : f32
    %1540 = vector.broadcast %cst_700 : f32 to vector<1x1xf32>
    %1541 = arith.divf %1540, %1539 : vector<1x1xf32>
    %1542 = vector.broadcast %1541 : vector<1x1xf32> to vector<16x128xf32>
    %1543 = arith.mulf %413, %1542 : vector<16x128xf32>
    %c0_701 = arith.constant 0 : index
    %c0_702 = arith.constant 0 : index
    %1544 = memref.load %arg11[%c0_701, %c0_702] : memref<1x2xf32, #tpu.memory_space<smem>>
    %1545 = arith.mulf %1507, %1531 : vector<16x128xf32>
    %cst_703 = arith.constant dense<0.000000e+00> : vector<16xf32>
    %1546 = vector.multi_reduction <add>, %1545, %cst_703 [1] : vector<16x128xf32> to vector<16xf32>
    %1547 = vector.shape_cast %1546 : vector<16xf32> to vector<16x1xf32>
    %cst_704 = arith.constant dense<0.000000e+00> : vector<1xf32>
    %1548 = vector.multi_reduction <add>, %1547, %cst_704 [0] : vector<16x1xf32> to vector<1xf32>
    %1549 = vector.shape_cast %1548 : vector<1xf32> to vector<1x1xf32>
    %1550 = vector.broadcast %1544 : f32 to vector<1x1xf32>
    %1551 = arith.mulf %1550, %1549 : vector<1x1xf32>
    %1552 = arith.mulf %1507, %1543 : vector<16x128xf32>
    %cst_705 = arith.constant dense<0.000000e+00> : vector<16xf32>
    %1553 = vector.multi_reduction <add>, %1552, %cst_705 [1] : vector<16x128xf32> to vector<16xf32>
    %1554 = vector.shape_cast %1553 : vector<16xf32> to vector<16x1xf32>
    %cst_706 = arith.constant dense<0.000000e+00> : vector<1xf32>
    %1555 = vector.multi_reduction <add>, %1554, %cst_706 [0] : vector<16x1xf32> to vector<1xf32>
    %1556 = vector.shape_cast %1555 : vector<1xf32> to vector<1x1xf32>
    %1557 = vector.broadcast %1544 : f32 to vector<1x1xf32>
    %1558 = arith.mulf %1557, %1556 : vector<1x1xf32>
    %1559 = arith.maximumf %1551, %1558 : vector<1x1xf32>
    %1560 = arith.subf %1551, %1559 : vector<1x1xf32>
    %1561 = math.exp %1560 : vector<1x1xf32>
    %1562 = arith.subf %1558, %1559 : vector<1x1xf32>
    %1563 = math.exp %1562 : vector<1x1xf32>
    %1564 = arith.addf %1561, %1563 : vector<1x1xf32>
    %cst_707 = arith.constant 1.000000e+00 : f32
    %1565 = vector.broadcast %cst_707 : f32 to vector<1x1xf32>
    %1566 = arith.divf %1565, %1564 : vector<1x1xf32>
    %1567 = arith.mulf %1561, %1566 : vector<1x1xf32>
    %1568 = vector.broadcast %1567 : vector<1x1xf32> to vector<16x128xf32>
    %1569 = arith.mulf %1568, %590 : vector<16x128xf32>
    %1570 = arith.mulf %1563, %1566 : vector<1x1xf32>
    %1571 = vector.broadcast %1570 : vector<1x1xf32> to vector<16x128xf32>
    %1572 = arith.mulf %1571, %649 : vector<16x128xf32>
    %1573 = arith.addf %1569, %1572 : vector<16x128xf32>
    %1574 = arith.mulf %1519, %1531 : vector<16x128xf32>
    %cst_708 = arith.constant dense<0.000000e+00> : vector<16xf32>
    %1575 = vector.multi_reduction <add>, %1574, %cst_708 [1] : vector<16x128xf32> to vector<16xf32>
    %1576 = vector.shape_cast %1575 : vector<16xf32> to vector<16x1xf32>
    %cst_709 = arith.constant dense<0.000000e+00> : vector<1xf32>
    %1577 = vector.multi_reduction <add>, %1576, %cst_709 [0] : vector<16x1xf32> to vector<1xf32>
    %1578 = vector.shape_cast %1577 : vector<1xf32> to vector<1x1xf32>
    %1579 = vector.broadcast %1544 : f32 to vector<1x1xf32>
    %1580 = arith.mulf %1579, %1578 : vector<1x1xf32>
    %1581 = arith.mulf %1519, %1543 : vector<16x128xf32>
    %cst_710 = arith.constant dense<0.000000e+00> : vector<16xf32>
    %1582 = vector.multi_reduction <add>, %1581, %cst_710 [1] : vector<16x128xf32> to vector<16xf32>
    %1583 = vector.shape_cast %1582 : vector<16xf32> to vector<16x1xf32>
    %cst_711 = arith.constant dense<0.000000e+00> : vector<1xf32>
    %1584 = vector.multi_reduction <add>, %1583, %cst_711 [0] : vector<16x1xf32> to vector<1xf32>
    %1585 = vector.shape_cast %1584 : vector<1xf32> to vector<1x1xf32>
    %1586 = vector.broadcast %1544 : f32 to vector<1x1xf32>
    %1587 = arith.mulf %1586, %1585 : vector<1x1xf32>
    %1588 = arith.maximumf %1580, %1587 : vector<1x1xf32>
    %1589 = arith.subf %1580, %1588 : vector<1x1xf32>
    %1590 = math.exp %1589 : vector<1x1xf32>
    %1591 = arith.subf %1587, %1588 : vector<1x1xf32>
    %1592 = math.exp %1591 : vector<1x1xf32>
    %1593 = arith.addf %1590, %1592 : vector<1x1xf32>
    %cst_712 = arith.constant 1.000000e+00 : f32
    %1594 = vector.broadcast %cst_712 : f32 to vector<1x1xf32>
    %1595 = arith.divf %1594, %1593 : vector<1x1xf32>
    %1596 = arith.mulf %1590, %1595 : vector<1x1xf32>
    %1597 = vector.broadcast %1596 : vector<1x1xf32> to vector<16x128xf32>
    %1598 = arith.mulf %1597, %590 : vector<16x128xf32>
    %1599 = arith.mulf %1592, %1595 : vector<1x1xf32>
    %1600 = vector.broadcast %1599 : vector<1x1xf32> to vector<16x128xf32>
    %1601 = arith.mulf %1600, %649 : vector<16x128xf32>
    %1602 = arith.addf %1598, %1601 : vector<16x128xf32>
    %1603 = arith.mulf %1352, %1352 : vector<16x128xf32>
    %cst_713 = arith.constant dense<0.000000e+00> : vector<16xf32>
    %1604 = vector.multi_reduction <add>, %1603, %cst_713 [1] : vector<16x128xf32> to vector<16xf32>
    %1605 = vector.shape_cast %1604 : vector<16xf32> to vector<16x1xf32>
    %cst_714 = arith.constant dense<0.000000e+00> : vector<1xf32>
    %1606 = vector.multi_reduction <add>, %1605, %cst_714 [0] : vector<16x1xf32> to vector<1xf32>
    %1607 = vector.shape_cast %1606 : vector<1xf32> to vector<1x1xf32>
    %1608 = math.sqrt %1607 : vector<1x1xf32>
    %cst_715 = arith.constant 9.99999996E-13 : f32
    %1609 = vector.broadcast %cst_715 : f32 to vector<1x1xf32>
    %1610 = arith.maximumf %1608, %1609 : vector<1x1xf32>
    %cst_716 = arith.constant 1.000000e+00 : f32
    %1611 = vector.broadcast %cst_716 : f32 to vector<1x1xf32>
    %1612 = arith.divf %1611, %1610 : vector<1x1xf32>
    %1613 = vector.broadcast %1612 : vector<1x1xf32> to vector<16x128xf32>
    %1614 = arith.mulf %1352, %1613 : vector<16x128xf32>
    %1615 = arith.mulf %1495, %1495 : vector<16x128xf32>
    %cst_717 = arith.constant dense<0.000000e+00> : vector<16xf32>
    %1616 = vector.multi_reduction <add>, %1615, %cst_717 [1] : vector<16x128xf32> to vector<16xf32>
    %1617 = vector.shape_cast %1616 : vector<16xf32> to vector<16x1xf32>
    %cst_718 = arith.constant dense<0.000000e+00> : vector<1xf32>
    %1618 = vector.multi_reduction <add>, %1617, %cst_718 [0] : vector<16x1xf32> to vector<1xf32>
    %1619 = vector.shape_cast %1618 : vector<1xf32> to vector<1x1xf32>
    %1620 = math.sqrt %1619 : vector<1x1xf32>
    %cst_719 = arith.constant 9.99999996E-13 : f32
    %1621 = vector.broadcast %cst_719 : f32 to vector<1x1xf32>
    %1622 = arith.maximumf %1620, %1621 : vector<1x1xf32>
    %cst_720 = arith.constant 1.000000e+00 : f32
    %1623 = vector.broadcast %cst_720 : f32 to vector<1x1xf32>
    %1624 = arith.divf %1623, %1622 : vector<1x1xf32>
    %1625 = vector.broadcast %1624 : vector<1x1xf32> to vector<16x128xf32>
    %1626 = arith.mulf %1495, %1625 : vector<16x128xf32>
    %1627 = arith.mulf %472, %472 : vector<16x128xf32>
    %cst_721 = arith.constant dense<0.000000e+00> : vector<16xf32>
    %1628 = vector.multi_reduction <add>, %1627, %cst_721 [1] : vector<16x128xf32> to vector<16xf32>
    %1629 = vector.shape_cast %1628 : vector<16xf32> to vector<16x1xf32>
    %cst_722 = arith.constant dense<0.000000e+00> : vector<1xf32>
    %1630 = vector.multi_reduction <add>, %1629, %cst_722 [0] : vector<16x1xf32> to vector<1xf32>
    %1631 = vector.shape_cast %1630 : vector<1xf32> to vector<1x1xf32>
    %1632 = math.sqrt %1631 : vector<1x1xf32>
    %cst_723 = arith.constant 9.99999996E-13 : f32
    %1633 = vector.broadcast %cst_723 : f32 to vector<1x1xf32>
    %1634 = arith.maximumf %1632, %1633 : vector<1x1xf32>
    %cst_724 = arith.constant 1.000000e+00 : f32
    %1635 = vector.broadcast %cst_724 : f32 to vector<1x1xf32>
    %1636 = arith.divf %1635, %1634 : vector<1x1xf32>
    %1637 = vector.broadcast %1636 : vector<1x1xf32> to vector<16x128xf32>
    %1638 = arith.mulf %472, %1637 : vector<16x128xf32>
    %1639 = arith.mulf %531, %531 : vector<16x128xf32>
    %cst_725 = arith.constant dense<0.000000e+00> : vector<16xf32>
    %1640 = vector.multi_reduction <add>, %1639, %cst_725 [1] : vector<16x128xf32> to vector<16xf32>
    %1641 = vector.shape_cast %1640 : vector<16xf32> to vector<16x1xf32>
    %cst_726 = arith.constant dense<0.000000e+00> : vector<1xf32>
    %1642 = vector.multi_reduction <add>, %1641, %cst_726 [0] : vector<16x1xf32> to vector<1xf32>
    %1643 = vector.shape_cast %1642 : vector<1xf32> to vector<1x1xf32>
    %1644 = math.sqrt %1643 : vector<1x1xf32>
    %cst_727 = arith.constant 9.99999996E-13 : f32
    %1645 = vector.broadcast %cst_727 : f32 to vector<1x1xf32>
    %1646 = arith.maximumf %1644, %1645 : vector<1x1xf32>
    %cst_728 = arith.constant 1.000000e+00 : f32
    %1647 = vector.broadcast %cst_728 : f32 to vector<1x1xf32>
    %1648 = arith.divf %1647, %1646 : vector<1x1xf32>
    %1649 = vector.broadcast %1648 : vector<1x1xf32> to vector<16x128xf32>
    %1650 = arith.mulf %531, %1649 : vector<16x128xf32>
    %c0_729 = arith.constant 0 : index
    %c1_730 = arith.constant 1 : index
    %1651 = memref.load %arg11[%c0_729, %c1_730] : memref<1x2xf32, #tpu.memory_space<smem>>
    %1652 = arith.mulf %1614, %1638 : vector<16x128xf32>
    %cst_731 = arith.constant dense<0.000000e+00> : vector<16xf32>
    %1653 = vector.multi_reduction <add>, %1652, %cst_731 [1] : vector<16x128xf32> to vector<16xf32>
    %1654 = vector.shape_cast %1653 : vector<16xf32> to vector<16x1xf32>
    %cst_732 = arith.constant dense<0.000000e+00> : vector<1xf32>
    %1655 = vector.multi_reduction <add>, %1654, %cst_732 [0] : vector<16x1xf32> to vector<1xf32>
    %1656 = vector.shape_cast %1655 : vector<1xf32> to vector<1x1xf32>
    %1657 = vector.broadcast %1651 : f32 to vector<1x1xf32>
    %1658 = arith.mulf %1657, %1656 : vector<1x1xf32>
    %1659 = arith.mulf %1614, %1650 : vector<16x128xf32>
    %cst_733 = arith.constant dense<0.000000e+00> : vector<16xf32>
    %1660 = vector.multi_reduction <add>, %1659, %cst_733 [1] : vector<16x128xf32> to vector<16xf32>
    %1661 = vector.shape_cast %1660 : vector<16xf32> to vector<16x1xf32>
    %cst_734 = arith.constant dense<0.000000e+00> : vector<1xf32>
    %1662 = vector.multi_reduction <add>, %1661, %cst_734 [0] : vector<16x1xf32> to vector<1xf32>
    %1663 = vector.shape_cast %1662 : vector<1xf32> to vector<1x1xf32>
    %1664 = vector.broadcast %1651 : f32 to vector<1x1xf32>
    %1665 = arith.mulf %1664, %1663 : vector<1x1xf32>
    %1666 = arith.maximumf %1658, %1665 : vector<1x1xf32>
    %1667 = arith.subf %1658, %1666 : vector<1x1xf32>
    %1668 = math.exp %1667 : vector<1x1xf32>
    %1669 = arith.subf %1665, %1666 : vector<1x1xf32>
    %1670 = math.exp %1669 : vector<1x1xf32>
    %1671 = arith.addf %1668, %1670 : vector<1x1xf32>
    %cst_735 = arith.constant 1.000000e+00 : f32
    %1672 = vector.broadcast %cst_735 : f32 to vector<1x1xf32>
    %1673 = arith.divf %1672, %1671 : vector<1x1xf32>
    %1674 = arith.mulf %1668, %1673 : vector<1x1xf32>
    %1675 = vector.broadcast %1674 : vector<1x1xf32> to vector<16x128xf32>
    %1676 = arith.mulf %1675, %708 : vector<16x128xf32>
    %1677 = arith.mulf %1670, %1673 : vector<1x1xf32>
    %1678 = vector.broadcast %1677 : vector<1x1xf32> to vector<16x128xf32>
    %1679 = arith.mulf %1678, %767 : vector<16x128xf32>
    %1680 = arith.addf %1676, %1679 : vector<16x128xf32>
    %1681 = arith.mulf %1626, %1638 : vector<16x128xf32>
    %cst_736 = arith.constant dense<0.000000e+00> : vector<16xf32>
    %1682 = vector.multi_reduction <add>, %1681, %cst_736 [1] : vector<16x128xf32> to vector<16xf32>
    %1683 = vector.shape_cast %1682 : vector<16xf32> to vector<16x1xf32>
    %cst_737 = arith.constant dense<0.000000e+00> : vector<1xf32>
    %1684 = vector.multi_reduction <add>, %1683, %cst_737 [0] : vector<16x1xf32> to vector<1xf32>
    %1685 = vector.shape_cast %1684 : vector<1xf32> to vector<1x1xf32>
    %1686 = vector.broadcast %1651 : f32 to vector<1x1xf32>
    %1687 = arith.mulf %1686, %1685 : vector<1x1xf32>
    %1688 = arith.mulf %1626, %1650 : vector<16x128xf32>
    %cst_738 = arith.constant dense<0.000000e+00> : vector<16xf32>
    %1689 = vector.multi_reduction <add>, %1688, %cst_738 [1] : vector<16x128xf32> to vector<16xf32>
    %1690 = vector.shape_cast %1689 : vector<16xf32> to vector<16x1xf32>
    %cst_739 = arith.constant dense<0.000000e+00> : vector<1xf32>
    %1691 = vector.multi_reduction <add>, %1690, %cst_739 [0] : vector<16x1xf32> to vector<1xf32>
    %1692 = vector.shape_cast %1691 : vector<1xf32> to vector<1x1xf32>
    %1693 = vector.broadcast %1651 : f32 to vector<1x1xf32>
    %1694 = arith.mulf %1693, %1692 : vector<1x1xf32>
    %1695 = arith.maximumf %1687, %1694 : vector<1x1xf32>
    %1696 = arith.subf %1687, %1695 : vector<1x1xf32>
    %1697 = math.exp %1696 : vector<1x1xf32>
    %1698 = arith.subf %1694, %1695 : vector<1x1xf32>
    %1699 = math.exp %1698 : vector<1x1xf32>
    %1700 = arith.addf %1697, %1699 : vector<1x1xf32>
    %cst_740 = arith.constant 1.000000e+00 : f32
    %1701 = vector.broadcast %cst_740 : f32 to vector<1x1xf32>
    %1702 = arith.divf %1701, %1700 : vector<1x1xf32>
    %1703 = arith.mulf %1697, %1702 : vector<1x1xf32>
    %1704 = vector.broadcast %1703 : vector<1x1xf32> to vector<16x128xf32>
    %1705 = arith.mulf %1704, %708 : vector<16x128xf32>
    %1706 = arith.mulf %1699, %1702 : vector<1x1xf32>
    %1707 = vector.broadcast %1706 : vector<1x1xf32> to vector<16x128xf32>
    %1708 = arith.mulf %1707, %767 : vector<16x128xf32>
    %1709 = arith.addf %1705, %1708 : vector<16x128xf32>
    %c0_741 = arith.constant 0 : index
    %c0_742 = arith.constant 0 : index
    %1710 = memref.load %arg12[%c0_741, %c0_742] : memref<4x4xf32, #tpu.memory_space<smem>>
    %1711 = vector.broadcast %1710 : f32 to vector<16x128xf32>
    %1712 = arith.mulf %1711, %1573 : vector<16x128xf32>
    %c0_743 = arith.constant 0 : index
    %c1_744 = arith.constant 1 : index
    %1713 = memref.load %arg12[%c0_743, %c1_744] : memref<4x4xf32, #tpu.memory_space<smem>>
    %1714 = vector.broadcast %1713 : f32 to vector<16x128xf32>
    %1715 = arith.mulf %1714, %1602 : vector<16x128xf32>
    %1716 = arith.addf %1712, %1715 : vector<16x128xf32>
    %c0_745 = arith.constant 0 : index
    %c2_746 = arith.constant 2 : index
    %1717 = memref.load %arg12[%c0_745, %c2_746] : memref<4x4xf32, #tpu.memory_space<smem>>
    %1718 = vector.broadcast %1717 : f32 to vector<16x128xf32>
    %1719 = arith.mulf %1718, %1680 : vector<16x128xf32>
    %1720 = arith.addf %1716, %1719 : vector<16x128xf32>
    %c0_747 = arith.constant 0 : index
    %c3_748 = arith.constant 3 : index
    %1721 = memref.load %arg12[%c0_747, %c3_748] : memref<4x4xf32, #tpu.memory_space<smem>>
    %1722 = vector.broadcast %1721 : f32 to vector<16x128xf32>
    %1723 = arith.mulf %1722, %1709 : vector<16x128xf32>
    %1724 = arith.addf %1720, %1723 : vector<16x128xf32>
    %c1_749 = arith.constant 1 : index
    %c0_750 = arith.constant 0 : index
    %1725 = memref.load %arg12[%c1_749, %c0_750] : memref<4x4xf32, #tpu.memory_space<smem>>
    %1726 = vector.broadcast %1725 : f32 to vector<16x128xf32>
    %1727 = arith.mulf %1726, %1573 : vector<16x128xf32>
    %c1_751 = arith.constant 1 : index
    %c1_752 = arith.constant 1 : index
    %1728 = memref.load %arg12[%c1_751, %c1_752] : memref<4x4xf32, #tpu.memory_space<smem>>
    %1729 = vector.broadcast %1728 : f32 to vector<16x128xf32>
    %1730 = arith.mulf %1729, %1602 : vector<16x128xf32>
    %1731 = arith.addf %1727, %1730 : vector<16x128xf32>
    %c1_753 = arith.constant 1 : index
    %c2_754 = arith.constant 2 : index
    %1732 = memref.load %arg12[%c1_753, %c2_754] : memref<4x4xf32, #tpu.memory_space<smem>>
    %1733 = vector.broadcast %1732 : f32 to vector<16x128xf32>
    %1734 = arith.mulf %1733, %1680 : vector<16x128xf32>
    %1735 = arith.addf %1731, %1734 : vector<16x128xf32>
    %c1_755 = arith.constant 1 : index
    %c3_756 = arith.constant 3 : index
    %1736 = memref.load %arg12[%c1_755, %c3_756] : memref<4x4xf32, #tpu.memory_space<smem>>
    %1737 = vector.broadcast %1736 : f32 to vector<16x128xf32>
    %1738 = arith.mulf %1737, %1709 : vector<16x128xf32>
    %1739 = arith.addf %1735, %1738 : vector<16x128xf32>
    %c2_757 = arith.constant 2 : index
    %c0_758 = arith.constant 0 : index
    %1740 = memref.load %arg12[%c2_757, %c0_758] : memref<4x4xf32, #tpu.memory_space<smem>>
    %1741 = vector.broadcast %1740 : f32 to vector<16x128xf32>
    %1742 = arith.mulf %1741, %1573 : vector<16x128xf32>
    %c2_759 = arith.constant 2 : index
    %c1_760 = arith.constant 1 : index
    %1743 = memref.load %arg12[%c2_759, %c1_760] : memref<4x4xf32, #tpu.memory_space<smem>>
    %1744 = vector.broadcast %1743 : f32 to vector<16x128xf32>
    %1745 = arith.mulf %1744, %1602 : vector<16x128xf32>
    %1746 = arith.addf %1742, %1745 : vector<16x128xf32>
    %c2_761 = arith.constant 2 : index
    %c2_762 = arith.constant 2 : index
    %1747 = memref.load %arg12[%c2_761, %c2_762] : memref<4x4xf32, #tpu.memory_space<smem>>
    %1748 = vector.broadcast %1747 : f32 to vector<16x128xf32>
    %1749 = arith.mulf %1748, %1680 : vector<16x128xf32>
    %1750 = arith.addf %1746, %1749 : vector<16x128xf32>
    %c2_763 = arith.constant 2 : index
    %c3_764 = arith.constant 3 : index
    %1751 = memref.load %arg12[%c2_763, %c3_764] : memref<4x4xf32, #tpu.memory_space<smem>>
    %1752 = vector.broadcast %1751 : f32 to vector<16x128xf32>
    %1753 = arith.mulf %1752, %1709 : vector<16x128xf32>
    %1754 = arith.addf %1750, %1753 : vector<16x128xf32>
    %c3_765 = arith.constant 3 : index
    %c0_766 = arith.constant 0 : index
    %1755 = memref.load %arg12[%c3_765, %c0_766] : memref<4x4xf32, #tpu.memory_space<smem>>
    %1756 = vector.broadcast %1755 : f32 to vector<16x128xf32>
    %1757 = arith.mulf %1756, %1573 : vector<16x128xf32>
    %c3_767 = arith.constant 3 : index
    %c1_768 = arith.constant 1 : index
    %1758 = memref.load %arg12[%c3_767, %c1_768] : memref<4x4xf32, #tpu.memory_space<smem>>
    %1759 = vector.broadcast %1758 : f32 to vector<16x128xf32>
    %1760 = arith.mulf %1759, %1602 : vector<16x128xf32>
    %1761 = arith.addf %1757, %1760 : vector<16x128xf32>
    %c3_769 = arith.constant 3 : index
    %c2_770 = arith.constant 2 : index
    %1762 = memref.load %arg12[%c3_769, %c2_770] : memref<4x4xf32, #tpu.memory_space<smem>>
    %1763 = vector.broadcast %1762 : f32 to vector<16x128xf32>
    %1764 = arith.mulf %1763, %1680 : vector<16x128xf32>
    %1765 = arith.addf %1761, %1764 : vector<16x128xf32>
    %c3_771 = arith.constant 3 : index
    %c3_772 = arith.constant 3 : index
    %1766 = memref.load %arg12[%c3_771, %c3_772] : memref<4x4xf32, #tpu.memory_space<smem>>
    %1767 = vector.broadcast %1766 : f32 to vector<16x128xf32>
    %1768 = arith.mulf %1767, %1709 : vector<16x128xf32>
    %1769 = arith.addf %1765, %1768 : vector<16x128xf32>
    %1770 = arith.addf %151, %1724 : vector<16x128xf32>
    %c0_773 = arith.constant 0 : index
    %c0_774 = arith.constant 0 : index
    %c0_775 = arith.constant 0 : index
    %c0_776 = arith.constant 0 : index
    %1771 = vector.load %arg13[%c0_773, %c0_774, %c0_775, %c0_776] : memref<1x4x16x128xf32, #tpu.memory_space<vmem>>, vector<1x1x16x128xf32>
    %1772 = vector.shape_cast %1771 : vector<1x1x16x128xf32> to vector<16x128xf32>
    %1773 = vector.shape_cast %1770 : vector<16x128xf32> to vector<1x1x16x128xf32>
    tpu.vector_store %arg13[%c0_773, %c0_774, %c0_775, %c0_776], %1773 {strides = array<i32>} : memref<1x4x16x128xf32, #tpu.memory_space<vmem>>, vector<1x1x16x128xf32>,
    %1774 = arith.addf %159, %1739 : vector<16x128xf32>
    %c0_777 = arith.constant 0 : index
    %c1_778 = arith.constant 1 : index
    %c0_779 = arith.constant 0 : index
    %c0_780 = arith.constant 0 : index
    %1775 = vector.load %arg13[%c0_777, %c1_778, %c0_779, %c0_780] : memref<1x4x16x128xf32, #tpu.memory_space<vmem>>, vector<1x1x16x128xf32>
    %1776 = vector.shape_cast %1775 : vector<1x1x16x128xf32> to vector<16x128xf32>
    %1777 = vector.shape_cast %1774 : vector<16x128xf32> to vector<1x1x16x128xf32>
    tpu.vector_store %arg13[%c0_777, %c1_778, %c0_779, %c0_780], %1777 {strides = array<i32>} : memref<1x4x16x128xf32, #tpu.memory_space<vmem>>, vector<1x1x16x128xf32>,
    %1778 = arith.addf %167, %1754 : vector<16x128xf32>
    %c0_781 = arith.constant 0 : index
    %c2_782 = arith.constant 2 : index
    %c0_783 = arith.constant 0 : index
    %c0_784 = arith.constant 0 : index
    %1779 = vector.load %arg13[%c0_781, %c2_782, %c0_783, %c0_784] : memref<1x4x16x128xf32, #tpu.memory_space<vmem>>, vector<1x1x16x128xf32>
    %1780 = vector.shape_cast %1779 : vector<1x1x16x128xf32> to vector<16x128xf32>
    %1781 = vector.shape_cast %1778 : vector<16x128xf32> to vector<1x1x16x128xf32>
    tpu.vector_store %arg13[%c0_781, %c2_782, %c0_783, %c0_784], %1781 {strides = array<i32>} : memref<1x4x16x128xf32, #tpu.memory_space<vmem>>, vector<1x1x16x128xf32>,
    %1782 = arith.addf %175, %1769 : vector<16x128xf32>
    %c0_785 = arith.constant 0 : index
    %c3_786 = arith.constant 3 : index
    %c0_787 = arith.constant 0 : index
    %c0_788 = arith.constant 0 : index
    %1783 = vector.load %arg13[%c0_785, %c3_786, %c0_787, %c0_788] : memref<1x4x16x128xf32, #tpu.memory_space<vmem>>, vector<1x1x16x128xf32>
    %1784 = vector.shape_cast %1783 : vector<1x1x16x128xf32> to vector<16x128xf32>
    %1785 = vector.shape_cast %1782 : vector<16x128xf32> to vector<1x1x16x128xf32>
    tpu.vector_store %arg13[%c0_785, %c3_786, %c0_787, %c0_788], %1785 {strides = array<i32>} : memref<1x4x16x128xf32, #tpu.memory_space<vmem>>, vector<1x1x16x128xf32>,
    return
  }
  func.func @transform_0(%arg0: i32) -> (i32, i32, i32, i32) {
    %c0_i32 = arith.constant 0 : i32
    %c0_i32_0 = arith.constant 0 : i32
    %c0_i32_1 = arith.constant 0 : i32
    %c0_i32_2 = arith.constant 0 : i32
    return %arg0, %c0_i32, %c0_i32_0, %c0_i32_1 : i32, i32, i32, i32
  }
  func.func @transform_1(%arg0: i32) -> (i32, i32, i32, i32) {
    %c0_i32 = arith.constant 0 : i32
    %c0_i32_0 = arith.constant 0 : i32
    %c0_i32_1 = arith.constant 0 : i32
    %c0_i32_2 = arith.constant 0 : i32
    return %arg0, %c0_i32, %c0_i32_0, %c0_i32_1 : i32, i32, i32, i32
  }
  func.func @transform_2(%arg0: i32) -> (i32, i32) {
    %c0_i32 = arith.constant 0 : i32
    %c0_i32_0 = arith.constant 0 : i32
    %c0_i32_1 = arith.constant 0 : i32
    return %c0_i32, %c0_i32_0 : i32, i32
  }
  func.func @transform_3(%arg0: i32) -> (i32, i32) {
    %c0_i32 = arith.constant 0 : i32
    %c0_i32_0 = arith.constant 0 : i32
    %c0_i32_1 = arith.constant 0 : i32
    return %c0_i32, %c0_i32_0 : i32, i32
  }
  func.func @transform_4(%arg0: i32) -> (i32, i32) {
    %c0_i32 = arith.constant 0 : i32
    %c0_i32_0 = arith.constant 0 : i32
    %c0_i32_1 = arith.constant 0 : i32
    return %c0_i32, %c0_i32_0 : i32, i32
  }
  func.func @transform_5(%arg0: i32) -> (i32, i32) {
    %c0_i32 = arith.constant 0 : i32
    %c0_i32_0 = arith.constant 0 : i32
    %c0_i32_1 = arith.constant 0 : i32
    return %c0_i32, %c0_i32_0 : i32, i32
  }
  func.func @transform_6(%arg0: i32) -> (i32, i32) {
    %c0_i32 = arith.constant 0 : i32
    %c0_i32_0 = arith.constant 0 : i32
    %c0_i32_1 = arith.constant 0 : i32
    return %c0_i32, %c0_i32_0 : i32, i32
  }
  func.func @transform_7(%arg0: i32) -> (i32, i32) {
    %c0_i32 = arith.constant 0 : i32
    %c0_i32_0 = arith.constant 0 : i32
    %c0_i32_1 = arith.constant 0 : i32
    return %c0_i32, %c0_i32_0 : i32, i32
  }
  func.func @transform_8(%arg0: i32) -> (i32, i32) {
    %c0_i32 = arith.constant 0 : i32
    %c0_i32_0 = arith.constant 0 : i32
    %c0_i32_1 = arith.constant 0 : i32
    return %c0_i32, %c0_i32_0 : i32, i32
  }
  func.func @transform_9(%arg0: i32) -> (i32, i32) {
    %c0_i32 = arith.constant 0 : i32
    %c0_i32_0 = arith.constant 0 : i32
    %c0_i32_1 = arith.constant 0 : i32
    return %c0_i32, %c0_i32_0 : i32, i32
  }
  func.func @transform_10(%arg0: i32) -> (i32, i32) {
    %c0_i32 = arith.constant 0 : i32
    %c0_i32_0 = arith.constant 0 : i32
    %c0_i32_1 = arith.constant 0 : i32
    return %c0_i32, %c0_i32_0 : i32, i32
  }
  func.func @transform_11(%arg0: i32) -> (i32, i32) {
    %c0_i32 = arith.constant 0 : i32
    %c0_i32_0 = arith.constant 0 : i32
    %c0_i32_1 = arith.constant 0 : i32
    return %c0_i32, %c0_i32_0 : i32, i32
  }
  func.func @transform_12(%arg0: i32) -> (i32, i32, i32, i32) {
    %c0_i32 = arith.constant 0 : i32
    %c0_i32_0 = arith.constant 0 : i32
    %c0_i32_1 = arith.constant 0 : i32
    %c0_i32_2 = arith.constant 0 : i32
    return %arg0, %c0_i32, %c0_i32_0, %c0_i32_1 : i32, i32, i32, i32
  }
}

</mosaic_0001>

<llo_original>
// kernel: tpu_custom_call.1
$region0: #{tpu_custom_call.1}
  #allocation0 [shape = 'u32[]', space=smem, size = 0x4, offset = 0x4, fixed_abs, tag = 'smem constant byte address 0x4 - core index']
  #allocation1 [shape = 'u32[144,128]{1,0:T(1,128)}', space=vmem, size = 0x12000, scoped, tag = 'internal scratch']
  %s0 = inlined_call_operand.hbm [shape: f32[2,4,16,128], index: 0, kind: input, shape index: {}]
  %s1 = inlined_call_operand.hbm [shape: f32[2,3,16,128], index: 1, kind: input, shape index: {}]
  %s2 = inlined_call_operand.vmem [shape: f32[4,3], index: 2, kind: input, shape index: {}]
  %s3 = inlined_call_operand.vmem [shape: f32[1,4], index: 3, kind: input, shape index: {}]
  %s4 = inlined_call_operand.vmem [shape: f32[1,4], index: 4, kind: input, shape index: {}]
  %s5 = inlined_call_operand.hbm [shape: f32[1,4], index: 5, kind: input, shape index: {}]
  %s6 = inlined_call_operand.vmem [shape: f32[8,4], index: 6, kind: input, shape index: {}]
  %s7 = inlined_call_operand.vmem [shape: f32[8,9], index: 7, kind: input, shape index: {}]
  %s8 = inlined_call_operand.vmem [shape: f32[4,4], index: 8, kind: input, shape index: {}]
  %s9 = inlined_call_operand.vmem [shape: f32[4,36], index: 9, kind: input, shape index: {}]
  %s10 = inlined_call_operand.vmem [shape: f32[1,2], index: 10, kind: input, shape index: {}]
  %s11 = inlined_call_operand.vmem [shape: f32[4,4], index: 11, kind: input, shape index: {}]
  %s12 = inlined_call_operand.hbm [shape: f32[2,4,16,128], index: 12, kind: output, shape index: {}]
  %s13 = sld [smem:[#allocation0]]
  $region129: #{tpu_custom_call.1} parent=0
    _
  %s15 = ssub.s32 1, %s13
  %s16 = scalar_select 0, %s15, %s13
  $region1: #{tpu_custom_call.1} parent=0
    #allocation2 [shape = 'u8[65536]{0}', space=vmem, size = 0x10000, scoped, tag = 'input window, operand 0']
    #allocation3 [shape = 's32[2]{0}', space=sflag, size = 0x8, scoped, tag = 'scoped memory for tpu_custom_call.1']
    #allocation4 [shape = 's32[2]{0}', space=sflag, size = 0x8, scoped, tag = 'scoped memory for tpu_custom_call.1']
    #allocation5 [shape = 's32[2]{0}', space=sflag, size = 0x8, scoped, tag = 'scoped memory for tpu_custom_call.1']
    #allocation6 [shape = 's32[2]{0}', space=sflag, size = 0x8, scoped, tag = 'scoped memory for tpu_custom_call.1']
    #allocation7 [shape = 'u8[49152]{0}', space=vmem, size = 0xc000, scoped, tag = 'input window, operand 1']
    #allocation8 [shape = 's32[2]{0}', space=sflag, size = 0x8, scoped, tag = 'scoped memory for tpu_custom_call.1']
    #allocation9 [shape = 'u8[2048]{0}', space=smem, size = 0x800, scoped, tag = 'input window, operand 2, single buffered']
    #allocation10 [shape = 'u8[512]{0}', space=smem, size = 0x200, scoped, tag = 'input window, operand 3, single buffered']
    #allocation11 [shape = 's32[1]{0}', space=sflag, size = 0x4, scoped, tag = 'scoped memory for tpu_custom_call.1']
    #allocation12 [shape = 'u8[512]{0}', space=smem, size = 0x200, scoped, tag = 'input window, operand 4, single buffered']
    #allocation13 [shape = 'u8[512]{0}', space=smem, size = 0x200, scoped, tag = 'input window, operand 5, single buffered']
    #allocation14 [shape = 'u8[4096]{0}', space=smem, size = 0x1000, scoped, tag = 'input window, operand 6, single buffered']
    #allocation15 [shape = 's32[1]{0}', space=sflag, size = 0x4, scoped, tag = 'scoped memory for tpu_custom_call.1']
    #allocation16 [shape = 'u8[4096]{0}', space=smem, size = 0x1000, scoped, tag = 'input window, operand 7, single buffered']
    #allocation17 [shape = 'u8[2048]{0}', space=smem, size = 0x800, scoped, tag = 'input window, operand 8, single buffered']
    #allocation18 [shape = 's32[1]{0}', space=sflag, size = 0x4, scoped, tag = 'scoped memory for tpu_custom_call.1']
    #allocation19 [shape = 'u8[2048]{0}', space=smem, size = 0x800, scoped, tag = 'input window, operand 9, single buffered']
    #allocation20 [shape = 'u8[512]{0}', space=smem, size = 0x200, scoped, tag = 'input window, operand 10, single buffered']
    #allocation21 [shape = 's32[1]{0}', space=sflag, size = 0x4, scoped, tag = 'scoped memory for tpu_custom_call.1']
    #allocation22 [shape = 'u8[2048]{0}', space=smem, size = 0x800, scoped, tag = 'input window, operand 11, single buffered']
    #allocation23 [shape = 'u8[65536]{0}', space=vmem, size = 0x10000, scoped, tag = 'output window, operand 0']
    %17 = vsyncpa [#allocation3], 0
    %s18 = scalar_lea.sflag [#allocation3], 1
    %19 = vsyncpa %s18, 0
    %20 = vsyncpa [#allocation8], 0
    %s21 = scalar_lea.sflag [#allocation8], 1
    %22 = vsyncpa %s21, 0
    %23 = vsyncpa [#allocation6], 0
    %24 = vsyncpa [#allocation11], 0
    %25 = vsyncpa [#allocation5], 0
    %26 = vsyncpa [#allocation15], 0
    %27 = vsyncpa [#allocation18], 0
    %28 = vsyncpa [#allocation21], 0
    %29 = vsyncpa [#allocation4], 0
    %s30 = scalar_lea.sflag [#allocation4], 1
    %31 = vsyncpa %s30, 0
    loop: start=0, step=1, limit=4
    $region2: #{tpu_custom_call.1} parent=1 // loop_pre_header
      _
    $region3: #{tpu_custom_call.1} parent=1 // loop_header
      %s33 = sphi 0, %s37
      %p34 = scmp.ge.s32.totalorder %s33, 4
      %s43 = sphi 0, %s45
      %s46 = sphi 0, %s43
      %s47 = sphi 0, %s46
      %s63 = sphi 0, %s47
      %s69 = sphi 0, %s71
      %s72 = sphi 0, %s69
      %s73 = sphi 0, %s72
      %s89 = sphi 0, %s73
      %s93 = sphi 0, %s93
      %s95 = sphi 0, %s93
      %s96 = sphi 0, %s95
      %s110 = sphi 0, %s96
      %s114 = sphi 0, %s114
      %s116 = sphi 0, %s114
      %s117 = sphi 0, %s116
      %s131 = sphi 0, %s117
      %s135 = sphi 0, %s135
      %s137 = sphi 0, %s135
      %s138 = sphi 0, %s137
      %s152 = sphi 0, %s138
      %s156 = sphi 0, %s156
      %s158 = sphi 0, %s156
      %s159 = sphi 0, %s158
      %s173 = sphi 0, %s159
      %s177 = sphi 0, %s177
      %s179 = sphi 0, %s177
      %s180 = sphi 0, %s179
      %s194 = sphi 0, %s180
      %s198 = sphi 0, %s198
      %s200 = sphi 0, %s198
      %s201 = sphi 0, %s200
      %s215 = sphi 0, %s201
      %s219 = sphi 0, %s219
      %s221 = sphi 0, %s219
      %s222 = sphi 0, %s221
      %s236 = sphi 0, %s222
      %s240 = sphi 0, %s240
      %s242 = sphi 0, %s240
      %s243 = sphi 0, %s242
      %s257 = sphi 0, %s243
      %s261 = sphi 0, %s261
      %s263 = sphi 0, %s261
      %s264 = sphi 0, %s263
      %s278 = sphi 0, %s264
      %s282 = sphi 0, %s282
      %s284 = sphi 0, %s282
      %s285 = sphi 0, %s284
      %s299 = sphi 0, %s285
      %s305 = sphi 0, %s307
      %s308 = sphi 0, %s305
      %s309 = sphi 0, %s308
      %s325 = sphi 0, %s309
    $region4: #{tpu_custom_call.1} parent=1 // loop_header_branch
      %36 = sbr.rel (%p34) target = $region8
    $region5: #{tpu_custom_call.1} parent=1 // loop_body
      %s38 = ssub.s32 %s33, 1
      %s39 = ssub.s32 %s33, 2
      %s40 = sadd.s32 %s33, 1
      %s41 = ssub.s32 %s33, %s40
      %p42 = scmp.eq.s32.totalorder %s41, 0
      %s44 = sadd.s32 %s43, 1
      %s45 = scalar_select %p42, %s43, %s44
      %p48 = pneg %p42
      %p49 = scmp.eq.s32.totalorder %s33, 1
      %p50 = por %p48, %p49
      %p51 = scmp.ne.s32.totalorder %s43, %s46
      %p52 = scmp.eq.s32.totalorder %s33, 0
      %p53 = por %p51, %p52
      %p54 = scmp.ne.s32.totalorder %s43, %s46
      %p55 = scmp.eq.s32.totalorder %s38, 1
      %p56 = por %p54, %p55
      %p57 = scmp.ne.s32.totalorder %s46, %s47
      %p58 = scmp.eq.s32.totalorder %s38, 0
      %p59 = por %p57, %p58
      %p60 = scmp.ne.s32.totalorder %s46, %s47
      %p61 = scmp.eq.s32.totalorder %s39, 1
      %p62 = por %p60, %p61
      %p64 = scmp.ne.s32.totalorder %s47, %s63
      %p65 = scmp.eq.s32.totalorder %s39, 0
      %p66 = por %p64, %p65
      %s67 = ssub.s32 %s33, %s40
      %p68 = scmp.eq.s32.totalorder %s67, 0
      %s70 = sadd.s32 %s69, 1
      %s71 = scalar_select %p68, %s69, %s70
      %p74 = pneg %p68
      %p75 = scmp.eq.s32.totalorder %s33, 1
      %p76 = por %p74, %p75
      %p77 = scmp.ne.s32.totalorder %s69, %s72
      %p78 = scmp.eq.s32.totalorder %s33, 0
      %p79 = por %p77, %p78
      %p80 = scmp.ne.s32.totalorder %s69, %s72
      %p81 = scmp.eq.s32.totalorder %s38, 1
      %p82 = por %p80, %p81
      %p83 = scmp.ne.s32.totalorder %s72, %s73
      %p84 = scmp.eq.s32.totalorder %s38, 0
      %p85 = por %p83, %p84
      %p86 = scmp.ne.s32.totalorder %s72, %s73
      %p87 = scmp.eq.s32.totalorder %s39, 1
      %p88 = por %p86, %p87
      %p90 = scmp.ne.s32.totalorder %s73, %s89
      %p91 = scmp.eq.s32.totalorder %s39, 0
      %p92 = por %p90, %p91
      %s94 = sadd.s32 %s93, 1
      %p97 = scmp.eq.s32.totalorder %s33, 1
      %p98 = scmp.ne.s32.totalorder %s93, %s95
      %p99 = scmp.eq.s32.totalorder %s33, 0
      %p100 = por %p98, %p99
      %p101 = scmp.ne.s32.totalorder %s93, %s95
      %p102 = scmp.eq.s32.totalorder %s38, 1
      %p103 = por %p101, %p102
      %p104 = scmp.ne.s32.totalorder %s95, %s96
      %p105 = scmp.eq.s32.totalorder %s38, 0
      %p106 = por %p104, %p105
      %p107 = scmp.ne.s32.totalorder %s95, %s96
      %p108 = scmp.eq.s32.totalorder %s39, 1
      %p109 = por %p107, %p108
      %p111 = scmp.ne.s32.totalorder %s96, %s110
      %p112 = scmp.eq.s32.totalorder %s39, 0
      %p113 = por %p111, %p112
      %s115 = sadd.s32 %s114, 1
      %p118 = scmp.eq.s32.totalorder %s33, 1
      %p119 = scmp.ne.s32.totalorder %s114, %s116
      %p120 = scmp.eq.s32.totalorder %s33, 0
      %p121 = por %p119, %p120
      %p122 = scmp.ne.s32.totalorder %s114, %s116
      %p123 = scmp.eq.s32.totalorder %s38, 1
      %p124 = por %p122, %p123
      %p125 = scmp.ne.s32.totalorder %s116, %s117
      %p126 = scmp.eq.s32.totalorder %s38, 0
      %p127 = por %p125, %p126
      %p128 = scmp.ne.s32.totalorder %s116, %s117
      %p129 = scmp.eq.s32.totalorder %s39, 1
      %p130 = por %p128, %p129
      %p132 = scmp.ne.s32.totalorder %s117, %s131
      %p133 = scmp.eq.s32.totalorder %s39, 0
      %p134 = por %p132, %p133
      %s136 = sadd.s32 %s135, 1
      %p139 = scmp.eq.s32.totalorder %s33, 1
      %p140 = scmp.ne.s32.totalorder %s135, %s137
      %p141 = scmp.eq.s32.totalorder %s33, 0
      %p142 = por %p140, %p141
      %p143 = scmp.ne.s32.totalorder %s135, %s137
      %p144 = scmp.eq.s32.totalorder %s38, 1
      %p145 = por %p143, %p144
      %p146 = scmp.ne.s32.totalorder %s137, %s138
      %p147 = scmp.eq.s32.totalorder %s38, 0
      %p148 = por %p146, %p147
      %p149 = scmp.ne.s32.totalorder %s137, %s138
      %p150 = scmp.eq.s32.totalorder %s39, 1
      %p151 = por %p149, %p150
      %p153 = scmp.ne.s32.totalorder %s138, %s152
      %p154 = scmp.eq.s32.totalorder %s39, 0
      %p155 = por %p153, %p154
      %s157 = sadd.s32 %s156, 1
      %p160 = scmp.eq.s32.totalorder %s33, 1
      %p161 = scmp.ne.s32.totalorder %s156, %s158
      %p162 = scmp.eq.s32.totalorder %s33, 0
      %p163 = por %p161, %p162
      %p164 = scmp.ne.s32.totalorder %s156, %s158
      %p165 = scmp.eq.s32.totalorder %s38, 1
      %p166 = por %p164, %p165
      %p167 = scmp.ne.s32.totalorder %s158, %s159
      %p168 = scmp.eq.s32.totalorder %s38, 0
      %p169 = por %p167, %p168
      %p170 = scmp.ne.s32.totalorder %s158, %s159
      %p171 = scmp.eq.s32.totalorder %s39, 1
      %p172 = por %p170, %p171
      %p174 = scmp.ne.s32.totalorder %s159, %s173
      %p175 = scmp.eq.s32.totalorder %s39, 0
      %p176 = por %p174, %p175
      %s178 = sadd.s32 %s177, 1
      %p181 = scmp.eq.s32.totalorder %s33, 1
      %p182 = scmp.ne.s32.totalorder %s177, %s179
      %p183 = scmp.eq.s32.totalorder %s33, 0
      %p184 = por %p182, %p183
      %p185 = scmp.ne.s32.totalorder %s177, %s179
      %p186 = scmp.eq.s32.totalorder %s38, 1
      %p187 = por %p185, %p186
      %p188 = scmp.ne.s32.totalorder %s179, %s180
      %p189 = scmp.eq.s32.totalorder %s38, 0
      %p190 = por %p188, %p189
      %p191 = scmp.ne.s32.totalorder %s179, %s180
      %p192 = scmp.eq.s32.totalorder %s39, 1
      %p193 = por %p191, %p192
      %p195 = scmp.ne.s32.totalorder %s180, %s194
      %p196 = scmp.eq.s32.totalorder %s39, 0
      %p197 = por %p195, %p196
      %s199 = sadd.s32 %s198, 1
      %p202 = scmp.eq.s32.totalorder %s33, 1
      %p203 = scmp.ne.s32.totalorder %s198, %s200
      %p204 = scmp.eq.s32.totalorder %s33, 0
      %p205 = por %p203, %p204
      %p206 = scmp.ne.s32.totalorder %s198, %s200
      %p207 = scmp.eq.s32.totalorder %s38, 1
      %p208 = por %p206, %p207
      %p209 = scmp.ne.s32.totalorder %s200, %s201
      %p210 = scmp.eq.s32.totalorder %s38, 0
      %p211 = por %p209, %p210
      %p212 = scmp.ne.s32.totalorder %s200, %s201
      %p213 = scmp.eq.s32.totalorder %s39, 1
      %p214 = por %p212, %p213
      %p216 = scmp.ne.s32.totalorder %s201, %s215
      %p217 = scmp.eq.s32.totalorder %s39, 0
      %p218 = por %p216, %p217
      %s220 = sadd.s32 %s219, 1
      %p223 = scmp.eq.s32.totalorder %s33, 1
      %p224 = scmp.ne.s32.totalorder %s219, %s221
      %p225 = scmp.eq.s32.totalorder %s33, 0
      %p226 = por %p224, %p225
      %p227 = scmp.ne.s32.totalorder %s219, %s221
      %p228 = scmp.eq.s32.totalorder %s38, 1
      %p229 = por %p227, %p228
      %p230 = scmp.ne.s32.totalorder %s221, %s222
      %p231 = scmp.eq.s32.totalorder %s38, 0
      %p232 = por %p230, %p231
      %p233 = scmp.ne.s32.totalorder %s221, %s222
      %p234 = scmp.eq.s32.totalorder %s39, 1
      %p235 = por %p233, %p234
      %p237 = scmp.ne.s32.totalorder %s222, %s236
      %p238 = scmp.eq.s32.totalorder %s39, 0
      %p239 = por %p237, %p238
      %s241 = sadd.s32 %s240, 1
      %p244 = scmp.eq.s32.totalorder %s33, 1
      %p245 = scmp.ne.s32.totalorder %s240, %s242
      %p246 = scmp.eq.s32.totalorder %s33, 0
      %p247 = por %p245, %p246
      %p248 = scmp.ne.s32.totalorder %s240, %s242
      %p249 = scmp.eq.s32.totalorder %s38, 1
      %p250 = por %p248, %p249
      %p251 = scmp.ne.s32.totalorder %s242, %s243
      %p252 = scmp.eq.s32.totalorder %s38, 0
      %p253 = por %p251, %p252
      %p254 = scmp.ne.s32.totalorder %s242, %s243
      %p255 = scmp.eq.s32.totalorder %s39, 1
      %p256 = por %p254, %p255
      %p258 = scmp.ne.s32.totalorder %s243, %s257
      %p259 = scmp.eq.s32.totalorder %s39, 0
      %p260 = por %p258, %p259
      %s262 = sadd.s32 %s261, 1
      %p265 = scmp.eq.s32.totalorder %s33, 1
      %p266 = scmp.ne.s32.totalorder %s261, %s263
      %p267 = scmp.eq.s32.totalorder %s33, 0
      %p268 = por %p266, %p267
      %p269 = scmp.ne.s32.totalorder %s261, %s263
      %p270 = scmp.eq.s32.totalorder %s38, 1
      %p271 = por %p269, %p270
      %p272 = scmp.ne.s32.totalorder %s263, %s264
      %p273 = scmp.eq.s32.totalorder %s38, 0
      %p274 = por %p272, %p273
      %p275 = scmp.ne.s32.totalorder %s263, %s264
      %p276 = scmp.eq.s32.totalorder %s39, 1
      %p277 = por %p275, %p276
      %p279 = scmp.ne.s32.totalorder %s264, %s278
      %p280 = scmp.eq.s32.totalorder %s39, 0
      %p281 = por %p279, %p280
      %s283 = sadd.s32 %s282, 1
      %p286 = scmp.eq.s32.totalorder %s33, 1
      %p287 = scmp.ne.s32.totalorder %s282, %s284
      %p288 = scmp.eq.s32.totalorder %s33, 0
      %p289 = por %p287, %p288
      %p290 = scmp.ne.s32.totalorder %s282, %s284
      %p291 = scmp.eq.s32.totalorder %s38, 1
      %p292 = por %p290, %p291
      %p293 = scmp.ne.s32.totalorder %s284, %s285
      %p294 = scmp.eq.s32.totalorder %s38, 0
      %p295 = por %p293, %p294
      %p296 = scmp.ne.s32.totalorder %s284, %s285
      %p297 = scmp.eq.s32.totalorder %s39, 1
      %p298 = por %p296, %p297
      %p300 = scmp.ne.s32.totalorder %s285, %s299
      %p301 = scmp.eq.s32.totalorder %s39, 0
      %p302 = por %p300, %p301
      %s303 = ssub.s32 %s33, %s40
      %p304 = scmp.eq.s32.totalorder %s303, 0
      %s306 = sadd.s32 %s305, 1
      %s307 = scalar_select %p304, %s305, %s306
      %p310 = pneg %p304
      %p311 = scmp.eq.s32.totalorder %s33, 1
      %p312 = por %p310, %p311
      %p313 = scmp.ne.s32.totalorder %s305, %s308
      %p314 = scmp.eq.s32.totalorder %s33, 0
      %p315 = por %p313, %p314
      %p316 = scmp.ne.s32.totalorder %s305, %s308
      %p317 = scmp.eq.s32.totalorder %s38, 1
      %p318 = por %p316, %p317
      %p319 = scmp.ne.s32.totalorder %s308, %s309
      %p320 = scmp.eq.s32.totalorder %s38, 0
      %p321 = por %p319, %p320
      %p322 = scmp.ne.s32.totalorder %s308, %s309
      %p323 = scmp.eq.s32.totalorder %s39, 1
      %p324 = por %p322, %p323
      %p326 = scmp.ne.s32.totalorder %s309, %s325
      %p327 = scmp.eq.s32.totalorder %s39, 0
      %p328 = por %p326, %p327
      %p329 = scmp.le.s32.totalorder 1, %s33
      %p330 = scmp.lt.s32.totalorder %s33, 3
      %p331 = pnand %p329, %p330
      %p332 = pneg %p331
      // Predicated region
      $region9: #{tpu_custom_call.1} parent=5 // pred_check
        _
      $region10: #{tpu_custom_call.1} parent=5 // pred_check_branch
        %334 = sbr.rel (%p331) target = $region12
      $region11: #{tpu_custom_call.1} parent=5 // pred_region
        %s335 = ssub.s32 %s33, 1
        // Predicated region
        $region13: #{tpu_custom_call.1} parent=11 // pred_check
          %p336 = pneg %p106
        $region14: #{tpu_custom_call.1} parent=11 // pred_check_branch
          %338 = sbr.rel (%p336) target = $region16
        $region15: #{tpu_custom_call.1} parent=11 // pred_region
          %s340 = ssub.s32 64, 64
          %341 = vsyncadd [#allocation6], %s340
          %s343 = sshll.u32 %s2, 4
          %s344 = int_to_ptr.vmem [resolvable:$true] %s343
          %346 = dma.vmem_to_smem %s344, 64, [#allocation9], [#allocation6]
        $region16: #{tpu_custom_call.1} parent=11 // pred_fallthru
          _
        // Predicated region
        $region17: #{tpu_custom_call.1} parent=11 // pred_check
          %p347 = pneg %p127
        $region18: #{tpu_custom_call.1} parent=11 // pred_check_branch
          %349 = sbr.rel (%p347) target = $region20
        $region19: #{tpu_custom_call.1} parent=11 // pred_region
          %s351 = ssub.s32 16, 16
          %352 = vsyncadd [#allocation11], %s351
          %s354 = sshll.u32 %s3, 4
          %s355 = int_to_ptr.vmem [resolvable:$true] %s354
          %357 = dma.vmem_to_smem %s355, 16, [#allocation10], [#allocation11]
        $region20: #{tpu_custom_call.1} parent=11 // pred_fallthru
          _
        // Predicated region
        $region21: #{tpu_custom_call.1} parent=11 // pred_check
          %p358 = pneg %p148
        $region22: #{tpu_custom_call.1} parent=11 // pred_check_branch
          %360 = sbr.rel (%p358) target = $region24
        $region23: #{tpu_custom_call.1} parent=11 // pred_region
          %s362 = ssub.s32 16, 16
          %363 = vsyncadd [#allocation11], %s362
          %s365 = sshll.u32 %s4, 4
          %s366 = int_to_ptr.vmem [resolvable:$true] %s365
          %368 = dma.vmem_to_smem %s366, 16, [#allocation12], [#allocation11]
        $region24: #{tpu_custom_call.1} parent=11 // pred_fallthru
          _
        // Predicated region
        $region25: #{tpu_custom_call.1} parent=11 // pred_check
          %p369 = pneg %p169
        $region26: #{tpu_custom_call.1} parent=11 // pred_check_branch
          %371 = sbr.rel (%p369) target = $region28
        $region27: #{tpu_custom_call.1} parent=11 // pred_region
          %s373 = ssub.s32 16, 16
          %374 = vsyncadd [#allocation5], %s373
          %377 = dma.hbm_to_smem %s5, 16, [#allocation13], [#allocation5]
        $region28: #{tpu_custom_call.1} parent=11 // pred_fallthru
          _
        // Predicated region
        $region29: #{tpu_custom_call.1} parent=11 // pred_check
          %p378 = pneg %p190
        $region30: #{tpu_custom_call.1} parent=11 // pred_check_branch
          %380 = sbr.rel (%p378) target = $region32
        $region31: #{tpu_custom_call.1} parent=11 // pred_region
          %s382 = ssub.s32 128, 128
          %383 = vsyncadd [#allocation15], %s382
          %s385 = sshll.u32 %s6, 4
          %s386 = int_to_ptr.vmem [resolvable:$true] %s385
          %388 = dma.vmem_to_smem %s386, 128, [#allocation14], [#allocation15]
        $region32: #{tpu_custom_call.1} parent=11 // pred_fallthru
          _
        // Predicated region
        $region33: #{tpu_custom_call.1} parent=11 // pred_check
          %p389 = pneg %p211
        $region34: #{tpu_custom_call.1} parent=11 // pred_check_branch
          %391 = sbr.rel (%p389) target = $region36
        $region35: #{tpu_custom_call.1} parent=11 // pred_region
          %s393 = ssub.s32 128, 128
          %394 = vsyncadd [#allocation15], %s393
          %s396 = sshll.u32 %s7, 4
          %s397 = int_to_ptr.vmem [resolvable:$true] %s396
          %399 = dma.vmem_to_smem %s397, 128, [#allocation16], [#allocation15]
        $region36: #{tpu_custom_call.1} parent=11 // pred_fallthru
          _
        // Predicated region
        $region37: #{tpu_custom_call.1} parent=11 // pred_check
          %p400 = pneg %p232
        $region38: #{tpu_custom_call.1} parent=11 // pred_check_branch
          %402 = sbr.rel (%p400) target = $region40
        $region39: #{tpu_custom_call.1} parent=11 // pred_region
          %s404 = ssub.s32 64, 64
          %405 = vsyncadd [#allocation18], %s404
          %s407 = sshll.u32 %s8, 4
          %s408 = int_to_ptr.vmem [resolvable:$true] %s407
          %410 = dma.vmem_to_smem %s408, 64, [#allocation17], [#allocation18]
        $region40: #{tpu_custom_call.1} parent=11 // pred_fallthru
          _
        // Predicated region
        $region41: #{tpu_custom_call.1} parent=11 // pred_check
          %p411 = pneg %p253
        $region42: #{tpu_custom_call.1} parent=11 // pred_check_branch
          %413 = sbr.rel (%p411) target = $region44
        $region43: #{tpu_custom_call.1} parent=11 // pred_region
          %s415 = ssub.s32 64, 64
          %416 = vsyncadd [#allocation18], %s415
          %s418 = sshll.u32 %s9, 4
          %s419 = int_to_ptr.vmem [resolvable:$true] %s418
          %421 = dma.vmem_to_smem %s419, 64, [#allocation19], [#allocation18]
        $region44: #{tpu_custom_call.1} parent=11 // pred_fallthru
          _
        // Predicated region
        $region45: #{tpu_custom_call.1} parent=11 // pred_check
          %p422 = pneg %p274
        $region46: #{tpu_custom_call.1} parent=11 // pred_check_branch
          %424 = sbr.rel (%p422) target = $region48
        $region47: #{tpu_custom_call.1} parent=11 // pred_region
          %s426 = ssub.s32 16, 16
          %427 = vsyncadd [#allocation21], %s426
          %s429 = sshll.u32 %s10, 4
          %s430 = int_to_ptr.vmem [resolvable:$true] %s429
          %432 = dma.vmem_to_smem %s430, 16, [#allocation20], [#allocation21]
        $region48: #{tpu_custom_call.1} parent=11 // pred_fallthru
          _
        // Predicated region
        $region49: #{tpu_custom_call.1} parent=11 // pred_check
          %p433 = pneg %p295
        $region50: #{tpu_custom_call.1} parent=11 // pred_check_branch
          %435 = sbr.rel (%p433) target = $region52
        $region51: #{tpu_custom_call.1} parent=11 // pred_region
          %s437 = ssub.s32 64, 64
          %438 = vsyncadd [#allocation21], %s437
          %s440 = sshll.u32 %s11, 4
          %s441 = int_to_ptr.vmem [resolvable:$true] %s440
          %443 = dma.vmem_to_smem %s441, 64, [#allocation22], [#allocation21]
        $region52: #{tpu_custom_call.1} parent=11 // pred_fallthru
          _
      $region12: #{tpu_custom_call.1} parent=5 // pred_fallthru
        _
      %p444 = scmp.lt.s32.totalorder %s33, 2
      // Predicated region
      $region53: #{tpu_custom_call.1} parent=5 // pred_check
        %p445 = pneg %p444
      $region54: #{tpu_custom_call.1} parent=5 // pred_check_branch
        %447 = sbr.rel (%p445) target = $region56
      $region55: #{tpu_custom_call.1} parent=5 // pred_region
        // Predicated region
        $region57: #{tpu_custom_call.1} parent=55 // pred_check
          %p448 = pneg %p53
        $region58: #{tpu_custom_call.1} parent=55 // pred_check_branch
          %450 = sbr.rel (%p448) target = $region60
        $region59: #{tpu_custom_call.1} parent=55 // pred_region
          %s451 = sand.u32 %s43, 1
          %s452 = scalar_lea.sflag [#allocation3], %s451
          %s453 = sand.u32 %s43, 1
          %s454 = smul.addr %s453, 64
          %s455 = scalar_lea.vmem [#allocation2], %s454
          %s457 = ssub.s32 1024, 1024
          %458 = vsyncadd %s452, %s457
          %s459 = smul.addr %s33, 8
          %s460 = smul.addr %s459, 128
          %s461 = scalar_lea.hbm %s0, %s460
          %s462 = sshll.u32 %s455, 4
          %s463 = int_to_ptr.vmem [resolvable:$true] %s462
          %468 = dma.hbm_to_vmem [thread:$0]  %s461, 1024, %s463, %s452, 128, 128, 8
        $region60: #{tpu_custom_call.1} parent=55 // pred_fallthru
          _
        // Predicated region
        $region61: #{tpu_custom_call.1} parent=55 // pred_check
          %p469 = pneg %p79
        $region62: #{tpu_custom_call.1} parent=55 // pred_check_branch
          %471 = sbr.rel (%p469) target = $region64
        $region63: #{tpu_custom_call.1} parent=55 // pred_region
          %s472 = sand.u32 %s69, 1
          %s473 = scalar_lea.sflag [#allocation8], %s472
          %s474 = sand.u32 %s69, 1
          %s475 = smul.addr %s474, 48
          %s476 = scalar_lea.vmem [#allocation7], %s475
          %s478 = ssub.s32 768, 768
          %479 = vsyncadd %s473, %s478
          %s480 = smul.addr %s33, 6
          %s481 = smul.addr %s480, 128
          %s482 = scalar_lea.hbm %s1, %s481
          %s483 = sshll.u32 %s476, 4
          %s484 = int_to_ptr.vmem [resolvable:$true] %s483
          %489 = dma.hbm_to_vmem [thread:$0]  %s482, 768, %s484, %s473, 128, 128, 8
        $region64: #{tpu_custom_call.1} parent=55 // pred_fallthru
          _
      $region56: #{tpu_custom_call.1} parent=5 // pred_fallthru
        _
      %p490 = scmp.le.s32.totalorder 1, %s33
      %p491 = scmp.lt.s32.totalorder %s33, 3
      %p492 = pnand %p490, %p491
      %p493 = pneg %p492
      // Predicated region
      $region65: #{tpu_custom_call.1} parent=5 // pred_check
        _
      $region66: #{tpu_custom_call.1} parent=5 // pred_check_branch
        %495 = sbr.rel (%p492) target = $region68
      $region67: #{tpu_custom_call.1} parent=5 // pred_region
        %s496 = ssub.s32 %s33, 1
        %s497 = sand.u32 %s46, 1
        %s498 = scalar_lea.sflag [#allocation3], %s497
        %s499 = sand.u32 %s46, 1
        %s500 = smul.addr %s499, 64
        %s501 = scalar_lea.vmem [#allocation2], %s500
        // Predicated region
        $region69: #{tpu_custom_call.1} parent=67 // pred_check
          %p502 = pneg %p59
        $region70: #{tpu_custom_call.1} parent=67 // pred_check_branch
          %504 = sbr.rel (%p502) target = $region72
        $region71: #{tpu_custom_call.1} parent=67 // pred_region
          %505 = dma.done %s498, 1024
        $region72: #{tpu_custom_call.1} parent=67 // pred_fallthru
          _
        %s506 = sand.u32 %s72, 1
        %s507 = scalar_lea.sflag [#allocation8], %s506
        %s508 = sand.u32 %s72, 1
        %s509 = smul.addr %s508, 48
        %s510 = scalar_lea.vmem [#allocation7], %s509
        // Predicated region
        $region73: #{tpu_custom_call.1} parent=67 // pred_check
          %p511 = pneg %p85
        $region74: #{tpu_custom_call.1} parent=67 // pred_check_branch
          %513 = sbr.rel (%p511) target = $region76
        $region75: #{tpu_custom_call.1} parent=67 // pred_region
          %514 = dma.done %s507, 768
        $region76: #{tpu_custom_call.1} parent=67 // pred_fallthru
          _
        // Predicated region
        $region77: #{tpu_custom_call.1} parent=67 // pred_check
          %p515 = pneg %p106
        $region78: #{tpu_custom_call.1} parent=67 // pred_check_branch
          %517 = sbr.rel (%p515) target = $region80
        $region79: #{tpu_custom_call.1} parent=67 // pred_region
          %518 = dma.done [#allocation6], 64
        $region80: #{tpu_custom_call.1} parent=67 // pred_fallthru
          _
        // Predicated region
        $region81: #{tpu_custom_call.1} parent=67 // pred_check
          %p519 = pneg %p127
        $region82: #{tpu_custom_call.1} parent=67 // pred_check_branch
          %521 = sbr.rel (%p519) target = $region84
        $region83: #{tpu_custom_call.1} parent=67 // pred_region
          %522 = dma.done [#allocation11], 16
        $region84: #{tpu_custom_call.1} parent=67 // pred_fallthru
          _
        // Predicated region
        $region85: #{tpu_custom_call.1} parent=67 // pred_check
          %p523 = pneg %p148
        $region86: #{tpu_custom_call.1} parent=67 // pred_check_branch
          %525 = sbr.rel (%p523) target = $region88
        $region87: #{tpu_custom_call.1} parent=67 // pred_region
          %526 = dma.done [#allocation11], 16
        $region88: #{tpu_custom_call.1} parent=67 // pred_fallthru
          _
        // Predicated region
        $region89: #{tpu_custom_call.1} parent=67 // pred_check
          %p527 = pneg %p169
        $region90: #{tpu_custom_call.1} parent=67 // pred_check_branch
          %529 = sbr.rel (%p527) target = $region92
        $region91: #{tpu_custom_call.1} parent=67 // pred_region
          %530 = dma.done [#allocation5], 16
        $region92: #{tpu_custom_call.1} parent=67 // pred_fallthru
          _
        // Predicated region
        $region93: #{tpu_custom_call.1} parent=67 // pred_check
          %p531 = pneg %p190
        $region94: #{tpu_custom_call.1} parent=67 // pred_check_branch
          %533 = sbr.rel (%p531) target = $region96
        $region95: #{tpu_custom_call.1} parent=67 // pred_region
          %534 = dma.done [#allocation15], 128
        $region96: #{tpu_custom_call.1} parent=67 // pred_fallthru
          _
        // Predicated region
        $region97: #{tpu_custom_call.1} parent=67 // pred_check
          %p535 = pneg %p211
        $region98: #{tpu_custom_call.1} parent=67 // pred_check_branch
          %537 = sbr.rel (%p535) target = $region100
        $region99: #{tpu_custom_call.1} parent=67 // pred_region
          %538 = dma.done [#allocation15], 128
        $region100: #{tpu_custom_call.1} parent=67 // pred_fallthru
          _
        // Predicated region
        $region101: #{tpu_custom_call.1} parent=67 // pred_check
          %p539 = pneg %p232
        $region102: #{tpu_custom_call.1} parent=67 // pred_check_branch
          %541 = sbr.rel (%p539) target = $region104
        $region103: #{tpu_custom_call.1} parent=67 // pred_region
          %542 = dma.done [#allocation18], 64
        $region104: #{tpu_custom_call.1} parent=67 // pred_fallthru
          _
        // Predicated region
        $region105: #{tpu_custom_call.1} parent=67 // pred_check
          %p543 = pneg %p253
        $region106: #{tpu_custom_call.1} parent=67 // pred_check_branch
          %545 = sbr.rel (%p543) target = $region108
        $region107: #{tpu_custom_call.1} parent=67 // pred_region
          %546 = dma.done [#allocation18], 64
        $region108: #{tpu_custom_call.1} parent=67 // pred_fallthru
          _
        // Predicated region
        $region109: #{tpu_custom_call.1} parent=67 // pred_check
          %p547 = pneg %p274
        $region110: #{tpu_custom_call.1} parent=67 // pred_check_branch
          %549 = sbr.rel (%p547) target = $region112
        $region111: #{tpu_custom_call.1} parent=67 // pred_region
          %550 = dma.done [#allocation21], 16
        $region112: #{tpu_custom_call.1} parent=67 // pred_fallthru
          _
        // Predicated region
        $region113: #{tpu_custom_call.1} parent=67 // pred_check
          %p551 = pneg %p295
        $region114: #{tpu_custom_call.1} parent=67 // pred_check_branch
          %553 = sbr.rel (%p551) target = $region116
        $region115: #{tpu_custom_call.1} parent=67 // pred_region
          %554 = dma.done [#allocation21], 64
        $region116: #{tpu_custom_call.1} parent=67 // pred_fallthru
          _
        %555 = sfence
        %s556 = sand.u32 %s46, 1
        %s557 = scalar_lea.sflag [#allocation3], %s556
        %s558 = sand.u32 %s46, 1
        %s559 = smul.addr %s558, 64
        %s560 = scalar_lea.vmem [#allocation2], %s559
        %p561 = pneg %p59
        %p562 = pneg %p56
        %s563 = sand.u32 %s72, 1
        %s564 = scalar_lea.sflag [#allocation8], %s563
        %s565 = sand.u32 %s72, 1
        %s566 = smul.addr %s565, 48
        %s567 = scalar_lea.vmem [#allocation7], %s566
        %p568 = pneg %p85
        %p569 = pneg %p82
        %p570 = pneg %p106
        %p571 = pneg %p103
        %p572 = pneg %p127
        %p573 = pneg %p124
        %p574 = pneg %p148
        %p575 = pneg %p145
        %p576 = pneg %p169
        %p577 = pneg %p166
        %p578 = pneg %p190
        %p579 = pneg %p187
        %p580 = pneg %p211
        %p581 = pneg %p208
        %p582 = pneg %p232
        %p583 = pneg %p229
        %p584 = pneg %p253
        %p585 = pneg %p250
        %p586 = pneg %p274
        %p587 = pneg %p271
        %p588 = pneg %p295
        %p589 = pneg %p292
        %p590 = pneg %p321
        %p591 = pneg %p318
        %s592 = sand.u32 %s308, 1
        %s593 = scalar_lea.sflag [#allocation4], %s592
        %s594 = sand.u32 %s308, 1
        %s595 = smul.addr %s594, 64
        %s596 = scalar_lea.vmem [#allocation23], %s595
        %v597 = vld [vmem:[%s501] sm:$0xff]
        %v598 = vld [vmem:[%s501 + $0x8] sm:$0xff]
        %s599 = scalar_lea.vmem %s501, 16 [#allocation2]
        %v600 = vld [vmem:[%s599] sm:$0xff]
        %v601 = vld [vmem:[%s599 + $0x8] sm:$0xff]
        %s602 = scalar_lea.vmem %s501, 32 [#allocation2]
        %v603 = vld [vmem:[%s602] sm:$0xff]
        %v604 = vld [vmem:[%s602 + $0x8] sm:$0xff]
        %s605 = scalar_lea.vmem %s501, 48 [#allocation2]
        %v606 = vld [vmem:[%s605] sm:$0xff]
        %v607 = vld [vmem:[%s605 + $0x8] sm:$0xff]
        %v608 = vld [vmem:[%s510] sm:$0xff]
        %v609 = vld [vmem:[%s510 + $0x8] sm:$0xff]
        %s610 = scalar_lea.vmem %s510, 16 [#allocation7]
        %v611 = vld [vmem:[%s610] sm:$0xff]
        %v612 = vld [vmem:[%s610 + $0x8] sm:$0xff]
        %s613 = scalar_lea.vmem %s510, 32 [#allocation7]
        %v614 = vld [vmem:[%s613] sm:$0xff]
        %v615 = vld [vmem:[%s613 + $0x8] sm:$0xff]
        %s616 = sld [smem:[#allocation9]]
        %v617 = vstv %s616
        %v618 = vmul.f32 %v617, %v608
        %v619 = vmul.f32 %v617, %v609
        %s620 = sld [smem:[#allocation9 + $0x1]]
        %v621 = vstv %s620
        %v622 = vmul.f32 %v621, %v611
        %v623 = vmul.f32 %v621, %v612
        %v624 = vadd.f32 %v618, %v622
        %v625 = vadd.f32 %v619, %v623
        %s626 = sld [smem:[#allocation9 + $0x2]]
        %v627 = vstv %s626
        %v628 = vmul.f32 %v627, %v614
        %v629 = vmul.f32 %v627, %v615
        %v630 = vadd.f32 %v624, %v628
        %v631 = vadd.f32 %v625, %v629
        %s632 = sld [smem:[#allocation10]]
        %v633 = vstv %s632
        %v634 = vadd.f32 %v630, %v633
        %v635 = vadd.f32 %v631, %v633
        %s636 = sld [smem:[#allocation9 + $0x80]]
        %v637 = vstv %s636
        %v638 = vmul.f32 %v637, %v608
        %v639 = vmul.f32 %v637, %v609
        %s640 = sld [smem:[#allocation9 + $0x81]]
        %v641 = vstv %s640
        %v642 = vmul.f32 %v641, %v611
        %v643 = vmul.f32 %v641, %v612
        %v644 = vadd.f32 %v638, %v642
        %v645 = vadd.f32 %v639, %v643
        %s646 = sld [smem:[#allocation9 + $0x82]]
        %v647 = vstv %s646
        %v648 = vmul.f32 %v647, %v614
        %v649 = vmul.f32 %v647, %v615
        %v650 = vadd.f32 %v644, %v648
        %v651 = vadd.f32 %v645, %v649
        %s652 = sld [smem:[#allocation10 + $0x1]]
        %v653 = vstv %s652
        %v654 = vadd.f32 %v650, %v653
        %v655 = vadd.f32 %v651, %v653
        %s656 = sld [smem:[#allocation9 + $0x100]]
        %v657 = vstv %s656
        %v658 = vmul.f32 %v657, %v608
        %v659 = vmul.f32 %v657, %v609
        %s660 = sld [smem:[#allocation9 + $0x101]]
        %v661 = vstv %s660
        %v662 = vmul.f32 %v661, %v611
        %v663 = vmul.f32 %v661, %v612
        %v664 = vadd.f32 %v658, %v662
        %v665 = vadd.f32 %v659, %v663
        %s666 = sld [smem:[#allocation9 + $0x102]]
        %v667 = vstv %s666
        %v668 = vmul.f32 %v667, %v614
        %v669 = vmul.f32 %v667, %v615
        %v670 = vadd.f32 %v664, %v668
        %v671 = vadd.f32 %v665, %v669
        %s672 = sld [smem:[#allocation10 + $0x2]]
        %v673 = vstv %s672
        %v674 = vadd.f32 %v670, %v673
        %v675 = vadd.f32 %v671, %v673
        %s676 = sld [smem:[#allocation9 + $0x180]]
        %v677 = vstv %s676
        %v678 = vmul.f32 %v677, %v608
        %v679 = vmul.f32 %v677, %v609
        %s680 = sld [smem:[#allocation9 + $0x181]]
        %v681 = vstv %s680
        %v682 = vmul.f32 %v681, %v611
        %v683 = vmul.f32 %v681, %v612
        %v684 = vadd.f32 %v678, %v682
        %v685 = vadd.f32 %v679, %v683
        %s686 = sld [smem:[#allocation9 + $0x182]]
        %v687 = vstv %s686
        %v688 = vmul.f32 %v687, %v614
        %v689 = vmul.f32 %v687, %v615
        %v690 = vadd.f32 %v684, %v688
        %v691 = vadd.f32 %v685, %v689
        %s692 = sld [smem:[#allocation10 + $0x3]]
        %v693 = vstv %s692
        %v694 = vadd.f32 %v690, %v693
        %v695 = vadd.f32 %v691, %v693
        %v696 = vadd.f32 %v634, %v654
        %v697 = vadd.f32 %v635, %v655
        %v698 = vadd.f32 %v696, %v674
        %v699 = vadd.f32 %v697, %v675
        %v700 = vadd.f32 %v698, %v694
        %v701 = vadd.f32 %v699, %v695
        %v702 = vmul.f32 %v700, 0.25
        %v703 = vmul.f32 %v701, 0.25
        %v704 = vsub.f32 %v634, %v702
        %v705 = vsub.f32 %v635, %v703
        %v706 = vmul.f32 %v704, %v704
        %v707 = vmul.f32 %v705, %v705
        %v708 = vsub.f32 %v654, %v702
        %v709 = vsub.f32 %v655, %v703
        %v710 = vmul.f32 %v708, %v708
        %v711 = vmul.f32 %v709, %v709
        %v712 = vadd.f32 %v706, %v710
        %v713 = vadd.f32 %v707, %v711
        %v714 = vsub.f32 %v674, %v702
        %v715 = vsub.f32 %v675, %v703
        %v716 = vmul.f32 %v714, %v714
        %v717 = vmul.f32 %v715, %v715
        %v718 = vadd.f32 %v712, %v716
        %v719 = vadd.f32 %v713, %v717
        %v720 = vsub.f32 %v694, %v702
        %v721 = vsub.f32 %v695, %v703
        %v722 = vmul.f32 %v720, %v720
        %v723 = vmul.f32 %v721, %v721
        %v724 = vadd.f32 %v718, %v722
        %v725 = vadd.f32 %v719, %v723
        %v726 = vmul.f32 %v724, 0.25
        %v727 = vmul.f32 %v725, 0.25
        %v728 = vadd.f32 %v726, 1e-05
        %v729 = vadd.f32 %v727, 1e-05
        %v730 = vrsqrt.pop %v728
        %v731 = vrsqrt.pop %v729
        %v732 = vmul.f32 %v704, %v730
        %v733 = vmul.f32 %v705, %v731
        %s734 = sld [smem:[#allocation12]]
        %v735 = vstv %s734
        %v736 = vmul.f32 %v732, %v735
        %v737 = vmul.f32 %v733, %v735
        %s738 = sld [smem:[#allocation13]]
        %v739 = vstv %s738
        %v740 = vadd.f32 %v736, %v739
        %v741 = vadd.f32 %v737, %v739
        %v742 = vmul.f32 %v708, %v730
        %v743 = vmul.f32 %v709, %v731
        %s744 = sld [smem:[#allocation12 + $0x1]]
        %v745 = vstv %s744
        %v746 = vmul.f32 %v742, %v745
        %v747 = vmul.f32 %v743, %v745
        %s748 = sld [smem:[#allocation13 + $0x1]]
        %v749 = vstv %s748
        %v750 = vadd.f32 %v746, %v749
        %v751 = vadd.f32 %v747, %v749
        %v752 = vmul.f32 %v714, %v730
        %v753 = vmul.f32 %v715, %v731
        %s754 = sld [smem:[#allocation12 + $0x2]]
        %v755 = vstv %s754
        %v756 = vmul.f32 %v752, %v755
        %v757 = vmul.f32 %v753, %v755
        %s758 = sld [smem:[#allocation13 + $0x2]]
        %v759 = vstv %s758
        %v760 = vadd.f32 %v756, %v759
        %v761 = vadd.f32 %v757, %v759
        %v762 = vmul.f32 %v720, %v730
        %v763 = vmul.f32 %v721, %v731
        %s764 = sld [smem:[#allocation12 + $0x3]]
        %v765 = vstv %s764
        %v766 = vmul.f32 %v762, %v765
        %v767 = vmul.f32 %v763, %v765
        %s768 = sld [smem:[#allocation13 + $0x3]]
        %v769 = vstv %s768
        %v770 = vadd.f32 %v766, %v769
        %v771 = vadd.f32 %v767, %v769
        %v772 = vadd.f32 %v597, %v600
        %v773 = vadd.f32 %v598, %v601
        %v774 = vadd.f32 %v772, %v603
        %v775 = vadd.f32 %v773, %v604
        %v776 = vadd.f32 %v774, %v606
        %v777 = vadd.f32 %v775, %v607
        %v778 = vmul.f32 %v776, 0.25
        %v779 = vmul.f32 %v777, 0.25
        %v780 = vsub.f32 %v597, %v778
        %v781 = vsub.f32 %v598, %v779
        %v782 = vmul.f32 %v780, %v780
        %v783 = vmul.f32 %v781, %v781
        %v784 = vsub.f32 %v600, %v778
        %v785 = vsub.f32 %v601, %v779
        %v786 = vmul.f32 %v784, %v784
        %v787 = vmul.f32 %v785, %v785
        %v788 = vadd.f32 %v782, %v786
        %v789 = vadd.f32 %v783, %v787
        %v790 = vsub.f32 %v603, %v778
        %v791 = vsub.f32 %v604, %v779
        %v792 = vmul.f32 %v790, %v790
        %v793 = vmul.f32 %v791, %v791
        %v794 = vadd.f32 %v788, %v792
        %v795 = vadd.f32 %v789, %v793
        %v796 = vsub.f32 %v606, %v778
        %v797 = vsub.f32 %v607, %v779
        %v798 = vmul.f32 %v796, %v796
        %v799 = vmul.f32 %v797, %v797
        %v800 = vadd.f32 %v794, %v798
        %v801 = vadd.f32 %v795, %v799
        %v802 = vmul.f32 %v800, 0.25
        %v803 = vmul.f32 %v801, 0.25
        %v804 = vadd.f32 %v802, 1e-05
        %v805 = vadd.f32 %v803, 1e-05
        %v806 = vrsqrt.pop %v804
        %v807 = vrsqrt.pop %v805
        %v808 = vmul.f32 %v780, %v806
        %v809 = vmul.f32 %v781, %v807
        %v810 = vmul.f32 %v808, %v735
        %v811 = vmul.f32 %v809, %v735
        %v812 = vadd.f32 %v810, %v739
        %v813 = vadd.f32 %v811, %v739
        %v814 = vmul.f32 %v784, %v806
        %v815 = vmul.f32 %v785, %v807
        %v816 = vmul.f32 %v814, %v745
        %v817 = vmul.f32 %v815, %v745
        %v818 = vadd.f32 %v816, %v749
        %v819 = vadd.f32 %v817, %v749
        %v820 = vmul.f32 %v790, %v806
        %v821 = vmul.f32 %v791, %v807
        %v822 = vmul.f32 %v820, %v755
        %v823 = vmul.f32 %v821, %v755
        %v824 = vadd.f32 %v822, %v759
        %v825 = vadd.f32 %v823, %v759
        %v826 = vmul.f32 %v796, %v806
        %v827 = vmul.f32 %v797, %v807
        %v828 = vmul.f32 %v826, %v765
        %v829 = vmul.f32 %v827, %v765
        %v830 = vadd.f32 %v828, %v769
        %v831 = vadd.f32 %v829, %v769
        %s832 = sld [smem:[#allocation14]]
        %v833 = vstv %s832
        %v834 = vmul.f32 %v833, %v812
        %v835 = vmul.f32 %v833, %v813
        %s836 = sld [smem:[#allocation14 + $0x1]]
        %v837 = vstv %s836
        %v838 = vmul.f32 %v837, %v818
        %v839 = vmul.f32 %v837, %v819
        %v840 = vadd.f32 %v834, %v838
        %v841 = vadd.f32 %v835, %v839
        %s842 = sld [smem:[#allocation14 + $0x2]]
        %v843 = vstv %s842
        %v844 = vmul.f32 %v843, %v824
        %v845 = vmul.f32 %v843, %v825
        %v846 = vadd.f32 %v840, %v844
        %v847 = vadd.f32 %v841, %v845
        %s848 = sld [smem:[#allocation14 + $0x3]]
        %v849 = vstv %s848
        %v850 = vmul.f32 %v849, %v830
        %v851 = vmul.f32 %v849, %v831
        %v852 = vadd.f32 %v846, %v850
        %v853 = vadd.f32 %v847, %v851
        %s854 = sld [smem:[#allocation14 + $0x80]]
        %v855 = vstv %s854
        %v856 = vmul.f32 %v855, %v812
        %v857 = vmul.f32 %v855, %v813
        %s858 = sld [smem:[#allocation14 + $0x81]]
        %v859 = vstv %s858
        %v860 = vmul.f32 %v859, %v818
        %v861 = vmul.f32 %v859, %v819
        %v862 = vadd.f32 %v856, %v860
        %v863 = vadd.f32 %v857, %v861
        %s864 = sld [smem:[#allocation14 + $0x82]]
        %v865 = vstv %s864
        %v866 = vmul.f32 %v865, %v824
        %v867 = vmul.f32 %v865, %v825
        %v868 = vadd.f32 %v862, %v866
        %v869 = vadd.f32 %v863, %v867
        %s870 = sld [smem:[#allocation14 + $0x83]]
        %v871 = vstv %s870
        %v872 = vmul.f32 %v871, %v830
        %v873 = vmul.f32 %v871, %v831
        %v874 = vadd.f32 %v868, %v872
        %v875 = vadd.f32 %v869, %v873
        %s876 = sld [smem:[#allocation14 + $0x100]]
        %v877 = vstv %s876
        %v878 = vmul.f32 %v877, %v812
        %v879 = vmul.f32 %v877, %v813
        %s880 = sld [smem:[#allocation14 + $0x101]]
        %v881 = vstv %s880
        %v882 = vmul.f32 %v881, %v818
        %v883 = vmul.f32 %v881, %v819
        %v884 = vadd.f32 %v878, %v882
        %v885 = vadd.f32 %v879, %v883
        %s886 = sld [smem:[#allocation14 + $0x102]]
        %v887 = vstv %s886
        %v888 = vmul.f32 %v887, %v824
        %v889 = vmul.f32 %v887, %v825
        %v890 = vadd.f32 %v884, %v888
        %v891 = vadd.f32 %v885, %v889
        %s892 = sld [smem:[#allocation14 + $0x103]]
        %v893 = vstv %s892
        %v894 = vmul.f32 %v893, %v830
        %v895 = vmul.f32 %v893, %v831
        %v896 = vadd.f32 %v890, %v894
        %v897 = vadd.f32 %v891, %v895
        %s898 = sld [smem:[#allocation14 + $0x180]]
        %v899 = vstv %s898
        %v900 = vmul.f32 %v899, %v812
        %v901 = vmul.f32 %v899, %v813
        %s902 = sld [smem:[#allocation14 + $0x181]]
        %v903 = vstv %s902
        %v904 = vmul.f32 %v903, %v818
        %v905 = vmul.f32 %v903, %v819
        %v906 = vadd.f32 %v900, %v904
        %v907 = vadd.f32 %v901, %v905
        %s908 = sld [smem:[#allocation14 + $0x182]]
        %v909 = vstv %s908
        %v910 = vmul.f32 %v909, %v824
        %v911 = vmul.f32 %v909, %v825
        %v912 = vadd.f32 %v906, %v910
        %v913 = vadd.f32 %v907, %v911
        %s914 = sld [smem:[#allocation14 + $0x183]]
        %v915 = vstv %s914
        %v916 = vmul.f32 %v915, %v830
        %v917 = vmul.f32 %v915, %v831
        %v918 = vadd.f32 %v912, %v916
        %v919 = vadd.f32 %v913, %v917
        %s920 = sld [smem:[#allocation14 + $0x200]]
        %v921 = vstv %s920
        %v922 = vmul.f32 %v921, %v812
        %v923 = vmul.f32 %v921, %v813
        %s924 = sld [smem:[#allocation14 + $0x201]]
        %v925 = vstv %s924
        %v926 = vmul.f32 %v925, %v818
        %v927 = vmul.f32 %v925, %v819
        %v928 = vadd.f32 %v922, %v926
        %v929 = vadd.f32 %v923, %v927
        %s930 = sld [smem:[#allocation14 + $0x202]]
        %v931 = vstv %s930
        %v932 = vmul.f32 %v931, %v824
        %v933 = vmul.f32 %v931, %v825
        %v934 = vadd.f32 %v928, %v932
        %v935 = vadd.f32 %v929, %v933
        %s936 = sld [smem:[#allocation14 + $0x203]]
        %v937 = vstv %s936
        %v938 = vmul.f32 %v937, %v830
        %v939 = vmul.f32 %v937, %v831
        %v940 = vadd.f32 %v934, %v938
        %v941 = vadd.f32 %v935, %v939
        %s942 = sld [smem:[#allocation14 + $0x280]]
        %v943 = vstv %s942
        %v944 = vmul.f32 %v943, %v812
        %v945 = vmul.f32 %v943, %v813
        %s946 = sld [smem:[#allocation14 + $0x281]]
        %v947 = vstv %s946
        %v948 = vmul.f32 %v947, %v818
        %v949 = vmul.f32 %v947, %v819
        %v950 = vadd.f32 %v944, %v948
        %v951 = vadd.f32 %v945, %v949
        %s952 = sld [smem:[#allocation14 + $0x282]]
        %v953 = vstv %s952
        %v954 = vmul.f32 %v953, %v824
        %v955 = vmul.f32 %v953, %v825
        %v956 = vadd.f32 %v950, %v954
        %v957 = vadd.f32 %v951, %v955
        %s958 = sld [smem:[#allocation14 + $0x283]]
        %v959 = vstv %s958
        %v960 = vmul.f32 %v959, %v830
        %v961 = vmul.f32 %v959, %v831
        %v962 = vadd.f32 %v956, %v960
        %v963 = vadd.f32 %v957, %v961
        %s964 = sld [smem:[#allocation14 + $0x300]]
        %v965 = vstv %s964
        %v966 = vmul.f32 %v965, %v812
        %v967 = vmul.f32 %v965, %v813
        %s968 = sld [smem:[#allocation14 + $0x301]]
        %v969 = vstv %s968
        %v970 = vmul.f32 %v969, %v818
        %v971 = vmul.f32 %v969, %v819
        %v972 = vadd.f32 %v966, %v970
        %v973 = vadd.f32 %v967, %v971
        %s974 = sld [smem:[#allocation14 + $0x302]]
        %v975 = vstv %s974
        %v976 = vmul.f32 %v975, %v824
        %v977 = vmul.f32 %v975, %v825
        %v978 = vadd.f32 %v972, %v976
        %v979 = vadd.f32 %v973, %v977
        %s980 = sld [smem:[#allocation14 + $0x303]]
        %v981 = vstv %s980
        %v982 = vmul.f32 %v981, %v830
        %v983 = vmul.f32 %v981, %v831
        %v984 = vadd.f32 %v978, %v982
        %v985 = vadd.f32 %v979, %v983
        %s986 = sld [smem:[#allocation14 + $0x380]]
        %v987 = vstv %s986
        %v988 = vmul.f32 %v987, %v812
        %v989 = vmul.f32 %v987, %v813
        %s990 = sld [smem:[#allocation14 + $0x381]]
        %v991 = vstv %s990
        %v992 = vmul.f32 %v991, %v818
        %v993 = vmul.f32 %v991, %v819
        %v994 = vadd.f32 %v988, %v992
        %v995 = vadd.f32 %v989, %v993
        %s996 = sld [smem:[#allocation14 + $0x382]]
        %v997 = vstv %s996
        %v998 = vmul.f32 %v997, %v824
        %v999 = vmul.f32 %v997, %v825
        %v1000 = vadd.f32 %v994, %v998
        %v1001 = vadd.f32 %v995, %v999
        %s1002 = sld [smem:[#allocation14 + $0x383]]
        %v1003 = vstv %s1002
        %v1004 = vmul.f32 %v1003, %v830
        %v1005 = vmul.f32 %v1003, %v831
        %v1006 = vadd.f32 %v1000, %v1004
        %v1007 = vadd.f32 %v1001, %v1005
        %vm1010 = vcmask 1040384
        %v1011 = vrot.slane %v852, 7
        %v1012 = vrot.slane %v853, 7
        %v1013 = vsel %vm1010, %v1011, %v1012
        %v1016 = vsel %vm1010, 0.0, %v1011
        %1018 = vrot.lane.b32.xlu0 %v1016, 1
        %v1019 = vpop.permute.xlu0 %1018
        %1020 = vrot.lane.b32.xlu0 %v1013, 1
        %v1021 = vpop.permute.xlu0 %1020
        %vm1024 = vcmask 7168
        %v1025 = vsel %vm1024, 0.0, %v1019
        %v1026 = vsel %vm1024, 0.0, %v1021
        %1027 = vrot.lane.b32.xlu0 %v1016, 127
        %v1028 = vpop.permute.xlu0 %1027
        %1029 = vrot.lane.b32.xlu0 %v1013, 127
        %v1030 = vpop.permute.xlu0 %1029
        %vm1033 = vcmask 1039360
        %v1034 = vsel %vm1033, %v1028, 0.0
        %v1035 = vsel %vm1033, %v1030, 0.0
        %1036 = vrot.lane.b32.xlu0 %v852, 1
        %v1037 = vpop.permute.xlu0 %1036
        %1038 = vrot.lane.b32.xlu0 %v853, 1
        %v1039 = vpop.permute.xlu0 %1038
        %v1042 = vsel %vm1024, 0.0, %v1037
        %v1043 = vsel %vm1024, 0.0, %v1039
        %1044 = vrot.lane.b32.xlu0 %v852, 127
        %v1045 = vpop.permute.xlu0 %1044
        %1046 = vrot.lane.b32.xlu0 %v853, 127
        %v1047 = vpop.permute.xlu0 %1046
        %v1050 = vsel %vm1033, %v1045, 0.0
        %v1051 = vsel %vm1033, %v1047, 0.0
        %vm1052 = vcmask 1046528
        %v1053 = vrot.slane %v852, 1
        %v1054 = vrot.slane %v853, 1
        %v1055 = vsel %vm1052, %v1053, %v1054
        %v1058 = vsel %vm1052, %v1054, 0.0
        %1060 = vrot.lane.b32.xlu0 %v1055, 1
        %v1061 = vpop.permute.xlu0 %1060
        %1062 = vrot.lane.b32.xlu0 %v1058, 1
        %v1063 = vpop.permute.xlu0 %1062
        %v1066 = vsel %vm1024, 0.0, %v1061
        %v1067 = vsel %vm1024, 0.0, %v1063
        %1068 = vrot.lane.b32.xlu0 %v1055, 127
        %v1069 = vpop.permute.xlu0 %1068
        %1070 = vrot.lane.b32.xlu0 %v1058, 127
        %v1071 = vpop.permute.xlu0 %1070
        %v1074 = vsel %vm1033, %v1069, 0.0
        %v1075 = vsel %vm1033, %v1071, 0.0
        %s1076 = sld [smem:[#allocation16]]
        %v1077 = vstv %s1076
        %v1078 = vmul.f32 %v1077, %v1025
        %v1079 = vmul.f32 %v1077, %v1026
        %s1080 = sld [smem:[#allocation16 + $0x1]]
        %v1081 = vstv %s1080
        %v1082 = vmul.f32 %v1081, %v1016
        %v1083 = vmul.f32 %v1081, %v1013
        %v1084 = vadd.f32 %v1078, %v1082
        %v1085 = vadd.f32 %v1079, %v1083
        %s1086 = sld [smem:[#allocation16 + $0x2]]
        %v1087 = vstv %s1086
        %v1088 = vmul.f32 %v1087, %v1034
        %v1089 = vmul.f32 %v1087, %v1035
        %v1090 = vadd.f32 %v1084, %v1088
        %v1091 = vadd.f32 %v1085, %v1089
        %s1092 = sld [smem:[#allocation16 + $0x3]]
        %v1093 = vstv %s1092
        %v1094 = vmul.f32 %v1093, %v1042
        %v1095 = vmul.f32 %v1093, %v1043
        %v1096 = vadd.f32 %v1090, %v1094
        %v1097 = vadd.f32 %v1091, %v1095
        %s1098 = sld [smem:[#allocation16 + $0x4]]
        %v1099 = vstv %s1098
        %v1100 = vmul.f32 %v1099, %v852
        %v1101 = vmul.f32 %v1099, %v853
        %v1102 = vadd.f32 %v1096, %v1100
        %v1103 = vadd.f32 %v1097, %v1101
        %s1104 = sld [smem:[#allocation16 + $0x5]]
        %v1105 = vstv %s1104
        %v1106 = vmul.f32 %v1105, %v1050
        %v1107 = vmul.f32 %v1105, %v1051
        %v1108 = vadd.f32 %v1102, %v1106
        %v1109 = vadd.f32 %v1103, %v1107
        %s1110 = sld [smem:[#allocation16 + $0x6]]
        %v1111 = vstv %s1110
        %v1112 = vmul.f32 %v1111, %v1066
        %v1113 = vmul.f32 %v1111, %v1067
        %v1114 = vadd.f32 %v1108, %v1112
        %v1115 = vadd.f32 %v1109, %v1113
        %s1116 = sld [smem:[#allocation16 + $0x7]]
        %v1117 = vstv %s1116
        %v1118 = vmul.f32 %v1117, %v1055
        %v1119 = vmul.f32 %v1117, %v1058
        %v1120 = vadd.f32 %v1114, %v1118
        %v1121 = vadd.f32 %v1115, %v1119
        %s1122 = sld [smem:[#allocation16 + $0x8]]
        %v1123 = vstv %s1122
        %v1124 = vmul.f32 %v1123, %v1074
        %v1125 = vmul.f32 %v1123, %v1075
        %v1126 = vadd.f32 %v1120, %v1124
        %v1127 = vadd.f32 %v1121, %v1125
        %v1130 = vrot.slane %v874, 7
        %v1131 = vrot.slane %v875, 7
        %v1132 = vsel %vm1010, %v1130, %v1131
        %v1135 = vsel %vm1010, 0.0, %v1130
        %1137 = vrot.lane.b32.xlu0 %v1135, 1
        %v1138 = vpop.permute.xlu0 %1137
        %1139 = vrot.lane.b32.xlu0 %v1132, 1
        %v1140 = vpop.permute.xlu0 %1139
        %v1143 = vsel %vm1024, 0.0, %v1138
        %v1144 = vsel %vm1024, 0.0, %v1140
        %1145 = vrot.lane.b32.xlu0 %v1135, 127
        %v1146 = vpop.permute.xlu0 %1145
        %1147 = vrot.lane.b32.xlu0 %v1132, 127
        %v1148 = vpop.permute.xlu0 %1147
        %v1151 = vsel %vm1033, %v1146, 0.0
        %v1152 = vsel %vm1033, %v1148, 0.0
        %1153 = vrot.lane.b32.xlu0 %v874, 1
        %v1154 = vpop.permute.xlu0 %1153
        %1155 = vrot.lane.b32.xlu0 %v875, 1
        %v1156 = vpop.permute.xlu0 %1155
        %v1159 = vsel %vm1024, 0.0, %v1154
        %v1160 = vsel %vm1024, 0.0, %v1156
        %1161 = vrot.lane.b32.xlu0 %v874, 127
        %v1162 = vpop.permute.xlu0 %1161
        %1163 = vrot.lane.b32.xlu0 %v875, 127
        %v1164 = vpop.permute.xlu0 %1163
        %v1167 = vsel %vm1033, %v1162, 0.0
        %v1168 = vsel %vm1033, %v1164, 0.0
        %v1169 = vrot.slane %v874, 1
        %v1170 = vrot.slane %v875, 1
        %v1171 = vsel %vm1052, %v1169, %v1170
        %v1174 = vsel %vm1052, %v1170, 0.0
        %1176 = vrot.lane.b32.xlu0 %v1171, 1
        %v1177 = vpop.permute.xlu0 %1176
        %1178 = vrot.lane.b32.xlu0 %v1174, 1
        %v1179 = vpop.permute.xlu0 %1178
        %v1182 = vsel %vm1024, 0.0, %v1177
        %v1183 = vsel %vm1024, 0.0, %v1179
        %1184 = vrot.lane.b32.xlu0 %v1171, 127
        %v1185 = vpop.permute.xlu0 %1184
        %1186 = vrot.lane.b32.xlu0 %v1174, 127
        %v1187 = vpop.permute.xlu0 %1186
        %v1190 = vsel %vm1033, %v1185, 0.0
        %v1191 = vsel %vm1033, %v1187, 0.0
        %s1192 = sld [smem:[#allocation16 + $0x80]]
        %v1193 = vstv %s1192
        %v1194 = vmul.f32 %v1193, %v1143
        %v1195 = vmul.f32 %v1193, %v1144
        %s1196 = sld [smem:[#allocation16 + $0x81]]
        %v1197 = vstv %s1196
        %v1198 = vmul.f32 %v1197, %v1135
        %v1199 = vmul.f32 %v1197, %v1132
        %v1200 = vadd.f32 %v1194, %v1198
        %v1201 = vadd.f32 %v1195, %v1199
        %s1202 = sld [smem:[#allocation16 + $0x82]]
        %v1203 = vstv %s1202
        %v1204 = vmul.f32 %v1203, %v1151
        %v1205 = vmul.f32 %v1203, %v1152
        %v1206 = vadd.f32 %v1200, %v1204
        %v1207 = vadd.f32 %v1201, %v1205
        %s1208 = sld [smem:[#allocation16 + $0x83]]
        %v1209 = vstv %s1208
        %v1210 = vmul.f32 %v1209, %v1159
        %v1211 = vmul.f32 %v1209, %v1160
        %v1212 = vadd.f32 %v1206, %v1210
        %v1213 = vadd.f32 %v1207, %v1211
        %s1214 = sld [smem:[#allocation16 + $0x84]]
        %v1215 = vstv %s1214
        %v1216 = vmul.f32 %v1215, %v874
        %v1217 = vmul.f32 %v1215, %v875
        %v1218 = vadd.f32 %v1212, %v1216
        %v1219 = vadd.f32 %v1213, %v1217
        %s1220 = sld [smem:[#allocation16 + $0x85]]
        %v1221 = vstv %s1220
        %v1222 = vmul.f32 %v1221, %v1167
        %v1223 = vmul.f32 %v1221, %v1168
        %v1224 = vadd.f32 %v1218, %v1222
        %v1225 = vadd.f32 %v1219, %v1223
        %s1226 = sld [smem:[#allocation16 + $0x86]]
        %v1227 = vstv %s1226
        %v1228 = vmul.f32 %v1227, %v1182
        %v1229 = vmul.f32 %v1227, %v1183
        %v1230 = vadd.f32 %v1224, %v1228
        %v1231 = vadd.f32 %v1225, %v1229
        %s1232 = sld [smem:[#allocation16 + $0x87]]
        %v1233 = vstv %s1232
        %v1234 = vmul.f32 %v1233, %v1171
        %v1235 = vmul.f32 %v1233, %v1174
        %v1236 = vadd.f32 %v1230, %v1234
        %v1237 = vadd.f32 %v1231, %v1235
        %s1238 = sld [smem:[#allocation16 + $0x88]]
        %v1239 = vstv %s1238
        %v1240 = vmul.f32 %v1239, %v1190
        %v1241 = vmul.f32 %v1239, %v1191
        %v1242 = vadd.f32 %v1236, %v1240
        %v1243 = vadd.f32 %v1237, %v1241
        %v1246 = vrot.slane %v896, 7
        %v1247 = vrot.slane %v897, 7
        %v1248 = vsel %vm1010, %v1246, %v1247
        %v1251 = vsel %vm1010, 0.0, %v1246
        %1253 = vrot.lane.b32.xlu0 %v1251, 1
        %v1254 = vpop.permute.xlu0 %1253
        %1255 = vrot.lane.b32.xlu0 %v1248, 1
        %v1256 = vpop.permute.xlu0 %1255
        %v1259 = vsel %vm1024, 0.0, %v1254
        %v1260 = vsel %vm1024, 0.0, %v1256
        %1261 = vrot.lane.b32.xlu0 %v1251, 127
        %v1262 = vpop.permute.xlu0 %1261
        %1263 = vrot.lane.b32.xlu0 %v1248, 127
        %v1264 = vpop.permute.xlu0 %1263
        %v1267 = vsel %vm1033, %v1262, 0.0
        %v1268 = vsel %vm1033, %v1264, 0.0
        %1269 = vrot.lane.b32.xlu0 %v896, 1
        %v1270 = vpop.permute.xlu0 %1269
        %1271 = vrot.lane.b32.xlu0 %v897, 1
        %v1272 = vpop.permute.xlu0 %1271
        %v1275 = vsel %vm1024, 0.0, %v1270
        %v1276 = vsel %vm1024, 0.0, %v1272
        %1277 = vrot.lane.b32.xlu0 %v896, 127
        %v1278 = vpop.permute.xlu0 %1277
        %1279 = vrot.lane.b32.xlu0 %v897, 127
        %v1280 = vpop.permute.xlu0 %1279
        %v1283 = vsel %vm1033, %v1278, 0.0
        %v1284 = vsel %vm1033, %v1280, 0.0
        %v1285 = vrot.slane %v896, 1
        %v1286 = vrot.slane %v897, 1
        %v1287 = vsel %vm1052, %v1285, %v1286
        %v1290 = vsel %vm1052, %v1286, 0.0
        %1292 = vrot.lane.b32.xlu0 %v1287, 1
        %v1293 = vpop.permute.xlu0 %1292
        %1294 = vrot.lane.b32.xlu0 %v1290, 1
        %v1295 = vpop.permute.xlu0 %1294
        %v1298 = vsel %vm1024, 0.0, %v1293
        %v1299 = vsel %vm1024, 0.0, %v1295
        %1300 = vrot.lane.b32.xlu0 %v1287, 127
        %v1301 = vpop.permute.xlu0 %1300
        %1302 = vrot.lane.b32.xlu0 %v1290, 127
        %v1303 = vpop.permute.xlu0 %1302
        %v1306 = vsel %vm1033, %v1301, 0.0
        %v1307 = vsel %vm1033, %v1303, 0.0
        %s1308 = sld [smem:[#allocation16 + $0x100]]
        %v1309 = vstv %s1308
        %v1310 = vmul.f32 %v1309, %v1259
        %v1311 = vmul.f32 %v1309, %v1260
        %s1312 = sld [smem:[#allocation16 + $0x101]]
        %v1313 = vstv %s1312
        %v1314 = vmul.f32 %v1313, %v1251
        %v1315 = vmul.f32 %v1313, %v1248
        %v1316 = vadd.f32 %v1310, %v1314
        %v1317 = vadd.f32 %v1311, %v1315
        %s1318 = sld [smem:[#allocation16 + $0x102]]
        %v1319 = vstv %s1318
        %v1320 = vmul.f32 %v1319, %v1267
        %v1321 = vmul.f32 %v1319, %v1268
        %v1322 = vadd.f32 %v1316, %v1320
        %v1323 = vadd.f32 %v1317, %v1321
        %s1324 = sld [smem:[#allocation16 + $0x103]]
        %v1325 = vstv %s1324
        %v1326 = vmul.f32 %v1325, %v1275
        %v1327 = vmul.f32 %v1325, %v1276
        %v1328 = vadd.f32 %v1322, %v1326
        %v1329 = vadd.f32 %v1323, %v1327
        %s1330 = sld [smem:[#allocation16 + $0x104]]
        %v1331 = vstv %s1330
        %v1332 = vmul.f32 %v1331, %v896
        %v1333 = vmul.f32 %v1331, %v897
        %v1334 = vadd.f32 %v1328, %v1332
        %v1335 = vadd.f32 %v1329, %v1333
        %s1336 = sld [smem:[#allocation16 + $0x105]]
        %v1337 = vstv %s1336
        %v1338 = vmul.f32 %v1337, %v1283
        %v1339 = vmul.f32 %v1337, %v1284
        %v1340 = vadd.f32 %v1334, %v1338
        %v1341 = vadd.f32 %v1335, %v1339
        %s1342 = sld [smem:[#allocation16 + $0x106]]
        %v1343 = vstv %s1342
        %v1344 = vmul.f32 %v1343, %v1298
        %v1345 = vmul.f32 %v1343, %v1299
        %v1346 = vadd.f32 %v1340, %v1344
        %v1347 = vadd.f32 %v1341, %v1345
        %s1348 = sld [smem:[#allocation16 + $0x107]]
        %v1349 = vstv %s1348
        %v1350 = vmul.f32 %v1349, %v1287
        %v1351 = vmul.f32 %v1349, %v1290
        %v1352 = vadd.f32 %v1346, %v1350
        %v1353 = vadd.f32 %v1347, %v1351
        %s1354 = sld [smem:[#allocation16 + $0x108]]
        %v1355 = vstv %s1354
        %v1356 = vmul.f32 %v1355, %v1306
        %v1357 = vmul.f32 %v1355, %v1307
        %v1358 = vadd.f32 %v1352, %v1356
        %v1359 = vadd.f32 %v1353, %v1357
        %v1362 = vrot.slane %v918, 7
        %v1363 = vrot.slane %v919, 7
        %v1364 = vsel %vm1010, %v1362, %v1363
        %v1367 = vsel %vm1010, 0.0, %v1362
        %1369 = vrot.lane.b32.xlu0 %v1367, 1
        %v1370 = vpop.permute.xlu0 %1369
        %1371 = vrot.lane.b32.xlu0 %v1364, 1
        %v1372 = vpop.permute.xlu0 %1371
        %v1375 = vsel %vm1024, 0.0, %v1370
        %v1376 = vsel %vm1024, 0.0, %v1372
        %1377 = vrot.lane.b32.xlu0 %v1367, 127
        %v1378 = vpop.permute.xlu0 %1377
        %1379 = vrot.lane.b32.xlu0 %v1364, 127
        %v1380 = vpop.permute.xlu0 %1379
        %v1383 = vsel %vm1033, %v1378, 0.0
        %v1384 = vsel %vm1033, %v1380, 0.0
        %1385 = vrot.lane.b32.xlu0 %v918, 1
        %v1386 = vpop.permute.xlu0 %1385
        %1387 = vrot.lane.b32.xlu0 %v919, 1
        %v1388 = vpop.permute.xlu0 %1387
        %v1391 = vsel %vm1024, 0.0, %v1386
        %v1392 = vsel %vm1024, 0.0, %v1388
        %1393 = vrot.lane.b32.xlu0 %v918, 127
        %v1394 = vpop.permute.xlu0 %1393
        %1395 = vrot.lane.b32.xlu0 %v919, 127
        %v1396 = vpop.permute.xlu0 %1395
        %v1399 = vsel %vm1033, %v1394, 0.0
        %v1400 = vsel %vm1033, %v1396, 0.0
        %v1401 = vrot.slane %v918, 1
        %v1402 = vrot.slane %v919, 1
        %v1403 = vsel %vm1052, %v1401, %v1402
        %v1406 = vsel %vm1052, %v1402, 0.0
        %1408 = vrot.lane.b32.xlu0 %v1403, 1
        %v1409 = vpop.permute.xlu0 %1408
        %1410 = vrot.lane.b32.xlu0 %v1406, 1
        %v1411 = vpop.permute.xlu0 %1410
        %v1414 = vsel %vm1024, 0.0, %v1409
        %v1415 = vsel %vm1024, 0.0, %v1411
        %1416 = vrot.lane.b32.xlu0 %v1403, 127
        %v1417 = vpop.permute.xlu0 %1416
        %1418 = vrot.lane.b32.xlu0 %v1406, 127
        %v1419 = vpop.permute.xlu0 %1418
        %v1422 = vsel %vm1033, %v1417, 0.0
        %v1423 = vsel %vm1033, %v1419, 0.0
        %s1424 = sld [smem:[#allocation16 + $0x180]]
        %v1425 = vstv %s1424
        %v1426 = vmul.f32 %v1425, %v1375
        %v1427 = vmul.f32 %v1425, %v1376
        %s1428 = sld [smem:[#allocation16 + $0x181]]
        %v1429 = vstv %s1428
        %v1430 = vmul.f32 %v1429, %v1367
        %v1431 = vmul.f32 %v1429, %v1364
        %v1432 = vadd.f32 %v1426, %v1430
        %v1433 = vadd.f32 %v1427, %v1431
        %s1434 = sld [smem:[#allocation16 + $0x182]]
        %v1435 = vstv %s1434
        %v1436 = vmul.f32 %v1435, %v1383
        %v1437 = vmul.f32 %v1435, %v1384
        %v1438 = vadd.f32 %v1432, %v1436
        %v1439 = vadd.f32 %v1433, %v1437
        %s1440 = sld [smem:[#allocation16 + $0x183]]
        %v1441 = vstv %s1440
        %v1442 = vmul.f32 %v1441, %v1391
        %v1443 = vmul.f32 %v1441, %v1392
        %v1444 = vadd.f32 %v1438, %v1442
        %v1445 = vadd.f32 %v1439, %v1443
        %s1446 = sld [smem:[#allocation16 + $0x184]]
        %v1447 = vstv %s1446
        %v1448 = vmul.f32 %v1447, %v918
        %v1449 = vmul.f32 %v1447, %v919
        %v1450 = vadd.f32 %v1444, %v1448
        %v1451 = vadd.f32 %v1445, %v1449
        %s1452 = sld [smem:[#allocation16 + $0x185]]
        %v1453 = vstv %s1452
        %v1454 = vmul.f32 %v1453, %v1399
        %v1455 = vmul.f32 %v1453, %v1400
        %v1456 = vadd.f32 %v1450, %v1454
        %v1457 = vadd.f32 %v1451, %v1455
        %s1458 = sld [smem:[#allocation16 + $0x186]]
        %v1459 = vstv %s1458
        %v1460 = vmul.f32 %v1459, %v1414
        %v1461 = vmul.f32 %v1459, %v1415
        %v1462 = vadd.f32 %v1456, %v1460
        %v1463 = vadd.f32 %v1457, %v1461
        %s1464 = sld [smem:[#allocation16 + $0x187]]
        %v1465 = vstv %s1464
        %v1466 = vmul.f32 %v1465, %v1403
        %v1467 = vmul.f32 %v1465, %v1406
        %v1468 = vadd.f32 %v1462, %v1466
        %v1469 = vadd.f32 %v1463, %v1467
        %s1470 = sld [smem:[#allocation16 + $0x188]]
        %v1471 = vstv %s1470
        %v1472 = vmul.f32 %v1471, %v1422
        %v1473 = vmul.f32 %v1471, %v1423
        %v1474 = vadd.f32 %v1468, %v1472
        %v1475 = vadd.f32 %v1469, %v1473
        %v1478 = vrot.slane %v940, 7
        %v1479 = vrot.slane %v941, 7
        %v1480 = vsel %vm1010, %v1478, %v1479
        %v1483 = vsel %vm1010, 0.0, %v1478
        %1485 = vrot.lane.b32.xlu0 %v1483, 1
        %v1486 = vpop.permute.xlu0 %1485
        %1487 = vrot.lane.b32.xlu0 %v1480, 1
        %v1488 = vpop.permute.xlu0 %1487
        %v1491 = vsel %vm1024, 0.0, %v1486
        %v1492 = vsel %vm1024, 0.0, %v1488
        %1493 = vrot.lane.b32.xlu0 %v1483, 127
        %v1494 = vpop.permute.xlu0 %1493
        %1495 = vrot.lane.b32.xlu0 %v1480, 127
        %v1496 = vpop.permute.xlu0 %1495
        %v1499 = vsel %vm1033, %v1494, 0.0
        %v1500 = vsel %vm1033, %v1496, 0.0
        %1501 = vrot.lane.b32.xlu0 %v940, 1
        %v1502 = vpop.permute.xlu0 %1501
        %1503 = vrot.lane.b32.xlu0 %v941, 1
        %v1504 = vpop.permute.xlu0 %1503
        %v1507 = vsel %vm1024, 0.0, %v1502
        %v1508 = vsel %vm1024, 0.0, %v1504
        %1509 = vrot.lane.b32.xlu0 %v940, 127
        %v1510 = vpop.permute.xlu0 %1509
        %1511 = vrot.lane.b32.xlu0 %v941, 127
        %v1512 = vpop.permute.xlu0 %1511
        %v1515 = vsel %vm1033, %v1510, 0.0
        %v1516 = vsel %vm1033, %v1512, 0.0
        %v1517 = vrot.slane %v940, 1
        %v1518 = vrot.slane %v941, 1
        %v1519 = vsel %vm1052, %v1517, %v1518
        %v1522 = vsel %vm1052, %v1518, 0.0
        %1524 = vrot.lane.b32.xlu0 %v1519, 1
        %v1525 = vpop.permute.xlu0 %1524
        %1526 = vrot.lane.b32.xlu0 %v1522, 1
        %v1527 = vpop.permute.xlu0 %1526
        %v1530 = vsel %vm1024, 0.0, %v1525
        %v1531 = vsel %vm1024, 0.0, %v1527
        %1532 = vrot.lane.b32.xlu0 %v1519, 127
        %v1533 = vpop.permute.xlu0 %1532
        %1534 = vrot.lane.b32.xlu0 %v1522, 127
        %v1535 = vpop.permute.xlu0 %1534
        %v1538 = vsel %vm1033, %v1533, 0.0
        %v1539 = vsel %vm1033, %v1535, 0.0
        %s1540 = sld [smem:[#allocation16 + $0x200]]
        %v1541 = vstv %s1540
        %v1542 = vmul.f32 %v1541, %v1491
        %v1543 = vmul.f32 %v1541, %v1492
        %s1544 = sld [smem:[#allocation16 + $0x201]]
        %v1545 = vstv %s1544
        %v1546 = vmul.f32 %v1545, %v1483
        %v1547 = vmul.f32 %v1545, %v1480
        %v1548 = vadd.f32 %v1542, %v1546
        %v1549 = vadd.f32 %v1543, %v1547
        %s1550 = sld [smem:[#allocation16 + $0x202]]
        %v1551 = vstv %s1550
        %v1552 = vmul.f32 %v1551, %v1499
        %v1553 = vmul.f32 %v1551, %v1500
        %v1554 = vadd.f32 %v1548, %v1552
        %v1555 = vadd.f32 %v1549, %v1553
        %s1556 = sld [smem:[#allocation16 + $0x203]]
        %v1557 = vstv %s1556
        %v1558 = vmul.f32 %v1557, %v1507
        %v1559 = vmul.f32 %v1557, %v1508
        %v1560 = vadd.f32 %v1554, %v1558
        %v1561 = vadd.f32 %v1555, %v1559
        %s1562 = sld [smem:[#allocation16 + $0x204]]
        %v1563 = vstv %s1562
        %v1564 = vmul.f32 %v1563, %v940
        %v1565 = vmul.f32 %v1563, %v941
        %v1566 = vadd.f32 %v1560, %v1564
        %v1567 = vadd.f32 %v1561, %v1565
        %s1568 = sld [smem:[#allocation16 + $0x205]]
        %v1569 = vstv %s1568
        %v1570 = vmul.f32 %v1569, %v1515
        %v1571 = vmul.f32 %v1569, %v1516
        %v1572 = vadd.f32 %v1566, %v1570
        %v1573 = vadd.f32 %v1567, %v1571
        %s1574 = sld [smem:[#allocation16 + $0x206]]
        %v1575 = vstv %s1574
        %v1576 = vmul.f32 %v1575, %v1530
        %v1577 = vmul.f32 %v1575, %v1531
        %v1578 = vadd.f32 %v1572, %v1576
        %v1579 = vadd.f32 %v1573, %v1577
        %s1580 = sld [smem:[#allocation16 + $0x207]]
        %v1581 = vstv %s1580
        %v1582 = vmul.f32 %v1581, %v1519
        %v1583 = vmul.f32 %v1581, %v1522
        %v1584 = vadd.f32 %v1578, %v1582
        %v1585 = vadd.f32 %v1579, %v1583
        %s1586 = sld [smem:[#allocation16 + $0x208]]
        %v1587 = vstv %s1586
        %v1588 = vmul.f32 %v1587, %v1538
        %v1589 = vmul.f32 %v1587, %v1539
        %v1590 = vadd.f32 %v1584, %v1588
        %v1591 = vadd.f32 %v1585, %v1589
        %v1594 = vrot.slane %v962, 7
        %v1595 = vrot.slane %v963, 7
        %v1596 = vsel %vm1010, %v1594, %v1595
        %v1599 = vsel %vm1010, 0.0, %v1594
        %1601 = vrot.lane.b32.xlu0 %v1599, 1
        %v1602 = vpop.permute.xlu0 %1601
        %1603 = vrot.lane.b32.xlu0 %v1596, 1
        %v1604 = vpop.permute.xlu0 %1603
        %v1607 = vsel %vm1024, 0.0, %v1602
        %v1608 = vsel %vm1024, 0.0, %v1604
        %1609 = vrot.lane.b32.xlu0 %v1599, 127
        %v1610 = vpop.permute.xlu0 %1609
        %1611 = vrot.lane.b32.xlu0 %v1596, 127
        %v1612 = vpop.permute.xlu0 %1611
        %v1615 = vsel %vm1033, %v1610, 0.0
        %v1616 = vsel %vm1033, %v1612, 0.0
        %1617 = vrot.lane.b32.xlu0 %v962, 1
        %v1618 = vpop.permute.xlu0 %1617
        %1619 = vrot.lane.b32.xlu0 %v963, 1
        %v1620 = vpop.permute.xlu0 %1619
        %v1623 = vsel %vm1024, 0.0, %v1618
        %v1624 = vsel %vm1024, 0.0, %v1620
        %1625 = vrot.lane.b32.xlu0 %v962, 127
        %v1626 = vpop.permute.xlu0 %1625
        %1627 = vrot.lane.b32.xlu0 %v963, 127
        %v1628 = vpop.permute.xlu0 %1627
        %v1631 = vsel %vm1033, %v1626, 0.0
        %v1632 = vsel %vm1033, %v1628, 0.0
        %v1633 = vrot.slane %v962, 1
        %v1634 = vrot.slane %v963, 1
        %v1635 = vsel %vm1052, %v1633, %v1634
        %v1638 = vsel %vm1052, %v1634, 0.0
        %1640 = vrot.lane.b32.xlu0 %v1635, 1
        %v1641 = vpop.permute.xlu0 %1640
        %1642 = vrot.lane.b32.xlu0 %v1638, 1
        %v1643 = vpop.permute.xlu0 %1642
        %v1646 = vsel %vm1024, 0.0, %v1641
        %v1647 = vsel %vm1024, 0.0, %v1643
        %1648 = vrot.lane.b32.xlu0 %v1635, 127
        %v1649 = vpop.permute.xlu0 %1648
        %1650 = vrot.lane.b32.xlu0 %v1638, 127
        %v1651 = vpop.permute.xlu0 %1650
        %v1654 = vsel %vm1033, %v1649, 0.0
        %v1655 = vsel %vm1033, %v1651, 0.0
        %s1656 = sld [smem:[#allocation16 + $0x280]]
        %v1657 = vstv %s1656
        %v1658 = vmul.f32 %v1657, %v1607
        %v1659 = vmul.f32 %v1657, %v1608
        %s1660 = sld [smem:[#allocation16 + $0x281]]
        %v1661 = vstv %s1660
        %v1662 = vmul.f32 %v1661, %v1599
        %v1663 = vmul.f32 %v1661, %v1596
        %v1664 = vadd.f32 %v1658, %v1662
        %v1665 = vadd.f32 %v1659, %v1663
        %s1666 = sld [smem:[#allocation16 + $0x282]]
        %v1667 = vstv %s1666
        %v1668 = vmul.f32 %v1667, %v1615
        %v1669 = vmul.f32 %v1667, %v1616
        %v1670 = vadd.f32 %v1664, %v1668
        %v1671 = vadd.f32 %v1665, %v1669
        %s1672 = sld [smem:[#allocation16 + $0x283]]
        %v1673 = vstv %s1672
        %v1674 = vmul.f32 %v1673, %v1623
        %v1675 = vmul.f32 %v1673, %v1624
        %v1676 = vadd.f32 %v1670, %v1674
        %v1677 = vadd.f32 %v1671, %v1675
        %s1678 = sld [smem:[#allocation16 + $0x284]]
        %v1679 = vstv %s1678
        %v1680 = vmul.f32 %v1679, %v962
        %v1681 = vmul.f32 %v1679, %v963
        %v1682 = vadd.f32 %v1676, %v1680
        %v1683 = vadd.f32 %v1677, %v1681
        %s1684 = sld [smem:[#allocation16 + $0x285]]
        %v1685 = vstv %s1684
        %v1686 = vmul.f32 %v1685, %v1631
        %v1687 = vmul.f32 %v1685, %v1632
        %v1688 = vadd.f32 %v1682, %v1686
        %v1689 = vadd.f32 %v1683, %v1687
        %s1690 = sld [smem:[#allocation16 + $0x286]]
        %v1691 = vstv %s1690
        %v1692 = vmul.f32 %v1691, %v1646
        %v1693 = vmul.f32 %v1691, %v1647
        %v1694 = vadd.f32 %v1688, %v1692
        %v1695 = vadd.f32 %v1689, %v1693
        %s1696 = sld [smem:[#allocation16 + $0x287]]
        %v1697 = vstv %s1696
        %v1698 = vmul.f32 %v1697, %v1635
        %v1699 = vmul.f32 %v1697, %v1638
        %v1700 = vadd.f32 %v1694, %v1698
        %v1701 = vadd.f32 %v1695, %v1699
        %s1702 = sld [smem:[#allocation16 + $0x288]]
        %v1703 = vstv %s1702
        %v1704 = vmul.f32 %v1703, %v1654
        %v1705 = vmul.f32 %v1703, %v1655
        %v1706 = vadd.f32 %v1700, %v1704
        %v1707 = vadd.f32 %v1701, %v1705
        %v1710 = vrot.slane %v984, 7
        %v1711 = vrot.slane %v985, 7
        %v1712 = vsel %vm1010, %v1710, %v1711
        %v1715 = vsel %vm1010, 0.0, %v1710
        %1717 = vrot.lane.b32.xlu0 %v1715, 1
        %v1718 = vpop.permute.xlu0 %1717
        %1719 = vrot.lane.b32.xlu0 %v1712, 1
        %v1720 = vpop.permute.xlu0 %1719
        %v1723 = vsel %vm1024, 0.0, %v1718
        %v1724 = vsel %vm1024, 0.0, %v1720
        %1725 = vrot.lane.b32.xlu0 %v1715, 127
        %v1726 = vpop.permute.xlu0 %1725
        %1727 = vrot.lane.b32.xlu0 %v1712, 127
        %v1728 = vpop.permute.xlu0 %1727
        %v1731 = vsel %vm1033, %v1726, 0.0
        %v1732 = vsel %vm1033, %v1728, 0.0
        %1733 = vrot.lane.b32.xlu0 %v984, 1
        %v1734 = vpop.permute.xlu0 %1733
        %1735 = vrot.lane.b32.xlu0 %v985, 1
        %v1736 = vpop.permute.xlu0 %1735
        %v1739 = vsel %vm1024, 0.0, %v1734
        %v1740 = vsel %vm1024, 0.0, %v1736
        %1741 = vrot.lane.b32.xlu0 %v984, 127
        %v1742 = vpop.permute.xlu0 %1741
        %1743 = vrot.lane.b32.xlu0 %v985, 127
        %v1744 = vpop.permute.xlu0 %1743
        %v1747 = vsel %vm1033, %v1742, 0.0
        %v1748 = vsel %vm1033, %v1744, 0.0
        %v1749 = vrot.slane %v984, 1
        %v1750 = vrot.slane %v985, 1
        %v1751 = vsel %vm1052, %v1749, %v1750
        %v1754 = vsel %vm1052, %v1750, 0.0
        %1756 = vrot.lane.b32.xlu0 %v1751, 1
        %v1757 = vpop.permute.xlu0 %1756
        %1758 = vrot.lane.b32.xlu0 %v1754, 1
        %v1759 = vpop.permute.xlu0 %1758
        %v1762 = vsel %vm1024, 0.0, %v1757
        %v1763 = vsel %vm1024, 0.0, %v1759
        %1764 = vrot.lane.b32.xlu0 %v1751, 127
        %v1765 = vpop.permute.xlu0 %1764
        %1766 = vrot.lane.b32.xlu0 %v1754, 127
        %v1767 = vpop.permute.xlu0 %1766
        %v1770 = vsel %vm1033, %v1765, 0.0
        %v1771 = vsel %vm1033, %v1767, 0.0
        %s1772 = sld [smem:[#allocation16 + $0x300]]
        %v1773 = vstv %s1772
        %v1774 = vmul.f32 %v1773, %v1723
        %v1775 = vmul.f32 %v1773, %v1724
        %s1776 = sld [smem:[#allocation16 + $0x301]]
        %v1777 = vstv %s1776
        %v1778 = vmul.f32 %v1777, %v1715
        %v1779 = vmul.f32 %v1777, %v1712
        %v1780 = vadd.f32 %v1774, %v1778
        %v1781 = vadd.f32 %v1775, %v1779
        %s1782 = sld [smem:[#allocation16 + $0x302]]
        %v1783 = vstv %s1782
        %v1784 = vmul.f32 %v1783, %v1731
        %v1785 = vmul.f32 %v1783, %v1732
        %v1786 = vadd.f32 %v1780, %v1784
        %v1787 = vadd.f32 %v1781, %v1785
        %s1788 = sld [smem:[#allocation16 + $0x303]]
        %v1789 = vstv %s1788
        %v1790 = vmul.f32 %v1789, %v1739
        %v1791 = vmul.f32 %v1789, %v1740
        %v1792 = vadd.f32 %v1786, %v1790
        %v1793 = vadd.f32 %v1787, %v1791
        %s1794 = sld [smem:[#allocation16 + $0x304]]
        %v1795 = vstv %s1794
        %v1796 = vmul.f32 %v1795, %v984
        %v1797 = vmul.f32 %v1795, %v985
        %v1798 = vadd.f32 %v1792, %v1796
        %v1799 = vadd.f32 %v1793, %v1797
        %s1800 = sld [smem:[#allocation16 + $0x305]]
        %v1801 = vstv %s1800
        %v1802 = vmul.f32 %v1801, %v1747
        %v1803 = vmul.f32 %v1801, %v1748
        %v1804 = vadd.f32 %v1798, %v1802
        %v1805 = vadd.f32 %v1799, %v1803
        %s1806 = sld [smem:[#allocation16 + $0x306]]
        %v1807 = vstv %s1806
        %v1808 = vmul.f32 %v1807, %v1762
        %v1809 = vmul.f32 %v1807, %v1763
        %v1810 = vadd.f32 %v1804, %v1808
        %v1811 = vadd.f32 %v1805, %v1809
        %s1812 = sld [smem:[#allocation16 + $0x307]]
        %v1813 = vstv %s1812
        %v1814 = vmul.f32 %v1813, %v1751
        %v1815 = vmul.f32 %v1813, %v1754
        %v1816 = vadd.f32 %v1810, %v1814
        %v1817 = vadd.f32 %v1811, %v1815
        %s1818 = sld [smem:[#allocation16 + $0x308]]
        %v1819 = vstv %s1818
        %v1820 = vmul.f32 %v1819, %v1770
        %v1821 = vmul.f32 %v1819, %v1771
        %v1822 = vadd.f32 %v1816, %v1820
        %v1823 = vadd.f32 %v1817, %v1821
        %v1826 = vrot.slane %v1006, 7
        %v1827 = vrot.slane %v1007, 7
        %v1828 = vsel %vm1010, %v1826, %v1827
        %v1831 = vsel %vm1010, 0.0, %v1826
        %1833 = vrot.lane.b32.xlu0 %v1831, 1
        %v1834 = vpop.permute.xlu0 %1833
        %1835 = vrot.lane.b32.xlu0 %v1828, 1
        %v1836 = vpop.permute.xlu0 %1835
        %v1839 = vsel %vm1024, 0.0, %v1834
        %v1840 = vsel %vm1024, 0.0, %v1836
        %1841 = vrot.lane.b32.xlu0 %v1831, 127
        %v1842 = vpop.permute.xlu0 %1841
        %1843 = vrot.lane.b32.xlu0 %v1828, 127
        %v1844 = vpop.permute.xlu0 %1843
        %v1847 = vsel %vm1033, %v1842, 0.0
        %v1848 = vsel %vm1033, %v1844, 0.0
        %1849 = vrot.lane.b32.xlu0 %v1006, 1
        %v1850 = vpop.permute.xlu0 %1849
        %1851 = vrot.lane.b32.xlu0 %v1007, 1
        %v1852 = vpop.permute.xlu0 %1851
        %v1855 = vsel %vm1024, 0.0, %v1850
        %v1856 = vsel %vm1024, 0.0, %v1852
        %1857 = vrot.lane.b32.xlu0 %v1006, 127
        %v1858 = vpop.permute.xlu0 %1857
        %1859 = vrot.lane.b32.xlu0 %v1007, 127
        %v1860 = vpop.permute.xlu0 %1859
        %v1863 = vsel %vm1033, %v1858, 0.0
        %v1864 = vsel %vm1033, %v1860, 0.0
        %v1865 = vrot.slane %v1006, 1
        %v1866 = vrot.slane %v1007, 1
        %v1867 = vsel %vm1052, %v1865, %v1866
        %v1870 = vsel %vm1052, %v1866, 0.0
        %1872 = vrot.lane.b32.xlu0 %v1867, 1
        %v1873 = vpop.permute.xlu0 %1872
        %1874 = vrot.lane.b32.xlu0 %v1870, 1
        %v1875 = vpop.permute.xlu0 %1874
        %v1878 = vsel %vm1024, 0.0, %v1873
        %v1879 = vsel %vm1024, 0.0, %v1875
        %1880 = vrot.lane.b32.xlu0 %v1867, 127
        %v1881 = vpop.permute.xlu0 %1880
        %1882 = vrot.lane.b32.xlu0 %v1870, 127
        %v1883 = vpop.permute.xlu0 %1882
        %v1886 = vsel %vm1033, %v1881, 0.0
        %v1887 = vsel %vm1033, %v1883, 0.0
        %s1888 = sld [smem:[#allocation16 + $0x380]]
        %v1889 = vstv %s1888
        %v1890 = vmul.f32 %v1889, %v1839
        %v1891 = vmul.f32 %v1889, %v1840
        %s1892 = sld [smem:[#allocation16 + $0x381]]
        %v1893 = vstv %s1892
        %v1894 = vmul.f32 %v1893, %v1831
        %v1895 = vmul.f32 %v1893, %v1828
        %v1896 = vadd.f32 %v1890, %v1894
        %v1897 = vadd.f32 %v1891, %v1895
        %s1898 = sld [smem:[#allocation16 + $0x382]]
        %v1899 = vstv %s1898
        %v1900 = vmul.f32 %v1899, %v1847
        %v1901 = vmul.f32 %v1899, %v1848
        %v1902 = vadd.f32 %v1896, %v1900
        %v1903 = vadd.f32 %v1897, %v1901
        %s1904 = sld [smem:[#allocation16 + $0x383]]
        %v1905 = vstv %s1904
        %v1906 = vmul.f32 %v1905, %v1855
        %v1907 = vmul.f32 %v1905, %v1856
        %v1908 = vadd.f32 %v1902, %v1906
        %v1909 = vadd.f32 %v1903, %v1907
        %s1910 = sld [smem:[#allocation16 + $0x384]]
        %v1911 = vstv %s1910
        %v1912 = vmul.f32 %v1911, %v1006
        %v1913 = vmul.f32 %v1911, %v1007
        %v1914 = vadd.f32 %v1908, %v1912
        %v1915 = vadd.f32 %v1909, %v1913
        %s1916 = sld [smem:[#allocation16 + $0x385]]
        %v1917 = vstv %s1916
        %v1918 = vmul.f32 %v1917, %v1863
        %v1919 = vmul.f32 %v1917, %v1864
        %v1920 = vadd.f32 %v1914, %v1918
        %v1921 = vadd.f32 %v1915, %v1919
        %s1922 = sld [smem:[#allocation16 + $0x386]]
        %v1923 = vstv %s1922
        %v1924 = vmul.f32 %v1923, %v1878
        %v1925 = vmul.f32 %v1923, %v1879
        %v1926 = vadd.f32 %v1920, %v1924
        %v1927 = vadd.f32 %v1921, %v1925
        %s1928 = sld [smem:[#allocation16 + $0x387]]
        %v1929 = vstv %s1928
        %v1930 = vmul.f32 %v1929, %v1867
        %v1931 = vmul.f32 %v1929, %v1870
        %v1932 = vadd.f32 %v1926, %v1930
        %v1933 = vadd.f32 %v1927, %v1931
        %s1934 = sld [smem:[#allocation16 + $0x388]]
        %v1935 = vstv %s1934
        %v1936 = vmul.f32 %v1935, %v1886
        %v1937 = vmul.f32 %v1935, %v1887
        %v1938 = vadd.f32 %v1932, %v1936
        %v1939 = vadd.f32 %v1933, %v1937
        %s1940 = sld [smem:[#allocation17]]
        %v1941 = vstv %s1940
        %v1942 = vmul.f32 %v1941, %v740
        %v1943 = vmul.f32 %v1941, %v741
        %s1944 = sld [smem:[#allocation17 + $0x1]]
        %v1945 = vstv %s1944
        %v1946 = vmul.f32 %v1945, %v750
        %v1947 = vmul.f32 %v1945, %v751
        %v1948 = vadd.f32 %v1942, %v1946
        %v1949 = vadd.f32 %v1943, %v1947
        %s1950 = sld [smem:[#allocation17 + $0x2]]
        %v1951 = vstv %s1950
        %v1952 = vmul.f32 %v1951, %v760
        %v1953 = vmul.f32 %v1951, %v761
        %v1954 = vadd.f32 %v1948, %v1952
        %v1955 = vadd.f32 %v1949, %v1953
        %s1956 = sld [smem:[#allocation17 + $0x3]]
        %v1957 = vstv %s1956
        %v1958 = vmul.f32 %v1957, %v770
        %v1959 = vmul.f32 %v1957, %v771
        %v1960 = vadd.f32 %v1954, %v1958
        %v1961 = vadd.f32 %v1955, %v1959
        %s1962 = sld [smem:[#allocation17 + $0x80]]
        %v1963 = vstv %s1962
        %v1964 = vmul.f32 %v1963, %v740
        %v1965 = vmul.f32 %v1963, %v741
        %s1966 = sld [smem:[#allocation17 + $0x81]]
        %v1967 = vstv %s1966
        %v1968 = vmul.f32 %v1967, %v750
        %v1969 = vmul.f32 %v1967, %v751
        %v1970 = vadd.f32 %v1964, %v1968
        %v1971 = vadd.f32 %v1965, %v1969
        %s1972 = sld [smem:[#allocation17 + $0x82]]
        %v1973 = vstv %s1972
        %v1974 = vmul.f32 %v1973, %v760
        %v1975 = vmul.f32 %v1973, %v761
        %v1976 = vadd.f32 %v1970, %v1974
        %v1977 = vadd.f32 %v1971, %v1975
        %s1978 = sld [smem:[#allocation17 + $0x83]]
        %v1979 = vstv %s1978
        %v1980 = vmul.f32 %v1979, %v770
        %v1981 = vmul.f32 %v1979, %v771
        %v1982 = vadd.f32 %v1976, %v1980
        %v1983 = vadd.f32 %v1977, %v1981
        %s1984 = sld [smem:[#allocation17 + $0x100]]
        %v1985 = vstv %s1984
        %v1986 = vmul.f32 %v1985, %v740
        %v1987 = vmul.f32 %v1985, %v741
        %s1988 = sld [smem:[#allocation17 + $0x101]]
        %v1989 = vstv %s1988
        %v1990 = vmul.f32 %v1989, %v750
        %v1991 = vmul.f32 %v1989, %v751
        %v1992 = vadd.f32 %v1986, %v1990
        %v1993 = vadd.f32 %v1987, %v1991
        %s1994 = sld [smem:[#allocation17 + $0x102]]
        %v1995 = vstv %s1994
        %v1996 = vmul.f32 %v1995, %v760
        %v1997 = vmul.f32 %v1995, %v761
        %v1998 = vadd.f32 %v1992, %v1996
        %v1999 = vadd.f32 %v1993, %v1997
        %s2000 = sld [smem:[#allocation17 + $0x103]]
        %v2001 = vstv %s2000
        %v2002 = vmul.f32 %v2001, %v770
        %v2003 = vmul.f32 %v2001, %v771
        %v2004 = vadd.f32 %v1998, %v2002
        %v2005 = vadd.f32 %v1999, %v2003
        %s2006 = sld [smem:[#allocation17 + $0x180]]
        %v2007 = vstv %s2006
        %v2008 = vmul.f32 %v2007, %v740
        %v2009 = vmul.f32 %v2007, %v741
        %s2010 = sld [smem:[#allocation17 + $0x181]]
        %v2011 = vstv %s2010
        %v2012 = vmul.f32 %v2011, %v750
        %v2013 = vmul.f32 %v2011, %v751
        %v2014 = vadd.f32 %v2008, %v2012
        %v2015 = vadd.f32 %v2009, %v2013
        %s2016 = sld [smem:[#allocation17 + $0x182]]
        %v2017 = vstv %s2016
        %v2018 = vmul.f32 %v2017, %v760
        %v2019 = vmul.f32 %v2017, %v761
        %v2020 = vadd.f32 %v2014, %v2018
        %v2021 = vadd.f32 %v2015, %v2019
        %s2022 = sld [smem:[#allocation17 + $0x183]]
        %v2023 = vstv %s2022
        %v2024 = vmul.f32 %v2023, %v770
        %v2025 = vmul.f32 %v2023, %v771
        %v2026 = vadd.f32 %v2020, %v2024
        %v2027 = vadd.f32 %v2021, %v2025
        %v2030 = vrot.slane %v1960, 7
        %v2031 = vrot.slane %v1961, 7
        %v2032 = vsel %vm1010, %v2030, %v2031
        %v2035 = vsel %vm1010, 0.0, %v2030
        %2037 = vrot.lane.b32.xlu0 %v2035, 1
        %v2038 = vpop.permute.xlu0 %2037
        %2039 = vrot.lane.b32.xlu0 %v2032, 1
        %v2040 = vpop.permute.xlu0 %2039
        %v2043 = vsel %vm1024, 0.0, %v2038
        %v2044 = vsel %vm1024, 0.0, %v2040
        %2045 = vrot.lane.b32.xlu0 %v2035, 127
        %v2046 = vpop.permute.xlu0 %2045
        %2047 = vrot.lane.b32.xlu0 %v2032, 127
        %v2048 = vpop.permute.xlu0 %2047
        %v2051 = vsel %vm1033, %v2046, 0.0
        %v2052 = vsel %vm1033, %v2048, 0.0
        %2053 = vrot.lane.b32.xlu0 %v1960, 1
        %v2054 = vpop.permute.xlu0 %2053
        %2055 = vrot.lane.b32.xlu0 %v1961, 1
        %v2056 = vpop.permute.xlu0 %2055
        %v2059 = vsel %vm1024, 0.0, %v2054
        %v2060 = vsel %vm1024, 0.0, %v2056
        %2061 = vrot.lane.b32.xlu0 %v1960, 127
        %v2062 = vpop.permute.xlu0 %2061
        %2063 = vrot.lane.b32.xlu0 %v1961, 127
        %v2064 = vpop.permute.xlu0 %2063
        %v2067 = vsel %vm1033, %v2062, 0.0
        %v2068 = vsel %vm1033, %v2064, 0.0
        %v2069 = vrot.slane %v1960, 1
        %v2070 = vrot.slane %v1961, 1
        %v2071 = vsel %vm1052, %v2069, %v2070
        %v2074 = vsel %vm1052, %v2070, 0.0
        %2076 = vrot.lane.b32.xlu0 %v2071, 1
        %v2077 = vpop.permute.xlu0 %2076
        %2078 = vrot.lane.b32.xlu0 %v2074, 1
        %v2079 = vpop.permute.xlu0 %2078
        %v2082 = vsel %vm1024, 0.0, %v2077
        %v2083 = vsel %vm1024, 0.0, %v2079
        %2084 = vrot.lane.b32.xlu0 %v2071, 127
        %v2085 = vpop.permute.xlu0 %2084
        %2086 = vrot.lane.b32.xlu0 %v2074, 127
        %v2087 = vpop.permute.xlu0 %2086
        %v2090 = vsel %vm1033, %v2085, 0.0
        %v2091 = vsel %vm1033, %v2087, 0.0
        %v2094 = vrot.slane %v1982, 7
        %v2095 = vrot.slane %v1983, 7
        %v2096 = vsel %vm1010, %v2094, %v2095
        %v2099 = vsel %vm1010, 0.0, %v2094
        %2101 = vrot.lane.b32.xlu0 %v2099, 1
        %v2102 = vpop.permute.xlu0 %2101
        %2103 = vrot.lane.b32.xlu0 %v2096, 1
        %v2104 = vpop.permute.xlu0 %2103
        %v2107 = vsel %vm1024, 0.0, %v2102
        %v2108 = vsel %vm1024, 0.0, %v2104
        %2109 = vrot.lane.b32.xlu0 %v2099, 127
        %v2110 = vpop.permute.xlu0 %2109
        %2111 = vrot.lane.b32.xlu0 %v2096, 127
        %v2112 = vpop.permute.xlu0 %2111
        %v2115 = vsel %vm1033, %v2110, 0.0
        %v2116 = vsel %vm1033, %v2112, 0.0
        %2117 = vrot.lane.b32.xlu0 %v1982, 1
        %v2118 = vpop.permute.xlu0 %2117
        %2119 = vrot.lane.b32.xlu0 %v1983, 1
        %v2120 = vpop.permute.xlu0 %2119
        %v2123 = vsel %vm1024, 0.0, %v2118
        %v2124 = vsel %vm1024, 0.0, %v2120
        %2125 = vrot.lane.b32.xlu0 %v1982, 127
        %v2126 = vpop.permute.xlu0 %2125
        %2127 = vrot.lane.b32.xlu0 %v1983, 127
        %v2128 = vpop.permute.xlu0 %2127
        %v2131 = vsel %vm1033, %v2126, 0.0
        %v2132 = vsel %vm1033, %v2128, 0.0
        %v2133 = vrot.slane %v1982, 1
        %v2134 = vrot.slane %v1983, 1
        %v2135 = vsel %vm1052, %v2133, %v2134
        %v2138 = vsel %vm1052, %v2134, 0.0
        %2140 = vrot.lane.b32.xlu0 %v2135, 1
        %v2141 = vpop.permute.xlu0 %2140
        %2142 = vrot.lane.b32.xlu0 %v2138, 1
        %v2143 = vpop.permute.xlu0 %2142
        %v2146 = vsel %vm1024, 0.0, %v2141
        %v2147 = vsel %vm1024, 0.0, %v2143
        %2148 = vrot.lane.b32.xlu0 %v2135, 127
        %v2149 = vpop.permute.xlu0 %2148
        %2150 = vrot.lane.b32.xlu0 %v2138, 127
        %v2151 = vpop.permute.xlu0 %2150
        %v2154 = vsel %vm1033, %v2149, 0.0
        %v2155 = vsel %vm1033, %v2151, 0.0
        %v2158 = vrot.slane %v2004, 7
        %v2159 = vrot.slane %v2005, 7
        %v2160 = vsel %vm1010, %v2158, %v2159
        %v2163 = vsel %vm1010, 0.0, %v2158
        %2165 = vrot.lane.b32.xlu0 %v2163, 1
        %v2166 = vpop.permute.xlu0 %2165
        %2167 = vrot.lane.b32.xlu0 %v2160, 1
        %v2168 = vpop.permute.xlu0 %2167
        %v2171 = vsel %vm1024, 0.0, %v2166
        %v2172 = vsel %vm1024, 0.0, %v2168
        %2173 = vrot.lane.b32.xlu0 %v2163, 127
        %v2174 = vpop.permute.xlu0 %2173
        %2175 = vrot.lane.b32.xlu0 %v2160, 127
        %v2176 = vpop.permute.xlu0 %2175
        %v2179 = vsel %vm1033, %v2174, 0.0
        %v2180 = vsel %vm1033, %v2176, 0.0
        %2181 = vrot.lane.b32.xlu0 %v2004, 1
        %v2182 = vpop.permute.xlu0 %2181
        %2183 = vrot.lane.b32.xlu0 %v2005, 1
        %v2184 = vpop.permute.xlu0 %2183
        %v2187 = vsel %vm1024, 0.0, %v2182
        %v2188 = vsel %vm1024, 0.0, %v2184
        %2189 = vrot.lane.b32.xlu0 %v2004, 127
        %v2190 = vpop.permute.xlu0 %2189
        %2191 = vrot.lane.b32.xlu0 %v2005, 127
        %v2192 = vpop.permute.xlu0 %2191
        %v2195 = vsel %vm1033, %v2190, 0.0
        %v2196 = vsel %vm1033, %v2192, 0.0
        %v2197 = vrot.slane %v2004, 1
        %v2198 = vrot.slane %v2005, 1
        %v2199 = vsel %vm1052, %v2197, %v2198
        %v2202 = vsel %vm1052, %v2198, 0.0
        %2204 = vrot.lane.b32.xlu0 %v2199, 1
        %v2205 = vpop.permute.xlu0 %2204
        %2206 = vrot.lane.b32.xlu0 %v2202, 1
        %v2207 = vpop.permute.xlu0 %2206
        %v2210 = vsel %vm1024, 0.0, %v2205
        %v2211 = vsel %vm1024, 0.0, %v2207
        %2212 = vrot.lane.b32.xlu0 %v2199, 127
        %v2213 = vpop.permute.xlu0 %2212
        %2214 = vrot.lane.b32.xlu0 %v2202, 127
        %v2215 = vpop.permute.xlu0 %2214
        %v2218 = vsel %vm1033, %v2213, 0.0
        %v2219 = vsel %vm1033, %v2215, 0.0
        %v2222 = vrot.slane %v2026, 7
        %v2223 = vrot.slane %v2027, 7
        %v2224 = vsel %vm1010, %v2222, %v2223
        %v2227 = vsel %vm1010, 0.0, %v2222
        %2229 = vrot.lane.b32.xlu0 %v2227, 1
        %v2230 = vpop.permute.xlu0 %2229
        %2231 = vrot.lane.b32.xlu0 %v2224, 1
        %v2232 = vpop.permute.xlu0 %2231
        %v2235 = vsel %vm1024, 0.0, %v2230
        %v2236 = vsel %vm1024, 0.0, %v2232
        %2237 = vrot.lane.b32.xlu0 %v2227, 127
        %v2238 = vpop.permute.xlu0 %2237
        %2239 = vrot.lane.b32.xlu0 %v2224, 127
        %v2240 = vpop.permute.xlu0 %2239
        %v2243 = vsel %vm1033, %v2238, 0.0
        %v2244 = vsel %vm1033, %v2240, 0.0
        %2245 = vrot.lane.b32.xlu0 %v2026, 1
        %v2246 = vpop.permute.xlu0 %2245
        %2247 = vrot.lane.b32.xlu0 %v2027, 1
        %v2248 = vpop.permute.xlu0 %2247
        %v2251 = vsel %vm1024, 0.0, %v2246
        %v2252 = vsel %vm1024, 0.0, %v2248
        %2253 = vrot.lane.b32.xlu0 %v2026, 127
        %v2254 = vpop.permute.xlu0 %2253
        %2255 = vrot.lane.b32.xlu0 %v2027, 127
        %v2256 = vpop.permute.xlu0 %2255
        %v2259 = vsel %vm1033, %v2254, 0.0
        %v2260 = vsel %vm1033, %v2256, 0.0
        %v2261 = vrot.slane %v2026, 1
        %v2262 = vrot.slane %v2027, 1
        %v2263 = vsel %vm1052, %v2261, %v2262
        %v2266 = vsel %vm1052, %v2262, 0.0
        %2268 = vrot.lane.b32.xlu0 %v2263, 1
        %v2269 = vpop.permute.xlu0 %2268
        %2270 = vrot.lane.b32.xlu0 %v2266, 1
        %v2271 = vpop.permute.xlu0 %2270
        %v2274 = vsel %vm1024, 0.0, %v2269
        %v2275 = vsel %vm1024, 0.0, %v2271
        %2276 = vrot.lane.b32.xlu0 %v2263, 127
        %v2277 = vpop.permute.xlu0 %2276
        %2278 = vrot.lane.b32.xlu0 %v2266, 127
        %v2279 = vpop.permute.xlu0 %2278
        %v2282 = vsel %vm1033, %v2277, 0.0
        %v2283 = vsel %vm1033, %v2279, 0.0
        %s2284 = sld [smem:[#allocation19]]
        %v2285 = vstv %s2284
        %v2286 = vmul.f32 %v2285, %v2043
        %v2287 = vmul.f32 %v2285, %v2044
        %s2288 = sld [smem:[#allocation19 + $0x1]]
        %v2289 = vstv %s2288
        %v2290 = vmul.f32 %v2289, %v2035
        %v2291 = vmul.f32 %v2289, %v2032
        %v2292 = vadd.f32 %v2286, %v2290
        %v2293 = vadd.f32 %v2287, %v2291
        %s2294 = sld [smem:[#allocation19 + $0x2]]
        %v2295 = vstv %s2294
        %v2296 = vmul.f32 %v2295, %v2051
        %v2297 = vmul.f32 %v2295, %v2052
        %v2298 = vadd.f32 %v2292, %v2296
        %v2299 = vadd.f32 %v2293, %v2297
        %s2300 = sld [smem:[#allocation19 + $0x3]]
        %v2301 = vstv %s2300
        %v2302 = vmul.f32 %v2301, %v2059
        %v2303 = vmul.f32 %v2301, %v2060
        %v2304 = vadd.f32 %v2298, %v2302
        %v2305 = vadd.f32 %v2299, %v2303
        %s2306 = sld [smem:[#allocation19 + $0x4]]
        %v2307 = vstv %s2306
        %v2308 = vmul.f32 %v2307, %v1960
        %v2309 = vmul.f32 %v2307, %v1961
        %v2310 = vadd.f32 %v2304, %v2308
        %v2311 = vadd.f32 %v2305, %v2309
        %s2312 = sld [smem:[#allocation19 + $0x5]]
        %v2313 = vstv %s2312
        %v2314 = vmul.f32 %v2313, %v2067
        %v2315 = vmul.f32 %v2313, %v2068
        %v2316 = vadd.f32 %v2310, %v2314
        %v2317 = vadd.f32 %v2311, %v2315
        %s2318 = sld [smem:[#allocation19 + $0x6]]
        %v2319 = vstv %s2318
        %v2320 = vmul.f32 %v2319, %v2082
        %v2321 = vmul.f32 %v2319, %v2083
        %v2322 = vadd.f32 %v2316, %v2320
        %v2323 = vadd.f32 %v2317, %v2321
        %s2324 = sld [smem:[#allocation19 + $0x7]]
        %v2325 = vstv %s2324
        %v2326 = vmul.f32 %v2325, %v2071
        %v2327 = vmul.f32 %v2325, %v2074
        %v2328 = vadd.f32 %v2322, %v2326
        %v2329 = vadd.f32 %v2323, %v2327
        %s2330 = sld [smem:[#allocation19 + $0x8]]
        %v2331 = vstv %s2330
        %v2332 = vmul.f32 %v2331, %v2090
        %v2333 = vmul.f32 %v2331, %v2091
        %v2334 = vadd.f32 %v2328, %v2332
        %v2335 = vadd.f32 %v2329, %v2333
        %s2336 = sld [smem:[#allocation19 + $0x9]]
        %v2337 = vstv %s2336
        %v2338 = vmul.f32 %v2337, %v2107
        %v2339 = vmul.f32 %v2337, %v2108
        %v2340 = vadd.f32 %v2334, %v2338
        %v2341 = vadd.f32 %v2335, %v2339
        %s2342 = sld [smem:[#allocation19 + $0xa]]
        %v2343 = vstv %s2342
        %v2344 = vmul.f32 %v2343, %v2099
        %v2345 = vmul.f32 %v2343, %v2096
        %v2346 = vadd.f32 %v2340, %v2344
        %v2347 = vadd.f32 %v2341, %v2345
        %s2348 = sld [smem:[#allocation19 + $0xb]]
        %v2349 = vstv %s2348
        %v2350 = vmul.f32 %v2349, %v2115
        %v2351 = vmul.f32 %v2349, %v2116
        %v2352 = vadd.f32 %v2346, %v2350
        %v2353 = vadd.f32 %v2347, %v2351
        %s2354 = sld [smem:[#allocation19 + $0xc]]
        %v2355 = vstv %s2354
        %v2356 = vmul.f32 %v2355, %v2123
        %v2357 = vmul.f32 %v2355, %v2124
        %v2358 = vadd.f32 %v2352, %v2356
        %v2359 = vadd.f32 %v2353, %v2357
        %s2360 = sld [smem:[#allocation19 + $0xd]]
        %v2361 = vstv %s2360
        %v2362 = vmul.f32 %v2361, %v1982
        %v2363 = vmul.f32 %v2361, %v1983
        %v2364 = vadd.f32 %v2358, %v2362
        %v2365 = vadd.f32 %v2359, %v2363
        %s2366 = sld [smem:[#allocation19 + $0xe]]
        %v2367 = vstv %s2366
        %v2368 = vmul.f32 %v2367, %v2131
        %v2369 = vmul.f32 %v2367, %v2132
        %v2370 = vadd.f32 %v2364, %v2368
        %v2371 = vadd.f32 %v2365, %v2369
        %s2372 = sld [smem:[#allocation19 + $0xf]]
        %v2373 = vstv %s2372
        %v2374 = vmul.f32 %v2373, %v2146
        %v2375 = vmul.f32 %v2373, %v2147
        %v2376 = vadd.f32 %v2370, %v2374
        %v2377 = vadd.f32 %v2371, %v2375
        %s2378 = sld [smem:[#allocation19 + $0x10]]
        %v2379 = vstv %s2378
        %v2380 = vmul.f32 %v2379, %v2135
        %v2381 = vmul.f32 %v2379, %v2138
        %v2382 = vadd.f32 %v2376, %v2380
        %v2383 = vadd.f32 %v2377, %v2381
        %s2384 = sld [smem:[#allocation19 + $0x11]]
        %v2385 = vstv %s2384
        %v2386 = vmul.f32 %v2385, %v2154
        %v2387 = vmul.f32 %v2385, %v2155
        %v2388 = vadd.f32 %v2382, %v2386
        %v2389 = vadd.f32 %v2383, %v2387
        %s2390 = sld [smem:[#allocation19 + $0x12]]
        %v2391 = vstv %s2390
        %v2392 = vmul.f32 %v2391, %v2171
        %v2393 = vmul.f32 %v2391, %v2172
        %v2394 = vadd.f32 %v2388, %v2392
        %v2395 = vadd.f32 %v2389, %v2393
        %s2396 = sld [smem:[#allocation19 + $0x13]]
        %v2397 = vstv %s2396
        %v2398 = vmul.f32 %v2397, %v2163
        %v2399 = vmul.f32 %v2397, %v2160
        %v2400 = vadd.f32 %v2394, %v2398
        %v2401 = vadd.f32 %v2395, %v2399
        %s2402 = sld [smem:[#allocation19 + $0x14]]
        %v2403 = vstv %s2402
        %v2404 = vmul.f32 %v2403, %v2179
        %v2405 = vmul.f32 %v2403, %v2180
        %v2406 = vadd.f32 %v2400, %v2404
        %v2407 = vadd.f32 %v2401, %v2405
        %s2408 = sld [smem:[#allocation19 + $0x15]]
        %v2409 = vstv %s2408
        %v2410 = vmul.f32 %v2409, %v2187
        %v2411 = vmul.f32 %v2409, %v2188
        %v2412 = vadd.f32 %v2406, %v2410
        %v2413 = vadd.f32 %v2407, %v2411
        %s2414 = sld [smem:[#allocation19 + $0x16]]
        %v2415 = vstv %s2414
        %v2416 = vmul.f32 %v2415, %v2004
        %v2417 = vmul.f32 %v2415, %v2005
        %v2418 = vadd.f32 %v2412, %v2416
        %v2419 = vadd.f32 %v2413, %v2417
        %s2420 = sld [smem:[#allocation19 + $0x17]]
        %v2421 = vstv %s2420
        %v2422 = vmul.f32 %v2421, %v2195
        %v2423 = vmul.f32 %v2421, %v2196
        %v2424 = vadd.f32 %v2418, %v2422
        %v2425 = vadd.f32 %v2419, %v2423
        %s2426 = sld [smem:[#allocation19 + $0x18]]
        %v2427 = vstv %s2426
        %v2428 = vmul.f32 %v2427, %v2210
        %v2429 = vmul.f32 %v2427, %v2211
        %v2430 = vadd.f32 %v2424, %v2428
        %v2431 = vadd.f32 %v2425, %v2429
        %s2432 = sld [smem:[#allocation19 + $0x19]]
        %v2433 = vstv %s2432
        %v2434 = vmul.f32 %v2433, %v2199
        %v2435 = vmul.f32 %v2433, %v2202
        %v2436 = vadd.f32 %v2430, %v2434
        %v2437 = vadd.f32 %v2431, %v2435
        %s2438 = sld [smem:[#allocation19 + $0x1a]]
        %v2439 = vstv %s2438
        %v2440 = vmul.f32 %v2439, %v2218
        %v2441 = vmul.f32 %v2439, %v2219
        %v2442 = vadd.f32 %v2436, %v2440
        %v2443 = vadd.f32 %v2437, %v2441
        %s2444 = sld [smem:[#allocation19 + $0x1b]]
        %v2445 = vstv %s2444
        %v2446 = vmul.f32 %v2445, %v2235
        %v2447 = vmul.f32 %v2445, %v2236
        %v2448 = vadd.f32 %v2442, %v2446
        %v2449 = vadd.f32 %v2443, %v2447
        %s2450 = sld [smem:[#allocation19 + $0x1c]]
        %v2451 = vstv %s2450
        %v2452 = vmul.f32 %v2451, %v2227
        %v2453 = vmul.f32 %v2451, %v2224
        %v2454 = vadd.f32 %v2448, %v2452
        %v2455 = vadd.f32 %v2449, %v2453
        %s2456 = sld [smem:[#allocation19 + $0x1d]]
        %v2457 = vstv %s2456
        %v2458 = vmul.f32 %v2457, %v2243
        %v2459 = vmul.f32 %v2457, %v2244
        %v2460 = vadd.f32 %v2454, %v2458
        %v2461 = vadd.f32 %v2455, %v2459
        %s2462 = sld [smem:[#allocation19 + $0x1e]]
        %v2463 = vstv %s2462
        %v2464 = vmul.f32 %v2463, %v2251
        %v2465 = vmul.f32 %v2463, %v2252
        %v2466 = vadd.f32 %v2460, %v2464
        %v2467 = vadd.f32 %v2461, %v2465
        %s2468 = sld [smem:[#allocation19 + $0x1f]]
        %v2469 = vstv %s2468
        %v2470 = vmul.f32 %v2469, %v2026
        %v2471 = vmul.f32 %v2469, %v2027
        %v2472 = vadd.f32 %v2466, %v2470
        %v2473 = vadd.f32 %v2467, %v2471
        %s2474 = sld [smem:[#allocation19 + $0x20]]
        %v2475 = vstv %s2474
        %v2476 = vmul.f32 %v2475, %v2259
        %v2477 = vmul.f32 %v2475, %v2260
        %v2478 = vadd.f32 %v2472, %v2476
        %v2479 = vadd.f32 %v2473, %v2477
        %s2480 = sld [smem:[#allocation19 + $0x21]]
        %v2481 = vstv %s2480
        %v2482 = vmul.f32 %v2481, %v2274
        %v2483 = vmul.f32 %v2481, %v2275
        %v2484 = vadd.f32 %v2478, %v2482
        %v2485 = vadd.f32 %v2479, %v2483
        %s2486 = sld [smem:[#allocation19 + $0x22]]
        %v2487 = vstv %s2486
        %v2488 = vmul.f32 %v2487, %v2263
        %v2489 = vmul.f32 %v2487, %v2266
        %v2490 = vadd.f32 %v2484, %v2488
        %v2491 = vadd.f32 %v2485, %v2489
        %s2492 = sld [smem:[#allocation19 + $0x23]]
        %v2493 = vstv %s2492
        %v2494 = vmul.f32 %v2493, %v2282
        %v2495 = vmul.f32 %v2493, %v2283
        %v2496 = vadd.f32 %v2490, %v2494
        %v2497 = vadd.f32 %v2491, %v2495
        %s2498 = sld [smem:[#allocation19 + $0x80]]
        %v2499 = vstv %s2498
        %v2500 = vmul.f32 %v2499, %v2043
        %v2501 = vmul.f32 %v2499, %v2044
        %s2502 = sld [smem:[#allocation19 + $0x81]]
        %v2503 = vstv %s2502
        %v2504 = vmul.f32 %v2503, %v2035
        %v2505 = vmul.f32 %v2503, %v2032
        %v2506 = vadd.f32 %v2500, %v2504
        %v2507 = vadd.f32 %v2501, %v2505
        %s2508 = sld [smem:[#allocation19 + $0x82]]
        %v2509 = vstv %s2508
        %v2510 = vmul.f32 %v2509, %v2051
        %v2511 = vmul.f32 %v2509, %v2052
        %v2512 = vadd.f32 %v2506, %v2510
        %v2513 = vadd.f32 %v2507, %v2511
        %s2514 = sld [smem:[#allocation19 + $0x83]]
        %v2515 = vstv %s2514
        %v2516 = vmul.f32 %v2515, %v2059
        %v2517 = vmul.f32 %v2515, %v2060
        %v2518 = vadd.f32 %v2512, %v2516
        %v2519 = vadd.f32 %v2513, %v2517
        %s2520 = sld [smem:[#allocation19 + $0x84]]
        %v2521 = vstv %s2520
        %v2522 = vmul.f32 %v2521, %v1960
        %v2523 = vmul.f32 %v2521, %v1961
        %v2524 = vadd.f32 %v2518, %v2522
        %v2525 = vadd.f32 %v2519, %v2523
        %s2526 = sld [smem:[#allocation19 + $0x85]]
        %v2527 = vstv %s2526
        %v2528 = vmul.f32 %v2527, %v2067
        %v2529 = vmul.f32 %v2527, %v2068
        %v2530 = vadd.f32 %v2524, %v2528
        %v2531 = vadd.f32 %v2525, %v2529
        %s2532 = sld [smem:[#allocation19 + $0x86]]
        %v2533 = vstv %s2532
        %v2534 = vmul.f32 %v2533, %v2082
        %v2535 = vmul.f32 %v2533, %v2083
        %v2536 = vadd.f32 %v2530, %v2534
        %v2537 = vadd.f32 %v2531, %v2535
        %s2538 = sld [smem:[#allocation19 + $0x87]]
        %v2539 = vstv %s2538
        %v2540 = vmul.f32 %v2539, %v2071
        %v2541 = vmul.f32 %v2539, %v2074
        %v2542 = vadd.f32 %v2536, %v2540
        %v2543 = vadd.f32 %v2537, %v2541
        %s2544 = sld [smem:[#allocation19 + $0x88]]
        %v2545 = vstv %s2544
        %v2546 = vmul.f32 %v2545, %v2090
        %v2547 = vmul.f32 %v2545, %v2091
        %v2548 = vadd.f32 %v2542, %v2546
        %v2549 = vadd.f32 %v2543, %v2547
        %s2550 = sld [smem:[#allocation19 + $0x89]]
        %v2551 = vstv %s2550
        %v2552 = vmul.f32 %v2551, %v2107
        %v2553 = vmul.f32 %v2551, %v2108
        %v2554 = vadd.f32 %v2548, %v2552
        %v2555 = vadd.f32 %v2549, %v2553
        %s2556 = sld [smem:[#allocation19 + $0x8a]]
        %v2557 = vstv %s2556
        %v2558 = vmul.f32 %v2557, %v2099
        %v2559 = vmul.f32 %v2557, %v2096
        %v2560 = vadd.f32 %v2554, %v2558
        %v2561 = vadd.f32 %v2555, %v2559
        %s2562 = sld [smem:[#allocation19 + $0x8b]]
        %v2563 = vstv %s2562
        %v2564 = vmul.f32 %v2563, %v2115
        %v2565 = vmul.f32 %v2563, %v2116
        %v2566 = vadd.f32 %v2560, %v2564
        %v2567 = vadd.f32 %v2561, %v2565
        %s2568 = sld [smem:[#allocation19 + $0x8c]]
        %v2569 = vstv %s2568
        %v2570 = vmul.f32 %v2569, %v2123
        %v2571 = vmul.f32 %v2569, %v2124
        %v2572 = vadd.f32 %v2566, %v2570
        %v2573 = vadd.f32 %v2567, %v2571
        %s2574 = sld [smem:[#allocation19 + $0x8d]]
        %v2575 = vstv %s2574
        %v2576 = vmul.f32 %v2575, %v1982
        %v2577 = vmul.f32 %v2575, %v1983
        %v2578 = vadd.f32 %v2572, %v2576
        %v2579 = vadd.f32 %v2573, %v2577
        %s2580 = sld [smem:[#allocation19 + $0x8e]]
        %v2581 = vstv %s2580
        %v2582 = vmul.f32 %v2581, %v2131
        %v2583 = vmul.f32 %v2581, %v2132
        %v2584 = vadd.f32 %v2578, %v2582
        %v2585 = vadd.f32 %v2579, %v2583
        %s2586 = sld [smem:[#allocation19 + $0x8f]]
        %v2587 = vstv %s2586
        %v2588 = vmul.f32 %v2587, %v2146
        %v2589 = vmul.f32 %v2587, %v2147
        %v2590 = vadd.f32 %v2584, %v2588
        %v2591 = vadd.f32 %v2585, %v2589
        %s2592 = sld [smem:[#allocation19 + $0x90]]
        %v2593 = vstv %s2592
        %v2594 = vmul.f32 %v2593, %v2135
        %v2595 = vmul.f32 %v2593, %v2138
        %v2596 = vadd.f32 %v2590, %v2594
        %v2597 = vadd.f32 %v2591, %v2595
        %s2598 = sld [smem:[#allocation19 + $0x91]]
        %v2599 = vstv %s2598
        %v2600 = vmul.f32 %v2599, %v2154
        %v2601 = vmul.f32 %v2599, %v2155
        %v2602 = vadd.f32 %v2596, %v2600
        %v2603 = vadd.f32 %v2597, %v2601
        %s2604 = sld [smem:[#allocation19 + $0x92]]
        %v2605 = vstv %s2604
        %v2606 = vmul.f32 %v2605, %v2171
        %v2607 = vmul.f32 %v2605, %v2172
        %v2608 = vadd.f32 %v2602, %v2606
        %v2609 = vadd.f32 %v2603, %v2607
        %s2610 = sld [smem:[#allocation19 + $0x93]]
        %v2611 = vstv %s2610
        %v2612 = vmul.f32 %v2611, %v2163
        %v2613 = vmul.f32 %v2611, %v2160
        %v2614 = vadd.f32 %v2608, %v2612
        %v2615 = vadd.f32 %v2609, %v2613
        %s2616 = sld [smem:[#allocation19 + $0x94]]
        %v2617 = vstv %s2616
        %v2618 = vmul.f32 %v2617, %v2179
        %v2619 = vmul.f32 %v2617, %v2180
        %v2620 = vadd.f32 %v2614, %v2618
        %v2621 = vadd.f32 %v2615, %v2619
        %s2622 = sld [smem:[#allocation19 + $0x95]]
        %v2623 = vstv %s2622
        %v2624 = vmul.f32 %v2623, %v2187
        %v2625 = vmul.f32 %v2623, %v2188
        %v2626 = vadd.f32 %v2620, %v2624
        %v2627 = vadd.f32 %v2621, %v2625
        %s2628 = sld [smem:[#allocation19 + $0x96]]
        %v2629 = vstv %s2628
        %v2630 = vmul.f32 %v2629, %v2004
        %v2631 = vmul.f32 %v2629, %v2005
        %v2632 = vadd.f32 %v2626, %v2630
        %v2633 = vadd.f32 %v2627, %v2631
        %s2634 = sld [smem:[#allocation19 + $0x97]]
        %v2635 = vstv %s2634
        %v2636 = vmul.f32 %v2635, %v2195
        %v2637 = vmul.f32 %v2635, %v2196
        %v2638 = vadd.f32 %v2632, %v2636
        %v2639 = vadd.f32 %v2633, %v2637
        %s2640 = sld [smem:[#allocation19 + $0x98]]
        %v2641 = vstv %s2640
        %v2642 = vmul.f32 %v2641, %v2210
        %v2643 = vmul.f32 %v2641, %v2211
        %v2644 = vadd.f32 %v2638, %v2642
        %v2645 = vadd.f32 %v2639, %v2643
        %s2646 = sld [smem:[#allocation19 + $0x99]]
        %v2647 = vstv %s2646
        %v2648 = vmul.f32 %v2647, %v2199
        %v2649 = vmul.f32 %v2647, %v2202
        %v2650 = vadd.f32 %v2644, %v2648
        %v2651 = vadd.f32 %v2645, %v2649
        %s2652 = sld [smem:[#allocation19 + $0x9a]]
        %v2653 = vstv %s2652
        %v2654 = vmul.f32 %v2653, %v2218
        %v2655 = vmul.f32 %v2653, %v2219
        %v2656 = vadd.f32 %v2650, %v2654
        %v2657 = vadd.f32 %v2651, %v2655
        %s2658 = sld [smem:[#allocation19 + $0x9b]]
        %v2659 = vstv %s2658
        %v2660 = vmul.f32 %v2659, %v2235
        %v2661 = vmul.f32 %v2659, %v2236
        %v2662 = vadd.f32 %v2656, %v2660
        %v2663 = vadd.f32 %v2657, %v2661
        %s2664 = sld [smem:[#allocation19 + $0x9c]]
        %v2665 = vstv %s2664
        %v2666 = vmul.f32 %v2665, %v2227
        %v2667 = vmul.f32 %v2665, %v2224
        %v2668 = vadd.f32 %v2662, %v2666
        %v2669 = vadd.f32 %v2663, %v2667
        %s2670 = sld [smem:[#allocation19 + $0x9d]]
        %v2671 = vstv %s2670
        %v2672 = vmul.f32 %v2671, %v2243
        %v2673 = vmul.f32 %v2671, %v2244
        %v2674 = vadd.f32 %v2668, %v2672
        %v2675 = vadd.f32 %v2669, %v2673
        %s2676 = sld [smem:[#allocation19 + $0x9e]]
        %v2677 = vstv %s2676
        %v2678 = vmul.f32 %v2677, %v2251
        %v2679 = vmul.f32 %v2677, %v2252
        %v2680 = vadd.f32 %v2674, %v2678
        %v2681 = vadd.f32 %v2675, %v2679
        %s2682 = sld [smem:[#allocation19 + $0x9f]]
        %v2683 = vstv %s2682
        %v2684 = vmul.f32 %v2683, %v2026
        %v2685 = vmul.f32 %v2683, %v2027
        %v2686 = vadd.f32 %v2680, %v2684
        %v2687 = vadd.f32 %v2681, %v2685
        %s2688 = sld [smem:[#allocation19 + $0xa0]]
        %v2689 = vstv %s2688
        %v2690 = vmul.f32 %v2689, %v2259
        %v2691 = vmul.f32 %v2689, %v2260
        %v2692 = vadd.f32 %v2686, %v2690
        %v2693 = vadd.f32 %v2687, %v2691
        %s2694 = sld [smem:[#allocation19 + $0xa1]]
        %v2695 = vstv %s2694
        %v2696 = vmul.f32 %v2695, %v2274
        %v2697 = vmul.f32 %v2695, %v2275
        %v2698 = vadd.f32 %v2692, %v2696
        %v2699 = vadd.f32 %v2693, %v2697
        %s2700 = sld [smem:[#allocation19 + $0xa2]]
        %v2701 = vstv %s2700
        %v2702 = vmul.f32 %v2701, %v2263
        %v2703 = vmul.f32 %v2701, %v2266
        %v2704 = vadd.f32 %v2698, %v2702
        %v2705 = vadd.f32 %v2699, %v2703
        %s2706 = sld [smem:[#allocation19 + $0xa3]]
        %v2707 = vstv %s2706
        %v2708 = vmul.f32 %v2707, %v2282
        %v2709 = vmul.f32 %v2707, %v2283
        %v2710 = vadd.f32 %v2704, %v2708
        %v2711 = vadd.f32 %v2705, %v2709
        %s2712 = sld [smem:[#allocation19 + $0x100]]
        %v2713 = vstv %s2712
        %v2714 = vmul.f32 %v2713, %v2043
        %v2715 = vmul.f32 %v2713, %v2044
        %s2716 = sld [smem:[#allocation19 + $0x101]]
        %v2717 = vstv %s2716
        %v2718 = vmul.f32 %v2717, %v2035
        %v2719 = vmul.f32 %v2717, %v2032
        %v2720 = vadd.f32 %v2714, %v2718
        %v2721 = vadd.f32 %v2715, %v2719
        %s2722 = sld [smem:[#allocation19 + $0x102]]
        %v2723 = vstv %s2722
        %v2724 = vmul.f32 %v2723, %v2051
        %v2725 = vmul.f32 %v2723, %v2052
        %v2726 = vadd.f32 %v2720, %v2724
        %v2727 = vadd.f32 %v2721, %v2725
        %s2728 = sld [smem:[#allocation19 + $0x103]]
        %v2729 = vstv %s2728
        %v2730 = vmul.f32 %v2729, %v2059
        %v2731 = vmul.f32 %v2729, %v2060
        %v2732 = vadd.f32 %v2726, %v2730
        %v2733 = vadd.f32 %v2727, %v2731
        %s2734 = sld [smem:[#allocation19 + $0x104]]
        %v2735 = vstv %s2734
        %v2736 = vmul.f32 %v2735, %v1960
        %v2737 = vmul.f32 %v2735, %v1961
        %v2738 = vadd.f32 %v2732, %v2736
        %v2739 = vadd.f32 %v2733, %v2737
        %s2740 = sld [smem:[#allocation19 + $0x105]]
        %v2741 = vstv %s2740
        %v2742 = vmul.f32 %v2741, %v2067
        %v2743 = vmul.f32 %v2741, %v2068
        %v2744 = vadd.f32 %v2738, %v2742
        %v2745 = vadd.f32 %v2739, %v2743
        %s2746 = sld [smem:[#allocation19 + $0x106]]
        %v2747 = vstv %s2746
        %v2748 = vmul.f32 %v2747, %v2082
        %v2749 = vmul.f32 %v2747, %v2083
        %v2750 = vadd.f32 %v2744, %v2748
        %v2751 = vadd.f32 %v2745, %v2749
        %s2752 = sld [smem:[#allocation19 + $0x107]]
        %v2753 = vstv %s2752
        %v2754 = vmul.f32 %v2753, %v2071
        %v2755 = vmul.f32 %v2753, %v2074
        %v2756 = vadd.f32 %v2750, %v2754
        %v2757 = vadd.f32 %v2751, %v2755
        %s2758 = sld [smem:[#allocation19 + $0x108]]
        %v2759 = vstv %s2758
        %v2760 = vmul.f32 %v2759, %v2090
        %v2761 = vmul.f32 %v2759, %v2091
        %v2762 = vadd.f32 %v2756, %v2760
        %v2763 = vadd.f32 %v2757, %v2761
        %s2764 = sld [smem:[#allocation19 + $0x109]]
        %v2765 = vstv %s2764
        %v2766 = vmul.f32 %v2765, %v2107
        %v2767 = vmul.f32 %v2765, %v2108
        %v2768 = vadd.f32 %v2762, %v2766
        %v2769 = vadd.f32 %v2763, %v2767
        %s2770 = sld [smem:[#allocation19 + $0x10a]]
        %v2771 = vstv %s2770
        %v2772 = vmul.f32 %v2771, %v2099
        %v2773 = vmul.f32 %v2771, %v2096
        %v2774 = vadd.f32 %v2768, %v2772
        %v2775 = vadd.f32 %v2769, %v2773
        %s2776 = sld [smem:[#allocation19 + $0x10b]]
        %v2777 = vstv %s2776
        %v2778 = vmul.f32 %v2777, %v2115
        %v2779 = vmul.f32 %v2777, %v2116
        %v2780 = vadd.f32 %v2774, %v2778
        %v2781 = vadd.f32 %v2775, %v2779
        %s2782 = sld [smem:[#allocation19 + $0x10c]]
        %v2783 = vstv %s2782
        %v2784 = vmul.f32 %v2783, %v2123
        %v2785 = vmul.f32 %v2783, %v2124
        %v2786 = vadd.f32 %v2780, %v2784
        %v2787 = vadd.f32 %v2781, %v2785
        %s2788 = sld [smem:[#allocation19 + $0x10d]]
        %v2789 = vstv %s2788
        %v2790 = vmul.f32 %v2789, %v1982
        %v2791 = vmul.f32 %v2789, %v1983
        %v2792 = vadd.f32 %v2786, %v2790
        %v2793 = vadd.f32 %v2787, %v2791
        %s2794 = sld [smem:[#allocation19 + $0x10e]]
        %v2795 = vstv %s2794
        %v2796 = vmul.f32 %v2795, %v2131
        %v2797 = vmul.f32 %v2795, %v2132
        %v2798 = vadd.f32 %v2792, %v2796
        %v2799 = vadd.f32 %v2793, %v2797
        %s2800 = sld [smem:[#allocation19 + $0x10f]]
        %v2801 = vstv %s2800
        %v2802 = vmul.f32 %v2801, %v2146
        %v2803 = vmul.f32 %v2801, %v2147
        %v2804 = vadd.f32 %v2798, %v2802
        %v2805 = vadd.f32 %v2799, %v2803
        %s2806 = sld [smem:[#allocation19 + $0x110]]
        %v2807 = vstv %s2806
        %v2808 = vmul.f32 %v2807, %v2135
        %v2809 = vmul.f32 %v2807, %v2138
        %v2810 = vadd.f32 %v2804, %v2808
        %v2811 = vadd.f32 %v2805, %v2809
        %s2812 = sld [smem:[#allocation19 + $0x111]]
        %v2813 = vstv %s2812
        %v2814 = vmul.f32 %v2813, %v2154
        %v2815 = vmul.f32 %v2813, %v2155
        %v2816 = vadd.f32 %v2810, %v2814
        %v2817 = vadd.f32 %v2811, %v2815
        %s2818 = sld [smem:[#allocation19 + $0x112]]
        %v2819 = vstv %s2818
        %v2820 = vmul.f32 %v2819, %v2171
        %v2821 = vmul.f32 %v2819, %v2172
        %v2822 = vadd.f32 %v2816, %v2820
        %v2823 = vadd.f32 %v2817, %v2821
        %s2824 = sld [smem:[#allocation19 + $0x113]]
        %v2825 = vstv %s2824
        %v2826 = vmul.f32 %v2825, %v2163
        %v2827 = vmul.f32 %v2825, %v2160
        %v2828 = vadd.f32 %v2822, %v2826
        %v2829 = vadd.f32 %v2823, %v2827
        %s2830 = sld [smem:[#allocation19 + $0x114]]
        %v2831 = vstv %s2830
        %v2832 = vmul.f32 %v2831, %v2179
        %v2833 = vmul.f32 %v2831, %v2180
        %v2834 = vadd.f32 %v2828, %v2832
        %v2835 = vadd.f32 %v2829, %v2833
        %s2836 = sld [smem:[#allocation19 + $0x115]]
        %v2837 = vstv %s2836
        %v2838 = vmul.f32 %v2837, %v2187
        %v2839 = vmul.f32 %v2837, %v2188
        %v2840 = vadd.f32 %v2834, %v2838
        %v2841 = vadd.f32 %v2835, %v2839
        %s2842 = sld [smem:[#allocation19 + $0x116]]
        %v2843 = vstv %s2842
        %v2844 = vmul.f32 %v2843, %v2004
        %v2845 = vmul.f32 %v2843, %v2005
        %v2846 = vadd.f32 %v2840, %v2844
        %v2847 = vadd.f32 %v2841, %v2845
        %s2848 = sld [smem:[#allocation19 + $0x117]]
        %v2849 = vstv %s2848
        %v2850 = vmul.f32 %v2849, %v2195
        %v2851 = vmul.f32 %v2849, %v2196
        %v2852 = vadd.f32 %v2846, %v2850
        %v2853 = vadd.f32 %v2847, %v2851
        %s2854 = sld [smem:[#allocation19 + $0x118]]
        %v2855 = vstv %s2854
        %v2856 = vmul.f32 %v2855, %v2210
        %v2857 = vmul.f32 %v2855, %v2211
        %v2858 = vadd.f32 %v2852, %v2856
        %v2859 = vadd.f32 %v2853, %v2857
        %s2860 = sld [smem:[#allocation19 + $0x119]]
        %v2861 = vstv %s2860
        %v2862 = vmul.f32 %v2861, %v2199
        %v2863 = vmul.f32 %v2861, %v2202
        %v2864 = vadd.f32 %v2858, %v2862
        %v2865 = vadd.f32 %v2859, %v2863
        %s2866 = sld [smem:[#allocation19 + $0x11a]]
        %v2867 = vstv %s2866
        %v2868 = vmul.f32 %v2867, %v2218
        %v2869 = vmul.f32 %v2867, %v2219
        %v2870 = vadd.f32 %v2864, %v2868
        %v2871 = vadd.f32 %v2865, %v2869
        %s2872 = sld [smem:[#allocation19 + $0x11b]]
        %v2873 = vstv %s2872
        %v2874 = vmul.f32 %v2873, %v2235
        %v2875 = vmul.f32 %v2873, %v2236
        %v2876 = vadd.f32 %v2870, %v2874
        %v2877 = vadd.f32 %v2871, %v2875
        %s2878 = sld [smem:[#allocation19 + $0x11c]]
        %v2879 = vstv %s2878
        %v2880 = vmul.f32 %v2879, %v2227
        %v2881 = vmul.f32 %v2879, %v2224
        %v2882 = vadd.f32 %v2876, %v2880
        %v2883 = vadd.f32 %v2877, %v2881
        %s2884 = sld [smem:[#allocation19 + $0x11d]]
        %v2885 = vstv %s2884
        %v2886 = vmul.f32 %v2885, %v2243
        %v2887 = vmul.f32 %v2885, %v2244
        %v2888 = vadd.f32 %v2882, %v2886
        %v2889 = vadd.f32 %v2883, %v2887
        %s2890 = sld [smem:[#allocation19 + $0x11e]]
        %v2891 = vstv %s2890
        %v2892 = vmul.f32 %v2891, %v2251
        %v2893 = vmul.f32 %v2891, %v2252
        %v2894 = vadd.f32 %v2888, %v2892
        %v2895 = vadd.f32 %v2889, %v2893
        %s2896 = sld [smem:[#allocation19 + $0x11f]]
        %v2897 = vstv %s2896
        %v2898 = vmul.f32 %v2897, %v2026
        %v2899 = vmul.f32 %v2897, %v2027
        %v2900 = vadd.f32 %v2894, %v2898
        %v2901 = vadd.f32 %v2895, %v2899
        %s2902 = sld [smem:[#allocation19 + $0x120]]
        %v2903 = vstv %s2902
        %v2904 = vmul.f32 %v2903, %v2259
        %v2905 = vmul.f32 %v2903, %v2260
        %v2906 = vadd.f32 %v2900, %v2904
        %v2907 = vadd.f32 %v2901, %v2905
        %s2908 = sld [smem:[#allocation19 + $0x121]]
        %v2909 = vstv %s2908
        %v2910 = vmul.f32 %v2909, %v2274
        %v2911 = vmul.f32 %v2909, %v2275
        %v2912 = vadd.f32 %v2906, %v2910
        %v2913 = vadd.f32 %v2907, %v2911
        %s2914 = sld [smem:[#allocation19 + $0x122]]
        %v2915 = vstv %s2914
        %v2916 = vmul.f32 %v2915, %v2263
        %v2917 = vmul.f32 %v2915, %v2266
        %v2918 = vadd.f32 %v2912, %v2916
        %v2919 = vadd.f32 %v2913, %v2917
        %s2920 = sld [smem:[#allocation19 + $0x123]]
        %v2921 = vstv %s2920
        %v2922 = vmul.f32 %v2921, %v2282
        %v2923 = vmul.f32 %v2921, %v2283
        %v2924 = vadd.f32 %v2918, %v2922
        %v2925 = vadd.f32 %v2919, %v2923
        %s2926 = sld [smem:[#allocation19 + $0x180]]
        %v2927 = vstv %s2926
        %v2928 = vmul.f32 %v2927, %v2043
        %v2929 = vmul.f32 %v2927, %v2044
        %s2930 = sld [smem:[#allocation19 + $0x181]]
        %v2931 = vstv %s2930
        %v2932 = vmul.f32 %v2931, %v2035
        %v2933 = vmul.f32 %v2931, %v2032
        %v2934 = vadd.f32 %v2928, %v2932
        %v2935 = vadd.f32 %v2929, %v2933
        %s2936 = sld [smem:[#allocation19 + $0x182]]
        %v2937 = vstv %s2936
        %v2938 = vmul.f32 %v2937, %v2051
        %v2939 = vmul.f32 %v2937, %v2052
        %v2940 = vadd.f32 %v2934, %v2938
        %v2941 = vadd.f32 %v2935, %v2939
        %s2942 = sld [smem:[#allocation19 + $0x183]]
        %v2943 = vstv %s2942
        %v2944 = vmul.f32 %v2943, %v2059
        %v2945 = vmul.f32 %v2943, %v2060
        %v2946 = vadd.f32 %v2940, %v2944
        %v2947 = vadd.f32 %v2941, %v2945
        %s2948 = sld [smem:[#allocation19 + $0x184]]
        %v2949 = vstv %s2948
        %v2950 = vmul.f32 %v2949, %v1960
        %v2951 = vmul.f32 %v2949, %v1961
        %v2952 = vadd.f32 %v2946, %v2950
        %v2953 = vadd.f32 %v2947, %v2951
        %s2954 = sld [smem:[#allocation19 + $0x185]]
        %v2955 = vstv %s2954
        %v2956 = vmul.f32 %v2955, %v2067
        %v2957 = vmul.f32 %v2955, %v2068
        %v2958 = vadd.f32 %v2952, %v2956
        %v2959 = vadd.f32 %v2953, %v2957
        %s2960 = sld [smem:[#allocation19 + $0x186]]
        %v2961 = vstv %s2960
        %v2962 = vmul.f32 %v2961, %v2082
        %v2963 = vmul.f32 %v2961, %v2083
        %v2964 = vadd.f32 %v2958, %v2962
        %v2965 = vadd.f32 %v2959, %v2963
        %s2966 = sld [smem:[#allocation19 + $0x187]]
        %v2967 = vstv %s2966
        %v2968 = vmul.f32 %v2967, %v2071
        %v2969 = vmul.f32 %v2967, %v2074
        %v2970 = vadd.f32 %v2964, %v2968
        %v2971 = vadd.f32 %v2965, %v2969
        %s2972 = sld [smem:[#allocation19 + $0x188]]
        %v2973 = vstv %s2972
        %v2974 = vmul.f32 %v2973, %v2090
        %v2975 = vmul.f32 %v2973, %v2091
        %v2976 = vadd.f32 %v2970, %v2974
        %v2977 = vadd.f32 %v2971, %v2975
        %s2978 = sld [smem:[#allocation19 + $0x189]]
        %v2979 = vstv %s2978
        %v2980 = vmul.f32 %v2979, %v2107
        %v2981 = vmul.f32 %v2979, %v2108
        %v2982 = vadd.f32 %v2976, %v2980
        %v2983 = vadd.f32 %v2977, %v2981
        %s2984 = sld [smem:[#allocation19 + $0x18a]]
        %v2985 = vstv %s2984
        %v2986 = vmul.f32 %v2985, %v2099
        %v2987 = vmul.f32 %v2985, %v2096
        %v2988 = vadd.f32 %v2982, %v2986
        %v2989 = vadd.f32 %v2983, %v2987
        %s2990 = sld [smem:[#allocation19 + $0x18b]]
        %v2991 = vstv %s2990
        %v2992 = vmul.f32 %v2991, %v2115
        %v2993 = vmul.f32 %v2991, %v2116
        %v2994 = vadd.f32 %v2988, %v2992
        %v2995 = vadd.f32 %v2989, %v2993
        %s2996 = sld [smem:[#allocation19 + $0x18c]]
        %v2997 = vstv %s2996
        %v2998 = vmul.f32 %v2997, %v2123
        %v2999 = vmul.f32 %v2997, %v2124
        %v3000 = vadd.f32 %v2994, %v2998
        %v3001 = vadd.f32 %v2995, %v2999
        %s3002 = sld [smem:[#allocation19 + $0x18d]]
        %v3003 = vstv %s3002
        %v3004 = vmul.f32 %v3003, %v1982
        %v3005 = vmul.f32 %v3003, %v1983
        %v3006 = vadd.f32 %v3000, %v3004
        %v3007 = vadd.f32 %v3001, %v3005
        %s3008 = sld [smem:[#allocation19 + $0x18e]]
        %v3009 = vstv %s3008
        %v3010 = vmul.f32 %v3009, %v2131
        %v3011 = vmul.f32 %v3009, %v2132
        %v3012 = vadd.f32 %v3006, %v3010
        %v3013 = vadd.f32 %v3007, %v3011
        %s3014 = sld [smem:[#allocation19 + $0x18f]]
        %v3015 = vstv %s3014
        %v3016 = vmul.f32 %v3015, %v2146
        %v3017 = vmul.f32 %v3015, %v2147
        %v3018 = vadd.f32 %v3012, %v3016
        %v3019 = vadd.f32 %v3013, %v3017
        %s3020 = sld [smem:[#allocation19 + $0x190]]
        %v3021 = vstv %s3020
        %v3022 = vmul.f32 %v3021, %v2135
        %v3023 = vmul.f32 %v3021, %v2138
        %v3024 = vadd.f32 %v3018, %v3022
        %v3025 = vadd.f32 %v3019, %v3023
        %s3026 = sld [smem:[#allocation19 + $0x191]]
        %v3027 = vstv %s3026
        %v3028 = vmul.f32 %v3027, %v2154
        %v3029 = vmul.f32 %v3027, %v2155
        %v3030 = vadd.f32 %v3024, %v3028
        %v3031 = vadd.f32 %v3025, %v3029
        %s3032 = sld [smem:[#allocation19 + $0x192]]
        %v3033 = vstv %s3032
        %v3034 = vmul.f32 %v3033, %v2171
        %v3035 = vmul.f32 %v3033, %v2172
        %v3036 = vadd.f32 %v3030, %v3034
        %v3037 = vadd.f32 %v3031, %v3035
        %s3038 = sld [smem:[#allocation19 + $0x193]]
        %v3039 = vstv %s3038
        %v3040 = vmul.f32 %v3039, %v2163
        %v3041 = vmul.f32 %v3039, %v2160
        %v3042 = vadd.f32 %v3036, %v3040
        %v3043 = vadd.f32 %v3037, %v3041
        %s3044 = sld [smem:[#allocation19 + $0x194]]
        %v3045 = vstv %s3044
        %v3046 = vmul.f32 %v3045, %v2179
        %v3047 = vmul.f32 %v3045, %v2180
        %v3048 = vadd.f32 %v3042, %v3046
        %v3049 = vadd.f32 %v3043, %v3047
        %s3050 = sld [smem:[#allocation19 + $0x195]]
        %v3051 = vstv %s3050
        %v3052 = vmul.f32 %v3051, %v2187
        %v3053 = vmul.f32 %v3051, %v2188
        %v3054 = vadd.f32 %v3048, %v3052
        %v3055 = vadd.f32 %v3049, %v3053
        %s3056 = sld [smem:[#allocation19 + $0x196]]
        %v3057 = vstv %s3056
        %v3058 = vmul.f32 %v3057, %v2004
        %v3059 = vmul.f32 %v3057, %v2005
        %v3060 = vadd.f32 %v3054, %v3058
        %v3061 = vadd.f32 %v3055, %v3059
        %s3062 = sld [smem:[#allocation19 + $0x197]]
        %v3063 = vstv %s3062
        %v3064 = vmul.f32 %v3063, %v2195
        %v3065 = vmul.f32 %v3063, %v2196
        %v3066 = vadd.f32 %v3060, %v3064
        %v3067 = vadd.f32 %v3061, %v3065
        %s3068 = sld [smem:[#allocation19 + $0x198]]
        %v3069 = vstv %s3068
        %v3070 = vmul.f32 %v3069, %v2210
        %v3071 = vmul.f32 %v3069, %v2211
        %v3072 = vadd.f32 %v3066, %v3070
        %v3073 = vadd.f32 %v3067, %v3071
        %s3074 = sld [smem:[#allocation19 + $0x199]]
        %v3075 = vstv %s3074
        %v3076 = vmul.f32 %v3075, %v2199
        %v3077 = vmul.f32 %v3075, %v2202
        %v3078 = vadd.f32 %v3072, %v3076
        %v3079 = vadd.f32 %v3073, %v3077
        %s3080 = sld [smem:[#allocation19 + $0x19a]]
        %v3081 = vstv %s3080
        %v3082 = vmul.f32 %v3081, %v2218
        %v3083 = vmul.f32 %v3081, %v2219
        %v3084 = vadd.f32 %v3078, %v3082
        %v3085 = vadd.f32 %v3079, %v3083
        %s3086 = sld [smem:[#allocation19 + $0x19b]]
        %v3087 = vstv %s3086
        %v3088 = vmul.f32 %v3087, %v2235
        %v3089 = vmul.f32 %v3087, %v2236
        %v3090 = vadd.f32 %v3084, %v3088
        %v3091 = vadd.f32 %v3085, %v3089
        %s3092 = sld [smem:[#allocation19 + $0x19c]]
        %v3093 = vstv %s3092
        %v3094 = vmul.f32 %v3093, %v2227
        %v3095 = vmul.f32 %v3093, %v2224
        %v3096 = vadd.f32 %v3090, %v3094
        %v3097 = vadd.f32 %v3091, %v3095
        %s3098 = sld [smem:[#allocation19 + $0x19d]]
        %v3099 = vstv %s3098
        %v3100 = vmul.f32 %v3099, %v2243
        %v3101 = vmul.f32 %v3099, %v2244
        %v3102 = vadd.f32 %v3096, %v3100
        %v3103 = vadd.f32 %v3097, %v3101
        %s3104 = sld [smem:[#allocation19 + $0x19e]]
        %v3105 = vstv %s3104
        %v3106 = vmul.f32 %v3105, %v2251
        %v3107 = vmul.f32 %v3105, %v2252
        %v3108 = vadd.f32 %v3102, %v3106
        %v3109 = vadd.f32 %v3103, %v3107
        %s3110 = sld [smem:[#allocation19 + $0x19f]]
        %v3111 = vstv %s3110
        %v3112 = vmul.f32 %v3111, %v2026
        %v3113 = vmul.f32 %v3111, %v2027
        %v3114 = vadd.f32 %v3108, %v3112
        %v3115 = vadd.f32 %v3109, %v3113
        %s3116 = sld [smem:[#allocation19 + $0x1a0]]
        %v3117 = vstv %s3116
        %v3118 = vmul.f32 %v3117, %v2259
        %v3119 = vmul.f32 %v3117, %v2260
        %v3120 = vadd.f32 %v3114, %v3118
        %v3121 = vadd.f32 %v3115, %v3119
        %s3122 = sld [smem:[#allocation19 + $0x1a1]]
        %v3123 = vstv %s3122
        %v3124 = vmul.f32 %v3123, %v2274
        %v3125 = vmul.f32 %v3123, %v2275
        %v3126 = vadd.f32 %v3120, %v3124
        %v3127 = vadd.f32 %v3121, %v3125
        %s3128 = sld [smem:[#allocation19 + $0x1a2]]
        %v3129 = vstv %s3128
        %v3130 = vmul.f32 %v3129, %v2263
        %v3131 = vmul.f32 %v3129, %v2266
        %v3132 = vadd.f32 %v3126, %v3130
        %v3133 = vadd.f32 %v3127, %v3131
        %s3134 = sld [smem:[#allocation19 + $0x1a3]]
        %v3135 = vstv %s3134
        %v3136 = vmul.f32 %v3135, %v2282
        %v3137 = vmul.f32 %v3135, %v2283
        %v3138 = vadd.f32 %v3132, %v3136
        %v3139 = vadd.f32 %v3133, %v3137
        %v3140 = vmul.f32 %v2496, %v2496
        %v3141 = vmul.f32 %v2497, %v2497
        %3142 = vadd.xlane.f32.xlu0 %v3140
        %v3143 = vpop.xlane.xlu0 %3142
        %3144 = vadd.xlane.f32.xlu0 %v3141
        %v3145 = vpop.xlane.xlu0 %3144
        %v3146 = vadd.f32 %v3143, %v3145
        %v3147 = vrot.slane %v3146, 4
        %v3148 = vadd.f32 %v3146, %v3147
        %v3149 = vrot.slane %v3148, 2
        %v3150 = vadd.f32 %v3148, %v3149
        %v3151 = vrot.slane %v3150, 1
        %v3152 = vadd.f32 %v3150, %v3151
        %v3153 = vrsqrt.pop %v3152
        %v3154 = vmul.f32 %v3152, %v3153
        %vm3155 = vcmp.eq.f32.partialorder %v3152, inf
        %v3156 = vsel %vm3155, %v3152, %v3154
        %vm3157 = vcmp.eq.f32.partialorder %v3152, 0.0
        %v3158 = vand.u32 %v3152, 2147483648
        %v3159 = vsel %vm3157, %v3158, %v3156
        %v3160 = vmax.f32 %v3159, 1e-12
        %v3161 = vrcp.pop %v3160
        %v3162 = vmul.f32 1.0, %v3161
        %v3163 = vmul.f32 %v2496, %v3162
        %v3164 = vmul.f32 %v2497, %v3162
        %v3165 = vmul.f32 %v2710, %v2710
        %v3166 = vmul.f32 %v2711, %v2711
        %3167 = vadd.xlane.f32.xlu0 %v3165
        %v3168 = vpop.xlane.xlu0 %3167
        %3169 = vadd.xlane.f32.xlu0 %v3166
        %v3170 = vpop.xlane.xlu0 %3169
        %v3171 = vadd.f32 %v3168, %v3170
        %v3172 = vrot.slane %v3171, 4
        %v3173 = vadd.f32 %v3171, %v3172
        %v3174 = vrot.slane %v3173, 2
        %v3175 = vadd.f32 %v3173, %v3174
        %v3176 = vrot.slane %v3175, 1
        %v3177 = vadd.f32 %v3175, %v3176
        %v3178 = vrsqrt.pop %v3177
        %v3179 = vmul.f32 %v3177, %v3178
        %vm3180 = vcmp.eq.f32.partialorder %v3177, inf
        %v3181 = vsel %vm3180, %v3177, %v3179
        %vm3182 = vcmp.eq.f32.partialorder %v3177, 0.0
        %v3183 = vand.u32 %v3177, 2147483648
        %v3184 = vsel %vm3182, %v3183, %v3181
        %v3185 = vmax.f32 %v3184, 1e-12
        %v3186 = vrcp.pop %v3185
        %v3187 = vmul.f32 1.0, %v3186
        %v3188 = vmul.f32 %v2710, %v3187
        %v3189 = vmul.f32 %v2711, %v3187
        %v3190 = vmul.f32 %v1126, %v1126
        %v3191 = vmul.f32 %v1127, %v1127
        %3192 = vadd.xlane.f32.xlu0 %v3190
        %v3193 = vpop.xlane.xlu0 %3192
        %3194 = vadd.xlane.f32.xlu0 %v3191
        %v3195 = vpop.xlane.xlu0 %3194
        %v3196 = vadd.f32 %v3193, %v3195
        %v3197 = vrot.slane %v3196, 4
        %v3198 = vadd.f32 %v3196, %v3197
        %v3199 = vrot.slane %v3198, 2
        %v3200 = vadd.f32 %v3198, %v3199
        %v3201 = vrot.slane %v3200, 1
        %v3202 = vadd.f32 %v3200, %v3201
        %v3203 = vrsqrt.pop %v3202
        %v3204 = vmul.f32 %v3202, %v3203
        %vm3205 = vcmp.eq.f32.partialorder %v3202, inf
        %v3206 = vsel %vm3205, %v3202, %v3204
        %vm3207 = vcmp.eq.f32.partialorder %v3202, 0.0
        %v3208 = vand.u32 %v3202, 2147483648
        %v3209 = vsel %vm3207, %v3208, %v3206
        %v3210 = vmax.f32 %v3209, 1e-12
        %v3211 = vrcp.pop %v3210
        %v3212 = vmul.f32 1.0, %v3211
        %v3213 = vmul.f32 %v1126, %v3212
        %v3214 = vmul.f32 %v1127, %v3212
        %v3215 = vmul.f32 %v1242, %v1242
        %v3216 = vmul.f32 %v1243, %v1243
        %3217 = vadd.xlane.f32.xlu0 %v3215
        %v3218 = vpop.xlane.xlu0 %3217
        %3219 = vadd.xlane.f32.xlu0 %v3216
        %v3220 = vpop.xlane.xlu0 %3219
        %v3221 = vadd.f32 %v3218, %v3220
        %v3222 = vrot.slane %v3221, 4
        %v3223 = vadd.f32 %v3221, %v3222
        %v3224 = vrot.slane %v3223, 2
        %v3225 = vadd.f32 %v3223, %v3224
        %v3226 = vrot.slane %v3225, 1
        %v3227 = vadd.f32 %v3225, %v3226
        %v3228 = vrsqrt.pop %v3227
        %v3229 = vmul.f32 %v3227, %v3228
        %vm3230 = vcmp.eq.f32.partialorder %v3227, inf
        %v3231 = vsel %vm3230, %v3227, %v3229
        %vm3232 = vcmp.eq.f32.partialorder %v3227, 0.0
        %v3233 = vand.u32 %v3227, 2147483648
        %v3234 = vsel %vm3232, %v3233, %v3231
        %v3235 = vmax.f32 %v3234, 1e-12
        %v3236 = vrcp.pop %v3235
        %v3237 = vmul.f32 1.0, %v3236
        %v3238 = vmul.f32 %v1242, %v3237
        %v3239 = vmul.f32 %v1243, %v3237
        %s3240 = sld [smem:[#allocation20]]
        %v3241 = vmul.f32 %v3163, %v3213
        %v3242 = vmul.f32 %v3164, %v3214
        %3243 = vadd.xlane.f32.xlu0 %v3241
        %v3244 = vpop.xlane.xlu0 %3243
        %3245 = vadd.xlane.f32.xlu0 %v3242
        %v3246 = vpop.xlane.xlu0 %3245
        %v3247 = vadd.f32 %v3244, %v3246
        %v3248 = vrot.slane %v3247, 4
        %v3249 = vadd.f32 %v3247, %v3248
        %v3250 = vrot.slane %v3249, 2
        %v3251 = vadd.f32 %v3249, %v3250
        %v3252 = vrot.slane %v3251, 1
        %v3253 = vadd.f32 %v3251, %v3252
        %v3254 = vstv %s3240
        %v3255 = vmul.f32 %v3254, %v3253
        %v3256 = vmul.f32 %v3163, %v3238
        %v3257 = vmul.f32 %v3164, %v3239
        %3258 = vadd.xlane.f32.xlu0 %v3256
        %v3259 = vpop.xlane.xlu0 %3258
        %3260 = vadd.xlane.f32.xlu0 %v3257
        %v3261 = vpop.xlane.xlu0 %3260
        %v3262 = vadd.f32 %v3259, %v3261
        %v3263 = vrot.slane %v3262, 4
        %v3264 = vadd.f32 %v3262, %v3263
        %v3265 = vrot.slane %v3264, 2
        %v3266 = vadd.f32 %v3264, %v3265
        %v3267 = vrot.slane %v3266, 1
        %v3268 = vadd.f32 %v3266, %v3267
        %v3269 = vmul.f32 %v3254, %v3268
        %v3270 = vmax.f32 %v3255, %v3269
        %v3271 = vsub.f32 %v3255, %v3270
        %v3272 = vmul.f32 %v3271, 1.442695
        %v3273 = vpow.pop %v3272
        %v3274 = vsub.f32 %v3269, %v3270
        %v3275 = vmul.f32 %v3274, 1.442695
        %v3276 = vpow.pop %v3275
        %v3277 = vadd.f32 %v3273, %v3276
        %v3278 = vrcp.pop %v3277
        %v3279 = vmul.f32 1.0, %v3278
        %v3280 = vmul.f32 %v3273, %v3279
        %v3281 = vmul.f32 %v3280, %v1590
        %v3282 = vmul.f32 %v3280, %v1591
        %v3283 = vmul.f32 %v3276, %v3279
        %v3284 = vmul.f32 %v3283, %v1706
        %v3285 = vmul.f32 %v3283, %v1707
        %v3286 = vadd.f32 %v3281, %v3284
        %v3287 = vadd.f32 %v3282, %v3285
        %v3288 = vmul.f32 %v3188, %v3213
        %v3289 = vmul.f32 %v3189, %v3214
        %3290 = vadd.xlane.f32.xlu0 %v3288
        %v3291 = vpop.xlane.xlu0 %3290
        %3292 = vadd.xlane.f32.xlu0 %v3289
        %v3293 = vpop.xlane.xlu0 %3292
        %v3294 = vadd.f32 %v3291, %v3293
        %v3295 = vrot.slane %v3294, 4
        %v3296 = vadd.f32 %v3294, %v3295
        %v3297 = vrot.slane %v3296, 2
        %v3298 = vadd.f32 %v3296, %v3297
        %v3299 = vrot.slane %v3298, 1
        %v3300 = vadd.f32 %v3298, %v3299
        %v3301 = vmul.f32 %v3254, %v3300
        %v3302 = vmul.f32 %v3188, %v3238
        %v3303 = vmul.f32 %v3189, %v3239
        %3304 = vadd.xlane.f32.xlu0 %v3302
        %v3305 = vpop.xlane.xlu0 %3304
        %3306 = vadd.xlane.f32.xlu0 %v3303
        %v3307 = vpop.xlane.xlu0 %3306
        %v3308 = vadd.f32 %v3305, %v3307
        %v3309 = vrot.slane %v3308, 4
        %v3310 = vadd.f32 %v3308, %v3309
        %v3311 = vrot.slane %v3310, 2
        %v3312 = vadd.f32 %v3310, %v3311
        %v3313 = vrot.slane %v3312, 1
        %v3314 = vadd.f32 %v3312, %v3313
        %v3315 = vmul.f32 %v3254, %v3314
        %v3316 = vmax.f32 %v3301, %v3315
        %v3317 = vsub.f32 %v3301, %v3316
        %v3318 = vmul.f32 %v3317, 1.442695
        %v3319 = vpow.pop %v3318
        %v3320 = vsub.f32 %v3315, %v3316
        %v3321 = vmul.f32 %v3320, 1.442695
        %v3322 = vpow.pop %v3321
        %v3323 = vadd.f32 %v3319, %v3322
        %v3324 = vrcp.pop %v3323
        %v3325 = vmul.f32 1.0, %v3324
        %v3326 = vmul.f32 %v3319, %v3325
        %v3327 = vmul.f32 %v3326, %v1590
        %v3328 = vmul.f32 %v3326, %v1591
        %v3329 = vmul.f32 %v3322, %v3325
        %v3330 = vmul.f32 %v3329, %v1706
        %v3331 = vmul.f32 %v3329, %v1707
        %v3332 = vadd.f32 %v3327, %v3330
        %v3333 = vadd.f32 %v3328, %v3331
        %v3334 = vmul.f32 %v2924, %v2924
        %v3335 = vmul.f32 %v2925, %v2925
        %3336 = vadd.xlane.f32.xlu0 %v3334
        %v3337 = vpop.xlane.xlu0 %3336
        %3338 = vadd.xlane.f32.xlu0 %v3335
        %v3339 = vpop.xlane.xlu0 %3338
        %v3340 = vadd.f32 %v3337, %v3339
        %v3341 = vrot.slane %v3340, 4
        %v3342 = vadd.f32 %v3340, %v3341
        %v3343 = vrot.slane %v3342, 2
        %v3344 = vadd.f32 %v3342, %v3343
        %v3345 = vrot.slane %v3344, 1
        %v3346 = vadd.f32 %v3344, %v3345
        %v3347 = vrsqrt.pop %v3346
        %v3348 = vmul.f32 %v3346, %v3347
        %vm3349 = vcmp.eq.f32.partialorder %v3346, inf
        %v3350 = vsel %vm3349, %v3346, %v3348
        %vm3351 = vcmp.eq.f32.partialorder %v3346, 0.0
        %v3352 = vand.u32 %v3346, 2147483648
        %v3353 = vsel %vm3351, %v3352, %v3350
        %v3354 = vmax.f32 %v3353, 1e-12
        %v3355 = vrcp.pop %v3354
        %v3356 = vmul.f32 1.0, %v3355
        %v3357 = vmul.f32 %v2924, %v3356
        %v3358 = vmul.f32 %v2925, %v3356
        %v3359 = vmul.f32 %v3138, %v3138
        %v3360 = vmul.f32 %v3139, %v3139
        %3361 = vadd.xlane.f32.xlu0 %v3359
        %v3362 = vpop.xlane.xlu0 %3361
        %3363 = vadd.xlane.f32.xlu0 %v3360
        %v3364 = vpop.xlane.xlu0 %3363
        %v3365 = vadd.f32 %v3362, %v3364
        %v3366 = vrot.slane %v3365, 4
        %v3367 = vadd.f32 %v3365, %v3366
        %v3368 = vrot.slane %v3367, 2
        %v3369 = vadd.f32 %v3367, %v3368
        %v3370 = vrot.slane %v3369, 1
        %v3371 = vadd.f32 %v3369, %v3370
        %v3372 = vrsqrt.pop %v3371
        %v3373 = vmul.f32 %v3371, %v3372
        %vm3374 = vcmp.eq.f32.partialorder %v3371, inf
        %v3375 = vsel %vm3374, %v3371, %v3373
        %vm3376 = vcmp.eq.f32.partialorder %v3371, 0.0
        %v3377 = vand.u32 %v3371, 2147483648
        %v3378 = vsel %vm3376, %v3377, %v3375
        %v3379 = vmax.f32 %v3378, 1e-12
        %v3380 = vrcp.pop %v3379
        %v3381 = vmul.f32 1.0, %v3380
        %v3382 = vmul.f32 %v3138, %v3381
        %v3383 = vmul.f32 %v3139, %v3381
        %v3384 = vmul.f32 %v1358, %v1358
        %v3385 = vmul.f32 %v1359, %v1359
        %3386 = vadd.xlane.f32.xlu0 %v3384
        %v3387 = vpop.xlane.xlu0 %3386
        %3388 = vadd.xlane.f32.xlu0 %v3385
        %v3389 = vpop.xlane.xlu0 %3388
        %v3390 = vadd.f32 %v3387, %v3389
        %v3391 = vrot.slane %v3390, 4
        %v3392 = vadd.f32 %v3390, %v3391
        %v3393 = vrot.slane %v3392, 2
        %v3394 = vadd.f32 %v3392, %v3393
        %v3395 = vrot.slane %v3394, 1
        %v3396 = vadd.f32 %v3394, %v3395
        %v3397 = vrsqrt.pop %v3396
        %v3398 = vmul.f32 %v3396, %v3397
        %vm3399 = vcmp.eq.f32.partialorder %v3396, inf
        %v3400 = vsel %vm3399, %v3396, %v3398
        %vm3401 = vcmp.eq.f32.partialorder %v3396, 0.0
        %v3402 = vand.u32 %v3396, 2147483648
        %v3403 = vsel %vm3401, %v3402, %v3400
        %v3404 = vmax.f32 %v3403, 1e-12
        %v3405 = vrcp.pop %v3404
        %v3406 = vmul.f32 1.0, %v3405
        %v3407 = vmul.f32 %v1358, %v3406
        %v3408 = vmul.f32 %v1359, %v3406
        %v3409 = vmul.f32 %v1474, %v1474
        %v3410 = vmul.f32 %v1475, %v1475
        %3411 = vadd.xlane.f32.xlu0 %v3409
        %v3412 = vpop.xlane.xlu0 %3411
        %3413 = vadd.xlane.f32.xlu0 %v3410
        %v3414 = vpop.xlane.xlu0 %3413
        %v3415 = vadd.f32 %v3412, %v3414
        %v3416 = vrot.slane %v3415, 4
        %v3417 = vadd.f32 %v3415, %v3416
        %v3418 = vrot.slane %v3417, 2
        %v3419 = vadd.f32 %v3417, %v3418
        %v3420 = vrot.slane %v3419, 1
        %v3421 = vadd.f32 %v3419, %v3420
        %v3422 = vrsqrt.pop %v3421
        %v3423 = vmul.f32 %v3421, %v3422
        %vm3424 = vcmp.eq.f32.partialorder %v3421, inf
        %v3425 = vsel %vm3424, %v3421, %v3423
        %vm3426 = vcmp.eq.f32.partialorder %v3421, 0.0
        %v3427 = vand.u32 %v3421, 2147483648
        %v3428 = vsel %vm3426, %v3427, %v3425
        %v3429 = vmax.f32 %v3428, 1e-12
        %v3430 = vrcp.pop %v3429
        %v3431 = vmul.f32 1.0, %v3430
        %v3432 = vmul.f32 %v1474, %v3431
        %v3433 = vmul.f32 %v1475, %v3431
        %s3434 = sld [smem:[#allocation20 + $0x1]]
        %v3435 = vmul.f32 %v3357, %v3407
        %v3436 = vmul.f32 %v3358, %v3408
        %3437 = vadd.xlane.f32.xlu0 %v3435
        %v3438 = vpop.xlane.xlu0 %3437
        %3439 = vadd.xlane.f32.xlu0 %v3436
        %v3440 = vpop.xlane.xlu0 %3439
        %v3441 = vadd.f32 %v3438, %v3440
        %v3442 = vrot.slane %v3441, 4
        %v3443 = vadd.f32 %v3441, %v3442
        %v3444 = vrot.slane %v3443, 2
        %v3445 = vadd.f32 %v3443, %v3444
        %v3446 = vrot.slane %v3445, 1
        %v3447 = vadd.f32 %v3445, %v3446
        %v3448 = vstv %s3434
        %v3449 = vmul.f32 %v3448, %v3447
        %v3450 = vmul.f32 %v3357, %v3432
        %v3451 = vmul.f32 %v3358, %v3433
        %3452 = vadd.xlane.f32.xlu0 %v3450
        %v3453 = vpop.xlane.xlu0 %3452
        %3454 = vadd.xlane.f32.xlu0 %v3451
        %v3455 = vpop.xlane.xlu0 %3454
        %v3456 = vadd.f32 %v3453, %v3455
        %v3457 = vrot.slane %v3456, 4
        %v3458 = vadd.f32 %v3456, %v3457
        %v3459 = vrot.slane %v3458, 2
        %v3460 = vadd.f32 %v3458, %v3459
        %v3461 = vrot.slane %v3460, 1
        %v3462 = vadd.f32 %v3460, %v3461
        %v3463 = vmul.f32 %v3448, %v3462
        %v3464 = vmax.f32 %v3449, %v3463
        %v3465 = vsub.f32 %v3449, %v3464
        %v3466 = vmul.f32 %v3465, 1.442695
        %v3467 = vpow.pop %v3466
        %v3468 = vsub.f32 %v3463, %v3464
        %v3469 = vmul.f32 %v3468, 1.442695
        %v3470 = vpow.pop %v3469
        %v3471 = vadd.f32 %v3467, %v3470
        %v3472 = vrcp.pop %v3471
        %v3473 = vmul.f32 1.0, %v3472
        %v3474 = vmul.f32 %v3467, %v3473
        %v3475 = vmul.f32 %v3474, %v1822
        %v3476 = vmul.f32 %v3474, %v1823
        %v3477 = vmul.f32 %v3470, %v3473
        %v3478 = vmul.f32 %v3477, %v1938
        %v3479 = vmul.f32 %v3477, %v1939
        %v3480 = vadd.f32 %v3475, %v3478
        %v3481 = vadd.f32 %v3476, %v3479
        %v3482 = vmul.f32 %v3382, %v3407
        %v3483 = vmul.f32 %v3383, %v3408
        %3484 = vadd.xlane.f32.xlu0 %v3482
        %v3485 = vpop.xlane.xlu0 %3484
        %3486 = vadd.xlane.f32.xlu0 %v3483
        %v3487 = vpop.xlane.xlu0 %3486
        %v3488 = vadd.f32 %v3485, %v3487
        %v3489 = vrot.slane %v3488, 4
        %v3490 = vadd.f32 %v3488, %v3489
        %v3491 = vrot.slane %v3490, 2
        %v3492 = vadd.f32 %v3490, %v3491
        %v3493 = vrot.slane %v3492, 1
        %v3494 = vadd.f32 %v3492, %v3493
        %v3495 = vmul.f32 %v3448, %v3494
        %v3496 = vmul.f32 %v3382, %v3432
        %v3497 = vmul.f32 %v3383, %v3433
        %3498 = vadd.xlane.f32.xlu0 %v3496
        %v3499 = vpop.xlane.xlu0 %3498
        %3500 = vadd.xlane.f32.xlu0 %v3497
        %v3501 = vpop.xlane.xlu0 %3500
        %v3502 = vadd.f32 %v3499, %v3501
        %v3503 = vrot.slane %v3502, 4
        %v3504 = vadd.f32 %v3502, %v3503
        %v3505 = vrot.slane %v3504, 2
        %v3506 = vadd.f32 %v3504, %v3505
        %v3507 = vrot.slane %v3506, 1
        %v3508 = vadd.f32 %v3506, %v3507
        %v3509 = vmul.f32 %v3448, %v3508
        %v3510 = vmax.f32 %v3495, %v3509
        %v3511 = vsub.f32 %v3495, %v3510
        %v3512 = vmul.f32 %v3511, 1.442695
        %v3513 = vpow.pop %v3512
        %v3514 = vsub.f32 %v3509, %v3510
        %v3515 = vmul.f32 %v3514, 1.442695
        %v3516 = vpow.pop %v3515
        %v3517 = vadd.f32 %v3513, %v3516
        %v3518 = vrcp.pop %v3517
        %v3519 = vmul.f32 1.0, %v3518
        %v3520 = vmul.f32 %v3513, %v3519
        %v3521 = vmul.f32 %v3520, %v1822
        %v3522 = vmul.f32 %v3520, %v1823
        %v3523 = vmul.f32 %v3516, %v3519
        %v3524 = vmul.f32 %v3523, %v1938
        %v3525 = vmul.f32 %v3523, %v1939
        %v3526 = vadd.f32 %v3521, %v3524
        %v3527 = vadd.f32 %v3522, %v3525
        %s3528 = sld [smem:[#allocation22]]
        %v3529 = vstv %s3528
        %v3530 = vmul.f32 %v3529, %v3286
        %v3531 = vmul.f32 %v3529, %v3287
        %s3532 = sld [smem:[#allocation22 + $0x1]]
        %v3533 = vstv %s3532
        %v3534 = vmul.f32 %v3533, %v3332
        %v3535 = vmul.f32 %v3533, %v3333
        %v3536 = vadd.f32 %v3530, %v3534
        %v3537 = vadd.f32 %v3531, %v3535
        %s3538 = sld [smem:[#allocation22 + $0x2]]
        %v3539 = vstv %s3538
        %v3540 = vmul.f32 %v3539, %v3480
        %v3541 = vmul.f32 %v3539, %v3481
        %v3542 = vadd.f32 %v3536, %v3540
        %v3543 = vadd.f32 %v3537, %v3541
        %s3544 = sld [smem:[#allocation22 + $0x3]]
        %v3545 = vstv %s3544
        %v3546 = vmul.f32 %v3545, %v3526
        %v3547 = vmul.f32 %v3545, %v3527
        %v3548 = vadd.f32 %v3542, %v3546
        %v3549 = vadd.f32 %v3543, %v3547
        %s3550 = sld [smem:[#allocation22 + $0x80]]
        %v3551 = vstv %s3550
        %v3552 = vmul.f32 %v3551, %v3286
        %v3553 = vmul.f32 %v3551, %v3287
        %s3554 = sld [smem:[#allocation22 + $0x81]]
        %v3555 = vstv %s3554
        %v3556 = vmul.f32 %v3555, %v3332
        %v3557 = vmul.f32 %v3555, %v3333
        %v3558 = vadd.f32 %v3552, %v3556
        %v3559 = vadd.f32 %v3553, %v3557
        %s3560 = sld [smem:[#allocation22 + $0x82]]
        %v3561 = vstv %s3560
        %v3562 = vmul.f32 %v3561, %v3480
        %v3563 = vmul.f32 %v3561, %v3481
        %v3564 = vadd.f32 %v3558, %v3562
        %v3565 = vadd.f32 %v3559, %v3563
        %s3566 = sld [smem:[#allocation22 + $0x83]]
        %v3567 = vstv %s3566
        %v3568 = vmul.f32 %v3567, %v3526
        %v3569 = vmul.f32 %v3567, %v3527
        %v3570 = vadd.f32 %v3564, %v3568
        %v3571 = vadd.f32 %v3565, %v3569
        %s3572 = sld [smem:[#allocation22 + $0x100]]
        %v3573 = vstv %s3572
        %v3574 = vmul.f32 %v3573, %v3286
        %v3575 = vmul.f32 %v3573, %v3287
        %s3576 = sld [smem:[#allocation22 + $0x101]]
        %v3577 = vstv %s3576
        %v3578 = vmul.f32 %v3577, %v3332
        %v3579 = vmul.f32 %v3577, %v3333
        %v3580 = vadd.f32 %v3574, %v3578
        %v3581 = vadd.f32 %v3575, %v3579
        %s3582 = sld [smem:[#allocation22 + $0x102]]
        %v3583 = vstv %s3582
        %v3584 = vmul.f32 %v3583, %v3480
        %v3585 = vmul.f32 %v3583, %v3481
        %v3586 = vadd.f32 %v3580, %v3584
        %v3587 = vadd.f32 %v3581, %v3585
        %s3588 = sld [smem:[#allocation22 + $0x103]]
        %v3589 = vstv %s3588
        %v3590 = vmul.f32 %v3589, %v3526
        %v3591 = vmul.f32 %v3589, %v3527
        %v3592 = vadd.f32 %v3586, %v3590
        %v3593 = vadd.f32 %v3587, %v3591
        %s3594 = sld [smem:[#allocation22 + $0x180]]
        %v3595 = vstv %s3594
        %v3596 = vmul.f32 %v3595, %v3286
        %v3597 = vmul.f32 %v3595, %v3287
        %s3598 = sld [smem:[#allocation22 + $0x181]]
        %v3599 = vstv %s3598
        %v3600 = vmul.f32 %v3599, %v3332
        %v3601 = vmul.f32 %v3599, %v3333
        %v3602 = vadd.f32 %v3596, %v3600
        %v3603 = vadd.f32 %v3597, %v3601
        %s3604 = sld [smem:[#allocation22 + $0x182]]
        %v3605 = vstv %s3604
        %v3606 = vmul.f32 %v3605, %v3480
        %v3607 = vmul.f32 %v3605, %v3481
        %v3608 = vadd.f32 %v3602, %v3606
        %v3609 = vadd.f32 %v3603, %v3607
        %s3610 = sld [smem:[#allocation22 + $0x183]]
        %v3611 = vstv %s3610
        %v3612 = vmul.f32 %v3611, %v3526
        %v3613 = vmul.f32 %v3611, %v3527
        %v3614 = vadd.f32 %v3608, %v3612
        %v3615 = vadd.f32 %v3609, %v3613
        %v3616 = vadd.f32 %v812, %v3548
        %v3617 = vadd.f32 %v813, %v3549
        %3618 = vst [vmem:[%s596] sm:$0xff] %v3616
        %3619 = vst [vmem:[%s596 + $0x8] sm:$0xff] %v3617
        %v3620 = vadd.f32 %v818, %v3570
        %v3621 = vadd.f32 %v819, %v3571
        %s3622 = scalar_lea.vmem %s596, 16 [#allocation23]
        %3623 = vst [vmem:[%s3622] sm:$0xff] %v3620
        %3624 = vst [vmem:[%s3622 + $0x8] sm:$0xff] %v3621
        %v3625 = vadd.f32 %v824, %v3592
        %v3626 = vadd.f32 %v825, %v3593
        %s3627 = scalar_lea.vmem %s596, 32 [#allocation23]
        %3628 = vst [vmem:[%s3627] sm:$0xff] %v3625
        %3629 = vst [vmem:[%s3627 + $0x8] sm:$0xff] %v3626
        %v3630 = vadd.f32 %v830, %v3614
        %v3631 = vadd.f32 %v831, %v3615
        %s3632 = scalar_lea.vmem %s596, 48 [#allocation23]
        %3633 = vst [vmem:[%s3632] sm:$0xff] %v3630
        %3634 = vst [vmem:[%s3632 + $0x8] sm:$0xff] %v3631
        %s3635 = sand.u32 %s308, 1
        %s3636 = scalar_lea.sflag [#allocation4], %s3635
        %s3637 = sand.u32 %s308, 1
        %s3638 = smul.addr %s3637, 64
        %s3639 = scalar_lea.vmem [#allocation23], %s3638
        // Predicated region
        $region117: #{tpu_custom_call.1} parent=67 // pred_check
          %p3640 = pneg %p318
        $region118: #{tpu_custom_call.1} parent=67 // pred_check_branch
          %3642 = sbr.rel (%p3640) target = $region120
        $region119: #{tpu_custom_call.1} parent=67 // pred_region
          %s3644 = ssub.s32 1024, 1024
          %3645 = vsyncadd %s3636, %s3644
          %s3646 = smul.addr %s38, 8
          %s3647 = smul.addr %s3646, 128
          %s3648 = scalar_lea.hbm %s12, %s3647
          %s3649 = sshll.u32 %s3639, 4
          %s3650 = int_to_ptr.vmem [resolvable:$true] %s3649
          %3655 = dma.vmem_to_hbm [thread:$0]  %s3650, 1024, %s3648, %s3636, 128, 128, 8
        $region120: #{tpu_custom_call.1} parent=67 // pred_fallthru
          _
      $region68: #{tpu_custom_call.1} parent=5 // pred_fallthru
        _
      %p3656 = scmp.le.s32.totalorder 2, %s33
      // Predicated region
      $region121: #{tpu_custom_call.1} parent=5 // pred_check
        %p3657 = pneg %p3656
      $region122: #{tpu_custom_call.1} parent=5 // pred_check_branch
        %3659 = sbr.rel (%p3657) target = $region124
      $region123: #{tpu_custom_call.1} parent=5 // pred_region
        %s3660 = ssub.s32 %s33, 2
        // Predicated region
        $region125: #{tpu_custom_call.1} parent=123 // pred_check
          %p3661 = pneg %p324
        $region126: #{tpu_custom_call.1} parent=123 // pred_check_branch
          %3663 = sbr.rel (%p3661) target = $region128
        $region127: #{tpu_custom_call.1} parent=123 // pred_region
          %s3664 = sand.u32 %s309, 1
          %s3665 = scalar_lea.sflag [#allocation4], %s3664
          %s3666 = sand.u32 %s309, 1
          %s3667 = smul.addr %s3666, 64
          %s3668 = scalar_lea.vmem [#allocation23], %s3667
          %3669 = dma.done %s3665, 1024
        $region128: #{tpu_custom_call.1} parent=123 // pred_fallthru
          _
      $region124: #{tpu_custom_call.1} parent=5 // pred_fallthru
        _
    $region6: #{tpu_custom_call.1} parent=1 // loop_footer
      %s37 = sadd.s32 1, %s33
    $region7: #{tpu_custom_call.1} parent=1 // loop_footer_branch
      %32 = sbr.rel target = $region3
    $region8: #{tpu_custom_call.1} parent=1 // loop_exit
      _
    %3670 = vsyncpa [#allocation3], 1
    %s3671 = scalar_lea.sflag [#allocation3], 1
    %3672 = vsyncpa %s3671, 1
    %3673 = vsyncpa [#allocation8], 1
    %s3674 = scalar_lea.sflag [#allocation8], 1
    %3675 = vsyncpa %s3674, 1
    %3676 = vsyncpa [#allocation4], 1
    %s3677 = scalar_lea.sflag [#allocation4], 1
    %3678 = vsyncpa %s3677, 1
    %3679 = vsyncpa [#allocation5], 1
    %s3680 = scalar_lea.sflag [#allocation5], 1
    %3681 = vsyncpa %s3680, 1
    %3682 = vsyncpa [#allocation6], 1
    %s3683 = scalar_lea.sflag [#allocation6], 1
    %3684 = vsyncpa %s3683, 1
    %3685 = vsyncpa [#allocation11], 1
    %3686 = vsyncpa [#allocation15], 1
    %3687 = vsyncpa [#allocation18], 1
    %3688 = vsyncpa [#allocation21], 1

</llo_original>
